<compile_context>
chip_gen: v7x
topology: tpu7x:2x2x1
jax: 0.10.0
libtpu: 0.0.40
codegen_flags: <defaults>
</compile_context>

<pallas_src>
import functools

import jax
import jax.numpy as jnp
from jax import lax
from jax.experimental import pallas as pl
from jax.experimental.pallas import tpu as pltpu

EPS = 1e-5
LANE = 128


def _round_up(x, m):
    return (x + m - 1) // m * m


# --------------------------------------------------------------------------
# Kernel
# --------------------------------------------------------------------------
def _basic_block_kernel(x_ref, w1_ref, b1_ref, w2_ref, b2_ref,
                        out_ref, hpad_ref, col_ref, *, H, W, Wa):
    """Fused BasicBlock for one image.

    x_ref   : (1, (H+2)*Wa, Cpad)  spatially + channel zero-padded NHWC slab
    w*_ref  : (9*Cpad, Cpad)       BN-scale-folded weights (tap-major rows)
    b*_ref  : (1, Cpad)            folded BN bias (f32)
    out_ref : (1, H*Wa, Cpad)      interior-rows lane-dense output slab
    hpad_ref: ((H+2)*Wa, Cpad)     padded intermediate activation (VMEM)
    col_ref : (H*Wa, 9*Cpad)       im2col scratch (VMEM)
    """
    cpad = x_ref.shape[-1]
    n = H * Wa                               # pixels in the output slab
    cdt = hpad_ref.dtype                     # MXU input dtype

    def conv3x3(load_row_window, w_ref):
        # Pack the 9 shifted windows along the contraction dim, then one MXU
        # matmul with K = 9*Cpad (the MXU accumulates internally; no f32
        # accumulator traffic through VMEM).
        for kh in range(3):
            win = load_row_window(kh)        # (n, Cpad), sublane-aligned load
            for kw in range(3):
                t = kh * 3 + kw
                shift = (1 - kw) % n         # +-1 column tap via XLU rotate;
                tap = win if shift == 0 else pltpu.roll(win, shift, axis=0)
                col_ref[:, t * cpad:(t + 1) * cpad] = tap   # lane-aligned store
        return jnp.dot(col_ref[...], w_ref[...],
                       preferred_element_type=jnp.float32)

    # Interior-column mask (pad ring / stride-alignment columns -> 0), built
    # from an iota so there is no lane-sparse mask operand to DMA.
    col_idx = lax.broadcasted_iota(jnp.int32, (n, 1), 0) % Wa
    interior = jnp.logical_and(col_idx >= 1, col_idx <= W)

    # ---- conv1 + bn1 + relu ------------------------------------------------
    acc1 = conv3x3(lambda kh: x_ref[0, pl.ds(kh * Wa, n), :], w1_ref)
    h = jnp.maximum(acc1 + b1_ref[...], 0.0)
    h = jnp.where(interior, h, 0.0)

    # Place h back on a padded grid.  Only the two ring rows are (re)zeroed
    # every step: they are tiny, never written elsewhere, and this stays
    # correct under megacore grid sharding (no program_id==0 trick).
    hpad_ref[pl.ds(0, Wa), :] = jnp.zeros((Wa, cpad), cdt)
    hpad_ref[pl.ds((H + 1) * Wa, Wa), :] = jnp.zeros((Wa, cpad), cdt)
    hpad_ref[pl.ds(Wa, n), :] = h.astype(cdt)

    # ---- conv2 + bn2 + residual + relu --------------------------------------
    acc2 = conv3x3(lambda kh: hpad_ref[pl.ds(kh * Wa, n), :], w2_ref)
    identity = x_ref[0, pl.ds(Wa, n), :].astype(jnp.float32)
    out = jnp.maximum(acc2 + b2_ref[...] + identity, 0.0)
    out_ref[0] = out.astype(out_ref.dtype)


# --------------------------------------------------------------------------
# Wrapper
# --------------------------------------------------------------------------
def fold_bn(gamma, beta, mean, var):
    scale = gamma / jnp.sqrt(var + EPS)
    bias = beta - mean * scale
    return scale, bias


def _prep_weight(w_oihw, scale, cpad, cdt):
    """OIHW -> HWIO, fold BN scale over Cout, pad channels, -> (9*Cpad, Cpad)."""
    cout, cin = w_oihw.shape[0], w_oihw.shape[1]
    w = jnp.transpose(w_oihw, (2, 3, 1, 0)) * scale[None, None, None, :]
    w = jnp.pad(w, ((0, 0), (0, 0), (0, cpad - cin), (0, cpad - cout)))
    return w.reshape(9 * cpad, cpad).astype(cdt)


def basic_block_forward(x_nchw, params, compute_dtype=None):
    """BasicBlock with stride=1, downsample=None, act=True (inference BN)."""
    N, C, H, W = x_nchw.shape
    assert params["w1"].shape[1] == C and params["w2"].shape[0] == C, (
        "stride=1 / downsample=None BasicBlock requires inplanes == planes")

    cdt = jnp.dtype(compute_dtype or x_nchw.dtype)  # pass bf16 for bf16 MXU path
    out_dtype = x_nchw.dtype
    itm = cdt.itemsize
    oitm = jnp.dtype(out_dtype).itemsize
    sub = max(8, 32 // itm)                 # sublane packing for compute dtype
    cpad = max(LANE, _round_up(C, LANE))
    Hp = H + 2
    Wa = _round_up(W + 2, sub)              # aligned flat row stride
    n_in = Hp * Wa                          # padded-slab pixels
    n_out = H * Wa                          # interior-row pixels

    # NCHW -> NHWC with the spatial pad ring and channel/lane padding done in
    # one fused XLA copy; the kernel slices this slab directly (no in-kernel
    # padding or scattering).
    x = jnp.transpose(x_nchw, (0, 2, 3, 1)).astype(cdt)
    x = jnp.pad(x, ((0, 0), (1, 1), (1, Wa - W - 1), (0, cpad - C)))
    x = x.reshape(N, n_in, cpad)

    s1, b1 = fold_bn(*params["bn1"])
    s2, b2 = fold_bn(*params["bn2"])
    w1 = _prep_weight(params["w1"], s1, cpad, cdt)
    w2 = _prep_weight(params["w2"], s2, cpad, cdt)
    b1 = jnp.pad(b1, (0, cpad - C)).reshape(1, cpad).astype(jnp.float32)
    b2 = jnp.pad(b2, (0, cpad - C)).reshape(1, cpad).astype(jnp.float32)

    # --- VMEM budget ----------------------------------------------------------
    est = (2 * n_in * cpad * itm            # x block (double buffered)
           + 2 * n_out * cpad * oitm        # out block (double buffered)
           + 2 * 2 * 9 * cpad * cpad * itm  # w1, w2
           + 2 * 2 * cpad * 4               # biases
           + n_in * cpad * itm              # hpad scratch
           + n_out * 9 * cpad * itm         # im2col scratch
           + 2 * n_out * cpad * 4)          # f32 matmul results (headroom)
    try:
        vmem_cap = int(pltpu.get_tpu_info().vmem_capacity_bytes)
    except Exception:                        # conservative, v7x-safe fallback
        vmem_cap = 64 * 1024 * 1024
    vmem_limit = int(min(max(2 * est, 32 * 1024 * 1024), (vmem_cap * 3) // 4))

    flops = int(2 * 2 * N * n_out * 9 * cpad * cpad)            # 2 convs
    bytes_accessed = int(x.size * itm + 2 * 9 * cpad * cpad * itm
                         + N * n_out * cpad * oitm)

    kernel = functools.partial(_basic_block_kernel, H=H, W=W, Wa=Wa)

    out_slab = pl.pallas_call(
        kernel,
        out_shape=jax.ShapeDtypeStruct((N, n_out, cpad), out_dtype),
        grid=(N,),
        in_specs=[
            pl.BlockSpec((1, n_in, cpad), lambda n: (n, 0, 0)),    # x slab
            pl.BlockSpec((9 * cpad, cpad), lambda n: (0, 0)),      # w1 (resident)
            pl.BlockSpec((1, cpad), lambda n: (0, 0)),             # b1
            pl.BlockSpec((9 * cpad, cpad), lambda n: (0, 0)),      # w2 (resident)
            pl.BlockSpec((1, cpad), lambda n: (0, 0)),             # b2
        ],
        out_specs=pl.BlockSpec((1, n_out, cpad), lambda n: (n, 0, 0)),
        scratch_shapes=[
            pltpu.VMEM((n_in, cpad), cdt),          # padded intermediate h
            pltpu.VMEM((n_out, 9 * cpad), cdt),     # im2col buffer
        ],
        compiler_params=pltpu.CompilerParams(
            dimension_semantics=("parallel",),       # shards batch over TCs
            vmem_limit_bytes=vmem_limit),
        cost_estimate=pl.CostEstimate(flops=flops, transcendentals=0,
                                      bytes_accessed=bytes_accessed),
    )(x, w1, b1, w2, b2)

    # Un-pad + NHWC -> NCHW (pure layout plumbing in XLA).
    out = out_slab.reshape(N, H, Wa, cpad)[:, :, 1:W + 1, :C]
    return jnp.transpose(out, (0, 3, 1, 2)).astype(out_dtype)


# --------------------------------------------------------------------------
# Pure-JAX reference + params
# --------------------------------------------------------------------------
def reference_forward(x_nchw, params):
    x = jnp.transpose(x_nchw, (0, 2, 3, 1))

    def conv(v, w_oihw):
        return lax.conv_general_dilated(
            v, jnp.transpose(w_oihw, (2, 3, 1, 0)),
            window_strides=(1, 1), padding=((1, 1), (1, 1)),
            dimension_numbers=("NHWC", "HWIO", "NHWC"),
            precision=lax.Precision.HIGHEST)

    def bn(v, p):
        g, b, m, var = p
        return g * (v - m) / jnp.sqrt(var + EPS) + b

    h = jax.nn.relu(bn(conv(x, params["w1"]), params["bn1"]))
    out = bn(conv(h, params["w2"]), params["bn2"]) + x
    return jnp.transpose(jax.nn.relu(out), (0, 3, 1, 2))


def init_params(key, inplanes, planes):
    ks = jax.random.split(key, 10)
    fan1 = inplanes * 9
    fan2 = planes * 9
    w1 = jax.random.normal(ks[0], (planes, inplanes, 3, 3), jnp.float32) / jnp.sqrt(fan1)
    w2 = jax.random.normal(ks[1], (planes, planes, 3, 3), jnp.float32) / jnp.sqrt(fan2)
    bn1 = (1.0 + 0.1 * jax.random.normal(ks[2], (planes,), jnp.float32),     # gamma
           0.1 * jax.random.normal(ks[3], (planes,), jnp.float32),           # beta
           0.1 * jax.random.normal(ks[4], (planes,), jnp.float32),           # running_mean
           0.5 + jnp.abs(jax.random.normal(ks[5], (planes,), jnp.float32)))  # running_var
    bn2 = (1.0 + 0.1 * jax.random.normal(ks[6], (planes,), jnp.float32),
           0.1 * jax.random.normal(ks[7], (planes,), jnp.float32),
           0.1 * jax.random.normal(ks[8], (planes,), jnp.float32),
           0.5 + jnp.abs(jax.random.normal(ks[9], (planes,), jnp.float32)))
    return {"w1": w1, "w2": w2, "bn1": bn1, "bn2": bn2}


if __name__ == "__main__":
    key = jax.random.PRNGKey(0)
    k_x, k_p = jax.random.split(key)

    N, C, H, W = 2, 4, 16, 16          # inplanes = planes = 4, stride = 1
    x = jax.random.normal(k_x, (N, C, H, W), jnp.float32)
    params = init_params(k_p, C, C)

    fwd = jax.jit(basic_block_forward)
    out = jax.block_until_ready(fwd(x, params))
    ref = jax.block_until_ready(reference_forward(x, params))

    assert out.shape == (N, C, H, W), out.shape
    max_err = float(jnp.max(jnp.abs(out - ref)))
    # f32 path; tolerance absorbs MXU pass-precision differences while still
    # catching any structural bug (tap/bias/mask errors are O(0.1..1)).
    assert max_err < 1e-2, f"max abs err {max_err}"
    print("KERNEL_OK")
</pallas_src>

<mosaic_0001>
module attributes {stable_mosaic.version = 11 : i64} {
  func.func @_basic_block_kernel(%arg0: i32, %arg1: memref<1x432x128xf32, #tpu.memory_space<vmem>>, %arg2: memref<1152x128xf32, #tpu.memory_space<vmem>>, %arg3: memref<1x128xf32, #tpu.memory_space<vmem>>, %arg4: memref<1152x128xf32, #tpu.memory_space<vmem>>, %arg5: memref<1x128xf32, #tpu.memory_space<vmem>>, %arg6: memref<1x384x128xf32, #tpu.memory_space<vmem>>, %arg7: memref<432x128xf32, #tpu.memory_space<vmem>>, %arg8: memref<384x1152xf32, #tpu.memory_space<vmem>>) attributes {dimension_semantics = [#tpu.dimension_semantics<parallel>], iteration_bounds = array<i64: 2>, scalar_prefetch = 0 : i64, scratch_operands = 2 : i64, tpu.core_type = #tpu.core_type<tc>, window_params = [{transform_indices = @transform_0, window_bounds = array<i64: 1, 432, 128>}, {pipeline_mode = #tpu.pipeline_mode<synchronous>, transform_indices = @transform_1, window_bounds = array<i64: 1152, 128>}, {pipeline_mode = #tpu.pipeline_mode<synchronous>, transform_indices = @transform_2, window_bounds = array<i64: 1, 128>}, {pipeline_mode = #tpu.pipeline_mode<synchronous>, transform_indices = @transform_3, window_bounds = array<i64: 1152, 128>}, {pipeline_mode = #tpu.pipeline_mode<synchronous>, transform_indices = @transform_4, window_bounds = array<i64: 1, 128>}, {transform_indices = @transform_5, window_bounds = array<i64: 1, 384, 128>}]} {
    %0 = tpu.iota {dimensions = array<i32: 0>} : vector<384x1xi32>
    %c24_i32 = arith.constant 24 : i32
    %c0_i32 = arith.constant 0 : i32
    %1 = arith.cmpi eq, %c24_i32, %c0_i32 : i32
    %c1_i32 = arith.constant 1 : i32
    %2 = arith.select %1, %c1_i32, %c24_i32 : i32
    %3 = vector.broadcast %2 : i32 to vector<384x1xi32>
    %4 = arith.remsi %0, %3 : vector<384x1xi32>
    %c0_i32_0 = arith.constant 0 : i32
    %5 = vector.broadcast %c0_i32_0 : i32 to vector<384x1xi32>
    %6 = arith.cmpi ne, %4, %5 : vector<384x1xi32>
    %c0_i32_1 = arith.constant 0 : i32
    %7 = vector.broadcast %c0_i32_1 : i32 to vector<384x1xi32>
    %8 = arith.cmpi slt, %4, %7 : vector<384x1xi32>
    %c0_i32_2 = arith.constant 0 : i32
    %9 = arith.cmpi slt, %2, %c0_i32_2 : i32
    %10 = vector.broadcast %9 : i1 to vector<384x1xi1>
    %11 = vector.broadcast %10 : vector<384x1xi1> to vector<384x1xi1>
    %12 = arith.xori %8, %11 : vector<384x1xi1>
    %13 = arith.andi %12, %6 : vector<384x1xi1>
    %14 = vector.broadcast %2 : i32 to vector<384x1xi32>
    %15 = arith.addi %4, %14 : vector<384x1xi32>
    %16 = arith.select %13, %15, %4 : vector<384x1xi1>, vector<384x1xi32>
    %c1_i32_3 = arith.constant 1 : i32
    %17 = vector.broadcast %c1_i32_3 : i32 to vector<384x1xi32>
    %18 = arith.cmpi sge, %16, %17 : vector<384x1xi32>
    %c16_i32 = arith.constant 16 : i32
    %19 = vector.broadcast %c16_i32 : i32 to vector<384x1xi32>
    %20 = arith.cmpi sle, %16, %19 : vector<384x1xi32>
    %21 = arith.andi %18, %20 : vector<384x1xi1>
    %c0 = arith.constant 0 : index
    %c0_4 = arith.constant 0 : index
    %c0_5 = arith.constant 0 : index
    %22 = vector.load %arg1[%c0, %c0_4, %c0_5] : memref<1x432x128xf32, #tpu.memory_space<vmem>>, vector<1x384x128xf32>
    %23 = vector.shape_cast %22 : vector<1x384x128xf32> to vector<384x128xf32>
    %c1_i32_6 = arith.constant 1 : i32
    %24 = tpu.dynamic_rotate %23 by %c1_i32_6 dim 0 : vector<384x128xf32>, i32 -> vector<384x128xf32>
    %c0_7 = arith.constant 0 : index
    %c0_8 = arith.constant 0 : index
    %25 = vector.load %arg8[%c0_7, %c0_8] : memref<384x1152xf32, #tpu.memory_space<vmem>>, vector<384x128xf32>
    tpu.vector_store %arg8[%c0_7, %c0_8], %24 {strides = array<i32>} : memref<384x1152xf32, #tpu.memory_space<vmem>>, vector<384x128xf32>,
    %c0_9 = arith.constant 0 : index
    %c128 = arith.constant 128 : index
    %26 = vector.load %arg8[%c0_9, %c128] : memref<384x1152xf32, #tpu.memory_space<vmem>>, vector<384x128xf32>
    tpu.vector_store %arg8[%c0_9, %c128], %23 {strides = array<i32>} : memref<384x1152xf32, #tpu.memory_space<vmem>>, vector<384x128xf32>,
    %c383_i32 = arith.constant 383 : i32
    %27 = tpu.dynamic_rotate %23 by %c383_i32 dim 0 : vector<384x128xf32>, i32 -> vector<384x128xf32>
    %c0_10 = arith.constant 0 : index
    %c256 = arith.constant 256 : index
    %28 = vector.load %arg8[%c0_10, %c256] : memref<384x1152xf32, #tpu.memory_space<vmem>>, vector<384x128xf32>
    tpu.vector_store %arg8[%c0_10, %c256], %27 {strides = array<i32>} : memref<384x1152xf32, #tpu.memory_space<vmem>>, vector<384x128xf32>,
    %c0_11 = arith.constant 0 : index
    %c24 = arith.constant 24 : index
    %c0_12 = arith.constant 0 : index
    %29 = vector.load %arg1[%c0_11, %c24, %c0_12] : memref<1x432x128xf32, #tpu.memory_space<vmem>>, vector<1x384x128xf32>
    %30 = vector.shape_cast %29 : vector<1x384x128xf32> to vector<384x128xf32>
    %c1_i32_13 = arith.constant 1 : i32
    %31 = tpu.dynamic_rotate %30 by %c1_i32_13 dim 0 : vector<384x128xf32>, i32 -> vector<384x128xf32>
    %c0_14 = arith.constant 0 : index
    %c384 = arith.constant 384 : index
    %32 = vector.load %arg8[%c0_14, %c384] : memref<384x1152xf32, #tpu.memory_space<vmem>>, vector<384x128xf32>
    tpu.vector_store %arg8[%c0_14, %c384], %31 {strides = array<i32>} : memref<384x1152xf32, #tpu.memory_space<vmem>>, vector<384x128xf32>,
    %c0_15 = arith.constant 0 : index
    %c512 = arith.constant 512 : index
    %33 = vector.load %arg8[%c0_15, %c512] : memref<384x1152xf32, #tpu.memory_space<vmem>>, vector<384x128xf32>
    tpu.vector_store %arg8[%c0_15, %c512], %30 {strides = array<i32>} : memref<384x1152xf32, #tpu.memory_space<vmem>>, vector<384x128xf32>,
    %c383_i32_16 = arith.constant 383 : i32
    %34 = tpu.dynamic_rotate %30 by %c383_i32_16 dim 0 : vector<384x128xf32>, i32 -> vector<384x128xf32>
    %c0_17 = arith.constant 0 : index
    %c640 = arith.constant 640 : index
    %35 = vector.load %arg8[%c0_17, %c640] : memref<384x1152xf32, #tpu.memory_space<vmem>>, vector<384x128xf32>
    tpu.vector_store %arg8[%c0_17, %c640], %34 {strides = array<i32>} : memref<384x1152xf32, #tpu.memory_space<vmem>>, vector<384x128xf32>,
    %c0_18 = arith.constant 0 : index
    %c48 = arith.constant 48 : index
    %c0_19 = arith.constant 0 : index
    %36 = vector.load %arg1[%c0_18, %c48, %c0_19] : memref<1x432x128xf32, #tpu.memory_space<vmem>>, vector<1x384x128xf32>
    %37 = vector.shape_cast %36 : vector<1x384x128xf32> to vector<384x128xf32>
    %c1_i32_20 = arith.constant 1 : i32
    %38 = tpu.dynamic_rotate %37 by %c1_i32_20 dim 0 : vector<384x128xf32>, i32 -> vector<384x128xf32>
    %c0_21 = arith.constant 0 : index
    %c768 = arith.constant 768 : index
    %39 = vector.load %arg8[%c0_21, %c768] : memref<384x1152xf32, #tpu.memory_space<vmem>>, vector<384x128xf32>
    tpu.vector_store %arg8[%c0_21, %c768], %38 {strides = array<i32>} : memref<384x1152xf32, #tpu.memory_space<vmem>>, vector<384x128xf32>,
    %c0_22 = arith.constant 0 : index
    %c896 = arith.constant 896 : index
    %40 = vector.load %arg8[%c0_22, %c896] : memref<384x1152xf32, #tpu.memory_space<vmem>>, vector<384x128xf32>
    tpu.vector_store %arg8[%c0_22, %c896], %37 {strides = array<i32>} : memref<384x1152xf32, #tpu.memory_space<vmem>>, vector<384x128xf32>,
    %c383_i32_23 = arith.constant 383 : i32
    %41 = tpu.dynamic_rotate %37 by %c383_i32_23 dim 0 : vector<384x128xf32>, i32 -> vector<384x128xf32>
    %c0_24 = arith.constant 0 : index
    %c1024 = arith.constant 1024 : index
    %42 = vector.load %arg8[%c0_24, %c1024] : memref<384x1152xf32, #tpu.memory_space<vmem>>, vector<384x128xf32>
    tpu.vector_store %arg8[%c0_24, %c1024], %41 {strides = array<i32>} : memref<384x1152xf32, #tpu.memory_space<vmem>>, vector<384x128xf32>,
    %c0_25 = arith.constant 0 : index
    %c0_26 = arith.constant 0 : index
    %43 = vector.load %arg8[%c0_25, %c0_26] : memref<384x1152xf32, #tpu.memory_space<vmem>>, vector<384x1152xf32>
    %c0_27 = arith.constant 0 : index
    %c0_28 = arith.constant 0 : index
    %44 = vector.load %arg2[%c0_27, %c0_28] : memref<1152x128xf32, #tpu.memory_space<vmem>>, vector<1152x128xf32>
    %cst = arith.constant dense<0.000000e+00> : vector<384x128xf32>
    %45 = tpu.matmul %43, %44, %cst {dimension_numbers = #tpu.dot_dimension_numbers<[1], [0], [0], [1], [0, 0, 1, 1], [], []>} : vector<384x1152xf32>, vector<1152x128xf32>, vector<384x128xf32> -> vector<384x128xf32>
    %c0_29 = arith.constant 0 : index
    %c0_30 = arith.constant 0 : index
    %46 = vector.load %arg3[%c0_29, %c0_30] : memref<1x128xf32, #tpu.memory_space<vmem>>, vector<1x128xf32>
    %47 = vector.broadcast %46 : vector<1x128xf32> to vector<384x128xf32>
    %48 = arith.addf %45, %47 : vector<384x128xf32>
    %cst_31 = arith.constant 0.000000e+00 : f32
    %49 = vector.broadcast %cst_31 : f32 to vector<384x128xf32>
    %50 = arith.maximumf %48, %49 : vector<384x128xf32>
    %cst_32 = arith.constant 0.000000e+00 : f32
    %51 = vector.shape_cast %21 : vector<384x1xi1> to vector<384x1xi1>
    %52 = vector.broadcast %51 : vector<384x1xi1> to vector<384x128xi1>
    %53 = vector.broadcast %cst_32 : f32 to vector<384x128xf32>
    %54 = arith.select %52, %50, %53 : vector<384x128xi1>, vector<384x128xf32>
    %cst_33 = arith.constant 0.000000e+00 : f32
    %55 = vector.broadcast %cst_33 : f32 to vector<24x128xf32>
    %c0_34 = arith.constant 0 : index
    %c0_35 = arith.constant 0 : index
    %56 = vector.load %arg7[%c0_34, %c0_35] : memref<432x128xf32, #tpu.memory_space<vmem>>, vector<24x128xf32>
    tpu.vector_store %arg7[%c0_34, %c0_35], %55 {strides = array<i32>} : memref<432x128xf32, #tpu.memory_space<vmem>>, vector<24x128xf32>,
    %cst_36 = arith.constant 0.000000e+00 : f32
    %57 = vector.broadcast %cst_36 : f32 to vector<24x128xf32>
    %c408 = arith.constant 408 : index
    %c0_37 = arith.constant 0 : index
    %58 = vector.load %arg7[%c408, %c0_37] : memref<432x128xf32, #tpu.memory_space<vmem>>, vector<24x128xf32>
    tpu.vector_store %arg7[%c408, %c0_37], %57 {strides = array<i32>} : memref<432x128xf32, #tpu.memory_space<vmem>>, vector<24x128xf32>,
    %c24_38 = arith.constant 24 : index
    %c0_39 = arith.constant 0 : index
    %59 = vector.load %arg7[%c24_38, %c0_39] : memref<432x128xf32, #tpu.memory_space<vmem>>, vector<384x128xf32>
    tpu.vector_store %arg7[%c24_38, %c0_39], %54 {strides = array<i32>} : memref<432x128xf32, #tpu.memory_space<vmem>>, vector<384x128xf32>,
    %c0_40 = arith.constant 0 : index
    %c0_41 = arith.constant 0 : index
    %60 = vector.load %arg7[%c0_40, %c0_41] : memref<432x128xf32, #tpu.memory_space<vmem>>, vector<384x128xf32>
    %c1_i32_42 = arith.constant 1 : i32
    %61 = tpu.dynamic_rotate %60 by %c1_i32_42 dim 0 : vector<384x128xf32>, i32 -> vector<384x128xf32>
    %c0_43 = arith.constant 0 : index
    %c0_44 = arith.constant 0 : index
    %62 = vector.load %arg8[%c0_43, %c0_44] : memref<384x1152xf32, #tpu.memory_space<vmem>>, vector<384x128xf32>
    tpu.vector_store %arg8[%c0_43, %c0_44], %61 {strides = array<i32>} : memref<384x1152xf32, #tpu.memory_space<vmem>>, vector<384x128xf32>,
    %c0_45 = arith.constant 0 : index
    %c128_46 = arith.constant 128 : index
    %63 = vector.load %arg8[%c0_45, %c128_46] : memref<384x1152xf32, #tpu.memory_space<vmem>>, vector<384x128xf32>
    tpu.vector_store %arg8[%c0_45, %c128_46], %60 {strides = array<i32>} : memref<384x1152xf32, #tpu.memory_space<vmem>>, vector<384x128xf32>,
    %c383_i32_47 = arith.constant 383 : i32
    %64 = tpu.dynamic_rotate %60 by %c383_i32_47 dim 0 : vector<384x128xf32>, i32 -> vector<384x128xf32>
    %c0_48 = arith.constant 0 : index
    %c256_49 = arith.constant 256 : index
    %65 = vector.load %arg8[%c0_48, %c256_49] : memref<384x1152xf32, #tpu.memory_space<vmem>>, vector<384x128xf32>
    tpu.vector_store %arg8[%c0_48, %c256_49], %64 {strides = array<i32>} : memref<384x1152xf32, #tpu.memory_space<vmem>>, vector<384x128xf32>,
    %c24_50 = arith.constant 24 : index
    %c0_51 = arith.constant 0 : index
    %66 = vector.load %arg7[%c24_50, %c0_51] : memref<432x128xf32, #tpu.memory_space<vmem>>, vector<384x128xf32>
    %c1_i32_52 = arith.constant 1 : i32
    %67 = tpu.dynamic_rotate %66 by %c1_i32_52 dim 0 : vector<384x128xf32>, i32 -> vector<384x128xf32>
    %c0_53 = arith.constant 0 : index
    %c384_54 = arith.constant 384 : index
    %68 = vector.load %arg8[%c0_53, %c384_54] : memref<384x1152xf32, #tpu.memory_space<vmem>>, vector<384x128xf32>
    tpu.vector_store %arg8[%c0_53, %c384_54], %67 {strides = array<i32>} : memref<384x1152xf32, #tpu.memory_space<vmem>>, vector<384x128xf32>,
    %c0_55 = arith.constant 0 : index
    %c512_56 = arith.constant 512 : index
    %69 = vector.load %arg8[%c0_55, %c512_56] : memref<384x1152xf32, #tpu.memory_space<vmem>>, vector<384x128xf32>
    tpu.vector_store %arg8[%c0_55, %c512_56], %66 {strides = array<i32>} : memref<384x1152xf32, #tpu.memory_space<vmem>>, vector<384x128xf32>,
    %c383_i32_57 = arith.constant 383 : i32
    %70 = tpu.dynamic_rotate %66 by %c383_i32_57 dim 0 : vector<384x128xf32>, i32 -> vector<384x128xf32>
    %c0_58 = arith.constant 0 : index
    %c640_59 = arith.constant 640 : index
    %71 = vector.load %arg8[%c0_58, %c640_59] : memref<384x1152xf32, #tpu.memory_space<vmem>>, vector<384x128xf32>
    tpu.vector_store %arg8[%c0_58, %c640_59], %70 {strides = array<i32>} : memref<384x1152xf32, #tpu.memory_space<vmem>>, vector<384x128xf32>,
    %c48_60 = arith.constant 48 : index
    %c0_61 = arith.constant 0 : index
    %72 = vector.load %arg7[%c48_60, %c0_61] : memref<432x128xf32, #tpu.memory_space<vmem>>, vector<384x128xf32>
    %c1_i32_62 = arith.constant 1 : i32
    %73 = tpu.dynamic_rotate %72 by %c1_i32_62 dim 0 : vector<384x128xf32>, i32 -> vector<384x128xf32>
    %c0_63 = arith.constant 0 : index
    %c768_64 = arith.constant 768 : index
    %74 = vector.load %arg8[%c0_63, %c768_64] : memref<384x1152xf32, #tpu.memory_space<vmem>>, vector<384x128xf32>
    tpu.vector_store %arg8[%c0_63, %c768_64], %73 {strides = array<i32>} : memref<384x1152xf32, #tpu.memory_space<vmem>>, vector<384x128xf32>,
    %c0_65 = arith.constant 0 : index
    %c896_66 = arith.constant 896 : index
    %75 = vector.load %arg8[%c0_65, %c896_66] : memref<384x1152xf32, #tpu.memory_space<vmem>>, vector<384x128xf32>
    tpu.vector_store %arg8[%c0_65, %c896_66], %72 {strides = array<i32>} : memref<384x1152xf32, #tpu.memory_space<vmem>>, vector<384x128xf32>,
    %c383_i32_67 = arith.constant 383 : i32
    %76 = tpu.dynamic_rotate %72 by %c383_i32_67 dim 0 : vector<384x128xf32>, i32 -> vector<384x128xf32>
    %c0_68 = arith.constant 0 : index
    %c1024_69 = arith.constant 1024 : index
    %77 = vector.load %arg8[%c0_68, %c1024_69] : memref<384x1152xf32, #tpu.memory_space<vmem>>, vector<384x128xf32>
    tpu.vector_store %arg8[%c0_68, %c1024_69], %76 {strides = array<i32>} : memref<384x1152xf32, #tpu.memory_space<vmem>>, vector<384x128xf32>,
    %c0_70 = arith.constant 0 : index
    %c0_71 = arith.constant 0 : index
    %78 = vector.load %arg8[%c0_70, %c0_71] : memref<384x1152xf32, #tpu.memory_space<vmem>>, vector<384x1152xf32>
    %c0_72 = arith.constant 0 : index
    %c0_73 = arith.constant 0 : index
    %79 = vector.load %arg4[%c0_72, %c0_73] : memref<1152x128xf32, #tpu.memory_space<vmem>>, vector<1152x128xf32>
    %cst_74 = arith.constant dense<0.000000e+00> : vector<384x128xf32>
    %80 = tpu.matmul %78, %79, %cst_74 {dimension_numbers = #tpu.dot_dimension_numbers<[1], [0], [0], [1], [0, 0, 1, 1], [], []>} : vector<384x1152xf32>, vector<1152x128xf32>, vector<384x128xf32> -> vector<384x128xf32>
    %c0_75 = arith.constant 0 : index
    %c24_76 = arith.constant 24 : index
    %c0_77 = arith.constant 0 : index
    %81 = vector.load %arg1[%c0_75, %c24_76, %c0_77] : memref<1x432x128xf32, #tpu.memory_space<vmem>>, vector<1x384x128xf32>
    %82 = vector.shape_cast %81 : vector<1x384x128xf32> to vector<384x128xf32>
    %c0_78 = arith.constant 0 : index
    %c0_79 = arith.constant 0 : index
    %83 = vector.load %arg5[%c0_78, %c0_79] : memref<1x128xf32, #tpu.memory_space<vmem>>, vector<1x128xf32>
    %84 = vector.broadcast %83 : vector<1x128xf32> to vector<384x128xf32>
    %85 = arith.addf %80, %84 : vector<384x128xf32>
    %86 = arith.addf %85, %82 : vector<384x128xf32>
    %cst_80 = arith.constant 0.000000e+00 : f32
    %87 = vector.broadcast %cst_80 : f32 to vector<384x128xf32>
    %88 = arith.maximumf %86, %87 : vector<384x128xf32>
    %c0_81 = arith.constant 0 : index
    %c0_82 = arith.constant 0 : index
    %c0_83 = arith.constant 0 : index
    %89 = vector.load %arg6[%c0_81, %c0_82, %c0_83] : memref<1x384x128xf32, #tpu.memory_space<vmem>>, vector<1x384x128xf32>
    %90 = vector.shape_cast %89 : vector<1x384x128xf32> to vector<384x128xf32>
    %91 = vector.shape_cast %88 : vector<384x128xf32> to vector<1x384x128xf32>
    tpu.vector_store %arg6[%c0_81, %c0_82, %c0_83], %91 {strides = array<i32>} : memref<1x384x128xf32, #tpu.memory_space<vmem>>, vector<1x384x128xf32>,
    return
  }
  func.func @transform_0(%arg0: i32) -> (i32, i32, i32) {
    %c0_i32 = arith.constant 0 : i32
    %c0_i32_0 = arith.constant 0 : i32
    %c0_i32_1 = arith.constant 0 : i32
    return %arg0, %c0_i32, %c0_i32_0 : i32, i32, i32
  }
  func.func @transform_1(%arg0: i32) -> (i32, i32) {
    %c0_i32 = arith.constant 0 : i32
    %c0_i32_0 = arith.constant 0 : i32
    %c0_i32_1 = arith.constant 0 : i32
    return %c0_i32, %c0_i32_0 : i32, i32
  }
  func.func @transform_2(%arg0: i32) -> (i32, i32) {
    %c0_i32 = arith.constant 0 : i32
    %c0_i32_0 = arith.constant 0 : i32
    %c0_i32_1 = arith.constant 0 : i32
    return %c0_i32, %c0_i32_0 : i32, i32
  }
  func.func @transform_3(%arg0: i32) -> (i32, i32) {
    %c0_i32 = arith.constant 0 : i32
    %c0_i32_0 = arith.constant 0 : i32
    %c0_i32_1 = arith.constant 0 : i32
    return %c0_i32, %c0_i32_0 : i32, i32
  }
  func.func @transform_4(%arg0: i32) -> (i32, i32) {
    %c0_i32 = arith.constant 0 : i32
    %c0_i32_0 = arith.constant 0 : i32
    %c0_i32_1 = arith.constant 0 : i32
    return %c0_i32, %c0_i32_0 : i32, i32
  }
  func.func @transform_5(%arg0: i32) -> (i32, i32, i32) {
    %c0_i32 = arith.constant 0 : i32
    %c0_i32_0 = arith.constant 0 : i32
    %c0_i32_1 = arith.constant 0 : i32
    return %arg0, %c0_i32, %c0_i32_0 : i32, i32, i32
  }
}

</mosaic_0001>

<llo_original>
// kernel: basic_block_forward.1
$region0: #{basic_block_forward.1}
  #allocation0 [shape = 'u32[]', space=smem, size = 0x4, offset = 0x4, fixed_abs, tag = 'smem constant byte address 0x4 - core index']
  #allocation1 [shape = 'u32[144,128]{1,0:T(1,128)}', space=vmem, size = 0x12000, scoped, tag = 'internal scratch']
  #allocation2 [shape = 'f32[432,128]{1,0:T(8,128)}', space=vmem, size = 0x36000, scoped, tag = 'scratch operand']
  #allocation3 [shape = 'f32[384,1152]{1,0:T(8,128)}', space=vmem, size = 0x1b0000, scoped, tag = 'scratch operand']
  %s0 = inlined_call_operand.vmem [shape: f32[2,432,128], index: 0, kind: input, shape index: {}]
  %s1 = inlined_call_operand.vmem [shape: f32[1152,128], index: 1, kind: input, shape index: {}]
  %s2 = inlined_call_operand.vmem [shape: f32[1,128], index: 2, kind: input, shape index: {}]
  %s3 = inlined_call_operand.vmem [shape: f32[1152,128], index: 3, kind: input, shape index: {}]
  %s4 = inlined_call_operand.vmem [shape: f32[1,128], index: 4, kind: input, shape index: {}]
  %s5 = inlined_call_operand.vmem [shape: f32[2,384,128], index: 5, kind: output, shape index: {}]
  %s6 = sld [smem:[#allocation0]]
  $region53: #{basic_block_forward.1} parent=0
    _
  %s8 = ssub.s32 1, %s6
  %s9 = scalar_select 0, %s8, %s6
  loop: start=0, step=1, limit=4
  $region2: #{basic_block_forward.1} parent=0 // loop_pre_header
    _
  $region3: #{basic_block_forward.1} parent=0 // loop_header
    %s11 = sphi 0, %s15
    %p12 = scmp.ge.s32.totalorder %s11, 4
    %s21 = sphi 0, %s23
    %s24 = sphi 0, %s21
    %s25 = sphi 0, %s24
    %s41 = sphi 0, %s25
    %s45 = sphi 0, %s45
    %s47 = sphi 0, %s45
    %s48 = sphi 0, %s47
    %s62 = sphi 0, %s48
    %s66 = sphi 0, %s66
    %s68 = sphi 0, %s66
    %s69 = sphi 0, %s68
    %s83 = sphi 0, %s69
    %s87 = sphi 0, %s87
    %s89 = sphi 0, %s87
    %s90 = sphi 0, %s89
    %s104 = sphi 0, %s90
    %s108 = sphi 0, %s108
    %s110 = sphi 0, %s108
    %s111 = sphi 0, %s110
    %s125 = sphi 0, %s111
    %s131 = sphi 0, %s133
    %s134 = sphi 0, %s131
    %s135 = sphi 0, %s134
    %s151 = sphi 0, %s135
  $region4: #{basic_block_forward.1} parent=0 // loop_header_branch
    %14 = sbr.rel (%p12) target = $region8
  $region5: #{basic_block_forward.1} parent=0 // loop_body
    %s16 = ssub.s32 %s11, 1
    %s17 = ssub.s32 %s11, 2
    %s18 = sadd.s32 %s11, 1
    %s19 = ssub.s32 %s11, %s18
    %p20 = scmp.eq.s32.totalorder %s19, 0
    %s22 = sadd.s32 %s21, 1
    %s23 = scalar_select %p20, %s21, %s22
    %p26 = pneg %p20
    %p27 = scmp.eq.s32.totalorder %s11, 1
    %p28 = por %p26, %p27
    %p29 = scmp.ne.s32.totalorder %s21, %s24
    %p30 = scmp.eq.s32.totalorder %s11, 0
    %p31 = por %p29, %p30
    %p32 = scmp.ne.s32.totalorder %s21, %s24
    %p33 = scmp.eq.s32.totalorder %s16, 1
    %p34 = por %p32, %p33
    %p35 = scmp.ne.s32.totalorder %s24, %s25
    %p36 = scmp.eq.s32.totalorder %s16, 0
    %p37 = por %p35, %p36
    %p38 = scmp.ne.s32.totalorder %s24, %s25
    %p39 = scmp.eq.s32.totalorder %s17, 1
    %p40 = por %p38, %p39
    %p42 = scmp.ne.s32.totalorder %s25, %s41
    %p43 = scmp.eq.s32.totalorder %s17, 0
    %p44 = por %p42, %p43
    %s46 = sadd.s32 %s45, 1
    %p49 = scmp.eq.s32.totalorder %s11, 1
    %p50 = scmp.ne.s32.totalorder %s45, %s47
    %p51 = scmp.eq.s32.totalorder %s11, 0
    %p52 = por %p50, %p51
    %p53 = scmp.ne.s32.totalorder %s45, %s47
    %p54 = scmp.eq.s32.totalorder %s16, 1
    %p55 = por %p53, %p54
    %p56 = scmp.ne.s32.totalorder %s47, %s48
    %p57 = scmp.eq.s32.totalorder %s16, 0
    %p58 = por %p56, %p57
    %p59 = scmp.ne.s32.totalorder %s47, %s48
    %p60 = scmp.eq.s32.totalorder %s17, 1
    %p61 = por %p59, %p60
    %p63 = scmp.ne.s32.totalorder %s48, %s62
    %p64 = scmp.eq.s32.totalorder %s17, 0
    %p65 = por %p63, %p64
    %s67 = sadd.s32 %s66, 1
    %p70 = scmp.eq.s32.totalorder %s11, 1
    %p71 = scmp.ne.s32.totalorder %s66, %s68
    %p72 = scmp.eq.s32.totalorder %s11, 0
    %p73 = por %p71, %p72
    %p74 = scmp.ne.s32.totalorder %s66, %s68
    %p75 = scmp.eq.s32.totalorder %s16, 1
    %p76 = por %p74, %p75
    %p77 = scmp.ne.s32.totalorder %s68, %s69
    %p78 = scmp.eq.s32.totalorder %s16, 0
    %p79 = por %p77, %p78
    %p80 = scmp.ne.s32.totalorder %s68, %s69
    %p81 = scmp.eq.s32.totalorder %s17, 1
    %p82 = por %p80, %p81
    %p84 = scmp.ne.s32.totalorder %s69, %s83
    %p85 = scmp.eq.s32.totalorder %s17, 0
    %p86 = por %p84, %p85
    %s88 = sadd.s32 %s87, 1
    %p91 = scmp.eq.s32.totalorder %s11, 1
    %p92 = scmp.ne.s32.totalorder %s87, %s89
    %p93 = scmp.eq.s32.totalorder %s11, 0
    %p94 = por %p92, %p93
    %p95 = scmp.ne.s32.totalorder %s87, %s89
    %p96 = scmp.eq.s32.totalorder %s16, 1
    %p97 = por %p95, %p96
    %p98 = scmp.ne.s32.totalorder %s89, %s90
    %p99 = scmp.eq.s32.totalorder %s16, 0
    %p100 = por %p98, %p99
    %p101 = scmp.ne.s32.totalorder %s89, %s90
    %p102 = scmp.eq.s32.totalorder %s17, 1
    %p103 = por %p101, %p102
    %p105 = scmp.ne.s32.totalorder %s90, %s104
    %p106 = scmp.eq.s32.totalorder %s17, 0
    %p107 = por %p105, %p106
    %s109 = sadd.s32 %s108, 1
    %p112 = scmp.eq.s32.totalorder %s11, 1
    %p113 = scmp.ne.s32.totalorder %s108, %s110
    %p114 = scmp.eq.s32.totalorder %s11, 0
    %p115 = por %p113, %p114
    %p116 = scmp.ne.s32.totalorder %s108, %s110
    %p117 = scmp.eq.s32.totalorder %s16, 1
    %p118 = por %p116, %p117
    %p119 = scmp.ne.s32.totalorder %s110, %s111
    %p120 = scmp.eq.s32.totalorder %s16, 0
    %p121 = por %p119, %p120
    %p122 = scmp.ne.s32.totalorder %s110, %s111
    %p123 = scmp.eq.s32.totalorder %s17, 1
    %p124 = por %p122, %p123
    %p126 = scmp.ne.s32.totalorder %s111, %s125
    %p127 = scmp.eq.s32.totalorder %s17, 0
    %p128 = por %p126, %p127
    %s129 = ssub.s32 %s11, %s18
    %p130 = scmp.eq.s32.totalorder %s129, 0
    %s132 = sadd.s32 %s131, 1
    %s133 = scalar_select %p130, %s131, %s132
    %p136 = pneg %p130
    %p137 = scmp.eq.s32.totalorder %s11, 1
    %p138 = por %p136, %p137
    %p139 = scmp.ne.s32.totalorder %s131, %s134
    %p140 = scmp.eq.s32.totalorder %s11, 0
    %p141 = por %p139, %p140
    %p142 = scmp.ne.s32.totalorder %s131, %s134
    %p143 = scmp.eq.s32.totalorder %s16, 1
    %p144 = por %p142, %p143
    %p145 = scmp.ne.s32.totalorder %s134, %s135
    %p146 = scmp.eq.s32.totalorder %s16, 0
    %p147 = por %p145, %p146
    %p148 = scmp.ne.s32.totalorder %s134, %s135
    %p149 = scmp.eq.s32.totalorder %s17, 1
    %p150 = por %p148, %p149
    %p152 = scmp.ne.s32.totalorder %s135, %s151
    %p153 = scmp.eq.s32.totalorder %s17, 0
    %p154 = por %p152, %p153
    %p155 = scmp.le.s32.totalorder 1, %s11
    %p156 = scmp.lt.s32.totalorder %s11, 3
    %p157 = pnand %p155, %p156
    %p158 = pneg %p157
    // Predicated region
    $region9: #{basic_block_forward.1} parent=5 // pred_check
      _
    $region10: #{basic_block_forward.1} parent=5 // pred_check_branch
      %160 = sbr.rel (%p157) target = $region12
    $region11: #{basic_block_forward.1} parent=5 // pred_region
      %s161 = ssub.s32 %s11, 1
      // Predicated region
      $region13: #{basic_block_forward.1} parent=11 // pred_check
        %p162 = pneg %p58
      $region14: #{basic_block_forward.1} parent=11 // pred_check_branch
        %164 = sbr.rel (%p162) target = $region16
      $region15: #{basic_block_forward.1} parent=11 // pred_region
        _
      $region16: #{basic_block_forward.1} parent=11 // pred_fallthru
        _
      // Predicated region
      $region17: #{basic_block_forward.1} parent=11 // pred_check
        %p165 = pneg %p79
      $region18: #{basic_block_forward.1} parent=11 // pred_check_branch
        %167 = sbr.rel (%p165) target = $region20
      $region19: #{basic_block_forward.1} parent=11 // pred_region
        _
      $region20: #{basic_block_forward.1} parent=11 // pred_fallthru
        _
      // Predicated region
      $region21: #{basic_block_forward.1} parent=11 // pred_check
        %p168 = pneg %p100
      $region22: #{basic_block_forward.1} parent=11 // pred_check_branch
        %170 = sbr.rel (%p168) target = $region24
      $region23: #{basic_block_forward.1} parent=11 // pred_region
        _
      $region24: #{basic_block_forward.1} parent=11 // pred_fallthru
        _
      // Predicated region
      $region25: #{basic_block_forward.1} parent=11 // pred_check
        %p171 = pneg %p121
      $region26: #{basic_block_forward.1} parent=11 // pred_check_branch
        %173 = sbr.rel (%p171) target = $region28
      $region27: #{basic_block_forward.1} parent=11 // pred_region
        _
      $region28: #{basic_block_forward.1} parent=11 // pred_fallthru
        _
    $region12: #{basic_block_forward.1} parent=5 // pred_fallthru
      _
    %p174 = scmp.lt.s32.totalorder %s11, 2
    // Predicated region
    $region29: #{basic_block_forward.1} parent=5 // pred_check
      %p175 = pneg %p174
    $region30: #{basic_block_forward.1} parent=5 // pred_check_branch
      %177 = sbr.rel (%p175) target = $region32
    $region31: #{basic_block_forward.1} parent=5 // pred_region
      // Predicated region
      $region33: #{basic_block_forward.1} parent=31 // pred_check
        %p178 = pneg %p31
      $region34: #{basic_block_forward.1} parent=31 // pred_check_branch
        %180 = sbr.rel (%p178) target = $region36
      $region35: #{basic_block_forward.1} parent=31 // pred_region
        %p181 = scmp.lt.s32.totalorder %s11, 1
        %s182 = scalar_select %p181, %s11, 1
        %s183 = smul.addr %s182, 54
        %s184 = smul.addr %s183, 8
        %s185 = scalar_lea.vmem %s0, %s184
      $region36: #{basic_block_forward.1} parent=31 // pred_fallthru
        _
    $region32: #{basic_block_forward.1} parent=5 // pred_fallthru
      _
    %p186 = scmp.le.s32.totalorder 1, %s11
    %p187 = scmp.lt.s32.totalorder %s11, 3
    %p188 = pnand %p186, %p187
    %p189 = pneg %p188
    // Predicated region
    $region37: #{basic_block_forward.1} parent=5 // pred_check
      _
    $region38: #{basic_block_forward.1} parent=5 // pred_check_branch
      %191 = sbr.rel (%p188) target = $region40
    $region39: #{basic_block_forward.1} parent=5 // pred_region
      %s192 = ssub.s32 %s11, 1
      %p193 = scmp.lt.s32.totalorder %s16, 1
      %s194 = scalar_select %p193, %s16, 1
      %s195 = smul.addr %s194, 54
      %s196 = smul.addr %s195, 8
      %s197 = scalar_lea.vmem %s0, %s196
      %p198 = pneg %p37
      %p199 = pneg %p34
      %p200 = pneg %p58
      %p201 = pneg %p55
      %p202 = pneg %p79
      %p203 = pneg %p76
      %p204 = pneg %p100
      %p205 = pneg %p97
      %p206 = pneg %p121
      %p207 = pneg %p118
      %p208 = pneg %p147
      %p209 = pneg %p144
      %p210 = scmp.lt.s32.totalorder %s16, 1
      %s211 = scalar_select %p210, %s16, 1
      %s212 = smul.addr %s211, 48
      %s213 = smul.addr %s212, 8
      %s214 = scalar_lea.vmem %s5, %s213
      %p215 = scmp.lt.s32.totalorder %s16, 1
      %s216 = scalar_select %p215, %s16, 1
      %s217 = smul.addr %s216, 54
      %s218 = smul.addr %s217, 8
      %s219 = scalar_lea.vmem %s0, %s218
      %p220 = scmp.lt.s32.totalorder %s16, 1
      %s221 = scalar_select %p220, %s16, 1
      %s222 = smul.addr %s221, 48
      %s223 = smul.addr %s222, 8
      %s224 = scalar_lea.vmem %s5, %s223
      %v225 = vlaneseq
      %v226 = vshrl.u32 %v225, 7
      %v227 = vadd.s32 %v226, 8
      %v228 = vadd.s32 %v226, 16
      %v229 = vadd.s32 %v226, 24
      %v230 = vadd.s32 %v226, 32
      %v231 = vadd.s32 %v226, 40
      %v232 = vadd.s32 %v226, 48
      %v233 = vadd.s32 %v226, 56
      %v234 = vadd.s32 %v226, 64
      %v235 = vadd.s32 %v226, 72
      %v236 = vadd.s32 %v226, 80
      %v237 = vadd.s32 %v226, 88
      %v238 = vadd.s32 %v226, 96
      %v239 = vadd.s32 %v226, 104
      %v240 = vadd.s32 %v226, 112
      %v241 = vadd.s32 %v226, 120
      %v242 = vadd.s32 %v226, 128
      %v243 = vadd.s32 %v226, 136
      %v244 = vadd.s32 %v226, 144
      %v245 = vadd.s32 %v226, 152
      %v246 = vadd.s32 %v226, 160
      %v247 = vadd.s32 %v226, 168
      %v248 = vadd.s32 %v226, 176
      %v249 = vadd.s32 %v226, 184
      %v250 = vadd.s32 %v226, 192
      %v251 = vadd.s32 %v226, 200
      %v252 = vadd.s32 %v226, 208
      %v253 = vadd.s32 %v226, 216
      %v254 = vadd.s32 %v226, 224
      %v255 = vadd.s32 %v226, 232
      %v256 = vadd.s32 %v226, 240
      %v257 = vadd.s32 %v226, 248
      %v258 = vadd.s32 %v226, 256
      %v259 = vadd.s32 %v226, 264
      %v260 = vadd.s32 %v226, 272
      %v261 = vadd.s32 %v226, 280
      %v262 = vadd.s32 %v226, 288
      %v263 = vadd.s32 %v226, 296
      %v264 = vadd.s32 %v226, 304
      %v265 = vadd.s32 %v226, 312
      %v266 = vadd.s32 %v226, 320
      %v267 = vadd.s32 %v226, 328
      %v268 = vadd.s32 %v226, 336
      %v269 = vadd.s32 %v226, 344
      %v270 = vadd.s32 %v226, 352
      %v271 = vadd.s32 %v226, 360
      %v272 = vadd.s32 %v226, 368
      %v273 = vadd.s32 %v226, 376
      %vm274 = vcmp.lt.s32.totalorder %v226, 0
      %v275 = vsub.s32 0, %v226
      %v276 = vsel %vm274, %v275, %v226
      %v277 = vmul.u32.u64.compose %v276, 2863311531
      %v278 = vextract.low.u32 %v277
      %v279 = vextract.high.u32 %v277
      %v280 = vshrl.u32 %v279, 4
      %v281 = vmul.u32 %v280, 24
      %v282 = vsub.s32 %v276, %v281
      %v283 = vsub.s32 0, %v282
      %v284 = vsel %vm274, %v283, %v282
      %vm285 = vcmp.lt.s32.totalorder %v227, 0
      %v286 = vsub.s32 0, %v227
      %v287 = vsel %vm285, %v286, %v227
      %v288 = vmul.u32.u64.compose %v287, 2863311531
      %v289 = vextract.low.u32 %v288
      %v290 = vextract.high.u32 %v288
      %v291 = vshrl.u32 %v290, 4
      %v292 = vmul.u32 %v291, 24
      %v293 = vsub.s32 %v287, %v292
      %v294 = vsub.s32 0, %v293
      %v295 = vsel %vm285, %v294, %v293
      %vm296 = vcmp.lt.s32.totalorder %v228, 0
      %v297 = vsub.s32 0, %v228
      %v298 = vsel %vm296, %v297, %v228
      %v299 = vmul.u32.u64.compose %v298, 2863311531
      %v300 = vextract.low.u32 %v299
      %v301 = vextract.high.u32 %v299
      %v302 = vshrl.u32 %v301, 4
      %v303 = vmul.u32 %v302, 24
      %v304 = vsub.s32 %v298, %v303
      %v305 = vsub.s32 0, %v304
      %v306 = vsel %vm296, %v305, %v304
      %vm307 = vcmp.lt.s32.totalorder %v229, 0
      %v308 = vsub.s32 0, %v229
      %v309 = vsel %vm307, %v308, %v229
      %v310 = vmul.u32.u64.compose %v309, 2863311531
      %v311 = vextract.low.u32 %v310
      %v312 = vextract.high.u32 %v310
      %v313 = vshrl.u32 %v312, 4
      %v314 = vmul.u32 %v313, 24
      %v315 = vsub.s32 %v309, %v314
      %v316 = vsub.s32 0, %v315
      %v317 = vsel %vm307, %v316, %v315
      %vm318 = vcmp.lt.s32.totalorder %v230, 0
      %v319 = vsub.s32 0, %v230
      %v320 = vsel %vm318, %v319, %v230
      %v321 = vmul.u32.u64.compose %v320, 2863311531
      %v322 = vextract.low.u32 %v321
      %v323 = vextract.high.u32 %v321
      %v324 = vshrl.u32 %v323, 4
      %v325 = vmul.u32 %v324, 24
      %v326 = vsub.s32 %v320, %v325
      %v327 = vsub.s32 0, %v326
      %v328 = vsel %vm318, %v327, %v326
      %vm329 = vcmp.lt.s32.totalorder %v231, 0
      %v330 = vsub.s32 0, %v231
      %v331 = vsel %vm329, %v330, %v231
      %v332 = vmul.u32.u64.compose %v331, 2863311531
      %v333 = vextract.low.u32 %v332
      %v334 = vextract.high.u32 %v332
      %v335 = vshrl.u32 %v334, 4
      %v336 = vmul.u32 %v335, 24
      %v337 = vsub.s32 %v331, %v336
      %v338 = vsub.s32 0, %v337
      %v339 = vsel %vm329, %v338, %v337
      %vm340 = vcmp.lt.s32.totalorder %v232, 0
      %v341 = vsub.s32 0, %v232
      %v342 = vsel %vm340, %v341, %v232
      %v343 = vmul.u32.u64.compose %v342, 2863311531
      %v344 = vextract.low.u32 %v343
      %v345 = vextract.high.u32 %v343
      %v346 = vshrl.u32 %v345, 4
      %v347 = vmul.u32 %v346, 24
      %v348 = vsub.s32 %v342, %v347
      %v349 = vsub.s32 0, %v348
      %v350 = vsel %vm340, %v349, %v348
      %vm351 = vcmp.lt.s32.totalorder %v233, 0
      %v352 = vsub.s32 0, %v233
      %v353 = vsel %vm351, %v352, %v233
      %v354 = vmul.u32.u64.compose %v353, 2863311531
      %v355 = vextract.low.u32 %v354
      %v356 = vextract.high.u32 %v354
      %v357 = vshrl.u32 %v356, 4
      %v358 = vmul.u32 %v357, 24
      %v359 = vsub.s32 %v353, %v358
      %v360 = vsub.s32 0, %v359
      %v361 = vsel %vm351, %v360, %v359
      %vm362 = vcmp.lt.s32.totalorder %v234, 0
      %v363 = vsub.s32 0, %v234
      %v364 = vsel %vm362, %v363, %v234
      %v365 = vmul.u32.u64.compose %v364, 2863311531
      %v366 = vextract.low.u32 %v365
      %v367 = vextract.high.u32 %v365
      %v368 = vshrl.u32 %v367, 4
      %v369 = vmul.u32 %v368, 24
      %v370 = vsub.s32 %v364, %v369
      %v371 = vsub.s32 0, %v370
      %v372 = vsel %vm362, %v371, %v370
      %vm373 = vcmp.lt.s32.totalorder %v235, 0
      %v374 = vsub.s32 0, %v235
      %v375 = vsel %vm373, %v374, %v235
      %v376 = vmul.u32.u64.compose %v375, 2863311531
      %v377 = vextract.low.u32 %v376
      %v378 = vextract.high.u32 %v376
      %v379 = vshrl.u32 %v378, 4
      %v380 = vmul.u32 %v379, 24
      %v381 = vsub.s32 %v375, %v380
      %v382 = vsub.s32 0, %v381
      %v383 = vsel %vm373, %v382, %v381
      %vm384 = vcmp.lt.s32.totalorder %v236, 0
      %v385 = vsub.s32 0, %v236
      %v386 = vsel %vm384, %v385, %v236
      %v387 = vmul.u32.u64.compose %v386, 2863311531
      %v388 = vextract.low.u32 %v387
      %v389 = vextract.high.u32 %v387
      %v390 = vshrl.u32 %v389, 4
      %v391 = vmul.u32 %v390, 24
      %v392 = vsub.s32 %v386, %v391
      %v393 = vsub.s32 0, %v392
      %v394 = vsel %vm384, %v393, %v392
      %vm395 = vcmp.lt.s32.totalorder %v237, 0
      %v396 = vsub.s32 0, %v237
      %v397 = vsel %vm395, %v396, %v237
      %v398 = vmul.u32.u64.compose %v397, 2863311531
      %v399 = vextract.low.u32 %v398
      %v400 = vextract.high.u32 %v398
      %v401 = vshrl.u32 %v400, 4
      %v402 = vmul.u32 %v401, 24
      %v403 = vsub.s32 %v397, %v402
      %v404 = vsub.s32 0, %v403
      %v405 = vsel %vm395, %v404, %v403
      %vm406 = vcmp.lt.s32.totalorder %v238, 0
      %v407 = vsub.s32 0, %v238
      %v408 = vsel %vm406, %v407, %v238
      %v409 = vmul.u32.u64.compose %v408, 2863311531
      %v410 = vextract.low.u32 %v409
      %v411 = vextract.high.u32 %v409
      %v412 = vshrl.u32 %v411, 4
      %v413 = vmul.u32 %v412, 24
      %v414 = vsub.s32 %v408, %v413
      %v415 = vsub.s32 0, %v414
      %v416 = vsel %vm406, %v415, %v414
      %vm417 = vcmp.lt.s32.totalorder %v239, 0
      %v418 = vsub.s32 0, %v239
      %v419 = vsel %vm417, %v418, %v239
      %v420 = vmul.u32.u64.compose %v419, 2863311531
      %v421 = vextract.low.u32 %v420
      %v422 = vextract.high.u32 %v420
      %v423 = vshrl.u32 %v422, 4
      %v424 = vmul.u32 %v423, 24
      %v425 = vsub.s32 %v419, %v424
      %v426 = vsub.s32 0, %v425
      %v427 = vsel %vm417, %v426, %v425
      %vm428 = vcmp.lt.s32.totalorder %v240, 0
      %v429 = vsub.s32 0, %v240
      %v430 = vsel %vm428, %v429, %v240
      %v431 = vmul.u32.u64.compose %v430, 2863311531
      %v432 = vextract.low.u32 %v431
      %v433 = vextract.high.u32 %v431
      %v434 = vshrl.u32 %v433, 4
      %v435 = vmul.u32 %v434, 24
      %v436 = vsub.s32 %v430, %v435
      %v437 = vsub.s32 0, %v436
      %v438 = vsel %vm428, %v437, %v436
      %vm439 = vcmp.lt.s32.totalorder %v241, 0
      %v440 = vsub.s32 0, %v241
      %v441 = vsel %vm439, %v440, %v241
      %v442 = vmul.u32.u64.compose %v441, 2863311531
      %v443 = vextract.low.u32 %v442
      %v444 = vextract.high.u32 %v442
      %v445 = vshrl.u32 %v444, 4
      %v446 = vmul.u32 %v445, 24
      %v447 = vsub.s32 %v441, %v446
      %v448 = vsub.s32 0, %v447
      %v449 = vsel %vm439, %v448, %v447
      %vm450 = vcmp.lt.s32.totalorder %v242, 0
      %v451 = vsub.s32 0, %v242
      %v452 = vsel %vm450, %v451, %v242
      %v453 = vmul.u32.u64.compose %v452, 2863311531
      %v454 = vextract.low.u32 %v453
      %v455 = vextract.high.u32 %v453
      %v456 = vshrl.u32 %v455, 4
      %v457 = vmul.u32 %v456, 24
      %v458 = vsub.s32 %v452, %v457
      %v459 = vsub.s32 0, %v458
      %v460 = vsel %vm450, %v459, %v458
      %vm461 = vcmp.lt.s32.totalorder %v243, 0
      %v462 = vsub.s32 0, %v243
      %v463 = vsel %vm461, %v462, %v243
      %v464 = vmul.u32.u64.compose %v463, 2863311531
      %v465 = vextract.low.u32 %v464
      %v466 = vextract.high.u32 %v464
      %v467 = vshrl.u32 %v466, 4
      %v468 = vmul.u32 %v467, 24
      %v469 = vsub.s32 %v463, %v468
      %v470 = vsub.s32 0, %v469
      %v471 = vsel %vm461, %v470, %v469
      %vm472 = vcmp.lt.s32.totalorder %v244, 0
      %v473 = vsub.s32 0, %v244
      %v474 = vsel %vm472, %v473, %v244
      %v475 = vmul.u32.u64.compose %v474, 2863311531
      %v476 = vextract.low.u32 %v475
      %v477 = vextract.high.u32 %v475
      %v478 = vshrl.u32 %v477, 4
      %v479 = vmul.u32 %v478, 24
      %v480 = vsub.s32 %v474, %v479
      %v481 = vsub.s32 0, %v480
      %v482 = vsel %vm472, %v481, %v480
      %vm483 = vcmp.lt.s32.totalorder %v245, 0
      %v484 = vsub.s32 0, %v245
      %v485 = vsel %vm483, %v484, %v245
      %v486 = vmul.u32.u64.compose %v485, 2863311531
      %v487 = vextract.low.u32 %v486
      %v488 = vextract.high.u32 %v486
      %v489 = vshrl.u32 %v488, 4
      %v490 = vmul.u32 %v489, 24
      %v491 = vsub.s32 %v485, %v490
      %v492 = vsub.s32 0, %v491
      %v493 = vsel %vm483, %v492, %v491
      %vm494 = vcmp.lt.s32.totalorder %v246, 0
      %v495 = vsub.s32 0, %v246
      %v496 = vsel %vm494, %v495, %v246
      %v497 = vmul.u32.u64.compose %v496, 2863311531
      %v498 = vextract.low.u32 %v497
      %v499 = vextract.high.u32 %v497
      %v500 = vshrl.u32 %v499, 4
      %v501 = vmul.u32 %v500, 24
      %v502 = vsub.s32 %v496, %v501
      %v503 = vsub.s32 0, %v502
      %v504 = vsel %vm494, %v503, %v502
      %vm505 = vcmp.lt.s32.totalorder %v247, 0
      %v506 = vsub.s32 0, %v247
      %v507 = vsel %vm505, %v506, %v247
      %v508 = vmul.u32.u64.compose %v507, 2863311531
      %v509 = vextract.low.u32 %v508
      %v510 = vextract.high.u32 %v508
      %v511 = vshrl.u32 %v510, 4
      %v512 = vmul.u32 %v511, 24
      %v513 = vsub.s32 %v507, %v512
      %v514 = vsub.s32 0, %v513
      %v515 = vsel %vm505, %v514, %v513
      %vm516 = vcmp.lt.s32.totalorder %v248, 0
      %v517 = vsub.s32 0, %v248
      %v518 = vsel %vm516, %v517, %v248
      %v519 = vmul.u32.u64.compose %v518, 2863311531
      %v520 = vextract.low.u32 %v519
      %v521 = vextract.high.u32 %v519
      %v522 = vshrl.u32 %v521, 4
      %v523 = vmul.u32 %v522, 24
      %v524 = vsub.s32 %v518, %v523
      %v525 = vsub.s32 0, %v524
      %v526 = vsel %vm516, %v525, %v524
      %vm527 = vcmp.lt.s32.totalorder %v249, 0
      %v528 = vsub.s32 0, %v249
      %v529 = vsel %vm527, %v528, %v249
      %v530 = vmul.u32.u64.compose %v529, 2863311531
      %v531 = vextract.low.u32 %v530
      %v532 = vextract.high.u32 %v530
      %v533 = vshrl.u32 %v532, 4
      %v534 = vmul.u32 %v533, 24
      %v535 = vsub.s32 %v529, %v534
      %v536 = vsub.s32 0, %v535
      %v537 = vsel %vm527, %v536, %v535
      %vm538 = vcmp.lt.s32.totalorder %v250, 0
      %v539 = vsub.s32 0, %v250
      %v540 = vsel %vm538, %v539, %v250
      %v541 = vmul.u32.u64.compose %v540, 2863311531
      %v542 = vextract.low.u32 %v541
      %v543 = vextract.high.u32 %v541
      %v544 = vshrl.u32 %v543, 4
      %v545 = vmul.u32 %v544, 24
      %v546 = vsub.s32 %v540, %v545
      %v547 = vsub.s32 0, %v546
      %v548 = vsel %vm538, %v547, %v546
      %vm549 = vcmp.lt.s32.totalorder %v251, 0
      %v550 = vsub.s32 0, %v251
      %v551 = vsel %vm549, %v550, %v251
      %v552 = vmul.u32.u64.compose %v551, 2863311531
      %v553 = vextract.low.u32 %v552
      %v554 = vextract.high.u32 %v552
      %v555 = vshrl.u32 %v554, 4
      %v556 = vmul.u32 %v555, 24
      %v557 = vsub.s32 %v551, %v556
      %v558 = vsub.s32 0, %v557
      %v559 = vsel %vm549, %v558, %v557
      %vm560 = vcmp.lt.s32.totalorder %v252, 0
      %v561 = vsub.s32 0, %v252
      %v562 = vsel %vm560, %v561, %v252
      %v563 = vmul.u32.u64.compose %v562, 2863311531
      %v564 = vextract.low.u32 %v563
      %v565 = vextract.high.u32 %v563
      %v566 = vshrl.u32 %v565, 4
      %v567 = vmul.u32 %v566, 24
      %v568 = vsub.s32 %v562, %v567
      %v569 = vsub.s32 0, %v568
      %v570 = vsel %vm560, %v569, %v568
      %vm571 = vcmp.lt.s32.totalorder %v253, 0
      %v572 = vsub.s32 0, %v253
      %v573 = vsel %vm571, %v572, %v253
      %v574 = vmul.u32.u64.compose %v573, 2863311531
      %v575 = vextract.low.u32 %v574
      %v576 = vextract.high.u32 %v574
      %v577 = vshrl.u32 %v576, 4
      %v578 = vmul.u32 %v577, 24
      %v579 = vsub.s32 %v573, %v578
      %v580 = vsub.s32 0, %v579
      %v581 = vsel %vm571, %v580, %v579
      %vm582 = vcmp.lt.s32.totalorder %v254, 0
      %v583 = vsub.s32 0, %v254
      %v584 = vsel %vm582, %v583, %v254
      %v585 = vmul.u32.u64.compose %v584, 2863311531
      %v586 = vextract.low.u32 %v585
      %v587 = vextract.high.u32 %v585
      %v588 = vshrl.u32 %v587, 4
      %v589 = vmul.u32 %v588, 24
      %v590 = vsub.s32 %v584, %v589
      %v591 = vsub.s32 0, %v590
      %v592 = vsel %vm582, %v591, %v590
      %vm593 = vcmp.lt.s32.totalorder %v255, 0
      %v594 = vsub.s32 0, %v255
      %v595 = vsel %vm593, %v594, %v255
      %v596 = vmul.u32.u64.compose %v595, 2863311531
      %v597 = vextract.low.u32 %v596
      %v598 = vextract.high.u32 %v596
      %v599 = vshrl.u32 %v598, 4
      %v600 = vmul.u32 %v599, 24
      %v601 = vsub.s32 %v595, %v600
      %v602 = vsub.s32 0, %v601
      %v603 = vsel %vm593, %v602, %v601
      %vm604 = vcmp.lt.s32.totalorder %v256, 0
      %v605 = vsub.s32 0, %v256
      %v606 = vsel %vm604, %v605, %v256
      %v607 = vmul.u32.u64.compose %v606, 2863311531
      %v608 = vextract.low.u32 %v607
      %v609 = vextract.high.u32 %v607
      %v610 = vshrl.u32 %v609, 4
      %v611 = vmul.u32 %v610, 24
      %v612 = vsub.s32 %v606, %v611
      %v613 = vsub.s32 0, %v612
      %v614 = vsel %vm604, %v613, %v612
      %vm615 = vcmp.lt.s32.totalorder %v257, 0
      %v616 = vsub.s32 0, %v257
      %v617 = vsel %vm615, %v616, %v257
      %v618 = vmul.u32.u64.compose %v617, 2863311531
      %v619 = vextract.low.u32 %v618
      %v620 = vextract.high.u32 %v618
      %v621 = vshrl.u32 %v620, 4
      %v622 = vmul.u32 %v621, 24
      %v623 = vsub.s32 %v617, %v622
      %v624 = vsub.s32 0, %v623
      %v625 = vsel %vm615, %v624, %v623
      %vm626 = vcmp.lt.s32.totalorder %v258, 0
      %v627 = vsub.s32 0, %v258
      %v628 = vsel %vm626, %v627, %v258
      %v629 = vmul.u32.u64.compose %v628, 2863311531
      %v630 = vextract.low.u32 %v629
      %v631 = vextract.high.u32 %v629
      %v632 = vshrl.u32 %v631, 4
      %v633 = vmul.u32 %v632, 24
      %v634 = vsub.s32 %v628, %v633
      %v635 = vsub.s32 0, %v634
      %v636 = vsel %vm626, %v635, %v634
      %vm637 = vcmp.lt.s32.totalorder %v259, 0
      %v638 = vsub.s32 0, %v259
      %v639 = vsel %vm637, %v638, %v259
      %v640 = vmul.u32.u64.compose %v639, 2863311531
      %v641 = vextract.low.u32 %v640
      %v642 = vextract.high.u32 %v640
      %v643 = vshrl.u32 %v642, 4
      %v644 = vmul.u32 %v643, 24
      %v645 = vsub.s32 %v639, %v644
      %v646 = vsub.s32 0, %v645
      %v647 = vsel %vm637, %v646, %v645
      %vm648 = vcmp.lt.s32.totalorder %v260, 0
      %v649 = vsub.s32 0, %v260
      %v650 = vsel %vm648, %v649, %v260
      %v651 = vmul.u32.u64.compose %v650, 2863311531
      %v652 = vextract.low.u32 %v651
      %v653 = vextract.high.u32 %v651
      %v654 = vshrl.u32 %v653, 4
      %v655 = vmul.u32 %v654, 24
      %v656 = vsub.s32 %v650, %v655
      %v657 = vsub.s32 0, %v656
      %v658 = vsel %vm648, %v657, %v656
      %vm659 = vcmp.lt.s32.totalorder %v261, 0
      %v660 = vsub.s32 0, %v261
      %v661 = vsel %vm659, %v660, %v261
      %v662 = vmul.u32.u64.compose %v661, 2863311531
      %v663 = vextract.low.u32 %v662
      %v664 = vextract.high.u32 %v662
      %v665 = vshrl.u32 %v664, 4
      %v666 = vmul.u32 %v665, 24
      %v667 = vsub.s32 %v661, %v666
      %v668 = vsub.s32 0, %v667
      %v669 = vsel %vm659, %v668, %v667
      %vm670 = vcmp.lt.s32.totalorder %v262, 0
      %v671 = vsub.s32 0, %v262
      %v672 = vsel %vm670, %v671, %v262
      %v673 = vmul.u32.u64.compose %v672, 2863311531
      %v674 = vextract.low.u32 %v673
      %v675 = vextract.high.u32 %v673
      %v676 = vshrl.u32 %v675, 4
      %v677 = vmul.u32 %v676, 24
      %v678 = vsub.s32 %v672, %v677
      %v679 = vsub.s32 0, %v678
      %v680 = vsel %vm670, %v679, %v678
      %vm681 = vcmp.lt.s32.totalorder %v263, 0
      %v682 = vsub.s32 0, %v263
      %v683 = vsel %vm681, %v682, %v263
      %v684 = vmul.u32.u64.compose %v683, 2863311531
      %v685 = vextract.low.u32 %v684
      %v686 = vextract.high.u32 %v684
      %v687 = vshrl.u32 %v686, 4
      %v688 = vmul.u32 %v687, 24
      %v689 = vsub.s32 %v683, %v688
      %v690 = vsub.s32 0, %v689
      %v691 = vsel %vm681, %v690, %v689
      %vm692 = vcmp.lt.s32.totalorder %v264, 0
      %v693 = vsub.s32 0, %v264
      %v694 = vsel %vm692, %v693, %v264
      %v695 = vmul.u32.u64.compose %v694, 2863311531
      %v696 = vextract.low.u32 %v695
      %v697 = vextract.high.u32 %v695
      %v698 = vshrl.u32 %v697, 4
      %v699 = vmul.u32 %v698, 24
      %v700 = vsub.s32 %v694, %v699
      %v701 = vsub.s32 0, %v700
      %v702 = vsel %vm692, %v701, %v700
      %vm703 = vcmp.lt.s32.totalorder %v265, 0
      %v704 = vsub.s32 0, %v265
      %v705 = vsel %vm703, %v704, %v265
      %v706 = vmul.u32.u64.compose %v705, 2863311531
      %v707 = vextract.low.u32 %v706
      %v708 = vextract.high.u32 %v706
      %v709 = vshrl.u32 %v708, 4
      %v710 = vmul.u32 %v709, 24
      %v711 = vsub.s32 %v705, %v710
      %v712 = vsub.s32 0, %v711
      %v713 = vsel %vm703, %v712, %v711
      %vm714 = vcmp.lt.s32.totalorder %v266, 0
      %v715 = vsub.s32 0, %v266
      %v716 = vsel %vm714, %v715, %v266
      %v717 = vmul.u32.u64.compose %v716, 2863311531
      %v718 = vextract.low.u32 %v717
      %v719 = vextract.high.u32 %v717
      %v720 = vshrl.u32 %v719, 4
      %v721 = vmul.u32 %v720, 24
      %v722 = vsub.s32 %v716, %v721
      %v723 = vsub.s32 0, %v722
      %v724 = vsel %vm714, %v723, %v722
      %vm725 = vcmp.lt.s32.totalorder %v267, 0
      %v726 = vsub.s32 0, %v267
      %v727 = vsel %vm725, %v726, %v267
      %v728 = vmul.u32.u64.compose %v727, 2863311531
      %v729 = vextract.low.u32 %v728
      %v730 = vextract.high.u32 %v728
      %v731 = vshrl.u32 %v730, 4
      %v732 = vmul.u32 %v731, 24
      %v733 = vsub.s32 %v727, %v732
      %v734 = vsub.s32 0, %v733
      %v735 = vsel %vm725, %v734, %v733
      %vm736 = vcmp.lt.s32.totalorder %v268, 0
      %v737 = vsub.s32 0, %v268
      %v738 = vsel %vm736, %v737, %v268
      %v739 = vmul.u32.u64.compose %v738, 2863311531
      %v740 = vextract.low.u32 %v739
      %v741 = vextract.high.u32 %v739
      %v742 = vshrl.u32 %v741, 4
      %v743 = vmul.u32 %v742, 24
      %v744 = vsub.s32 %v738, %v743
      %v745 = vsub.s32 0, %v744
      %v746 = vsel %vm736, %v745, %v744
      %vm747 = vcmp.lt.s32.totalorder %v269, 0
      %v748 = vsub.s32 0, %v269
      %v749 = vsel %vm747, %v748, %v269
      %v750 = vmul.u32.u64.compose %v749, 2863311531
      %v751 = vextract.low.u32 %v750
      %v752 = vextract.high.u32 %v750
      %v753 = vshrl.u32 %v752, 4
      %v754 = vmul.u32 %v753, 24
      %v755 = vsub.s32 %v749, %v754
      %v756 = vsub.s32 0, %v755
      %v757 = vsel %vm747, %v756, %v755
      %vm758 = vcmp.lt.s32.totalorder %v270, 0
      %v759 = vsub.s32 0, %v270
      %v760 = vsel %vm758, %v759, %v270
      %v761 = vmul.u32.u64.compose %v760, 2863311531
      %v762 = vextract.low.u32 %v761
      %v763 = vextract.high.u32 %v761
      %v764 = vshrl.u32 %v763, 4
      %v765 = vmul.u32 %v764, 24
      %v766 = vsub.s32 %v760, %v765
      %v767 = vsub.s32 0, %v766
      %v768 = vsel %vm758, %v767, %v766
      %vm769 = vcmp.lt.s32.totalorder %v271, 0
      %v770 = vsub.s32 0, %v271
      %v771 = vsel %vm769, %v770, %v271
      %v772 = vmul.u32.u64.compose %v771, 2863311531
      %v773 = vextract.low.u32 %v772
      %v774 = vextract.high.u32 %v772
      %v775 = vshrl.u32 %v774, 4
      %v776 = vmul.u32 %v775, 24
      %v777 = vsub.s32 %v771, %v776
      %v778 = vsub.s32 0, %v777
      %v779 = vsel %vm769, %v778, %v777
      %vm780 = vcmp.lt.s32.totalorder %v272, 0
      %v781 = vsub.s32 0, %v272
      %v782 = vsel %vm780, %v781, %v272
      %v783 = vmul.u32.u64.compose %v782, 2863311531
      %v784 = vextract.low.u32 %v783
      %v785 = vextract.high.u32 %v783
      %v786 = vshrl.u32 %v785, 4
      %v787 = vmul.u32 %v786, 24
      %v788 = vsub.s32 %v782, %v787
      %v789 = vsub.s32 0, %v788
      %v790 = vsel %vm780, %v789, %v788
      %vm791 = vcmp.lt.s32.totalorder %v273, 0
      %v792 = vsub.s32 0, %v273
      %v793 = vsel %vm791, %v792, %v273
      %v794 = vmul.u32.u64.compose %v793, 2863311531
      %v795 = vextract.low.u32 %v794
      %v796 = vextract.high.u32 %v794
      %v797 = vshrl.u32 %v796, 4
      %v798 = vmul.u32 %v797, 24
      %v799 = vsub.s32 %v793, %v798
      %v800 = vsub.s32 0, %v799
      %v801 = vsel %vm791, %v800, %v799
      %vm802 = vcmp.ne.s32.totalorder %v284, 0
      %vm803 = vcmp.ne.s32.totalorder %v295, 0
      %vm804 = vcmp.ne.s32.totalorder %v306, 0
      %vm805 = vcmp.ne.s32.totalorder %v317, 0
      %vm806 = vcmp.ne.s32.totalorder %v328, 0
      %vm807 = vcmp.ne.s32.totalorder %v339, 0
      %vm808 = vcmp.ne.s32.totalorder %v350, 0
      %vm809 = vcmp.ne.s32.totalorder %v361, 0
      %vm810 = vcmp.ne.s32.totalorder %v372, 0
      %vm811 = vcmp.ne.s32.totalorder %v383, 0
      %vm812 = vcmp.ne.s32.totalorder %v394, 0
      %vm813 = vcmp.ne.s32.totalorder %v405, 0
      %vm814 = vcmp.ne.s32.totalorder %v416, 0
      %vm815 = vcmp.ne.s32.totalorder %v427, 0
      %vm816 = vcmp.ne.s32.totalorder %v438, 0
      %vm817 = vcmp.ne.s32.totalorder %v449, 0
      %vm818 = vcmp.ne.s32.totalorder %v460, 0
      %vm819 = vcmp.ne.s32.totalorder %v471, 0
      %vm820 = vcmp.ne.s32.totalorder %v482, 0
      %vm821 = vcmp.ne.s32.totalorder %v493, 0
      %vm822 = vcmp.ne.s32.totalorder %v504, 0
      %vm823 = vcmp.ne.s32.totalorder %v515, 0
      %vm824 = vcmp.ne.s32.totalorder %v526, 0
      %vm825 = vcmp.ne.s32.totalorder %v537, 0
      %vm826 = vcmp.ne.s32.totalorder %v548, 0
      %vm827 = vcmp.ne.s32.totalorder %v559, 0
      %vm828 = vcmp.ne.s32.totalorder %v570, 0
      %vm829 = vcmp.ne.s32.totalorder %v581, 0
      %vm830 = vcmp.ne.s32.totalorder %v592, 0
      %vm831 = vcmp.ne.s32.totalorder %v603, 0
      %vm832 = vcmp.ne.s32.totalorder %v614, 0
      %vm833 = vcmp.ne.s32.totalorder %v625, 0
      %vm834 = vcmp.ne.s32.totalorder %v636, 0
      %vm835 = vcmp.ne.s32.totalorder %v647, 0
      %vm836 = vcmp.ne.s32.totalorder %v658, 0
      %vm837 = vcmp.ne.s32.totalorder %v669, 0
      %vm838 = vcmp.ne.s32.totalorder %v680, 0
      %vm839 = vcmp.ne.s32.totalorder %v691, 0
      %vm840 = vcmp.ne.s32.totalorder %v702, 0
      %vm841 = vcmp.ne.s32.totalorder %v713, 0
      %vm842 = vcmp.ne.s32.totalorder %v724, 0
      %vm843 = vcmp.ne.s32.totalorder %v735, 0
      %vm844 = vcmp.ne.s32.totalorder %v746, 0
      %vm845 = vcmp.ne.s32.totalorder %v757, 0
      %vm846 = vcmp.ne.s32.totalorder %v768, 0
      %vm847 = vcmp.ne.s32.totalorder %v779, 0
      %vm848 = vcmp.ne.s32.totalorder %v790, 0
      %vm849 = vcmp.ne.s32.totalorder %v801, 0
      %vm850 = vcmp.lt.s32.totalorder %v284, 0
      %vm851 = vcmp.lt.s32.totalorder %v295, 0
      %vm852 = vcmp.lt.s32.totalorder %v306, 0
      %vm853 = vcmp.lt.s32.totalorder %v317, 0
      %vm854 = vcmp.lt.s32.totalorder %v328, 0
      %vm855 = vcmp.lt.s32.totalorder %v339, 0
      %vm856 = vcmp.lt.s32.totalorder %v350, 0
      %vm857 = vcmp.lt.s32.totalorder %v361, 0
      %vm858 = vcmp.lt.s32.totalorder %v372, 0
      %vm859 = vcmp.lt.s32.totalorder %v383, 0
      %vm860 = vcmp.lt.s32.totalorder %v394, 0
      %vm861 = vcmp.lt.s32.totalorder %v405, 0
      %vm862 = vcmp.lt.s32.totalorder %v416, 0
      %vm863 = vcmp.lt.s32.totalorder %v427, 0
      %vm864 = vcmp.lt.s32.totalorder %v438, 0
      %vm865 = vcmp.lt.s32.totalorder %v449, 0
      %vm866 = vcmp.lt.s32.totalorder %v460, 0
      %vm867 = vcmp.lt.s32.totalorder %v471, 0
      %vm868 = vcmp.lt.s32.totalorder %v482, 0
      %vm869 = vcmp.lt.s32.totalorder %v493, 0
      %vm870 = vcmp.lt.s32.totalorder %v504, 0
      %vm871 = vcmp.lt.s32.totalorder %v515, 0
      %vm872 = vcmp.lt.s32.totalorder %v526, 0
      %vm873 = vcmp.lt.s32.totalorder %v537, 0
      %vm874 = vcmp.lt.s32.totalorder %v548, 0
      %vm875 = vcmp.lt.s32.totalorder %v559, 0
      %vm876 = vcmp.lt.s32.totalorder %v570, 0
      %vm877 = vcmp.lt.s32.totalorder %v581, 0
      %vm878 = vcmp.lt.s32.totalorder %v592, 0
      %vm879 = vcmp.lt.s32.totalorder %v603, 0
      %vm880 = vcmp.lt.s32.totalorder %v614, 0
      %vm881 = vcmp.lt.s32.totalorder %v625, 0
      %vm882 = vcmp.lt.s32.totalorder %v636, 0
      %vm883 = vcmp.lt.s32.totalorder %v647, 0
      %vm884 = vcmp.lt.s32.totalorder %v658, 0
      %vm885 = vcmp.lt.s32.totalorder %v669, 0
      %vm886 = vcmp.lt.s32.totalorder %v680, 0
      %vm887 = vcmp.lt.s32.totalorder %v691, 0
      %vm888 = vcmp.lt.s32.totalorder %v702, 0
      %vm889 = vcmp.lt.s32.totalorder %v713, 0
      %vm890 = vcmp.lt.s32.totalorder %v724, 0
      %vm891 = vcmp.lt.s32.totalorder %v735, 0
      %vm892 = vcmp.lt.s32.totalorder %v746, 0
      %vm893 = vcmp.lt.s32.totalorder %v757, 0
      %vm894 = vcmp.lt.s32.totalorder %v768, 0
      %vm895 = vcmp.lt.s32.totalorder %v779, 0
      %vm896 = vcmp.lt.s32.totalorder %v790, 0
      %vm897 = vcmp.lt.s32.totalorder %v801, 0
      %vm898 = vmand %vm850, %vm802
      %vm899 = vmand %vm851, %vm803
      %vm900 = vmand %vm852, %vm804
      %vm901 = vmand %vm853, %vm805
      %vm902 = vmand %vm854, %vm806
      %vm903 = vmand %vm855, %vm807
      %vm904 = vmand %vm856, %vm808
      %vm905 = vmand %vm857, %vm809
      %vm906 = vmand %vm858, %vm810
      %vm907 = vmand %vm859, %vm811
      %vm908 = vmand %vm860, %vm812
      %vm909 = vmand %vm861, %vm813
      %vm910 = vmand %vm862, %vm814
      %vm911 = vmand %vm863, %vm815
      %vm912 = vmand %vm864, %vm816
      %vm913 = vmand %vm865, %vm817
      %vm914 = vmand %vm866, %vm818
      %vm915 = vmand %vm867, %vm819
      %vm916 = vmand %vm868, %vm820
      %vm917 = vmand %vm869, %vm821
      %vm918 = vmand %vm870, %vm822
      %vm919 = vmand %vm871, %vm823
      %vm920 = vmand %vm872, %vm824
      %vm921 = vmand %vm873, %vm825
      %vm922 = vmand %vm874, %vm826
      %vm923 = vmand %vm875, %vm827
      %vm924 = vmand %vm876, %vm828
      %vm925 = vmand %vm877, %vm829
      %vm926 = vmand %vm878, %vm830
      %vm927 = vmand %vm879, %vm831
      %vm928 = vmand %vm880, %vm832
      %vm929 = vmand %vm881, %vm833
      %vm930 = vmand %vm882, %vm834
      %vm931 = vmand %vm883, %vm835
      %vm932 = vmand %vm884, %vm836
      %vm933 = vmand %vm885, %vm837
      %vm934 = vmand %vm886, %vm838
      %vm935 = vmand %vm887, %vm839
      %vm936 = vmand %vm888, %vm840
      %vm937 = vmand %vm889, %vm841
      %vm938 = vmand %vm890, %vm842
      %vm939 = vmand %vm891, %vm843
      %vm940 = vmand %vm892, %vm844
      %vm941 = vmand %vm893, %vm845
      %vm942 = vmand %vm894, %vm846
      %vm943 = vmand %vm895, %vm847
      %vm944 = vmand %vm896, %vm848
      %vm945 = vmand %vm897, %vm849
      %v946 = vadd.s32 %v284, 24
      %v947 = vadd.s32 %v295, 24
      %v948 = vadd.s32 %v306, 24
      %v949 = vadd.s32 %v317, 24
      %v950 = vadd.s32 %v328, 24
      %v951 = vadd.s32 %v339, 24
      %v952 = vadd.s32 %v350, 24
      %v953 = vadd.s32 %v361, 24
      %v954 = vadd.s32 %v372, 24
      %v955 = vadd.s32 %v383, 24
      %v956 = vadd.s32 %v394, 24
      %v957 = vadd.s32 %v405, 24
      %v958 = vadd.s32 %v416, 24
      %v959 = vadd.s32 %v427, 24
      %v960 = vadd.s32 %v438, 24
      %v961 = vadd.s32 %v449, 24
      %v962 = vadd.s32 %v460, 24
      %v963 = vadd.s32 %v471, 24
      %v964 = vadd.s32 %v482, 24
      %v965 = vadd.s32 %v493, 24
      %v966 = vadd.s32 %v504, 24
      %v967 = vadd.s32 %v515, 24
      %v968 = vadd.s32 %v526, 24
      %v969 = vadd.s32 %v537, 24
      %v970 = vadd.s32 %v548, 24
      %v971 = vadd.s32 %v559, 24
      %v972 = vadd.s32 %v570, 24
      %v973 = vadd.s32 %v581, 24
      %v974 = vadd.s32 %v592, 24
      %v975 = vadd.s32 %v603, 24
      %v976 = vadd.s32 %v614, 24
      %v977 = vadd.s32 %v625, 24
      %v978 = vadd.s32 %v636, 24
      %v979 = vadd.s32 %v647, 24
      %v980 = vadd.s32 %v658, 24
      %v981 = vadd.s32 %v669, 24
      %v982 = vadd.s32 %v680, 24
      %v983 = vadd.s32 %v691, 24
      %v984 = vadd.s32 %v702, 24
      %v985 = vadd.s32 %v713, 24
      %v986 = vadd.s32 %v724, 24
      %v987 = vadd.s32 %v735, 24
      %v988 = vadd.s32 %v746, 24
      %v989 = vadd.s32 %v757, 24
      %v990 = vadd.s32 %v768, 24
      %v991 = vadd.s32 %v779, 24
      %v992 = vadd.s32 %v790, 24
      %v993 = vadd.s32 %v801, 24
      %v994 = vsel %vm898, %v946, %v284
      %v995 = vsel %vm899, %v947, %v295
      %v996 = vsel %vm900, %v948, %v306
      %v997 = vsel %vm901, %v949, %v317
      %v998 = vsel %vm902, %v950, %v328
      %v999 = vsel %vm903, %v951, %v339
      %v1000 = vsel %vm904, %v952, %v350
      %v1001 = vsel %vm905, %v953, %v361
      %v1002 = vsel %vm906, %v954, %v372
      %v1003 = vsel %vm907, %v955, %v383
      %v1004 = vsel %vm908, %v956, %v394
      %v1005 = vsel %vm909, %v957, %v405
      %v1006 = vsel %vm910, %v958, %v416
      %v1007 = vsel %vm911, %v959, %v427
      %v1008 = vsel %vm912, %v960, %v438
      %v1009 = vsel %vm913, %v961, %v449
      %v1010 = vsel %vm914, %v962, %v460
      %v1011 = vsel %vm915, %v963, %v471
      %v1012 = vsel %vm916, %v964, %v482
      %v1013 = vsel %vm917, %v965, %v493
      %v1014 = vsel %vm918, %v966, %v504
      %v1015 = vsel %vm919, %v967, %v515
      %v1016 = vsel %vm920, %v968, %v526
      %v1017 = vsel %vm921, %v969, %v537
      %v1018 = vsel %vm922, %v970, %v548
      %v1019 = vsel %vm923, %v971, %v559
      %v1020 = vsel %vm924, %v972, %v570
      %v1021 = vsel %vm925, %v973, %v581
      %v1022 = vsel %vm926, %v974, %v592
      %v1023 = vsel %vm927, %v975, %v603
      %v1024 = vsel %vm928, %v976, %v614
      %v1025 = vsel %vm929, %v977, %v625
      %v1026 = vsel %vm930, %v978, %v636
      %v1027 = vsel %vm931, %v979, %v647
      %v1028 = vsel %vm932, %v980, %v658
      %v1029 = vsel %vm933, %v981, %v669
      %v1030 = vsel %vm934, %v982, %v680
      %v1031 = vsel %vm935, %v983, %v691
      %v1032 = vsel %vm936, %v984, %v702
      %v1033 = vsel %vm937, %v985, %v713
      %v1034 = vsel %vm938, %v986, %v724
      %v1035 = vsel %vm939, %v987, %v735
      %v1036 = vsel %vm940, %v988, %v746
      %v1037 = vsel %vm941, %v989, %v757
      %v1038 = vsel %vm942, %v990, %v768
      %v1039 = vsel %vm943, %v991, %v779
      %v1040 = vsel %vm944, %v992, %v790
      %v1041 = vsel %vm945, %v993, %v801
      %vm1042 = vcmp.ge.s32.totalorder %v994, 1
      %vm1043 = vcmp.ge.s32.totalorder %v995, 1
      %vm1044 = vcmp.ge.s32.totalorder %v996, 1
      %vm1045 = vcmp.ge.s32.totalorder %v997, 1
      %vm1046 = vcmp.ge.s32.totalorder %v998, 1
      %vm1047 = vcmp.ge.s32.totalorder %v999, 1
      %vm1048 = vcmp.ge.s32.totalorder %v1000, 1
      %vm1049 = vcmp.ge.s32.totalorder %v1001, 1
      %vm1050 = vcmp.ge.s32.totalorder %v1002, 1
      %vm1051 = vcmp.ge.s32.totalorder %v1003, 1
      %vm1052 = vcmp.ge.s32.totalorder %v1004, 1
      %vm1053 = vcmp.ge.s32.totalorder %v1005, 1
      %vm1054 = vcmp.ge.s32.totalorder %v1006, 1
      %vm1055 = vcmp.ge.s32.totalorder %v1007, 1
      %vm1056 = vcmp.ge.s32.totalorder %v1008, 1
      %vm1057 = vcmp.ge.s32.totalorder %v1009, 1
      %vm1058 = vcmp.ge.s32.totalorder %v1010, 1
      %vm1059 = vcmp.ge.s32.totalorder %v1011, 1
      %vm1060 = vcmp.ge.s32.totalorder %v1012, 1
      %vm1061 = vcmp.ge.s32.totalorder %v1013, 1
      %vm1062 = vcmp.ge.s32.totalorder %v1014, 1
      %vm1063 = vcmp.ge.s32.totalorder %v1015, 1
      %vm1064 = vcmp.ge.s32.totalorder %v1016, 1
      %vm1065 = vcmp.ge.s32.totalorder %v1017, 1
      %vm1066 = vcmp.ge.s32.totalorder %v1018, 1
      %vm1067 = vcmp.ge.s32.totalorder %v1019, 1
      %vm1068 = vcmp.ge.s32.totalorder %v1020, 1
      %vm1069 = vcmp.ge.s32.totalorder %v1021, 1
      %vm1070 = vcmp.ge.s32.totalorder %v1022, 1
      %vm1071 = vcmp.ge.s32.totalorder %v1023, 1
      %vm1072 = vcmp.ge.s32.totalorder %v1024, 1
      %vm1073 = vcmp.ge.s32.totalorder %v1025, 1
      %vm1074 = vcmp.ge.s32.totalorder %v1026, 1
      %vm1075 = vcmp.ge.s32.totalorder %v1027, 1
      %vm1076 = vcmp.ge.s32.totalorder %v1028, 1
      %vm1077 = vcmp.ge.s32.totalorder %v1029, 1
      %vm1078 = vcmp.ge.s32.totalorder %v1030, 1
      %vm1079 = vcmp.ge.s32.totalorder %v1031, 1
      %vm1080 = vcmp.ge.s32.totalorder %v1032, 1
      %vm1081 = vcmp.ge.s32.totalorder %v1033, 1
      %vm1082 = vcmp.ge.s32.totalorder %v1034, 1
      %vm1083 = vcmp.ge.s32.totalorder %v1035, 1
      %vm1084 = vcmp.ge.s32.totalorder %v1036, 1
      %vm1085 = vcmp.ge.s32.totalorder %v1037, 1
      %vm1086 = vcmp.ge.s32.totalorder %v1038, 1
      %vm1087 = vcmp.ge.s32.totalorder %v1039, 1
      %vm1088 = vcmp.ge.s32.totalorder %v1040, 1
      %vm1089 = vcmp.ge.s32.totalorder %v1041, 1
      %vm1090 = vcmp.le.s32.totalorder %v994, 16
      %vm1091 = vcmp.le.s32.totalorder %v995, 16
      %vm1092 = vcmp.le.s32.totalorder %v996, 16
      %vm1093 = vcmp.le.s32.totalorder %v997, 16
      %vm1094 = vcmp.le.s32.totalorder %v998, 16
      %vm1095 = vcmp.le.s32.totalorder %v999, 16
      %vm1096 = vcmp.le.s32.totalorder %v1000, 16
      %vm1097 = vcmp.le.s32.totalorder %v1001, 16
      %vm1098 = vcmp.le.s32.totalorder %v1002, 16
      %vm1099 = vcmp.le.s32.totalorder %v1003, 16
      %vm1100 = vcmp.le.s32.totalorder %v1004, 16
      %vm1101 = vcmp.le.s32.totalorder %v1005, 16
      %vm1102 = vcmp.le.s32.totalorder %v1006, 16
      %vm1103 = vcmp.le.s32.totalorder %v1007, 16
      %vm1104 = vcmp.le.s32.totalorder %v1008, 16
      %vm1105 = vcmp.le.s32.totalorder %v1009, 16
      %vm1106 = vcmp.le.s32.totalorder %v1010, 16
      %vm1107 = vcmp.le.s32.totalorder %v1011, 16
      %vm1108 = vcmp.le.s32.totalorder %v1012, 16
      %vm1109 = vcmp.le.s32.totalorder %v1013, 16
      %vm1110 = vcmp.le.s32.totalorder %v1014, 16
      %vm1111 = vcmp.le.s32.totalorder %v1015, 16
      %vm1112 = vcmp.le.s32.totalorder %v1016, 16
      %vm1113 = vcmp.le.s32.totalorder %v1017, 16
      %vm1114 = vcmp.le.s32.totalorder %v1018, 16
      %vm1115 = vcmp.le.s32.totalorder %v1019, 16
      %vm1116 = vcmp.le.s32.totalorder %v1020, 16
      %vm1117 = vcmp.le.s32.totalorder %v1021, 16
      %vm1118 = vcmp.le.s32.totalorder %v1022, 16
      %vm1119 = vcmp.le.s32.totalorder %v1023, 16
      %vm1120 = vcmp.le.s32.totalorder %v1024, 16
      %vm1121 = vcmp.le.s32.totalorder %v1025, 16
      %vm1122 = vcmp.le.s32.totalorder %v1026, 16
      %vm1123 = vcmp.le.s32.totalorder %v1027, 16
      %vm1124 = vcmp.le.s32.totalorder %v1028, 16
      %vm1125 = vcmp.le.s32.totalorder %v1029, 16
      %vm1126 = vcmp.le.s32.totalorder %v1030, 16
      %vm1127 = vcmp.le.s32.totalorder %v1031, 16
      %vm1128 = vcmp.le.s32.totalorder %v1032, 16
      %vm1129 = vcmp.le.s32.totalorder %v1033, 16
      %vm1130 = vcmp.le.s32.totalorder %v1034, 16
      %vm1131 = vcmp.le.s32.totalorder %v1035, 16
      %vm1132 = vcmp.le.s32.totalorder %v1036, 16
      %vm1133 = vcmp.le.s32.totalorder %v1037, 16
      %vm1134 = vcmp.le.s32.totalorder %v1038, 16
      %vm1135 = vcmp.le.s32.totalorder %v1039, 16
      %vm1136 = vcmp.le.s32.totalorder %v1040, 16
      %vm1137 = vcmp.le.s32.totalorder %v1041, 16
      %vm1138 = vmand %vm1042, %vm1090
      %vm1139 = vmand %vm1043, %vm1091
      %vm1140 = vmand %vm1044, %vm1092
      %vm1141 = vmand %vm1045, %vm1093
      %vm1142 = vmand %vm1046, %vm1094
      %vm1143 = vmand %vm1047, %vm1095
      %vm1144 = vmand %vm1048, %vm1096
      %vm1145 = vmand %vm1049, %vm1097
      %vm1146 = vmand %vm1050, %vm1098
      %vm1147 = vmand %vm1051, %vm1099
      %vm1148 = vmand %vm1052, %vm1100
      %vm1149 = vmand %vm1053, %vm1101
      %vm1150 = vmand %vm1054, %vm1102
      %vm1151 = vmand %vm1055, %vm1103
      %vm1152 = vmand %vm1056, %vm1104
      %vm1153 = vmand %vm1057, %vm1105
      %vm1154 = vmand %vm1058, %vm1106
      %vm1155 = vmand %vm1059, %vm1107
      %vm1156 = vmand %vm1060, %vm1108
      %vm1157 = vmand %vm1061, %vm1109
      %vm1158 = vmand %vm1062, %vm1110
      %vm1159 = vmand %vm1063, %vm1111
      %vm1160 = vmand %vm1064, %vm1112
      %vm1161 = vmand %vm1065, %vm1113
      %vm1162 = vmand %vm1066, %vm1114
      %vm1163 = vmand %vm1067, %vm1115
      %vm1164 = vmand %vm1068, %vm1116
      %vm1165 = vmand %vm1069, %vm1117
      %vm1166 = vmand %vm1070, %vm1118
      %vm1167 = vmand %vm1071, %vm1119
      %vm1168 = vmand %vm1072, %vm1120
      %vm1169 = vmand %vm1073, %vm1121
      %vm1170 = vmand %vm1074, %vm1122
      %vm1171 = vmand %vm1075, %vm1123
      %vm1172 = vmand %vm1076, %vm1124
      %vm1173 = vmand %vm1077, %vm1125
      %vm1174 = vmand %vm1078, %vm1126
      %vm1175 = vmand %vm1079, %vm1127
      %vm1176 = vmand %vm1080, %vm1128
      %vm1177 = vmand %vm1081, %vm1129
      %vm1178 = vmand %vm1082, %vm1130
      %vm1179 = vmand %vm1083, %vm1131
      %vm1180 = vmand %vm1084, %vm1132
      %vm1181 = vmand %vm1085, %vm1133
      %vm1182 = vmand %vm1086, %vm1134
      %vm1183 = vmand %vm1087, %vm1135
      %vm1184 = vmand %vm1088, %vm1136
      %vm1185 = vmand %vm1089, %vm1137
      %v1186 = vld [vmem:[%s219] sm:$0xff]
      %v1187 = vld [vmem:[%s219 + $0x8] sm:$0xff]
      %v1188 = vld [vmem:[%s219 + $0x10] sm:$0xff]
      %v1189 = vld [vmem:[%s219 + $0x18] sm:$0xff]
      %v1190 = vld [vmem:[%s219 + $0x20] sm:$0xff]
      %v1191 = vld [vmem:[%s219 + $0x28] sm:$0xff]
      %v1192 = vld [vmem:[%s219 + $0x30] sm:$0xff]
      %v1193 = vld [vmem:[%s219 + $0x38] sm:$0xff]
      %v1194 = vld [vmem:[%s219 + $0x40] sm:$0xff]
      %v1195 = vld [vmem:[%s219 + $0x48] sm:$0xff]
      %v1196 = vld [vmem:[%s219 + $0x50] sm:$0xff]
      %v1197 = vld [vmem:[%s219 + $0x58] sm:$0xff]
      %v1198 = vld [vmem:[%s219 + $0x60] sm:$0xff]
      %v1199 = vld [vmem:[%s219 + $0x68] sm:$0xff]
      %v1200 = vld [vmem:[%s219 + $0x70] sm:$0xff]
      %v1201 = vld [vmem:[%s219 + $0x78] sm:$0xff]
      %v1202 = vld [vmem:[%s219 + $0x80] sm:$0xff]
      %v1203 = vld [vmem:[%s219 + $0x88] sm:$0xff]
      %v1204 = vld [vmem:[%s219 + $0x90] sm:$0xff]
      %v1205 = vld [vmem:[%s219 + $0x98] sm:$0xff]
      %v1206 = vld [vmem:[%s219 + $0xa0] sm:$0xff]
      %v1207 = vld [vmem:[%s219 + $0xa8] sm:$0xff]
      %v1208 = vld [vmem:[%s219 + $0xb0] sm:$0xff]
      %v1209 = vld [vmem:[%s219 + $0xb8] sm:$0xff]
      %v1210 = vld [vmem:[%s219 + $0xc0] sm:$0xff]
      %v1211 = vld [vmem:[%s219 + $0xc8] sm:$0xff]
      %v1212 = vld [vmem:[%s219 + $0xd0] sm:$0xff]
      %v1213 = vld [vmem:[%s219 + $0xd8] sm:$0xff]
      %v1214 = vld [vmem:[%s219 + $0xe0] sm:$0xff]
      %v1215 = vld [vmem:[%s219 + $0xe8] sm:$0xff]
      %v1216 = vld [vmem:[%s219 + $0xf0] sm:$0xff]
      %v1217 = vld [vmem:[%s219 + $0xf8] sm:$0xff]
      %v1218 = vld [vmem:[%s219 + $0x100] sm:$0xff]
      %v1219 = vld [vmem:[%s219 + $0x108] sm:$0xff]
      %v1220 = vld [vmem:[%s219 + $0x110] sm:$0xff]
      %v1221 = vld [vmem:[%s219 + $0x118] sm:$0xff]
      %v1222 = vld [vmem:[%s219 + $0x120] sm:$0xff]
      %v1223 = vld [vmem:[%s219 + $0x128] sm:$0xff]
      %v1224 = vld [vmem:[%s219 + $0x130] sm:$0xff]
      %v1225 = vld [vmem:[%s219 + $0x138] sm:$0xff]
      %v1226 = vld [vmem:[%s219 + $0x140] sm:$0xff]
      %v1227 = vld [vmem:[%s219 + $0x148] sm:$0xff]
      %v1228 = vld [vmem:[%s219 + $0x150] sm:$0xff]
      %v1229 = vld [vmem:[%s219 + $0x158] sm:$0xff]
      %v1230 = vld [vmem:[%s219 + $0x160] sm:$0xff]
      %v1231 = vld [vmem:[%s219 + $0x168] sm:$0xff]
      %v1232 = vld [vmem:[%s219 + $0x170] sm:$0xff]
      %v1233 = vld [vmem:[%s219 + $0x178] sm:$0xff]
      %v1234 = vrot.slane %v1186, 7
      %v1235 = vrot.slane %v1187, 7
      %v1236 = vrot.slane %v1188, 7
      %v1237 = vrot.slane %v1189, 7
      %v1238 = vrot.slane %v1190, 7
      %v1239 = vrot.slane %v1191, 7
      %v1240 = vrot.slane %v1192, 7
      %v1241 = vrot.slane %v1193, 7
      %v1242 = vrot.slane %v1194, 7
      %v1243 = vrot.slane %v1195, 7
      %v1244 = vrot.slane %v1196, 7
      %v1245 = vrot.slane %v1197, 7
      %v1246 = vrot.slane %v1198, 7
      %v1247 = vrot.slane %v1199, 7
      %v1248 = vrot.slane %v1200, 7
      %v1249 = vrot.slane %v1201, 7
      %v1250 = vrot.slane %v1202, 7
      %v1251 = vrot.slane %v1203, 7
      %v1252 = vrot.slane %v1204, 7
      %v1253 = vrot.slane %v1205, 7
      %v1254 = vrot.slane %v1206, 7
      %v1255 = vrot.slane %v1207, 7
      %v1256 = vrot.slane %v1208, 7
      %v1257 = vrot.slane %v1209, 7
      %v1258 = vrot.slane %v1210, 7
      %v1259 = vrot.slane %v1211, 7
      %v1260 = vrot.slane %v1212, 7
      %v1261 = vrot.slane %v1213, 7
      %v1262 = vrot.slane %v1214, 7
      %v1263 = vrot.slane %v1215, 7
      %v1264 = vrot.slane %v1216, 7
      %v1265 = vrot.slane %v1217, 7
      %v1266 = vrot.slane %v1218, 7
      %v1267 = vrot.slane %v1219, 7
      %v1268 = vrot.slane %v1220, 7
      %v1269 = vrot.slane %v1221, 7
      %v1270 = vrot.slane %v1222, 7
      %v1271 = vrot.slane %v1223, 7
      %v1272 = vrot.slane %v1224, 7
      %v1273 = vrot.slane %v1225, 7
      %v1274 = vrot.slane %v1226, 7
      %v1275 = vrot.slane %v1227, 7
      %v1276 = vrot.slane %v1228, 7
      %v1277 = vrot.slane %v1229, 7
      %v1278 = vrot.slane %v1230, 7
      %v1279 = vrot.slane %v1231, 7
      %v1280 = vrot.slane %v1232, 7
      %v1281 = vrot.slane %v1233, 7
      %vm1282 = vcmp.lt.s32.totalorder %v226, 1
      %v1283 = vsel %vm1282, %v1280, %v1281
      %v1284 = vsel %vm1282, %v1279, %v1280
      %v1285 = vsel %vm1282, %v1278, %v1279
      %v1286 = vsel %vm1282, %v1277, %v1278
      %v1287 = vsel %vm1282, %v1276, %v1277
      %v1288 = vsel %vm1282, %v1275, %v1276
      %v1289 = vsel %vm1282, %v1274, %v1275
      %v1290 = vsel %vm1282, %v1273, %v1274
      %v1291 = vsel %vm1282, %v1272, %v1273
      %v1292 = vsel %vm1282, %v1271, %v1272
      %v1293 = vsel %vm1282, %v1270, %v1271
      %v1294 = vsel %vm1282, %v1269, %v1270
      %v1295 = vsel %vm1282, %v1268, %v1269
      %v1296 = vsel %vm1282, %v1267, %v1268
      %v1297 = vsel %vm1282, %v1266, %v1267
      %v1298 = vsel %vm1282, %v1265, %v1266
      %v1299 = vsel %vm1282, %v1264, %v1265
      %v1300 = vsel %vm1282, %v1263, %v1264
      %v1301 = vsel %vm1282, %v1262, %v1263
      %v1302 = vsel %vm1282, %v1261, %v1262
      %v1303 = vsel %vm1282, %v1260, %v1261
      %v1304 = vsel %vm1282, %v1259, %v1260
      %v1305 = vsel %vm1282, %v1258, %v1259
      %v1306 = vsel %vm1282, %v1257, %v1258
      %v1307 = vsel %vm1282, %v1256, %v1257
      %v1308 = vsel %vm1282, %v1255, %v1256
      %v1309 = vsel %vm1282, %v1254, %v1255
      %v1310 = vsel %vm1282, %v1253, %v1254
      %v1311 = vsel %vm1282, %v1252, %v1253
      %v1312 = vsel %vm1282, %v1251, %v1252
      %v1313 = vsel %vm1282, %v1250, %v1251
      %v1314 = vsel %vm1282, %v1249, %v1250
      %v1315 = vsel %vm1282, %v1248, %v1249
      %v1316 = vsel %vm1282, %v1247, %v1248
      %v1317 = vsel %vm1282, %v1246, %v1247
      %v1318 = vsel %vm1282, %v1245, %v1246
      %v1319 = vsel %vm1282, %v1244, %v1245
      %v1320 = vsel %vm1282, %v1243, %v1244
      %v1321 = vsel %vm1282, %v1242, %v1243
      %v1322 = vsel %vm1282, %v1241, %v1242
      %v1323 = vsel %vm1282, %v1240, %v1241
      %v1324 = vsel %vm1282, %v1239, %v1240
      %v1325 = vsel %vm1282, %v1238, %v1239
      %v1326 = vsel %vm1282, %v1237, %v1238
      %v1327 = vsel %vm1282, %v1236, %v1237
      %v1328 = vsel %vm1282, %v1235, %v1236
      %v1329 = vsel %vm1282, %v1234, %v1235
      %v1330 = vsel %vm1282, %v1281, %v1234
      %1331 = vst [vmem:[#allocation3] sm:$0xff] %v1330
      %1332 = vst [vmem:[#allocation3 + $0x48] sm:$0xff] %v1329
      %1333 = vst [vmem:[#allocation3 + $0x90] sm:$0xff] %v1328
      %1334 = vst [vmem:[#allocation3 + $0xd8] sm:$0xff] %v1327
      %1335 = vst [vmem:[#allocation3 + $0x120] sm:$0xff] %v1326
      %1336 = vst [vmem:[#allocation3 + $0x168] sm:$0xff] %v1325
      %1337 = vst [vmem:[#allocation3 + $0x1b0] sm:$0xff] %v1324
      %1338 = vst [vmem:[#allocation3 + $0x1f8] sm:$0xff] %v1323
      %1339 = vst [vmem:[#allocation3 + $0x240] sm:$0xff] %v1322
      %1340 = vst [vmem:[#allocation3 + $0x288] sm:$0xff] %v1321
      %1341 = vst [vmem:[#allocation3 + $0x2d0] sm:$0xff] %v1320
      %1342 = vst [vmem:[#allocation3 + $0x318] sm:$0xff] %v1319
      %1343 = vst [vmem:[#allocation3 + $0x360] sm:$0xff] %v1318
      %1344 = vst [vmem:[#allocation3 + $0x3a8] sm:$0xff] %v1317
      %1345 = vst [vmem:[#allocation3 + $0x3f0] sm:$0xff] %v1316
      %1346 = vst [vmem:[#allocation3 + $0x438] sm:$0xff] %v1315
      %1347 = vst [vmem:[#allocation3 + $0x480] sm:$0xff] %v1314
      %1348 = vst [vmem:[#allocation3 + $0x4c8] sm:$0xff] %v1313
      %1349 = vst [vmem:[#allocation3 + $0x510] sm:$0xff] %v1312
      %1350 = vst [vmem:[#allocation3 + $0x558] sm:$0xff] %v1311
      %1351 = vst [vmem:[#allocation3 + $0x5a0] sm:$0xff] %v1310
      %1352 = vst [vmem:[#allocation3 + $0x5e8] sm:$0xff] %v1309
      %1353 = vst [vmem:[#allocation3 + $0x630] sm:$0xff] %v1308
      %1354 = vst [vmem:[#allocation3 + $0x678] sm:$0xff] %v1307
      %1355 = vst [vmem:[#allocation3 + $0x6c0] sm:$0xff] %v1306
      %1356 = vst [vmem:[#allocation3 + $0x708] sm:$0xff] %v1305
      %1357 = vst [vmem:[#allocation3 + $0x750] sm:$0xff] %v1304
      %1358 = vst [vmem:[#allocation3 + $0x798] sm:$0xff] %v1303
      %1359 = vst [vmem:[#allocation3 + $0x7e0] sm:$0xff] %v1302
      %1360 = vst [vmem:[#allocation3 + $0x828] sm:$0xff] %v1301
      %1361 = vst [vmem:[#allocation3 + $0x870] sm:$0xff] %v1300
      %1362 = vst [vmem:[#allocation3 + $0x8b8] sm:$0xff] %v1299
      %1363 = vst [vmem:[#allocation3 + $0x900] sm:$0xff] %v1298
      %1364 = vst [vmem:[#allocation3 + $0x948] sm:$0xff] %v1297
      %1365 = vst [vmem:[#allocation3 + $0x990] sm:$0xff] %v1296
      %1366 = vst [vmem:[#allocation3 + $0x9d8] sm:$0xff] %v1295
      %1367 = vst [vmem:[#allocation3 + $0xa20] sm:$0xff] %v1294
      %1368 = vst [vmem:[#allocation3 + $0xa68] sm:$0xff] %v1293
      %1369 = vst [vmem:[#allocation3 + $0xab0] sm:$0xff] %v1292
      %1370 = vst [vmem:[#allocation3 + $0xaf8] sm:$0xff] %v1291
      %1371 = vst [vmem:[#allocation3 + $0xb40] sm:$0xff] %v1290
      %1372 = vst [vmem:[#allocation3 + $0xb88] sm:$0xff] %v1289
      %1373 = vst [vmem:[#allocation3 + $0xbd0] sm:$0xff] %v1288
      %1374 = vst [vmem:[#allocation3 + $0xc18] sm:$0xff] %v1287
      %1375 = vst [vmem:[#allocation3 + $0xc60] sm:$0xff] %v1286
      %1376 = vst [vmem:[#allocation3 + $0xca8] sm:$0xff] %v1285
      %1377 = vst [vmem:[#allocation3 + $0xcf0] sm:$0xff] %v1284
      %1378 = vst [vmem:[#allocation3 + $0xd38] sm:$0xff] %v1283
      %1379 = vst [vmem:[#allocation3 + $0x8] sm:$0xff] %v1186
      %1380 = vst [vmem:[#allocation3 + $0x50] sm:$0xff] %v1187
      %1381 = vst [vmem:[#allocation3 + $0x98] sm:$0xff] %v1188
      %1382 = vst [vmem:[#allocation3 + $0xe0] sm:$0xff] %v1189
      %1383 = vst [vmem:[#allocation3 + $0x128] sm:$0xff] %v1190
      %1384 = vst [vmem:[#allocation3 + $0x170] sm:$0xff] %v1191
      %1385 = vst [vmem:[#allocation3 + $0x1b8] sm:$0xff] %v1192
      %1386 = vst [vmem:[#allocation3 + $0x200] sm:$0xff] %v1193
      %1387 = vst [vmem:[#allocation3 + $0x248] sm:$0xff] %v1194
      %1388 = vst [vmem:[#allocation3 + $0x290] sm:$0xff] %v1195
      %1389 = vst [vmem:[#allocation3 + $0x2d8] sm:$0xff] %v1196
      %1390 = vst [vmem:[#allocation3 + $0x320] sm:$0xff] %v1197
      %1391 = vst [vmem:[#allocation3 + $0x368] sm:$0xff] %v1198
      %1392 = vst [vmem:[#allocation3 + $0x3b0] sm:$0xff] %v1199
      %1393 = vst [vmem:[#allocation3 + $0x3f8] sm:$0xff] %v1200
      %1394 = vst [vmem:[#allocation3 + $0x440] sm:$0xff] %v1201
      %1395 = vst [vmem:[#allocation3 + $0x488] sm:$0xff] %v1202
      %1396 = vst [vmem:[#allocation3 + $0x4d0] sm:$0xff] %v1203
      %1397 = vst [vmem:[#allocation3 + $0x518] sm:$0xff] %v1204
      %1398 = vst [vmem:[#allocation3 + $0x560] sm:$0xff] %v1205
      %1399 = vst [vmem:[#allocation3 + $0x5a8] sm:$0xff] %v1206
      %1400 = vst [vmem:[#allocation3 + $0x5f0] sm:$0xff] %v1207
      %1401 = vst [vmem:[#allocation3 + $0x638] sm:$0xff] %v1208
      %1402 = vst [vmem:[#allocation3 + $0x680] sm:$0xff] %v1209
      %1403 = vst [vmem:[#allocation3 + $0x6c8] sm:$0xff] %v1210
      %1404 = vst [vmem:[#allocation3 + $0x710] sm:$0xff] %v1211
      %1405 = vst [vmem:[#allocation3 + $0x758] sm:$0xff] %v1212
      %1406 = vst [vmem:[#allocation3 + $0x7a0] sm:$0xff] %v1213
      %1407 = vst [vmem:[#allocation3 + $0x7e8] sm:$0xff] %v1214
      %1408 = vst [vmem:[#allocation3 + $0x830] sm:$0xff] %v1215
      %1409 = vst [vmem:[#allocation3 + $0x878] sm:$0xff] %v1216
      %1410 = vst [vmem:[#allocation3 + $0x8c0] sm:$0xff] %v1217
      %1411 = vst [vmem:[#allocation3 + $0x908] sm:$0xff] %v1218
      %1412 = vst [vmem:[#allocation3 + $0x950] sm:$0xff] %v1219
      %1413 = vst [vmem:[#allocation3 + $0x998] sm:$0xff] %v1220
      %1414 = vst [vmem:[#allocation3 + $0x9e0] sm:$0xff] %v1221
      %1415 = vst [vmem:[#allocation3 + $0xa28] sm:$0xff] %v1222
      %1416 = vst [vmem:[#allocation3 + $0xa70] sm:$0xff] %v1223
      %1417 = vst [vmem:[#allocation3 + $0xab8] sm:$0xff] %v1224
      %1418 = vst [vmem:[#allocation3 + $0xb00] sm:$0xff] %v1225
      %1419 = vst [vmem:[#allocation3 + $0xb48] sm:$0xff] %v1226
      %1420 = vst [vmem:[#allocation3 + $0xb90] sm:$0xff] %v1227
      %1421 = vst [vmem:[#allocation3 + $0xbd8] sm:$0xff] %v1228
      %1422 = vst [vmem:[#allocation3 + $0xc20] sm:$0xff] %v1229
      %1423 = vst [vmem:[#allocation3 + $0xc68] sm:$0xff] %v1230
      %1424 = vst [vmem:[#allocation3 + $0xcb0] sm:$0xff] %v1231
      %1425 = vst [vmem:[#allocation3 + $0xcf8] sm:$0xff] %v1232
      %1426 = vst [vmem:[#allocation3 + $0xd40] sm:$0xff] %v1233
      %v1427 = vrot.slane %v1186, 1
      %v1428 = vrot.slane %v1187, 1
      %v1429 = vrot.slane %v1188, 1
      %v1430 = vrot.slane %v1189, 1
      %v1431 = vrot.slane %v1190, 1
      %v1432 = vrot.slane %v1191, 1
      %v1433 = vrot.slane %v1192, 1
      %v1434 = vrot.slane %v1193, 1
      %v1435 = vrot.slane %v1194, 1
      %v1436 = vrot.slane %v1195, 1
      %v1437 = vrot.slane %v1196, 1
      %v1438 = vrot.slane %v1197, 1
      %v1439 = vrot.slane %v1198, 1
      %v1440 = vrot.slane %v1199, 1
      %v1441 = vrot.slane %v1200, 1
      %v1442 = vrot.slane %v1201, 1
      %v1443 = vrot.slane %v1202, 1
      %v1444 = vrot.slane %v1203, 1
      %v1445 = vrot.slane %v1204, 1
      %v1446 = vrot.slane %v1205, 1
      %v1447 = vrot.slane %v1206, 1
      %v1448 = vrot.slane %v1207, 1
      %v1449 = vrot.slane %v1208, 1
      %v1450 = vrot.slane %v1209, 1
      %v1451 = vrot.slane %v1210, 1
      %v1452 = vrot.slane %v1211, 1
      %v1453 = vrot.slane %v1212, 1
      %v1454 = vrot.slane %v1213, 1
      %v1455 = vrot.slane %v1214, 1
      %v1456 = vrot.slane %v1215, 1
      %v1457 = vrot.slane %v1216, 1
      %v1458 = vrot.slane %v1217, 1
      %v1459 = vrot.slane %v1218, 1
      %v1460 = vrot.slane %v1219, 1
      %v1461 = vrot.slane %v1220, 1
      %v1462 = vrot.slane %v1221, 1
      %v1463 = vrot.slane %v1222, 1
      %v1464 = vrot.slane %v1223, 1
      %v1465 = vrot.slane %v1224, 1
      %v1466 = vrot.slane %v1225, 1
      %v1467 = vrot.slane %v1226, 1
      %v1468 = vrot.slane %v1227, 1
      %v1469 = vrot.slane %v1228, 1
      %v1470 = vrot.slane %v1229, 1
      %v1471 = vrot.slane %v1230, 1
      %v1472 = vrot.slane %v1231, 1
      %v1473 = vrot.slane %v1232, 1
      %v1474 = vrot.slane %v1233, 1
      %vm1475 = vcmp.lt.s32.totalorder %v226, 7
      %v1476 = vsel %vm1475, %v1473, %v1474
      %v1477 = vsel %vm1475, %v1472, %v1473
      %v1478 = vsel %vm1475, %v1471, %v1472
      %v1479 = vsel %vm1475, %v1470, %v1471
      %v1480 = vsel %vm1475, %v1469, %v1470
      %v1481 = vsel %vm1475, %v1468, %v1469
      %v1482 = vsel %vm1475, %v1467, %v1468
      %v1483 = vsel %vm1475, %v1466, %v1467
      %v1484 = vsel %vm1475, %v1465, %v1466
      %v1485 = vsel %vm1475, %v1464, %v1465
      %v1486 = vsel %vm1475, %v1463, %v1464
      %v1487 = vsel %vm1475, %v1462, %v1463
      %v1488 = vsel %vm1475, %v1461, %v1462
      %v1489 = vsel %vm1475, %v1460, %v1461
      %v1490 = vsel %vm1475, %v1459, %v1460
      %v1491 = vsel %vm1475, %v1458, %v1459
      %v1492 = vsel %vm1475, %v1457, %v1458
      %v1493 = vsel %vm1475, %v1456, %v1457
      %v1494 = vsel %vm1475, %v1455, %v1456
      %v1495 = vsel %vm1475, %v1454, %v1455
      %v1496 = vsel %vm1475, %v1453, %v1454
      %v1497 = vsel %vm1475, %v1452, %v1453
      %v1498 = vsel %vm1475, %v1451, %v1452
      %v1499 = vsel %vm1475, %v1450, %v1451
      %v1500 = vsel %vm1475, %v1449, %v1450
      %v1501 = vsel %vm1475, %v1448, %v1449
      %v1502 = vsel %vm1475, %v1447, %v1448
      %v1503 = vsel %vm1475, %v1446, %v1447
      %v1504 = vsel %vm1475, %v1445, %v1446
      %v1505 = vsel %vm1475, %v1444, %v1445
      %v1506 = vsel %vm1475, %v1443, %v1444
      %v1507 = vsel %vm1475, %v1442, %v1443
      %v1508 = vsel %vm1475, %v1441, %v1442
      %v1509 = vsel %vm1475, %v1440, %v1441
      %v1510 = vsel %vm1475, %v1439, %v1440
      %v1511 = vsel %vm1475, %v1438, %v1439
      %v1512 = vsel %vm1475, %v1437, %v1438
      %v1513 = vsel %vm1475, %v1436, %v1437
      %v1514 = vsel %vm1475, %v1435, %v1436
      %v1515 = vsel %vm1475, %v1434, %v1435
      %v1516 = vsel %vm1475, %v1433, %v1434
      %v1517 = vsel %vm1475, %v1432, %v1433
      %v1518 = vsel %vm1475, %v1431, %v1432
      %v1519 = vsel %vm1475, %v1430, %v1431
      %v1520 = vsel %vm1475, %v1429, %v1430
      %v1521 = vsel %vm1475, %v1428, %v1429
      %v1522 = vsel %vm1475, %v1427, %v1428
      %v1523 = vsel %vm1475, %v1474, %v1427
      %1524 = vst [vmem:[#allocation3 + $0x10] sm:$0xff] %v1522
      %1525 = vst [vmem:[#allocation3 + $0x58] sm:$0xff] %v1521
      %1526 = vst [vmem:[#allocation3 + $0xa0] sm:$0xff] %v1520
      %1527 = vst [vmem:[#allocation3 + $0xe8] sm:$0xff] %v1519
      %1528 = vst [vmem:[#allocation3 + $0x130] sm:$0xff] %v1518
      %1529 = vst [vmem:[#allocation3 + $0x178] sm:$0xff] %v1517
      %1530 = vst [vmem:[#allocation3 + $0x1c0] sm:$0xff] %v1516
      %1531 = vst [vmem:[#allocation3 + $0x208] sm:$0xff] %v1515
      %1532 = vst [vmem:[#allocation3 + $0x250] sm:$0xff] %v1514
      %1533 = vst [vmem:[#allocation3 + $0x298] sm:$0xff] %v1513
      %1534 = vst [vmem:[#allocation3 + $0x2e0] sm:$0xff] %v1512
      %1535 = vst [vmem:[#allocation3 + $0x328] sm:$0xff] %v1511
      %1536 = vst [vmem:[#allocation3 + $0x370] sm:$0xff] %v1510
      %1537 = vst [vmem:[#allocation3 + $0x3b8] sm:$0xff] %v1509
      %1538 = vst [vmem:[#allocation3 + $0x400] sm:$0xff] %v1508
      %1539 = vst [vmem:[#allocation3 + $0x448] sm:$0xff] %v1507
      %1540 = vst [vmem:[#allocation3 + $0x490] sm:$0xff] %v1506
      %1541 = vst [vmem:[#allocation3 + $0x4d8] sm:$0xff] %v1505
      %1542 = vst [vmem:[#allocation3 + $0x520] sm:$0xff] %v1504
      %1543 = vst [vmem:[#allocation3 + $0x568] sm:$0xff] %v1503
      %1544 = vst [vmem:[#allocation3 + $0x5b0] sm:$0xff] %v1502
      %1545 = vst [vmem:[#allocation3 + $0x5f8] sm:$0xff] %v1501
      %1546 = vst [vmem:[#allocation3 + $0x640] sm:$0xff] %v1500
      %1547 = vst [vmem:[#allocation3 + $0x688] sm:$0xff] %v1499
      %1548 = vst [vmem:[#allocation3 + $0x6d0] sm:$0xff] %v1498
      %1549 = vst [vmem:[#allocation3 + $0x718] sm:$0xff] %v1497
      %1550 = vst [vmem:[#allocation3 + $0x760] sm:$0xff] %v1496
      %1551 = vst [vmem:[#allocation3 + $0x7a8] sm:$0xff] %v1495
      %1552 = vst [vmem:[#allocation3 + $0x7f0] sm:$0xff] %v1494
      %1553 = vst [vmem:[#allocation3 + $0x838] sm:$0xff] %v1493
      %1554 = vst [vmem:[#allocation3 + $0x880] sm:$0xff] %v1492
      %1555 = vst [vmem:[#allocation3 + $0x8c8] sm:$0xff] %v1491
      %1556 = vst [vmem:[#allocation3 + $0x910] sm:$0xff] %v1490
      %1557 = vst [vmem:[#allocation3 + $0x958] sm:$0xff] %v1489
      %1558 = vst [vmem:[#allocation3 + $0x9a0] sm:$0xff] %v1488
      %1559 = vst [vmem:[#allocation3 + $0x9e8] sm:$0xff] %v1487
      %1560 = vst [vmem:[#allocation3 + $0xa30] sm:$0xff] %v1486
      %1561 = vst [vmem:[#allocation3 + $0xa78] sm:$0xff] %v1485
      %1562 = vst [vmem:[#allocation3 + $0xac0] sm:$0xff] %v1484
      %1563 = vst [vmem:[#allocation3 + $0xb08] sm:$0xff] %v1483
      %1564 = vst [vmem:[#allocation3 + $0xb50] sm:$0xff] %v1482
      %1565 = vst [vmem:[#allocation3 + $0xb98] sm:$0xff] %v1481
      %1566 = vst [vmem:[#allocation3 + $0xbe0] sm:$0xff] %v1480
      %1567 = vst [vmem:[#allocation3 + $0xc28] sm:$0xff] %v1479
      %1568 = vst [vmem:[#allocation3 + $0xc70] sm:$0xff] %v1478
      %1569 = vst [vmem:[#allocation3 + $0xcb8] sm:$0xff] %v1477
      %1570 = vst [vmem:[#allocation3 + $0xd00] sm:$0xff] %v1476
      %1571 = vst [vmem:[#allocation3 + $0xd48] sm:$0xff] %v1523
      %v1572 = vld [vmem:[%s219 + $0x18] sm:$0xff]
      %v1573 = vld [vmem:[%s219 + $0x20] sm:$0xff]
      %v1574 = vld [vmem:[%s219 + $0x28] sm:$0xff]
      %v1575 = vld [vmem:[%s219 + $0x30] sm:$0xff]
      %v1576 = vld [vmem:[%s219 + $0x38] sm:$0xff]
      %v1577 = vld [vmem:[%s219 + $0x40] sm:$0xff]
      %v1578 = vld [vmem:[%s219 + $0x48] sm:$0xff]
      %v1579 = vld [vmem:[%s219 + $0x50] sm:$0xff]
      %v1580 = vld [vmem:[%s219 + $0x58] sm:$0xff]
      %v1581 = vld [vmem:[%s219 + $0x60] sm:$0xff]
      %v1582 = vld [vmem:[%s219 + $0x68] sm:$0xff]
      %v1583 = vld [vmem:[%s219 + $0x70] sm:$0xff]
      %v1584 = vld [vmem:[%s219 + $0x78] sm:$0xff]
      %v1585 = vld [vmem:[%s219 + $0x80] sm:$0xff]
      %v1586 = vld [vmem:[%s219 + $0x88] sm:$0xff]
      %v1587 = vld [vmem:[%s219 + $0x90] sm:$0xff]
      %v1588 = vld [vmem:[%s219 + $0x98] sm:$0xff]
      %v1589 = vld [vmem:[%s219 + $0xa0] sm:$0xff]
      %v1590 = vld [vmem:[%s219 + $0xa8] sm:$0xff]
      %v1591 = vld [vmem:[%s219 + $0xb0] sm:$0xff]
      %v1592 = vld [vmem:[%s219 + $0xb8] sm:$0xff]
      %v1593 = vld [vmem:[%s219 + $0xc0] sm:$0xff]
      %v1594 = vld [vmem:[%s219 + $0xc8] sm:$0xff]
      %v1595 = vld [vmem:[%s219 + $0xd0] sm:$0xff]
      %v1596 = vld [vmem:[%s219 + $0xd8] sm:$0xff]
      %v1597 = vld [vmem:[%s219 + $0xe0] sm:$0xff]
      %v1598 = vld [vmem:[%s219 + $0xe8] sm:$0xff]
      %v1599 = vld [vmem:[%s219 + $0xf0] sm:$0xff]
      %v1600 = vld [vmem:[%s219 + $0xf8] sm:$0xff]
      %v1601 = vld [vmem:[%s219 + $0x100] sm:$0xff]
      %v1602 = vld [vmem:[%s219 + $0x108] sm:$0xff]
      %v1603 = vld [vmem:[%s219 + $0x110] sm:$0xff]
      %v1604 = vld [vmem:[%s219 + $0x118] sm:$0xff]
      %v1605 = vld [vmem:[%s219 + $0x120] sm:$0xff]
      %v1606 = vld [vmem:[%s219 + $0x128] sm:$0xff]
      %v1607 = vld [vmem:[%s219 + $0x130] sm:$0xff]
      %v1608 = vld [vmem:[%s219 + $0x138] sm:$0xff]
      %v1609 = vld [vmem:[%s219 + $0x140] sm:$0xff]
      %v1610 = vld [vmem:[%s219 + $0x148] sm:$0xff]
      %v1611 = vld [vmem:[%s219 + $0x150] sm:$0xff]
      %v1612 = vld [vmem:[%s219 + $0x158] sm:$0xff]
      %v1613 = vld [vmem:[%s219 + $0x160] sm:$0xff]
      %v1614 = vld [vmem:[%s219 + $0x168] sm:$0xff]
      %v1615 = vld [vmem:[%s219 + $0x170] sm:$0xff]
      %v1616 = vld [vmem:[%s219 + $0x178] sm:$0xff]
      %v1617 = vld [vmem:[%s219 + $0x180] sm:$0xff]
      %v1618 = vld [vmem:[%s219 + $0x188] sm:$0xff]
      %v1619 = vld [vmem:[%s219 + $0x190] sm:$0xff]
      %v1620 = vrot.slane %v1572, 7
      %v1621 = vrot.slane %v1573, 7
      %v1622 = vrot.slane %v1574, 7
      %v1623 = vrot.slane %v1575, 7
      %v1624 = vrot.slane %v1576, 7
      %v1625 = vrot.slane %v1577, 7
      %v1626 = vrot.slane %v1578, 7
      %v1627 = vrot.slane %v1579, 7
      %v1628 = vrot.slane %v1580, 7
      %v1629 = vrot.slane %v1581, 7
      %v1630 = vrot.slane %v1582, 7
      %v1631 = vrot.slane %v1583, 7
      %v1632 = vrot.slane %v1584, 7
      %v1633 = vrot.slane %v1585, 7
      %v1634 = vrot.slane %v1586, 7
      %v1635 = vrot.slane %v1587, 7
      %v1636 = vrot.slane %v1588, 7
      %v1637 = vrot.slane %v1589, 7
      %v1638 = vrot.slane %v1590, 7
      %v1639 = vrot.slane %v1591, 7
      %v1640 = vrot.slane %v1592, 7
      %v1641 = vrot.slane %v1593, 7
      %v1642 = vrot.slane %v1594, 7
      %v1643 = vrot.slane %v1595, 7
      %v1644 = vrot.slane %v1596, 7
      %v1645 = vrot.slane %v1597, 7
      %v1646 = vrot.slane %v1598, 7
      %v1647 = vrot.slane %v1599, 7
      %v1648 = vrot.slane %v1600, 7
      %v1649 = vrot.slane %v1601, 7
      %v1650 = vrot.slane %v1602, 7
      %v1651 = vrot.slane %v1603, 7
      %v1652 = vrot.slane %v1604, 7
      %v1653 = vrot.slane %v1605, 7
      %v1654 = vrot.slane %v1606, 7
      %v1655 = vrot.slane %v1607, 7
      %v1656 = vrot.slane %v1608, 7
      %v1657 = vrot.slane %v1609, 7
      %v1658 = vrot.slane %v1610, 7
      %v1659 = vrot.slane %v1611, 7
      %v1660 = vrot.slane %v1612, 7
      %v1661 = vrot.slane %v1613, 7
      %v1662 = vrot.slane %v1614, 7
      %v1663 = vrot.slane %v1615, 7
      %v1664 = vrot.slane %v1616, 7
      %v1665 = vrot.slane %v1617, 7
      %v1666 = vrot.slane %v1618, 7
      %v1667 = vrot.slane %v1619, 7
      %v1668 = vsel %vm1282, %v1666, %v1667
      %v1669 = vsel %vm1282, %v1665, %v1666
      %v1670 = vsel %vm1282, %v1664, %v1665
      %v1671 = vsel %vm1282, %v1663, %v1664
      %v1672 = vsel %vm1282, %v1662, %v1663
      %v1673 = vsel %vm1282, %v1661, %v1662
      %v1674 = vsel %vm1282, %v1660, %v1661
      %v1675 = vsel %vm1282, %v1659, %v1660
      %v1676 = vsel %vm1282, %v1658, %v1659
      %v1677 = vsel %vm1282, %v1657, %v1658
      %v1678 = vsel %vm1282, %v1656, %v1657
      %v1679 = vsel %vm1282, %v1655, %v1656
      %v1680 = vsel %vm1282, %v1654, %v1655
      %v1681 = vsel %vm1282, %v1653, %v1654
      %v1682 = vsel %vm1282, %v1652, %v1653
      %v1683 = vsel %vm1282, %v1651, %v1652
      %v1684 = vsel %vm1282, %v1650, %v1651
      %v1685 = vsel %vm1282, %v1649, %v1650
      %v1686 = vsel %vm1282, %v1648, %v1649
      %v1687 = vsel %vm1282, %v1647, %v1648
      %v1688 = vsel %vm1282, %v1646, %v1647
      %v1689 = vsel %vm1282, %v1645, %v1646
      %v1690 = vsel %vm1282, %v1644, %v1645
      %v1691 = vsel %vm1282, %v1643, %v1644
      %v1692 = vsel %vm1282, %v1642, %v1643
      %v1693 = vsel %vm1282, %v1641, %v1642
      %v1694 = vsel %vm1282, %v1640, %v1641
      %v1695 = vsel %vm1282, %v1639, %v1640
      %v1696 = vsel %vm1282, %v1638, %v1639
      %v1697 = vsel %vm1282, %v1637, %v1638
      %v1698 = vsel %vm1282, %v1636, %v1637
      %v1699 = vsel %vm1282, %v1635, %v1636
      %v1700 = vsel %vm1282, %v1634, %v1635
      %v1701 = vsel %vm1282, %v1633, %v1634
      %v1702 = vsel %vm1282, %v1632, %v1633
      %v1703 = vsel %vm1282, %v1631, %v1632
      %v1704 = vsel %vm1282, %v1630, %v1631
      %v1705 = vsel %vm1282, %v1629, %v1630
      %v1706 = vsel %vm1282, %v1628, %v1629
      %v1707 = vsel %vm1282, %v1627, %v1628
      %v1708 = vsel %vm1282, %v1626, %v1627
      %v1709 = vsel %vm1282, %v1625, %v1626
      %v1710 = vsel %vm1282, %v1624, %v1625
      %v1711 = vsel %vm1282, %v1623, %v1624
      %v1712 = vsel %vm1282, %v1622, %v1623
      %v1713 = vsel %vm1282, %v1621, %v1622
      %v1714 = vsel %vm1282, %v1620, %v1621
      %v1715 = vsel %vm1282, %v1667, %v1620
      %1716 = vst [vmem:[#allocation3 + $0x18] sm:$0xff] %v1715
      %1717 = vst [vmem:[#allocation3 + $0x60] sm:$0xff] %v1714
      %1718 = vst [vmem:[#allocation3 + $0xa8] sm:$0xff] %v1713
      %1719 = vst [vmem:[#allocation3 + $0xf0] sm:$0xff] %v1712
      %1720 = vst [vmem:[#allocation3 + $0x138] sm:$0xff] %v1711
      %1721 = vst [vmem:[#allocation3 + $0x180] sm:$0xff] %v1710
      %1722 = vst [vmem:[#allocation3 + $0x1c8] sm:$0xff] %v1709
      %1723 = vst [vmem:[#allocation3 + $0x210] sm:$0xff] %v1708
      %1724 = vst [vmem:[#allocation3 + $0x258] sm:$0xff] %v1707
      %1725 = vst [vmem:[#allocation3 + $0x2a0] sm:$0xff] %v1706
      %1726 = vst [vmem:[#allocation3 + $0x2e8] sm:$0xff] %v1705
      %1727 = vst [vmem:[#allocation3 + $0x330] sm:$0xff] %v1704
      %1728 = vst [vmem:[#allocation3 + $0x378] sm:$0xff] %v1703
      %1729 = vst [vmem:[#allocation3 + $0x3c0] sm:$0xff] %v1702
      %1730 = vst [vmem:[#allocation3 + $0x408] sm:$0xff] %v1701
      %1731 = vst [vmem:[#allocation3 + $0x450] sm:$0xff] %v1700
      %1732 = vst [vmem:[#allocation3 + $0x498] sm:$0xff] %v1699
      %1733 = vst [vmem:[#allocation3 + $0x4e0] sm:$0xff] %v1698
      %1734 = vst [vmem:[#allocation3 + $0x528] sm:$0xff] %v1697
      %1735 = vst [vmem:[#allocation3 + $0x570] sm:$0xff] %v1696
      %1736 = vst [vmem:[#allocation3 + $0x5b8] sm:$0xff] %v1695
      %1737 = vst [vmem:[#allocation3 + $0x600] sm:$0xff] %v1694
      %1738 = vst [vmem:[#allocation3 + $0x648] sm:$0xff] %v1693
      %1739 = vst [vmem:[#allocation3 + $0x690] sm:$0xff] %v1692
      %1740 = vst [vmem:[#allocation3 + $0x6d8] sm:$0xff] %v1691
      %1741 = vst [vmem:[#allocation3 + $0x720] sm:$0xff] %v1690
      %1742 = vst [vmem:[#allocation3 + $0x768] sm:$0xff] %v1689
      %1743 = vst [vmem:[#allocation3 + $0x7b0] sm:$0xff] %v1688
      %1744 = vst [vmem:[#allocation3 + $0x7f8] sm:$0xff] %v1687
      %1745 = vst [vmem:[#allocation3 + $0x840] sm:$0xff] %v1686
      %1746 = vst [vmem:[#allocation3 + $0x888] sm:$0xff] %v1685
      %1747 = vst [vmem:[#allocation3 + $0x8d0] sm:$0xff] %v1684
      %1748 = vst [vmem:[#allocation3 + $0x918] sm:$0xff] %v1683
      %1749 = vst [vmem:[#allocation3 + $0x960] sm:$0xff] %v1682
      %1750 = vst [vmem:[#allocation3 + $0x9a8] sm:$0xff] %v1681
      %1751 = vst [vmem:[#allocation3 + $0x9f0] sm:$0xff] %v1680
      %1752 = vst [vmem:[#allocation3 + $0xa38] sm:$0xff] %v1679
      %1753 = vst [vmem:[#allocation3 + $0xa80] sm:$0xff] %v1678
      %1754 = vst [vmem:[#allocation3 + $0xac8] sm:$0xff] %v1677
      %1755 = vst [vmem:[#allocation3 + $0xb10] sm:$0xff] %v1676
      %1756 = vst [vmem:[#allocation3 + $0xb58] sm:$0xff] %v1675
      %1757 = vst [vmem:[#allocation3 + $0xba0] sm:$0xff] %v1674
      %1758 = vst [vmem:[#allocation3 + $0xbe8] sm:$0xff] %v1673
      %1759 = vst [vmem:[#allocation3 + $0xc30] sm:$0xff] %v1672
      %1760 = vst [vmem:[#allocation3 + $0xc78] sm:$0xff] %v1671
      %1761 = vst [vmem:[#allocation3 + $0xcc0] sm:$0xff] %v1670
      %1762 = vst [vmem:[#allocation3 + $0xd08] sm:$0xff] %v1669
      %1763 = vst [vmem:[#allocation3 + $0xd50] sm:$0xff] %v1668
      %1764 = vst [vmem:[#allocation3 + $0x20] sm:$0xff] %v1572
      %1765 = vst [vmem:[#allocation3 + $0x68] sm:$0xff] %v1573
      %1766 = vst [vmem:[#allocation3 + $0xb0] sm:$0xff] %v1574
      %1767 = vst [vmem:[#allocation3 + $0xf8] sm:$0xff] %v1575
      %1768 = vst [vmem:[#allocation3 + $0x140] sm:$0xff] %v1576
      %1769 = vst [vmem:[#allocation3 + $0x188] sm:$0xff] %v1577
      %1770 = vst [vmem:[#allocation3 + $0x1d0] sm:$0xff] %v1578
      %1771 = vst [vmem:[#allocation3 + $0x218] sm:$0xff] %v1579
      %1772 = vst [vmem:[#allocation3 + $0x260] sm:$0xff] %v1580
      %1773 = vst [vmem:[#allocation3 + $0x2a8] sm:$0xff] %v1581
      %1774 = vst [vmem:[#allocation3 + $0x2f0] sm:$0xff] %v1582
      %1775 = vst [vmem:[#allocation3 + $0x338] sm:$0xff] %v1583
      %1776 = vst [vmem:[#allocation3 + $0x380] sm:$0xff] %v1584
      %1777 = vst [vmem:[#allocation3 + $0x3c8] sm:$0xff] %v1585
      %1778 = vst [vmem:[#allocation3 + $0x410] sm:$0xff] %v1586
      %1779 = vst [vmem:[#allocation3 + $0x458] sm:$0xff] %v1587
      %1780 = vst [vmem:[#allocation3 + $0x4a0] sm:$0xff] %v1588
      %1781 = vst [vmem:[#allocation3 + $0x4e8] sm:$0xff] %v1589
      %1782 = vst [vmem:[#allocation3 + $0x530] sm:$0xff] %v1590
      %1783 = vst [vmem:[#allocation3 + $0x578] sm:$0xff] %v1591
      %1784 = vst [vmem:[#allocation3 + $0x5c0] sm:$0xff] %v1592
      %1785 = vst [vmem:[#allocation3 + $0x608] sm:$0xff] %v1593
      %1786 = vst [vmem:[#allocation3 + $0x650] sm:$0xff] %v1594
      %1787 = vst [vmem:[#allocation3 + $0x698] sm:$0xff] %v1595
      %1788 = vst [vmem:[#allocation3 + $0x6e0] sm:$0xff] %v1596
      %1789 = vst [vmem:[#allocation3 + $0x728] sm:$0xff] %v1597
      %1790 = vst [vmem:[#allocation3 + $0x770] sm:$0xff] %v1598
      %1791 = vst [vmem:[#allocation3 + $0x7b8] sm:$0xff] %v1599
      %1792 = vst [vmem:[#allocation3 + $0x800] sm:$0xff] %v1600
      %1793 = vst [vmem:[#allocation3 + $0x848] sm:$0xff] %v1601
      %1794 = vst [vmem:[#allocation3 + $0x890] sm:$0xff] %v1602
      %1795 = vst [vmem:[#allocation3 + $0x8d8] sm:$0xff] %v1603
      %1796 = vst [vmem:[#allocation3 + $0x920] sm:$0xff] %v1604
      %1797 = vst [vmem:[#allocation3 + $0x968] sm:$0xff] %v1605
      %1798 = vst [vmem:[#allocation3 + $0x9b0] sm:$0xff] %v1606
      %1799 = vst [vmem:[#allocation3 + $0x9f8] sm:$0xff] %v1607
      %1800 = vst [vmem:[#allocation3 + $0xa40] sm:$0xff] %v1608
      %1801 = vst [vmem:[#allocation3 + $0xa88] sm:$0xff] %v1609
      %1802 = vst [vmem:[#allocation3 + $0xad0] sm:$0xff] %v1610
      %1803 = vst [vmem:[#allocation3 + $0xb18] sm:$0xff] %v1611
      %1804 = vst [vmem:[#allocation3 + $0xb60] sm:$0xff] %v1612
      %1805 = vst [vmem:[#allocation3 + $0xba8] sm:$0xff] %v1613
      %1806 = vst [vmem:[#allocation3 + $0xbf0] sm:$0xff] %v1614
      %1807 = vst [vmem:[#allocation3 + $0xc38] sm:$0xff] %v1615
      %1808 = vst [vmem:[#allocation3 + $0xc80] sm:$0xff] %v1616
      %1809 = vst [vmem:[#allocation3 + $0xcc8] sm:$0xff] %v1617
      %1810 = vst [vmem:[#allocation3 + $0xd10] sm:$0xff] %v1618
      %1811 = vst [vmem:[#allocation3 + $0xd58] sm:$0xff] %v1619
      %v1812 = vrot.slane %v1572, 1
      %v1813 = vrot.slane %v1573, 1
      %v1814 = vrot.slane %v1574, 1
      %v1815 = vrot.slane %v1575, 1
      %v1816 = vrot.slane %v1576, 1
      %v1817 = vrot.slane %v1577, 1
      %v1818 = vrot.slane %v1578, 1
      %v1819 = vrot.slane %v1579, 1
      %v1820 = vrot.slane %v1580, 1
      %v1821 = vrot.slane %v1581, 1
      %v1822 = vrot.slane %v1582, 1
      %v1823 = vrot.slane %v1583, 1
      %v1824 = vrot.slane %v1584, 1
      %v1825 = vrot.slane %v1585, 1
      %v1826 = vrot.slane %v1586, 1
      %v1827 = vrot.slane %v1587, 1
      %v1828 = vrot.slane %v1588, 1
      %v1829 = vrot.slane %v1589, 1
      %v1830 = vrot.slane %v1590, 1
      %v1831 = vrot.slane %v1591, 1
      %v1832 = vrot.slane %v1592, 1
      %v1833 = vrot.slane %v1593, 1
      %v1834 = vrot.slane %v1594, 1
      %v1835 = vrot.slane %v1595, 1
      %v1836 = vrot.slane %v1596, 1
      %v1837 = vrot.slane %v1597, 1
      %v1838 = vrot.slane %v1598, 1
      %v1839 = vrot.slane %v1599, 1
      %v1840 = vrot.slane %v1600, 1
      %v1841 = vrot.slane %v1601, 1
      %v1842 = vrot.slane %v1602, 1
      %v1843 = vrot.slane %v1603, 1
      %v1844 = vrot.slane %v1604, 1
      %v1845 = vrot.slane %v1605, 1
      %v1846 = vrot.slane %v1606, 1
      %v1847 = vrot.slane %v1607, 1
      %v1848 = vrot.slane %v1608, 1
      %v1849 = vrot.slane %v1609, 1
      %v1850 = vrot.slane %v1610, 1
      %v1851 = vrot.slane %v1611, 1
      %v1852 = vrot.slane %v1612, 1
      %v1853 = vrot.slane %v1613, 1
      %v1854 = vrot.slane %v1614, 1
      %v1855 = vrot.slane %v1615, 1
      %v1856 = vrot.slane %v1616, 1
      %v1857 = vrot.slane %v1617, 1
      %v1858 = vrot.slane %v1618, 1
      %v1859 = vrot.slane %v1619, 1
      %v1860 = vsel %vm1475, %v1858, %v1859
      %v1861 = vsel %vm1475, %v1857, %v1858
      %v1862 = vsel %vm1475, %v1856, %v1857
      %v1863 = vsel %vm1475, %v1855, %v1856
      %v1864 = vsel %vm1475, %v1854, %v1855
      %v1865 = vsel %vm1475, %v1853, %v1854
      %v1866 = vsel %vm1475, %v1852, %v1853
      %v1867 = vsel %vm1475, %v1851, %v1852
      %v1868 = vsel %vm1475, %v1850, %v1851
      %v1869 = vsel %vm1475, %v1849, %v1850
      %v1870 = vsel %vm1475, %v1848, %v1849
      %v1871 = vsel %vm1475, %v1847, %v1848
      %v1872 = vsel %vm1475, %v1846, %v1847
      %v1873 = vsel %vm1475, %v1845, %v1846
      %v1874 = vsel %vm1475, %v1844, %v1845
      %v1875 = vsel %vm1475, %v1843, %v1844
      %v1876 = vsel %vm1475, %v1842, %v1843
      %v1877 = vsel %vm1475, %v1841, %v1842
      %v1878 = vsel %vm1475, %v1840, %v1841
      %v1879 = vsel %vm1475, %v1839, %v1840
      %v1880 = vsel %vm1475, %v1838, %v1839
      %v1881 = vsel %vm1475, %v1837, %v1838
      %v1882 = vsel %vm1475, %v1836, %v1837
      %v1883 = vsel %vm1475, %v1835, %v1836
      %v1884 = vsel %vm1475, %v1834, %v1835
      %v1885 = vsel %vm1475, %v1833, %v1834
      %v1886 = vsel %vm1475, %v1832, %v1833
      %v1887 = vsel %vm1475, %v1831, %v1832
      %v1888 = vsel %vm1475, %v1830, %v1831
      %v1889 = vsel %vm1475, %v1829, %v1830
      %v1890 = vsel %vm1475, %v1828, %v1829
      %v1891 = vsel %vm1475, %v1827, %v1828
      %v1892 = vsel %vm1475, %v1826, %v1827
      %v1893 = vsel %vm1475, %v1825, %v1826
      %v1894 = vsel %vm1475, %v1824, %v1825
      %v1895 = vsel %vm1475, %v1823, %v1824
      %v1896 = vsel %vm1475, %v1822, %v1823
      %v1897 = vsel %vm1475, %v1821, %v1822
      %v1898 = vsel %vm1475, %v1820, %v1821
      %v1899 = vsel %vm1475, %v1819, %v1820
      %v1900 = vsel %vm1475, %v1818, %v1819
      %v1901 = vsel %vm1475, %v1817, %v1818
      %v1902 = vsel %vm1475, %v1816, %v1817
      %v1903 = vsel %vm1475, %v1815, %v1816
      %v1904 = vsel %vm1475, %v1814, %v1815
      %v1905 = vsel %vm1475, %v1813, %v1814
      %v1906 = vsel %vm1475, %v1812, %v1813
      %v1907 = vsel %vm1475, %v1859, %v1812
      %1908 = vst [vmem:[#allocation3 + $0x28] sm:$0xff] %v1906
      %1909 = vst [vmem:[#allocation3 + $0x70] sm:$0xff] %v1905
      %1910 = vst [vmem:[#allocation3 + $0xb8] sm:$0xff] %v1904
      %1911 = vst [vmem:[#allocation3 + $0x100] sm:$0xff] %v1903
      %1912 = vst [vmem:[#allocation3 + $0x148] sm:$0xff] %v1902
      %1913 = vst [vmem:[#allocation3 + $0x190] sm:$0xff] %v1901
      %1914 = vst [vmem:[#allocation3 + $0x1d8] sm:$0xff] %v1900
      %1915 = vst [vmem:[#allocation3 + $0x220] sm:$0xff] %v1899
      %1916 = vst [vmem:[#allocation3 + $0x268] sm:$0xff] %v1898
      %1917 = vst [vmem:[#allocation3 + $0x2b0] sm:$0xff] %v1897
      %1918 = vst [vmem:[#allocation3 + $0x2f8] sm:$0xff] %v1896
      %1919 = vst [vmem:[#allocation3 + $0x340] sm:$0xff] %v1895
      %1920 = vst [vmem:[#allocation3 + $0x388] sm:$0xff] %v1894
      %1921 = vst [vmem:[#allocation3 + $0x3d0] sm:$0xff] %v1893
      %1922 = vst [vmem:[#allocation3 + $0x418] sm:$0xff] %v1892
      %1923 = vst [vmem:[#allocation3 + $0x460] sm:$0xff] %v1891
      %1924 = vst [vmem:[#allocation3 + $0x4a8] sm:$0xff] %v1890
      %1925 = vst [vmem:[#allocation3 + $0x4f0] sm:$0xff] %v1889
      %1926 = vst [vmem:[#allocation3 + $0x538] sm:$0xff] %v1888
      %1927 = vst [vmem:[#allocation3 + $0x580] sm:$0xff] %v1887
      %1928 = vst [vmem:[#allocation3 + $0x5c8] sm:$0xff] %v1886
      %1929 = vst [vmem:[#allocation3 + $0x610] sm:$0xff] %v1885
      %1930 = vst [vmem:[#allocation3 + $0x658] sm:$0xff] %v1884
      %1931 = vst [vmem:[#allocation3 + $0x6a0] sm:$0xff] %v1883
      %1932 = vst [vmem:[#allocation3 + $0x6e8] sm:$0xff] %v1882
      %1933 = vst [vmem:[#allocation3 + $0x730] sm:$0xff] %v1881
      %1934 = vst [vmem:[#allocation3 + $0x778] sm:$0xff] %v1880
      %1935 = vst [vmem:[#allocation3 + $0x7c0] sm:$0xff] %v1879
      %1936 = vst [vmem:[#allocation3 + $0x808] sm:$0xff] %v1878
      %1937 = vst [vmem:[#allocation3 + $0x850] sm:$0xff] %v1877
      %1938 = vst [vmem:[#allocation3 + $0x898] sm:$0xff] %v1876
      %1939 = vst [vmem:[#allocation3 + $0x8e0] sm:$0xff] %v1875
      %1940 = vst [vmem:[#allocation3 + $0x928] sm:$0xff] %v1874
      %1941 = vst [vmem:[#allocation3 + $0x970] sm:$0xff] %v1873
      %1942 = vst [vmem:[#allocation3 + $0x9b8] sm:$0xff] %v1872
      %1943 = vst [vmem:[#allocation3 + $0xa00] sm:$0xff] %v1871
      %1944 = vst [vmem:[#allocation3 + $0xa48] sm:$0xff] %v1870
      %1945 = vst [vmem:[#allocation3 + $0xa90] sm:$0xff] %v1869
      %1946 = vst [vmem:[#allocation3 + $0xad8] sm:$0xff] %v1868
      %1947 = vst [vmem:[#allocation3 + $0xb20] sm:$0xff] %v1867
      %1948 = vst [vmem:[#allocation3 + $0xb68] sm:$0xff] %v1866
      %1949 = vst [vmem:[#allocation3 + $0xbb0] sm:$0xff] %v1865
      %1950 = vst [vmem:[#allocation3 + $0xbf8] sm:$0xff] %v1864
      %1951 = vst [vmem:[#allocation3 + $0xc40] sm:$0xff] %v1863
      %1952 = vst [vmem:[#allocation3 + $0xc88] sm:$0xff] %v1862
      %1953 = vst [vmem:[#allocation3 + $0xcd0] sm:$0xff] %v1861
      %1954 = vst [vmem:[#allocation3 + $0xd18] sm:$0xff] %v1860
      %1955 = vst [vmem:[#allocation3 + $0xd60] sm:$0xff] %v1907
      %v1956 = vld [vmem:[%s219 + $0x30] sm:$0xff]
      %v1957 = vld [vmem:[%s219 + $0x38] sm:$0xff]
      %v1958 = vld [vmem:[%s219 + $0x40] sm:$0xff]
      %v1959 = vld [vmem:[%s219 + $0x48] sm:$0xff]
      %v1960 = vld [vmem:[%s219 + $0x50] sm:$0xff]
      %v1961 = vld [vmem:[%s219 + $0x58] sm:$0xff]
      %v1962 = vld [vmem:[%s219 + $0x60] sm:$0xff]
      %v1963 = vld [vmem:[%s219 + $0x68] sm:$0xff]
      %v1964 = vld [vmem:[%s219 + $0x70] sm:$0xff]
      %v1965 = vld [vmem:[%s219 + $0x78] sm:$0xff]
      %v1966 = vld [vmem:[%s219 + $0x80] sm:$0xff]
      %v1967 = vld [vmem:[%s219 + $0x88] sm:$0xff]
      %v1968 = vld [vmem:[%s219 + $0x90] sm:$0xff]
      %v1969 = vld [vmem:[%s219 + $0x98] sm:$0xff]
      %v1970 = vld [vmem:[%s219 + $0xa0] sm:$0xff]
      %v1971 = vld [vmem:[%s219 + $0xa8] sm:$0xff]
      %v1972 = vld [vmem:[%s219 + $0xb0] sm:$0xff]
      %v1973 = vld [vmem:[%s219 + $0xb8] sm:$0xff]
      %v1974 = vld [vmem:[%s219 + $0xc0] sm:$0xff]
      %v1975 = vld [vmem:[%s219 + $0xc8] sm:$0xff]
      %v1976 = vld [vmem:[%s219 + $0xd0] sm:$0xff]
      %v1977 = vld [vmem:[%s219 + $0xd8] sm:$0xff]
      %v1978 = vld [vmem:[%s219 + $0xe0] sm:$0xff]
      %v1979 = vld [vmem:[%s219 + $0xe8] sm:$0xff]
      %v1980 = vld [vmem:[%s219 + $0xf0] sm:$0xff]
      %v1981 = vld [vmem:[%s219 + $0xf8] sm:$0xff]
      %v1982 = vld [vmem:[%s219 + $0x100] sm:$0xff]
      %v1983 = vld [vmem:[%s219 + $0x108] sm:$0xff]
      %v1984 = vld [vmem:[%s219 + $0x110] sm:$0xff]
      %v1985 = vld [vmem:[%s219 + $0x118] sm:$0xff]
      %v1986 = vld [vmem:[%s219 + $0x120] sm:$0xff]
      %v1987 = vld [vmem:[%s219 + $0x128] sm:$0xff]
      %v1988 = vld [vmem:[%s219 + $0x130] sm:$0xff]
      %v1989 = vld [vmem:[%s219 + $0x138] sm:$0xff]
      %v1990 = vld [vmem:[%s219 + $0x140] sm:$0xff]
      %v1991 = vld [vmem:[%s219 + $0x148] sm:$0xff]
      %v1992 = vld [vmem:[%s219 + $0x150] sm:$0xff]
      %v1993 = vld [vmem:[%s219 + $0x158] sm:$0xff]
      %v1994 = vld [vmem:[%s219 + $0x160] sm:$0xff]
      %v1995 = vld [vmem:[%s219 + $0x168] sm:$0xff]
      %v1996 = vld [vmem:[%s219 + $0x170] sm:$0xff]
      %v1997 = vld [vmem:[%s219 + $0x178] sm:$0xff]
      %v1998 = vld [vmem:[%s219 + $0x180] sm:$0xff]
      %v1999 = vld [vmem:[%s219 + $0x188] sm:$0xff]
      %v2000 = vld [vmem:[%s219 + $0x190] sm:$0xff]
      %v2001 = vld [vmem:[%s219 + $0x198] sm:$0xff]
      %v2002 = vld [vmem:[%s219 + $0x1a0] sm:$0xff]
      %v2003 = vld [vmem:[%s219 + $0x1a8] sm:$0xff]
      %v2004 = vrot.slane %v1956, 7
      %v2005 = vrot.slane %v1957, 7
      %v2006 = vrot.slane %v1958, 7
      %v2007 = vrot.slane %v1959, 7
      %v2008 = vrot.slane %v1960, 7
      %v2009 = vrot.slane %v1961, 7
      %v2010 = vrot.slane %v1962, 7
      %v2011 = vrot.slane %v1963, 7
      %v2012 = vrot.slane %v1964, 7
      %v2013 = vrot.slane %v1965, 7
      %v2014 = vrot.slane %v1966, 7
      %v2015 = vrot.slane %v1967, 7
      %v2016 = vrot.slane %v1968, 7
      %v2017 = vrot.slane %v1969, 7
      %v2018 = vrot.slane %v1970, 7
      %v2019 = vrot.slane %v1971, 7
      %v2020 = vrot.slane %v1972, 7
      %v2021 = vrot.slane %v1973, 7
      %v2022 = vrot.slane %v1974, 7
      %v2023 = vrot.slane %v1975, 7
      %v2024 = vrot.slane %v1976, 7
      %v2025 = vrot.slane %v1977, 7
      %v2026 = vrot.slane %v1978, 7
      %v2027 = vrot.slane %v1979, 7
      %v2028 = vrot.slane %v1980, 7
      %v2029 = vrot.slane %v1981, 7
      %v2030 = vrot.slane %v1982, 7
      %v2031 = vrot.slane %v1983, 7
      %v2032 = vrot.slane %v1984, 7
      %v2033 = vrot.slane %v1985, 7
      %v2034 = vrot.slane %v1986, 7
      %v2035 = vrot.slane %v1987, 7
      %v2036 = vrot.slane %v1988, 7
      %v2037 = vrot.slane %v1989, 7
      %v2038 = vrot.slane %v1990, 7
      %v2039 = vrot.slane %v1991, 7
      %v2040 = vrot.slane %v1992, 7
      %v2041 = vrot.slane %v1993, 7
      %v2042 = vrot.slane %v1994, 7
      %v2043 = vrot.slane %v1995, 7
      %v2044 = vrot.slane %v1996, 7
      %v2045 = vrot.slane %v1997, 7
      %v2046 = vrot.slane %v1998, 7
      %v2047 = vrot.slane %v1999, 7
      %v2048 = vrot.slane %v2000, 7
      %v2049 = vrot.slane %v2001, 7
      %v2050 = vrot.slane %v2002, 7
      %v2051 = vrot.slane %v2003, 7
      %v2052 = vsel %vm1282, %v2050, %v2051
      %v2053 = vsel %vm1282, %v2049, %v2050
      %v2054 = vsel %vm1282, %v2048, %v2049
      %v2055 = vsel %vm1282, %v2047, %v2048
      %v2056 = vsel %vm1282, %v2046, %v2047
      %v2057 = vsel %vm1282, %v2045, %v2046
      %v2058 = vsel %vm1282, %v2044, %v2045
      %v2059 = vsel %vm1282, %v2043, %v2044
      %v2060 = vsel %vm1282, %v2042, %v2043
      %v2061 = vsel %vm1282, %v2041, %v2042
      %v2062 = vsel %vm1282, %v2040, %v2041
      %v2063 = vsel %vm1282, %v2039, %v2040
      %v2064 = vsel %vm1282, %v2038, %v2039
      %v2065 = vsel %vm1282, %v2037, %v2038
      %v2066 = vsel %vm1282, %v2036, %v2037
      %v2067 = vsel %vm1282, %v2035, %v2036
      %v2068 = vsel %vm1282, %v2034, %v2035
      %v2069 = vsel %vm1282, %v2033, %v2034
      %v2070 = vsel %vm1282, %v2032, %v2033
      %v2071 = vsel %vm1282, %v2031, %v2032
      %v2072 = vsel %vm1282, %v2030, %v2031
      %v2073 = vsel %vm1282, %v2029, %v2030
      %v2074 = vsel %vm1282, %v2028, %v2029
      %v2075 = vsel %vm1282, %v2027, %v2028
      %v2076 = vsel %vm1282, %v2026, %v2027
      %v2077 = vsel %vm1282, %v2025, %v2026
      %v2078 = vsel %vm1282, %v2024, %v2025
      %v2079 = vsel %vm1282, %v2023, %v2024
      %v2080 = vsel %vm1282, %v2022, %v2023
      %v2081 = vsel %vm1282, %v2021, %v2022
      %v2082 = vsel %vm1282, %v2020, %v2021
      %v2083 = vsel %vm1282, %v2019, %v2020
      %v2084 = vsel %vm1282, %v2018, %v2019
      %v2085 = vsel %vm1282, %v2017, %v2018
      %v2086 = vsel %vm1282, %v2016, %v2017
      %v2087 = vsel %vm1282, %v2015, %v2016
      %v2088 = vsel %vm1282, %v2014, %v2015
      %v2089 = vsel %vm1282, %v2013, %v2014
      %v2090 = vsel %vm1282, %v2012, %v2013
      %v2091 = vsel %vm1282, %v2011, %v2012
      %v2092 = vsel %vm1282, %v2010, %v2011
      %v2093 = vsel %vm1282, %v2009, %v2010
      %v2094 = vsel %vm1282, %v2008, %v2009
      %v2095 = vsel %vm1282, %v2007, %v2008
      %v2096 = vsel %vm1282, %v2006, %v2007
      %v2097 = vsel %vm1282, %v2005, %v2006
      %v2098 = vsel %vm1282, %v2004, %v2005
      %v2099 = vsel %vm1282, %v2051, %v2004
      %2100 = vst [vmem:[#allocation3 + $0x30] sm:$0xff] %v2099
      %2101 = vst [vmem:[#allocation3 + $0x78] sm:$0xff] %v2098
      %2102 = vst [vmem:[#allocation3 + $0xc0] sm:$0xff] %v2097
      %2103 = vst [vmem:[#allocation3 + $0x108] sm:$0xff] %v2096
      %2104 = vst [vmem:[#allocation3 + $0x150] sm:$0xff] %v2095
      %2105 = vst [vmem:[#allocation3 + $0x198] sm:$0xff] %v2094
      %2106 = vst [vmem:[#allocation3 + $0x1e0] sm:$0xff] %v2093
      %2107 = vst [vmem:[#allocation3 + $0x228] sm:$0xff] %v2092
      %2108 = vst [vmem:[#allocation3 + $0x270] sm:$0xff] %v2091
      %2109 = vst [vmem:[#allocation3 + $0x2b8] sm:$0xff] %v2090
      %2110 = vst [vmem:[#allocation3 + $0x300] sm:$0xff] %v2089
      %2111 = vst [vmem:[#allocation3 + $0x348] sm:$0xff] %v2088
      %2112 = vst [vmem:[#allocation3 + $0x390] sm:$0xff] %v2087
      %2113 = vst [vmem:[#allocation3 + $0x3d8] sm:$0xff] %v2086
      %2114 = vst [vmem:[#allocation3 + $0x420] sm:$0xff] %v2085
      %2115 = vst [vmem:[#allocation3 + $0x468] sm:$0xff] %v2084
      %2116 = vst [vmem:[#allocation3 + $0x4b0] sm:$0xff] %v2083
      %2117 = vst [vmem:[#allocation3 + $0x4f8] sm:$0xff] %v2082
      %2118 = vst [vmem:[#allocation3 + $0x540] sm:$0xff] %v2081
      %2119 = vst [vmem:[#allocation3 + $0x588] sm:$0xff] %v2080
      %2120 = vst [vmem:[#allocation3 + $0x5d0] sm:$0xff] %v2079
      %2121 = vst [vmem:[#allocation3 + $0x618] sm:$0xff] %v2078
      %2122 = vst [vmem:[#allocation3 + $0x660] sm:$0xff] %v2077
      %2123 = vst [vmem:[#allocation3 + $0x6a8] sm:$0xff] %v2076
      %2124 = vst [vmem:[#allocation3 + $0x6f0] sm:$0xff] %v2075
      %2125 = vst [vmem:[#allocation3 + $0x738] sm:$0xff] %v2074
      %2126 = vst [vmem:[#allocation3 + $0x780] sm:$0xff] %v2073
      %2127 = vst [vmem:[#allocation3 + $0x7c8] sm:$0xff] %v2072
      %2128 = vst [vmem:[#allocation3 + $0x810] sm:$0xff] %v2071
      %2129 = vst [vmem:[#allocation3 + $0x858] sm:$0xff] %v2070
      %2130 = vst [vmem:[#allocation3 + $0x8a0] sm:$0xff] %v2069
      %2131 = vst [vmem:[#allocation3 + $0x8e8] sm:$0xff] %v2068
      %2132 = vst [vmem:[#allocation3 + $0x930] sm:$0xff] %v2067
      %2133 = vst [vmem:[#allocation3 + $0x978] sm:$0xff] %v2066
      %2134 = vst [vmem:[#allocation3 + $0x9c0] sm:$0xff] %v2065
      %2135 = vst [vmem:[#allocation3 + $0xa08] sm:$0xff] %v2064
      %2136 = vst [vmem:[#allocation3 + $0xa50] sm:$0xff] %v2063
      %2137 = vst [vmem:[#allocation3 + $0xa98] sm:$0xff] %v2062
      %2138 = vst [vmem:[#allocation3 + $0xae0] sm:$0xff] %v2061
      %2139 = vst [vmem:[#allocation3 + $0xb28] sm:$0xff] %v2060
      %2140 = vst [vmem:[#allocation3 + $0xb70] sm:$0xff] %v2059
      %2141 = vst [vmem:[#allocation3 + $0xbb8] sm:$0xff] %v2058
      %2142 = vst [vmem:[#allocation3 + $0xc00] sm:$0xff] %v2057
      %2143 = vst [vmem:[#allocation3 + $0xc48] sm:$0xff] %v2056
      %2144 = vst [vmem:[#allocation3 + $0xc90] sm:$0xff] %v2055
      %2145 = vst [vmem:[#allocation3 + $0xcd8] sm:$0xff] %v2054
      %2146 = vst [vmem:[#allocation3 + $0xd20] sm:$0xff] %v2053
      %2147 = vst [vmem:[#allocation3 + $0xd68] sm:$0xff] %v2052
      %2148 = vst [vmem:[#allocation3 + $0x38] sm:$0xff] %v1956
      %2149 = vst [vmem:[#allocation3 + $0x80] sm:$0xff] %v1957
      %2150 = vst [vmem:[#allocation3 + $0xc8] sm:$0xff] %v1958
      %2151 = vst [vmem:[#allocation3 + $0x110] sm:$0xff] %v1959
      %2152 = vst [vmem:[#allocation3 + $0x158] sm:$0xff] %v1960
      %2153 = vst [vmem:[#allocation3 + $0x1a0] sm:$0xff] %v1961
      %2154 = vst [vmem:[#allocation3 + $0x1e8] sm:$0xff] %v1962
      %2155 = vst [vmem:[#allocation3 + $0x230] sm:$0xff] %v1963
      %2156 = vst [vmem:[#allocation3 + $0x278] sm:$0xff] %v1964
      %2157 = vst [vmem:[#allocation3 + $0x2c0] sm:$0xff] %v1965
      %2158 = vst [vmem:[#allocation3 + $0x308] sm:$0xff] %v1966
      %2159 = vst [vmem:[#allocation3 + $0x350] sm:$0xff] %v1967
      %2160 = vst [vmem:[#allocation3 + $0x398] sm:$0xff] %v1968
      %2161 = vst [vmem:[#allocation3 + $0x3e0] sm:$0xff] %v1969
      %2162 = vst [vmem:[#allocation3 + $0x428] sm:$0xff] %v1970
      %2163 = vst [vmem:[#allocation3 + $0x470] sm:$0xff] %v1971
      %2164 = vst [vmem:[#allocation3 + $0x4b8] sm:$0xff] %v1972
      %2165 = vst [vmem:[#allocation3 + $0x500] sm:$0xff] %v1973
      %2166 = vst [vmem:[#allocation3 + $0x548] sm:$0xff] %v1974
      %2167 = vst [vmem:[#allocation3 + $0x590] sm:$0xff] %v1975
      %2168 = vst [vmem:[#allocation3 + $0x5d8] sm:$0xff] %v1976
      %2169 = vst [vmem:[#allocation3 + $0x620] sm:$0xff] %v1977
      %2170 = vst [vmem:[#allocation3 + $0x668] sm:$0xff] %v1978
      %2171 = vst [vmem:[#allocation3 + $0x6b0] sm:$0xff] %v1979
      %2172 = vst [vmem:[#allocation3 + $0x6f8] sm:$0xff] %v1980
      %2173 = vst [vmem:[#allocation3 + $0x740] sm:$0xff] %v1981
      %2174 = vst [vmem:[#allocation3 + $0x788] sm:$0xff] %v1982
      %2175 = vst [vmem:[#allocation3 + $0x7d0] sm:$0xff] %v1983
      %2176 = vst [vmem:[#allocation3 + $0x818] sm:$0xff] %v1984
      %2177 = vst [vmem:[#allocation3 + $0x860] sm:$0xff] %v1985
      %2178 = vst [vmem:[#allocation3 + $0x8a8] sm:$0xff] %v1986
      %2179 = vst [vmem:[#allocation3 + $0x8f0] sm:$0xff] %v1987
      %2180 = vst [vmem:[#allocation3 + $0x938] sm:$0xff] %v1988
      %2181 = vst [vmem:[#allocation3 + $0x980] sm:$0xff] %v1989
      %2182 = vst [vmem:[#allocation3 + $0x9c8] sm:$0xff] %v1990
      %2183 = vst [vmem:[#allocation3 + $0xa10] sm:$0xff] %v1991
      %2184 = vst [vmem:[#allocation3 + $0xa58] sm:$0xff] %v1992
      %2185 = vst [vmem:[#allocation3 + $0xaa0] sm:$0xff] %v1993
      %2186 = vst [vmem:[#allocation3 + $0xae8] sm:$0xff] %v1994
      %2187 = vst [vmem:[#allocation3 + $0xb30] sm:$0xff] %v1995
      %2188 = vst [vmem:[#allocation3 + $0xb78] sm:$0xff] %v1996
      %2189 = vst [vmem:[#allocation3 + $0xbc0] sm:$0xff] %v1997
      %2190 = vst [vmem:[#allocation3 + $0xc08] sm:$0xff] %v1998
      %2191 = vst [vmem:[#allocation3 + $0xc50] sm:$0xff] %v1999
      %2192 = vst [vmem:[#allocation3 + $0xc98] sm:$0xff] %v2000
      %2193 = vst [vmem:[#allocation3 + $0xce0] sm:$0xff] %v2001
      %2194 = vst [vmem:[#allocation3 + $0xd28] sm:$0xff] %v2002
      %2195 = vst [vmem:[#allocation3 + $0xd70] sm:$0xff] %v2003
      %v2196 = vrot.slane %v1956, 1
      %v2197 = vrot.slane %v1957, 1
      %v2198 = vrot.slane %v1958, 1
      %v2199 = vrot.slane %v1959, 1
      %v2200 = vrot.slane %v1960, 1
      %v2201 = vrot.slane %v1961, 1
      %v2202 = vrot.slane %v1962, 1
      %v2203 = vrot.slane %v1963, 1
      %v2204 = vrot.slane %v1964, 1
      %v2205 = vrot.slane %v1965, 1
      %v2206 = vrot.slane %v1966, 1
      %v2207 = vrot.slane %v1967, 1
      %v2208 = vrot.slane %v1968, 1
      %v2209 = vrot.slane %v1969, 1
      %v2210 = vrot.slane %v1970, 1
      %v2211 = vrot.slane %v1971, 1
      %v2212 = vrot.slane %v1972, 1
      %v2213 = vrot.slane %v1973, 1
      %v2214 = vrot.slane %v1974, 1
      %v2215 = vrot.slane %v1975, 1
      %v2216 = vrot.slane %v1976, 1
      %v2217 = vrot.slane %v1977, 1
      %v2218 = vrot.slane %v1978, 1
      %v2219 = vrot.slane %v1979, 1
      %v2220 = vrot.slane %v1980, 1
      %v2221 = vrot.slane %v1981, 1
      %v2222 = vrot.slane %v1982, 1
      %v2223 = vrot.slane %v1983, 1
      %v2224 = vrot.slane %v1984, 1
      %v2225 = vrot.slane %v1985, 1
      %v2226 = vrot.slane %v1986, 1
      %v2227 = vrot.slane %v1987, 1
      %v2228 = vrot.slane %v1988, 1
      %v2229 = vrot.slane %v1989, 1
      %v2230 = vrot.slane %v1990, 1
      %v2231 = vrot.slane %v1991, 1
      %v2232 = vrot.slane %v1992, 1
      %v2233 = vrot.slane %v1993, 1
      %v2234 = vrot.slane %v1994, 1
      %v2235 = vrot.slane %v1995, 1
      %v2236 = vrot.slane %v1996, 1
      %v2237 = vrot.slane %v1997, 1
      %v2238 = vrot.slane %v1998, 1
      %v2239 = vrot.slane %v1999, 1
      %v2240 = vrot.slane %v2000, 1
      %v2241 = vrot.slane %v2001, 1
      %v2242 = vrot.slane %v2002, 1
      %v2243 = vrot.slane %v2003, 1
      %v2244 = vsel %vm1475, %v2242, %v2243
      %v2245 = vsel %vm1475, %v2241, %v2242
      %v2246 = vsel %vm1475, %v2240, %v2241
      %v2247 = vsel %vm1475, %v2239, %v2240
      %v2248 = vsel %vm1475, %v2238, %v2239
      %v2249 = vsel %vm1475, %v2237, %v2238
      %v2250 = vsel %vm1475, %v2236, %v2237
      %v2251 = vsel %vm1475, %v2235, %v2236
      %v2252 = vsel %vm1475, %v2234, %v2235
      %v2253 = vsel %vm1475, %v2233, %v2234
      %v2254 = vsel %vm1475, %v2232, %v2233
      %v2255 = vsel %vm1475, %v2231, %v2232
      %v2256 = vsel %vm1475, %v2230, %v2231
      %v2257 = vsel %vm1475, %v2229, %v2230
      %v2258 = vsel %vm1475, %v2228, %v2229
      %v2259 = vsel %vm1475, %v2227, %v2228
      %v2260 = vsel %vm1475, %v2226, %v2227
      %v2261 = vsel %vm1475, %v2225, %v2226
      %v2262 = vsel %vm1475, %v2224, %v2225
      %v2263 = vsel %vm1475, %v2223, %v2224
      %v2264 = vsel %vm1475, %v2222, %v2223
      %v2265 = vsel %vm1475, %v2221, %v2222
      %v2266 = vsel %vm1475, %v2220, %v2221
      %v2267 = vsel %vm1475, %v2219, %v2220
      %v2268 = vsel %vm1475, %v2218, %v2219
      %v2269 = vsel %vm1475, %v2217, %v2218
      %v2270 = vsel %vm1475, %v2216, %v2217
      %v2271 = vsel %vm1475, %v2215, %v2216
      %v2272 = vsel %vm1475, %v2214, %v2215
      %v2273 = vsel %vm1475, %v2213, %v2214
      %v2274 = vsel %vm1475, %v2212, %v2213
      %v2275 = vsel %vm1475, %v2211, %v2212
      %v2276 = vsel %vm1475, %v2210, %v2211
      %v2277 = vsel %vm1475, %v2209, %v2210
      %v2278 = vsel %vm1475, %v2208, %v2209
      %v2279 = vsel %vm1475, %v2207, %v2208
      %v2280 = vsel %vm1475, %v2206, %v2207
      %v2281 = vsel %vm1475, %v2205, %v2206
      %v2282 = vsel %vm1475, %v2204, %v2205
      %v2283 = vsel %vm1475, %v2203, %v2204
      %v2284 = vsel %vm1475, %v2202, %v2203
      %v2285 = vsel %vm1475, %v2201, %v2202
      %v2286 = vsel %vm1475, %v2200, %v2201
      %v2287 = vsel %vm1475, %v2199, %v2200
      %v2288 = vsel %vm1475, %v2198, %v2199
      %v2289 = vsel %vm1475, %v2197, %v2198
      %v2290 = vsel %vm1475, %v2196, %v2197
      %v2291 = vsel %vm1475, %v2243, %v2196
      %2292 = vst [vmem:[#allocation3 + $0x40] sm:$0xff] %v2290
      %2293 = vst [vmem:[#allocation3 + $0x88] sm:$0xff] %v2289
      %2294 = vst [vmem:[#allocation3 + $0xd0] sm:$0xff] %v2288
      %2295 = vst [vmem:[#allocation3 + $0x118] sm:$0xff] %v2287
      %2296 = vst [vmem:[#allocation3 + $0x160] sm:$0xff] %v2286
      %2297 = vst [vmem:[#allocation3 + $0x1a8] sm:$0xff] %v2285
      %2298 = vst [vmem:[#allocation3 + $0x1f0] sm:$0xff] %v2284
      %2299 = vst [vmem:[#allocation3 + $0x238] sm:$0xff] %v2283
      %2300 = vst [vmem:[#allocation3 + $0x280] sm:$0xff] %v2282
      %2301 = vst [vmem:[#allocation3 + $0x2c8] sm:$0xff] %v2281
      %2302 = vst [vmem:[#allocation3 + $0x310] sm:$0xff] %v2280
      %2303 = vst [vmem:[#allocation3 + $0x358] sm:$0xff] %v2279
      %2304 = vst [vmem:[#allocation3 + $0x3a0] sm:$0xff] %v2278
      %2305 = vst [vmem:[#allocation3 + $0x3e8] sm:$0xff] %v2277
      %2306 = vst [vmem:[#allocation3 + $0x430] sm:$0xff] %v2276
      %2307 = vst [vmem:[#allocation3 + $0x478] sm:$0xff] %v2275
      %2308 = vst [vmem:[#allocation3 + $0x4c0] sm:$0xff] %v2274
      %2309 = vst [vmem:[#allocation3 + $0x508] sm:$0xff] %v2273
      %2310 = vst [vmem:[#allocation3 + $0x550] sm:$0xff] %v2272
      %2311 = vst [vmem:[#allocation3 + $0x598] sm:$0xff] %v2271
      %2312 = vst [vmem:[#allocation3 + $0x5e0] sm:$0xff] %v2270
      %2313 = vst [vmem:[#allocation3 + $0x628] sm:$0xff] %v2269
      %2314 = vst [vmem:[#allocation3 + $0x670] sm:$0xff] %v2268
      %2315 = vst [vmem:[#allocation3 + $0x6b8] sm:$0xff] %v2267
      %2316 = vst [vmem:[#allocation3 + $0x700] sm:$0xff] %v2266
      %2317 = vst [vmem:[#allocation3 + $0x748] sm:$0xff] %v2265
      %2318 = vst [vmem:[#allocation3 + $0x790] sm:$0xff] %v2264
      %2319 = vst [vmem:[#allocation3 + $0x7d8] sm:$0xff] %v2263
      %2320 = vst [vmem:[#allocation3 + $0x820] sm:$0xff] %v2262
      %2321 = vst [vmem:[#allocation3 + $0x868] sm:$0xff] %v2261
      %2322 = vst [vmem:[#allocation3 + $0x8b0] sm:$0xff] %v2260
      %2323 = vst [vmem:[#allocation3 + $0x8f8] sm:$0xff] %v2259
      %2324 = vst [vmem:[#allocation3 + $0x940] sm:$0xff] %v2258
      %2325 = vst [vmem:[#allocation3 + $0x988] sm:$0xff] %v2257
      %2326 = vst [vmem:[#allocation3 + $0x9d0] sm:$0xff] %v2256
      %2327 = vst [vmem:[#allocation3 + $0xa18] sm:$0xff] %v2255
      %2328 = vst [vmem:[#allocation3 + $0xa60] sm:$0xff] %v2254
      %2329 = vst [vmem:[#allocation3 + $0xaa8] sm:$0xff] %v2253
      %2330 = vst [vmem:[#allocation3 + $0xaf0] sm:$0xff] %v2252
      %2331 = vst [vmem:[#allocation3 + $0xb38] sm:$0xff] %v2251
      %2332 = vst [vmem:[#allocation3 + $0xb80] sm:$0xff] %v2250
      %2333 = vst [vmem:[#allocation3 + $0xbc8] sm:$0xff] %v2249
      %2334 = vst [vmem:[#allocation3 + $0xc10] sm:$0xff] %v2248
      %2335 = vst [vmem:[#allocation3 + $0xc58] sm:$0xff] %v2247
      %2336 = vst [vmem:[#allocation3 + $0xca0] sm:$0xff] %v2246
      %2337 = vst [vmem:[#allocation3 + $0xce8] sm:$0xff] %v2245
      %2338 = vst [vmem:[#allocation3 + $0xd30] sm:$0xff] %v2244
      %2339 = vst [vmem:[#allocation3 + $0xd78] sm:$0xff] %v2291
      %v2340 = vld [vmem:[#allocation3] sm:$0xff]
      %v2341 = vld [vmem:[#allocation3 + $0x8] sm:$0xff]
      %v2342 = vld [vmem:[#allocation3 + $0x10] sm:$0xff]
      %v2343 = vld [vmem:[#allocation3 + $0x18] sm:$0xff]
      %v2344 = vld [vmem:[#allocation3 + $0x20] sm:$0xff]
      %v2345 = vld [vmem:[#allocation3 + $0x28] sm:$0xff]
      %v2346 = vld [vmem:[#allocation3 + $0x30] sm:$0xff]
      %v2347 = vld [vmem:[#allocation3 + $0x38] sm:$0xff]
      %v2348 = vld [vmem:[#allocation3 + $0x40] sm:$0xff]
      %v2349 = vld [vmem:[#allocation3 + $0x48] sm:$0xff]
      %v2350 = vld [vmem:[#allocation3 + $0x50] sm:$0xff]
      %v2351 = vld [vmem:[#allocation3 + $0x58] sm:$0xff]
      %v2352 = vld [vmem:[#allocation3 + $0x60] sm:$0xff]
      %v2353 = vld [vmem:[#allocation3 + $0x68] sm:$0xff]
      %v2354 = vld [vmem:[#allocation3 + $0x70] sm:$0xff]
      %v2355 = vld [vmem:[#allocation3 + $0x78] sm:$0xff]
      %v2356 = vld [vmem:[#allocation3 + $0x80] sm:$0xff]
      %v2357 = vld [vmem:[#allocation3 + $0x88] sm:$0xff]
      %v2358 = vld [vmem:[#allocation3 + $0x90] sm:$0xff]
      %v2359 = vld [vmem:[#allocation3 + $0x98] sm:$0xff]
      %v2360 = vld [vmem:[#allocation3 + $0xa0] sm:$0xff]
      %v2361 = vld [vmem:[#allocation3 + $0xa8] sm:$0xff]
      %v2362 = vld [vmem:[#allocation3 + $0xb0] sm:$0xff]
      %v2363 = vld [vmem:[#allocation3 + $0xb8] sm:$0xff]
      %v2364 = vld [vmem:[#allocation3 + $0xc0] sm:$0xff]
      %v2365 = vld [vmem:[#allocation3 + $0xc8] sm:$0xff]
      %v2366 = vld [vmem:[#allocation3 + $0xd0] sm:$0xff]
      %v2367 = vld [vmem:[#allocation3 + $0xd8] sm:$0xff]
      %v2368 = vld [vmem:[#allocation3 + $0xe0] sm:$0xff]
      %v2369 = vld [vmem:[#allocation3 + $0xe8] sm:$0xff]
      %v2370 = vld [vmem:[#allocation3 + $0xf0] sm:$0xff]
      %v2371 = vld [vmem:[#allocation3 + $0xf8] sm:$0xff]
      %v2372 = vld [vmem:[#allocation3 + $0x100] sm:$0xff]
      %v2373 = vld [vmem:[#allocation3 + $0x108] sm:$0xff]
      %v2374 = vld [vmem:[#allocation3 + $0x110] sm:$0xff]
      %v2375 = vld [vmem:[#allocation3 + $0x118] sm:$0xff]
      %v2376 = vld [vmem:[#allocation3 + $0x120] sm:$0xff]
      %v2377 = vld [vmem:[#allocation3 + $0x128] sm:$0xff]
      %v2378 = vld [vmem:[#allocation3 + $0x130] sm:$0xff]
      %v2379 = vld [vmem:[#allocation3 + $0x138] sm:$0xff]
      %v2380 = vld [vmem:[#allocation3 + $0x140] sm:$0xff]
      %v2381 = vld [vmem:[#allocation3 + $0x148] sm:$0xff]
      %v2382 = vld [vmem:[#allocation3 + $0x150] sm:$0xff]
      %v2383 = vld [vmem:[#allocation3 + $0x158] sm:$0xff]
      %v2384 = vld [vmem:[#allocation3 + $0x160] sm:$0xff]
      %v2385 = vld [vmem:[#allocation3 + $0x168] sm:$0xff]
      %v2386 = vld [vmem:[#allocation3 + $0x170] sm:$0xff]
      %v2387 = vld [vmem:[#allocation3 + $0x178] sm:$0xff]
      %v2388 = vld [vmem:[#allocation3 + $0x180] sm:$0xff]
      %v2389 = vld [vmem:[#allocation3 + $0x188] sm:$0xff]
      %v2390 = vld [vmem:[#allocation3 + $0x190] sm:$0xff]
      %v2391 = vld [vmem:[#allocation3 + $0x198] sm:$0xff]
      %v2392 = vld [vmem:[#allocation3 + $0x1a0] sm:$0xff]
      %v2393 = vld [vmem:[#allocation3 + $0x1a8] sm:$0xff]
      %v2394 = vld [vmem:[#allocation3 + $0x1b0] sm:$0xff]
      %v2395 = vld [vmem:[#allocation3 + $0x1b8] sm:$0xff]
      %v2396 = vld [vmem:[#allocation3 + $0x1c0] sm:$0xff]
      %v2397 = vld [vmem:[#allocation3 + $0x1c8] sm:$0xff]
      %v2398 = vld [vmem:[#allocation3 + $0x1d0] sm:$0xff]
      %v2399 = vld [vmem:[#allocation3 + $0x1d8] sm:$0xff]
      %v2400 = vld [vmem:[#allocation3 + $0x1e0] sm:$0xff]
      %v2401 = vld [vmem:[#allocation3 + $0x1e8] sm:$0xff]
      %v2402 = vld [vmem:[#allocation3 + $0x1f0] sm:$0xff]
      %v2403 = vld [vmem:[#allocation3 + $0x1f8] sm:$0xff]
      %v2404 = vld [vmem:[#allocation3 + $0x200] sm:$0xff]
      %v2405 = vld [vmem:[#allocation3 + $0x208] sm:$0xff]
      %v2406 = vld [vmem:[#allocation3 + $0x210] sm:$0xff]
      %v2407 = vld [vmem:[#allocation3 + $0x218] sm:$0xff]
      %v2408 = vld [vmem:[#allocation3 + $0x220] sm:$0xff]
      %v2409 = vld [vmem:[#allocation3 + $0x228] sm:$0xff]
      %v2410 = vld [vmem:[#allocation3 + $0x230] sm:$0xff]
      %v2411 = vld [vmem:[#allocation3 + $0x238] sm:$0xff]
      %v2412 = vld [vmem:[#allocation3 + $0x240] sm:$0xff]
      %v2413 = vld [vmem:[#allocation3 + $0x248] sm:$0xff]
      %v2414 = vld [vmem:[#allocation3 + $0x250] sm:$0xff]
      %v2415 = vld [vmem:[#allocation3 + $0x258] sm:$0xff]
      %v2416 = vld [vmem:[#allocation3 + $0x260] sm:$0xff]
      %v2417 = vld [vmem:[#allocation3 + $0x268] sm:$0xff]
      %v2418 = vld [vmem:[#allocation3 + $0x270] sm:$0xff]
      %v2419 = vld [vmem:[#allocation3 + $0x278] sm:$0xff]
      %v2420 = vld [vmem:[#allocation3 + $0x280] sm:$0xff]
      %v2421 = vld [vmem:[#allocation3 + $0x288] sm:$0xff]
      %v2422 = vld [vmem:[#allocation3 + $0x290] sm:$0xff]
      %v2423 = vld [vmem:[#allocation3 + $0x298] sm:$0xff]
      %v2424 = vld [vmem:[#allocation3 + $0x2a0] sm:$0xff]
      %v2425 = vld [vmem:[#allocation3 + $0x2a8] sm:$0xff]
      %v2426 = vld [vmem:[#allocation3 + $0x2b0] sm:$0xff]
      %v2427 = vld [vmem:[#allocation3 + $0x2b8] sm:$0xff]
      %v2428 = vld [vmem:[#allocation3 + $0x2c0] sm:$0xff]
      %v2429 = vld [vmem:[#allocation3 + $0x2c8] sm:$0xff]
      %v2430 = vld [vmem:[#allocation3 + $0x2d0] sm:$0xff]
      %v2431 = vld [vmem:[#allocation3 + $0x2d8] sm:$0xff]
      %v2432 = vld [vmem:[#allocation3 + $0x2e0] sm:$0xff]
      %v2433 = vld [vmem:[#allocation3 + $0x2e8] sm:$0xff]
      %v2434 = vld [vmem:[#allocation3 + $0x2f0] sm:$0xff]
      %v2435 = vld [vmem:[#allocation3 + $0x2f8] sm:$0xff]
      %v2436 = vld [vmem:[#allocation3 + $0x300] sm:$0xff]
      %v2437 = vld [vmem:[#allocation3 + $0x308] sm:$0xff]
      %v2438 = vld [vmem:[#allocation3 + $0x310] sm:$0xff]
      %v2439 = vld [vmem:[#allocation3 + $0x318] sm:$0xff]
      %v2440 = vld [vmem:[#allocation3 + $0x320] sm:$0xff]
      %v2441 = vld [vmem:[#allocation3 + $0x328] sm:$0xff]
      %v2442 = vld [vmem:[#allocation3 + $0x330] sm:$0xff]
      %v2443 = vld [vmem:[#allocation3 + $0x338] sm:$0xff]
      %v2444 = vld [vmem:[#allocation3 + $0x340] sm:$0xff]
      %v2445 = vld [vmem:[#allocation3 + $0x348] sm:$0xff]
      %v2446 = vld [vmem:[#allocation3 + $0x350] sm:$0xff]
      %v2447 = vld [vmem:[#allocation3 + $0x358] sm:$0xff]
      %v2448 = vld [vmem:[#allocation3 + $0x360] sm:$0xff]
      %v2449 = vld [vmem:[#allocation3 + $0x368] sm:$0xff]
      %v2450 = vld [vmem:[#allocation3 + $0x370] sm:$0xff]
      %v2451 = vld [vmem:[#allocation3 + $0x378] sm:$0xff]
      %v2452 = vld [vmem:[#allocation3 + $0x380] sm:$0xff]
      %v2453 = vld [vmem:[#allocation3 + $0x388] sm:$0xff]
      %v2454 = vld [vmem:[#allocation3 + $0x390] sm:$0xff]
      %v2455 = vld [vmem:[#allocation3 + $0x398] sm:$0xff]
      %v2456 = vld [vmem:[#allocation3 + $0x3a0] sm:$0xff]
      %v2457 = vld [vmem:[#allocation3 + $0x3a8] sm:$0xff]
      %v2458 = vld [vmem:[#allocation3 + $0x3b0] sm:$0xff]
      %v2459 = vld [vmem:[#allocation3 + $0x3b8] sm:$0xff]
      %v2460 = vld [vmem:[#allocation3 + $0x3c0] sm:$0xff]
      %v2461 = vld [vmem:[#allocation3 + $0x3c8] sm:$0xff]
      %v2462 = vld [vmem:[#allocation3 + $0x3d0] sm:$0xff]
      %v2463 = vld [vmem:[#allocation3 + $0x3d8] sm:$0xff]
      %v2464 = vld [vmem:[#allocation3 + $0x3e0] sm:$0xff]
      %v2465 = vld [vmem:[#allocation3 + $0x3e8] sm:$0xff]
      %v2466 = vld [vmem:[#allocation3 + $0x3f0] sm:$0xff]
      %v2467 = vld [vmem:[#allocation3 + $0x3f8] sm:$0xff]
      %v2468 = vld [vmem:[#allocation3 + $0x400] sm:$0xff]
      %v2469 = vld [vmem:[#allocation3 + $0x408] sm:$0xff]
      %v2470 = vld [vmem:[#allocation3 + $0x410] sm:$0xff]
      %v2471 = vld [vmem:[#allocation3 + $0x418] sm:$0xff]
      %v2472 = vld [vmem:[#allocation3 + $0x420] sm:$0xff]
      %v2473 = vld [vmem:[#allocation3 + $0x428] sm:$0xff]
      %v2474 = vld [vmem:[#allocation3 + $0x430] sm:$0xff]
      %v2475 = vld [vmem:[#allocation3 + $0x438] sm:$0xff]
      %v2476 = vld [vmem:[#allocation3 + $0x440] sm:$0xff]
      %v2477 = vld [vmem:[#allocation3 + $0x448] sm:$0xff]
      %v2478 = vld [vmem:[#allocation3 + $0x450] sm:$0xff]
      %v2479 = vld [vmem:[#allocation3 + $0x458] sm:$0xff]
      %v2480 = vld [vmem:[#allocation3 + $0x460] sm:$0xff]
      %v2481 = vld [vmem:[#allocation3 + $0x468] sm:$0xff]
      %v2482 = vld [vmem:[#allocation3 + $0x470] sm:$0xff]
      %v2483 = vld [vmem:[#allocation3 + $0x478] sm:$0xff]
      %v2484 = vld [vmem:[#allocation3 + $0x480] sm:$0xff]
      %v2485 = vld [vmem:[#allocation3 + $0x488] sm:$0xff]
      %v2486 = vld [vmem:[#allocation3 + $0x490] sm:$0xff]
      %v2487 = vld [vmem:[#allocation3 + $0x498] sm:$0xff]
      %v2488 = vld [vmem:[#allocation3 + $0x4a0] sm:$0xff]
      %v2489 = vld [vmem:[#allocation3 + $0x4a8] sm:$0xff]
      %v2490 = vld [vmem:[#allocation3 + $0x4b0] sm:$0xff]
      %v2491 = vld [vmem:[#allocation3 + $0x4b8] sm:$0xff]
      %v2492 = vld [vmem:[#allocation3 + $0x4c0] sm:$0xff]
      %v2493 = vld [vmem:[#allocation3 + $0x4c8] sm:$0xff]
      %v2494 = vld [vmem:[#allocation3 + $0x4d0] sm:$0xff]
      %v2495 = vld [vmem:[#allocation3 + $0x4d8] sm:$0xff]
      %v2496 = vld [vmem:[#allocation3 + $0x4e0] sm:$0xff]
      %v2497 = vld [vmem:[#allocation3 + $0x4e8] sm:$0xff]
      %v2498 = vld [vmem:[#allocation3 + $0x4f0] sm:$0xff]
      %v2499 = vld [vmem:[#allocation3 + $0x4f8] sm:$0xff]
      %v2500 = vld [vmem:[#allocation3 + $0x500] sm:$0xff]
      %v2501 = vld [vmem:[#allocation3 + $0x508] sm:$0xff]
      %v2502 = vld [vmem:[#allocation3 + $0x510] sm:$0xff]
      %v2503 = vld [vmem:[#allocation3 + $0x518] sm:$0xff]
      %v2504 = vld [vmem:[#allocation3 + $0x520] sm:$0xff]
      %v2505 = vld [vmem:[#allocation3 + $0x528] sm:$0xff]
      %v2506 = vld [vmem:[#allocation3 + $0x530] sm:$0xff]
      %v2507 = vld [vmem:[#allocation3 + $0x538] sm:$0xff]
      %v2508 = vld [vmem:[#allocation3 + $0x540] sm:$0xff]
      %v2509 = vld [vmem:[#allocation3 + $0x548] sm:$0xff]
      %v2510 = vld [vmem:[#allocation3 + $0x550] sm:$0xff]
      %v2511 = vld [vmem:[#allocation3 + $0x558] sm:$0xff]
      %v2512 = vld [vmem:[#allocation3 + $0x560] sm:$0xff]
      %v2513 = vld [vmem:[#allocation3 + $0x568] sm:$0xff]
      %v2514 = vld [vmem:[#allocation3 + $0x570] sm:$0xff]
      %v2515 = vld [vmem:[#allocation3 + $0x578] sm:$0xff]
      %v2516 = vld [vmem:[#allocation3 + $0x580] sm:$0xff]
      %v2517 = vld [vmem:[#allocation3 + $0x588] sm:$0xff]
      %v2518 = vld [vmem:[#allocation3 + $0x590] sm:$0xff]
      %v2519 = vld [vmem:[#allocation3 + $0x598] sm:$0xff]
      %v2520 = vld [vmem:[#allocation3 + $0x5a0] sm:$0xff]
      %v2521 = vld [vmem:[#allocation3 + $0x5a8] sm:$0xff]
      %v2522 = vld [vmem:[#allocation3 + $0x5b0] sm:$0xff]
      %v2523 = vld [vmem:[#allocation3 + $0x5b8] sm:$0xff]
      %v2524 = vld [vmem:[#allocation3 + $0x5c0] sm:$0xff]
      %v2525 = vld [vmem:[#allocation3 + $0x5c8] sm:$0xff]
      %v2526 = vld [vmem:[#allocation3 + $0x5d0] sm:$0xff]
      %v2527 = vld [vmem:[#allocation3 + $0x5d8] sm:$0xff]
      %v2528 = vld [vmem:[#allocation3 + $0x5e0] sm:$0xff]
      %v2529 = vld [vmem:[#allocation3 + $0x5e8] sm:$0xff]
      %v2530 = vld [vmem:[#allocation3 + $0x5f0] sm:$0xff]
      %v2531 = vld [vmem:[#allocation3 + $0x5f8] sm:$0xff]
      %v2532 = vld [vmem:[#allocation3 + $0x600] sm:$0xff]
      %v2533 = vld [vmem:[#allocation3 + $0x608] sm:$0xff]
      %v2534 = vld [vmem:[#allocation3 + $0x610] sm:$0xff]
      %v2535 = vld [vmem:[#allocation3 + $0x618] sm:$0xff]
      %v2536 = vld [vmem:[#allocation3 + $0x620] sm:$0xff]
      %v2537 = vld [vmem:[#allocation3 + $0x628] sm:$0xff]
      %v2538 = vld [vmem:[#allocation3 + $0x630] sm:$0xff]
      %v2539 = vld [vmem:[#allocation3 + $0x638] sm:$0xff]
      %v2540 = vld [vmem:[#allocation3 + $0x640] sm:$0xff]
      %v2541 = vld [vmem:[#allocation3 + $0x648] sm:$0xff]
      %v2542 = vld [vmem:[#allocation3 + $0x650] sm:$0xff]
      %v2543 = vld [vmem:[#allocation3 + $0x658] sm:$0xff]
      %v2544 = vld [vmem:[#allocation3 + $0x660] sm:$0xff]
      %v2545 = vld [vmem:[#allocation3 + $0x668] sm:$0xff]
      %v2546 = vld [vmem:[#allocation3 + $0x670] sm:$0xff]
      %v2547 = vld [vmem:[#allocation3 + $0x678] sm:$0xff]
      %v2548 = vld [vmem:[#allocation3 + $0x680] sm:$0xff]
      %v2549 = vld [vmem:[#allocation3 + $0x688] sm:$0xff]
      %v2550 = vld [vmem:[#allocation3 + $0x690] sm:$0xff]
      %v2551 = vld [vmem:[#allocation3 + $0x698] sm:$0xff]
      %v2552 = vld [vmem:[#allocation3 + $0x6a0] sm:$0xff]
      %v2553 = vld [vmem:[#allocation3 + $0x6a8] sm:$0xff]
      %v2554 = vld [vmem:[#allocation3 + $0x6b0] sm:$0xff]
      %v2555 = vld [vmem:[#allocation3 + $0x6b8] sm:$0xff]
      %v2556 = vld [vmem:[#allocation3 + $0x6c0] sm:$0xff]
      %v2557 = vld [vmem:[#allocation3 + $0x6c8] sm:$0xff]
      %v2558 = vld [vmem:[#allocation3 + $0x6d0] sm:$0xff]
      %v2559 = vld [vmem:[#allocation3 + $0x6d8] sm:$0xff]
      %v2560 = vld [vmem:[#allocation3 + $0x6e0] sm:$0xff]
      %v2561 = vld [vmem:[#allocation3 + $0x6e8] sm:$0xff]
      %v2562 = vld [vmem:[#allocation3 + $0x6f0] sm:$0xff]
      %v2563 = vld [vmem:[#allocation3 + $0x6f8] sm:$0xff]
      %v2564 = vld [vmem:[#allocation3 + $0x700] sm:$0xff]
      %v2565 = vld [vmem:[#allocation3 + $0x708] sm:$0xff]
      %v2566 = vld [vmem:[#allocation3 + $0x710] sm:$0xff]
      %v2567 = vld [vmem:[#allocation3 + $0x718] sm:$0xff]
      %v2568 = vld [vmem:[#allocation3 + $0x720] sm:$0xff]
      %v2569 = vld [vmem:[#allocation3 + $0x728] sm:$0xff]
      %v2570 = vld [vmem:[#allocation3 + $0x730] sm:$0xff]
      %v2571 = vld [vmem:[#allocation3 + $0x738] sm:$0xff]
      %v2572 = vld [vmem:[#allocation3 + $0x740] sm:$0xff]
      %v2573 = vld [vmem:[#allocation3 + $0x748] sm:$0xff]
      %v2574 = vld [vmem:[#allocation3 + $0x750] sm:$0xff]
      %v2575 = vld [vmem:[#allocation3 + $0x758] sm:$0xff]
      %v2576 = vld [vmem:[#allocation3 + $0x760] sm:$0xff]
      %v2577 = vld [vmem:[#allocation3 + $0x768] sm:$0xff]
      %v2578 = vld [vmem:[#allocation3 + $0x770] sm:$0xff]
      %v2579 = vld [vmem:[#allocation3 + $0x778] sm:$0xff]
      %v2580 = vld [vmem:[#allocation3 + $0x780] sm:$0xff]
      %v2581 = vld [vmem:[#allocation3 + $0x788] sm:$0xff]
      %v2582 = vld [vmem:[#allocation3 + $0x790] sm:$0xff]
      %v2583 = vld [vmem:[#allocation3 + $0x798] sm:$0xff]
      %v2584 = vld [vmem:[#allocation3 + $0x7a0] sm:$0xff]
      %v2585 = vld [vmem:[#allocation3 + $0x7a8] sm:$0xff]
      %v2586 = vld [vmem:[#allocation3 + $0x7b0] sm:$0xff]
      %v2587 = vld [vmem:[#allocation3 + $0x7b8] sm:$0xff]
      %v2588 = vld [vmem:[#allocation3 + $0x7c0] sm:$0xff]
      %v2589 = vld [vmem:[#allocation3 + $0x7c8] sm:$0xff]
      %v2590 = vld [vmem:[#allocation3 + $0x7d0] sm:$0xff]
      %v2591 = vld [vmem:[#allocation3 + $0x7d8] sm:$0xff]
      %v2592 = vld [vmem:[#allocation3 + $0x7e0] sm:$0xff]
      %v2593 = vld [vmem:[#allocation3 + $0x7e8] sm:$0xff]
      %v2594 = vld [vmem:[#allocation3 + $0x7f0] sm:$0xff]
      %v2595 = vld [vmem:[#allocation3 + $0x7f8] sm:$0xff]
      %v2596 = vld [vmem:[#allocation3 + $0x800] sm:$0xff]
      %v2597 = vld [vmem:[#allocation3 + $0x808] sm:$0xff]
      %v2598 = vld [vmem:[#allocation3 + $0x810] sm:$0xff]
      %v2599 = vld [vmem:[#allocation3 + $0x818] sm:$0xff]
      %v2600 = vld [vmem:[#allocation3 + $0x820] sm:$0xff]
      %v2601 = vld [vmem:[#allocation3 + $0x828] sm:$0xff]
      %v2602 = vld [vmem:[#allocation3 + $0x830] sm:$0xff]
      %v2603 = vld [vmem:[#allocation3 + $0x838] sm:$0xff]
      %v2604 = vld [vmem:[#allocation3 + $0x840] sm:$0xff]
      %v2605 = vld [vmem:[#allocation3 + $0x848] sm:$0xff]
      %v2606 = vld [vmem:[#allocation3 + $0x850] sm:$0xff]
      %v2607 = vld [vmem:[#allocation3 + $0x858] sm:$0xff]
      %v2608 = vld [vmem:[#allocation3 + $0x860] sm:$0xff]
      %v2609 = vld [vmem:[#allocation3 + $0x868] sm:$0xff]
      %v2610 = vld [vmem:[#allocation3 + $0x870] sm:$0xff]
      %v2611 = vld [vmem:[#allocation3 + $0x878] sm:$0xff]
      %v2612 = vld [vmem:[#allocation3 + $0x880] sm:$0xff]
      %v2613 = vld [vmem:[#allocation3 + $0x888] sm:$0xff]
      %v2614 = vld [vmem:[#allocation3 + $0x890] sm:$0xff]
      %v2615 = vld [vmem:[#allocation3 + $0x898] sm:$0xff]
      %v2616 = vld [vmem:[#allocation3 + $0x8a0] sm:$0xff]
      %v2617 = vld [vmem:[#allocation3 + $0x8a8] sm:$0xff]
      %v2618 = vld [vmem:[#allocation3 + $0x8b0] sm:$0xff]
      %v2619 = vld [vmem:[#allocation3 + $0x8b8] sm:$0xff]
      %v2620 = vld [vmem:[#allocation3 + $0x8c0] sm:$0xff]
      %v2621 = vld [vmem:[#allocation3 + $0x8c8] sm:$0xff]
      %v2622 = vld [vmem:[#allocation3 + $0x8d0] sm:$0xff]
      %v2623 = vld [vmem:[#allocation3 + $0x8d8] sm:$0xff]
      %v2624 = vld [vmem:[#allocation3 + $0x8e0] sm:$0xff]
      %v2625 = vld [vmem:[#allocation3 + $0x8e8] sm:$0xff]
      %v2626 = vld [vmem:[#allocation3 + $0x8f0] sm:$0xff]
      %v2627 = vld [vmem:[#allocation3 + $0x8f8] sm:$0xff]
      %v2628 = vld [vmem:[#allocation3 + $0x900] sm:$0xff]
      %v2629 = vld [vmem:[#allocation3 + $0x908] sm:$0xff]
      %v2630 = vld [vmem:[#allocation3 + $0x910] sm:$0xff]
      %v2631 = vld [vmem:[#allocation3 + $0x918] sm:$0xff]
      %v2632 = vld [vmem:[#allocation3 + $0x920] sm:$0xff]
      %v2633 = vld [vmem:[#allocation3 + $0x928] sm:$0xff]
      %v2634 = vld [vmem:[#allocation3 + $0x930] sm:$0xff]
      %v2635 = vld [vmem:[#allocation3 + $0x938] sm:$0xff]
      %v2636 = vld [vmem:[#allocation3 + $0x940] sm:$0xff]
      %v2637 = vld [vmem:[#allocation3 + $0x948] sm:$0xff]
      %v2638 = vld [vmem:[#allocation3 + $0x950] sm:$0xff]
      %v2639 = vld [vmem:[#allocation3 + $0x958] sm:$0xff]
      %v2640 = vld [vmem:[#allocation3 + $0x960] sm:$0xff]
      %v2641 = vld [vmem:[#allocation3 + $0x968] sm:$0xff]
      %v2642 = vld [vmem:[#allocation3 + $0x970] sm:$0xff]
      %v2643 = vld [vmem:[#allocation3 + $0x978] sm:$0xff]
      %v2644 = vld [vmem:[#allocation3 + $0x980] sm:$0xff]
      %v2645 = vld [vmem:[#allocation3 + $0x988] sm:$0xff]
      %v2646 = vld [vmem:[#allocation3 + $0x990] sm:$0xff]
      %v2647 = vld [vmem:[#allocation3 + $0x998] sm:$0xff]
      %v2648 = vld [vmem:[#allocation3 + $0x9a0] sm:$0xff]
      %v2649 = vld [vmem:[#allocation3 + $0x9a8] sm:$0xff]
      %v2650 = vld [vmem:[#allocation3 + $0x9b0] sm:$0xff]
      %v2651 = vld [vmem:[#allocation3 + $0x9b8] sm:$0xff]
      %v2652 = vld [vmem:[#allocation3 + $0x9c0] sm:$0xff]
      %v2653 = vld [vmem:[#allocation3 + $0x9c8] sm:$0xff]
      %v2654 = vld [vmem:[#allocation3 + $0x9d0] sm:$0xff]
      %v2655 = vld [vmem:[#allocation3 + $0x9d8] sm:$0xff]
      %v2656 = vld [vmem:[#allocation3 + $0x9e0] sm:$0xff]
      %v2657 = vld [vmem:[#allocation3 + $0x9e8] sm:$0xff]
      %v2658 = vld [vmem:[#allocation3 + $0x9f0] sm:$0xff]
      %v2659 = vld [vmem:[#allocation3 + $0x9f8] sm:$0xff]
      %v2660 = vld [vmem:[#allocation3 + $0xa00] sm:$0xff]
      %v2661 = vld [vmem:[#allocation3 + $0xa08] sm:$0xff]
      %v2662 = vld [vmem:[#allocation3 + $0xa10] sm:$0xff]
      %v2663 = vld [vmem:[#allocation3 + $0xa18] sm:$0xff]
      %v2664 = vld [vmem:[#allocation3 + $0xa20] sm:$0xff]
      %v2665 = vld [vmem:[#allocation3 + $0xa28] sm:$0xff]
      %v2666 = vld [vmem:[#allocation3 + $0xa30] sm:$0xff]
      %v2667 = vld [vmem:[#allocation3 + $0xa38] sm:$0xff]
      %v2668 = vld [vmem:[#allocation3 + $0xa40] sm:$0xff]
      %v2669 = vld [vmem:[#allocation3 + $0xa48] sm:$0xff]
      %v2670 = vld [vmem:[#allocation3 + $0xa50] sm:$0xff]
      %v2671 = vld [vmem:[#allocation3 + $0xa58] sm:$0xff]
      %v2672 = vld [vmem:[#allocation3 + $0xa60] sm:$0xff]
      %v2673 = vld [vmem:[#allocation3 + $0xa68] sm:$0xff]
      %v2674 = vld [vmem:[#allocation3 + $0xa70] sm:$0xff]
      %v2675 = vld [vmem:[#allocation3 + $0xa78] sm:$0xff]
      %v2676 = vld [vmem:[#allocation3 + $0xa80] sm:$0xff]
      %v2677 = vld [vmem:[#allocation3 + $0xa88] sm:$0xff]
      %v2678 = vld [vmem:[#allocation3 + $0xa90] sm:$0xff]
      %v2679 = vld [vmem:[#allocation3 + $0xa98] sm:$0xff]
      %v2680 = vld [vmem:[#allocation3 + $0xaa0] sm:$0xff]
      %v2681 = vld [vmem:[#allocation3 + $0xaa8] sm:$0xff]
      %v2682 = vld [vmem:[#allocation3 + $0xab0] sm:$0xff]
      %v2683 = vld [vmem:[#allocation3 + $0xab8] sm:$0xff]
      %v2684 = vld [vmem:[#allocation3 + $0xac0] sm:$0xff]
      %v2685 = vld [vmem:[#allocation3 + $0xac8] sm:$0xff]
      %v2686 = vld [vmem:[#allocation3 + $0xad0] sm:$0xff]
      %v2687 = vld [vmem:[#allocation3 + $0xad8] sm:$0xff]
      %v2688 = vld [vmem:[#allocation3 + $0xae0] sm:$0xff]
      %v2689 = vld [vmem:[#allocation3 + $0xae8] sm:$0xff]
      %v2690 = vld [vmem:[#allocation3 + $0xaf0] sm:$0xff]
      %v2691 = vld [vmem:[#allocation3 + $0xaf8] sm:$0xff]
      %v2692 = vld [vmem:[#allocation3 + $0xb00] sm:$0xff]
      %v2693 = vld [vmem:[#allocation3 + $0xb08] sm:$0xff]
      %v2694 = vld [vmem:[#allocation3 + $0xb10] sm:$0xff]
      %v2695 = vld [vmem:[#allocation3 + $0xb18] sm:$0xff]
      %v2696 = vld [vmem:[#allocation3 + $0xb20] sm:$0xff]
      %v2697 = vld [vmem:[#allocation3 + $0xb28] sm:$0xff]
      %v2698 = vld [vmem:[#allocation3 + $0xb30] sm:$0xff]
      %v2699 = vld [vmem:[#allocation3 + $0xb38] sm:$0xff]
      %v2700 = vld [vmem:[#allocation3 + $0xb40] sm:$0xff]
      %v2701 = vld [vmem:[#allocation3 + $0xb48] sm:$0xff]
      %v2702 = vld [vmem:[#allocation3 + $0xb50] sm:$0xff]
      %v2703 = vld [vmem:[#allocation3 + $0xb58] sm:$0xff]
      %v2704 = vld [vmem:[#allocation3 + $0xb60] sm:$0xff]
      %v2705 = vld [vmem:[#allocation3 + $0xb68] sm:$0xff]
      %v2706 = vld [vmem:[#allocation3 + $0xb70] sm:$0xff]
      %v2707 = vld [vmem:[#allocation3 + $0xb78] sm:$0xff]
      %v2708 = vld [vmem:[#allocation3 + $0xb80] sm:$0xff]
      %v2709 = vld [vmem:[#allocation3 + $0xb88] sm:$0xff]
      %v2710 = vld [vmem:[#allocation3 + $0xb90] sm:$0xff]
      %v2711 = vld [vmem:[#allocation3 + $0xb98] sm:$0xff]
      %v2712 = vld [vmem:[#allocation3 + $0xba0] sm:$0xff]
      %v2713 = vld [vmem:[#allocation3 + $0xba8] sm:$0xff]
      %v2714 = vld [vmem:[#allocation3 + $0xbb0] sm:$0xff]
      %v2715 = vld [vmem:[#allocation3 + $0xbb8] sm:$0xff]
      %v2716 = vld [vmem:[#allocation3 + $0xbc0] sm:$0xff]
      %v2717 = vld [vmem:[#allocation3 + $0xbc8] sm:$0xff]
      %v2718 = vld [vmem:[#allocation3 + $0xbd0] sm:$0xff]
      %v2719 = vld [vmem:[#allocation3 + $0xbd8] sm:$0xff]
      %v2720 = vld [vmem:[#allocation3 + $0xbe0] sm:$0xff]
      %v2721 = vld [vmem:[#allocation3 + $0xbe8] sm:$0xff]
      %v2722 = vld [vmem:[#allocation3 + $0xbf0] sm:$0xff]
      %v2723 = vld [vmem:[#allocation3 + $0xbf8] sm:$0xff]
      %v2724 = vld [vmem:[#allocation3 + $0xc00] sm:$0xff]
      %v2725 = vld [vmem:[#allocation3 + $0xc08] sm:$0xff]
      %v2726 = vld [vmem:[#allocation3 + $0xc10] sm:$0xff]
      %v2727 = vld [vmem:[#allocation3 + $0xc18] sm:$0xff]
      %v2728 = vld [vmem:[#allocation3 + $0xc20] sm:$0xff]
      %v2729 = vld [vmem:[#allocation3 + $0xc28] sm:$0xff]
      %v2730 = vld [vmem:[#allocation3 + $0xc30] sm:$0xff]
      %v2731 = vld [vmem:[#allocation3 + $0xc38] sm:$0xff]
      %v2732 = vld [vmem:[#allocation3 + $0xc40] sm:$0xff]
      %v2733 = vld [vmem:[#allocation3 + $0xc48] sm:$0xff]
      %v2734 = vld [vmem:[#allocation3 + $0xc50] sm:$0xff]
      %v2735 = vld [vmem:[#allocation3 + $0xc58] sm:$0xff]
      %v2736 = vld [vmem:[#allocation3 + $0xc60] sm:$0xff]
      %v2737 = vld [vmem:[#allocation3 + $0xc68] sm:$0xff]
      %v2738 = vld [vmem:[#allocation3 + $0xc70] sm:$0xff]
      %v2739 = vld [vmem:[#allocation3 + $0xc78] sm:$0xff]
      %v2740 = vld [vmem:[#allocation3 + $0xc80] sm:$0xff]
      %v2741 = vld [vmem:[#allocation3 + $0xc88] sm:$0xff]
      %v2742 = vld [vmem:[#allocation3 + $0xc90] sm:$0xff]
      %v2743 = vld [vmem:[#allocation3 + $0xc98] sm:$0xff]
      %v2744 = vld [vmem:[#allocation3 + $0xca0] sm:$0xff]
      %v2745 = vld [vmem:[#allocation3 + $0xca8] sm:$0xff]
      %v2746 = vld [vmem:[#allocation3 + $0xcb0] sm:$0xff]
      %v2747 = vld [vmem:[#allocation3 + $0xcb8] sm:$0xff]
      %v2748 = vld [vmem:[#allocation3 + $0xcc0] sm:$0xff]
      %v2749 = vld [vmem:[#allocation3 + $0xcc8] sm:$0xff]
      %v2750 = vld [vmem:[#allocation3 + $0xcd0] sm:$0xff]
      %v2751 = vld [vmem:[#allocation3 + $0xcd8] sm:$0xff]
      %v2752 = vld [vmem:[#allocation3 + $0xce0] sm:$0xff]
      %v2753 = vld [vmem:[#allocation3 + $0xce8] sm:$0xff]
      %v2754 = vld [vmem:[#allocation3 + $0xcf0] sm:$0xff]
      %v2755 = vld [vmem:[#allocation3 + $0xcf8] sm:$0xff]
      %v2756 = vld [vmem:[#allocation3 + $0xd00] sm:$0xff]
      %v2757 = vld [vmem:[#allocation3 + $0xd08] sm:$0xff]
      %v2758 = vld [vmem:[#allocation3 + $0xd10] sm:$0xff]
      %v2759 = vld [vmem:[#allocation3 + $0xd18] sm:$0xff]
      %v2760 = vld [vmem:[#allocation3 + $0xd20] sm:$0xff]
      %v2761 = vld [vmem:[#allocation3 + $0xd28] sm:$0xff]
      %v2762 = vld [vmem:[#allocation3 + $0xd30] sm:$0xff]
      %v2763 = vld [vmem:[#allocation3 + $0xd38] sm:$0xff]
      %v2764 = vld [vmem:[#allocation3 + $0xd40] sm:$0xff]
      %v2765 = vld [vmem:[#allocation3 + $0xd48] sm:$0xff]
      %v2766 = vld [vmem:[#allocation3 + $0xd50] sm:$0xff]
      %v2767 = vld [vmem:[#allocation3 + $0xd58] sm:$0xff]
      %v2768 = vld [vmem:[#allocation3 + $0xd60] sm:$0xff]
      %v2769 = vld [vmem:[#allocation3 + $0xd68] sm:$0xff]
      %v2770 = vld [vmem:[#allocation3 + $0xd70] sm:$0xff]
      %v2771 = vld [vmem:[#allocation3 + $0xd78] sm:$0xff]
      %v2772 = vld [vmem:[%s1] sm:$0xff]
      %v2773 = vld [vmem:[%s1 + $0x8] sm:$0xff]
      %v2774 = vld [vmem:[%s1 + $0x10] sm:$0xff]
      %v2775 = vld [vmem:[%s1 + $0x18] sm:$0xff]
      %v2776 = vld [vmem:[%s1 + $0x20] sm:$0xff]
      %v2777 = vld [vmem:[%s1 + $0x28] sm:$0xff]
      %v2778 = vld [vmem:[%s1 + $0x30] sm:$0xff]
      %v2779 = vld [vmem:[%s1 + $0x38] sm:$0xff]
      %v2780 = vld [vmem:[%s1 + $0x40] sm:$0xff]
      %v2781 = vld [vmem:[%s1 + $0x48] sm:$0xff]
      %v2782 = vld [vmem:[%s1 + $0x50] sm:$0xff]
      %v2783 = vld [vmem:[%s1 + $0x58] sm:$0xff]
      %v2784 = vld [vmem:[%s1 + $0x60] sm:$0xff]
      %v2785 = vld [vmem:[%s1 + $0x68] sm:$0xff]
      %v2786 = vld [vmem:[%s1 + $0x70] sm:$0xff]
      %v2787 = vld [vmem:[%s1 + $0x78] sm:$0xff]
      %v2788 = vld [vmem:[%s1 + $0x80] sm:$0xff]
      %v2789 = vld [vmem:[%s1 + $0x88] sm:$0xff]
      %v2790 = vld [vmem:[%s1 + $0x90] sm:$0xff]
      %v2791 = vld [vmem:[%s1 + $0x98] sm:$0xff]
      %v2792 = vld [vmem:[%s1 + $0xa0] sm:$0xff]
      %v2793 = vld [vmem:[%s1 + $0xa8] sm:$0xff]
      %v2794 = vld [vmem:[%s1 + $0xb0] sm:$0xff]
      %v2795 = vld [vmem:[%s1 + $0xb8] sm:$0xff]
      %v2796 = vld [vmem:[%s1 + $0xc0] sm:$0xff]
      %v2797 = vld [vmem:[%s1 + $0xc8] sm:$0xff]
      %v2798 = vld [vmem:[%s1 + $0xd0] sm:$0xff]
      %v2799 = vld [vmem:[%s1 + $0xd8] sm:$0xff]
      %v2800 = vld [vmem:[%s1 + $0xe0] sm:$0xff]
      %v2801 = vld [vmem:[%s1 + $0xe8] sm:$0xff]
      %v2802 = vld [vmem:[%s1 + $0xf0] sm:$0xff]
      %v2803 = vld [vmem:[%s1 + $0xf8] sm:$0xff]
      %v2804 = vld [vmem:[%s1 + $0x100] sm:$0xff]
      %v2805 = vld [vmem:[%s1 + $0x108] sm:$0xff]
      %v2806 = vld [vmem:[%s1 + $0x110] sm:$0xff]
      %v2807 = vld [vmem:[%s1 + $0x118] sm:$0xff]
      %v2808 = vld [vmem:[%s1 + $0x120] sm:$0xff]
      %v2809 = vld [vmem:[%s1 + $0x128] sm:$0xff]
      %v2810 = vld [vmem:[%s1 + $0x130] sm:$0xff]
      %v2811 = vld [vmem:[%s1 + $0x138] sm:$0xff]
      %v2812 = vld [vmem:[%s1 + $0x140] sm:$0xff]
      %v2813 = vld [vmem:[%s1 + $0x148] sm:$0xff]
      %v2814 = vld [vmem:[%s1 + $0x150] sm:$0xff]
      %v2815 = vld [vmem:[%s1 + $0x158] sm:$0xff]
      %v2816 = vld [vmem:[%s1 + $0x160] sm:$0xff]
      %v2817 = vld [vmem:[%s1 + $0x168] sm:$0xff]
      %v2818 = vld [vmem:[%s1 + $0x170] sm:$0xff]
      %v2819 = vld [vmem:[%s1 + $0x178] sm:$0xff]
      %v2820 = vld [vmem:[%s1 + $0x180] sm:$0xff]
      %v2821 = vld [vmem:[%s1 + $0x188] sm:$0xff]
      %v2822 = vld [vmem:[%s1 + $0x190] sm:$0xff]
      %v2823 = vld [vmem:[%s1 + $0x198] sm:$0xff]
      %v2824 = vld [vmem:[%s1 + $0x1a0] sm:$0xff]
      %v2825 = vld [vmem:[%s1 + $0x1a8] sm:$0xff]
      %v2826 = vld [vmem:[%s1 + $0x1b0] sm:$0xff]
      %v2827 = vld [vmem:[%s1 + $0x1b8] sm:$0xff]
      %v2828 = vld [vmem:[%s1 + $0x1c0] sm:$0xff]
      %v2829 = vld [vmem:[%s1 + $0x1c8] sm:$0xff]
      %v2830 = vld [vmem:[%s1 + $0x1d0] sm:$0xff]
      %v2831 = vld [vmem:[%s1 + $0x1d8] sm:$0xff]
      %v2832 = vld [vmem:[%s1 + $0x1e0] sm:$0xff]
      %v2833 = vld [vmem:[%s1 + $0x1e8] sm:$0xff]
      %v2834 = vld [vmem:[%s1 + $0x1f0] sm:$0xff]
      %v2835 = vld [vmem:[%s1 + $0x1f8] sm:$0xff]
      %v2836 = vld [vmem:[%s1 + $0x200] sm:$0xff]
      %v2837 = vld [vmem:[%s1 + $0x208] sm:$0xff]
      %v2838 = vld [vmem:[%s1 + $0x210] sm:$0xff]
      %v2839 = vld [vmem:[%s1 + $0x218] sm:$0xff]
      %v2840 = vld [vmem:[%s1 + $0x220] sm:$0xff]
      %v2841 = vld [vmem:[%s1 + $0x228] sm:$0xff]
      %v2842 = vld [vmem:[%s1 + $0x230] sm:$0xff]
      %v2843 = vld [vmem:[%s1 + $0x238] sm:$0xff]
      %v2844 = vld [vmem:[%s1 + $0x240] sm:$0xff]
      %v2845 = vld [vmem:[%s1 + $0x248] sm:$0xff]
      %v2846 = vld [vmem:[%s1 + $0x250] sm:$0xff]
      %v2847 = vld [vmem:[%s1 + $0x258] sm:$0xff]
      %v2848 = vld [vmem:[%s1 + $0x260] sm:$0xff]
      %v2849 = vld [vmem:[%s1 + $0x268] sm:$0xff]
      %v2850 = vld [vmem:[%s1 + $0x270] sm:$0xff]
      %v2851 = vld [vmem:[%s1 + $0x278] sm:$0xff]
      %v2852 = vld [vmem:[%s1 + $0x280] sm:$0xff]
      %v2853 = vld [vmem:[%s1 + $0x288] sm:$0xff]
      %v2854 = vld [vmem:[%s1 + $0x290] sm:$0xff]
      %v2855 = vld [vmem:[%s1 + $0x298] sm:$0xff]
      %v2856 = vld [vmem:[%s1 + $0x2a0] sm:$0xff]
      %v2857 = vld [vmem:[%s1 + $0x2a8] sm:$0xff]
      %v2858 = vld [vmem:[%s1 + $0x2b0] sm:$0xff]
      %v2859 = vld [vmem:[%s1 + $0x2b8] sm:$0xff]
      %v2860 = vld [vmem:[%s1 + $0x2c0] sm:$0xff]
      %v2861 = vld [vmem:[%s1 + $0x2c8] sm:$0xff]
      %v2862 = vld [vmem:[%s1 + $0x2d0] sm:$0xff]
      %v2863 = vld [vmem:[%s1 + $0x2d8] sm:$0xff]
      %v2864 = vld [vmem:[%s1 + $0x2e0] sm:$0xff]
      %v2865 = vld [vmem:[%s1 + $0x2e8] sm:$0xff]
      %v2866 = vld [vmem:[%s1 + $0x2f0] sm:$0xff]
      %v2867 = vld [vmem:[%s1 + $0x2f8] sm:$0xff]
      %v2868 = vld [vmem:[%s1 + $0x300] sm:$0xff]
      %v2869 = vld [vmem:[%s1 + $0x308] sm:$0xff]
      %v2870 = vld [vmem:[%s1 + $0x310] sm:$0xff]
      %v2871 = vld [vmem:[%s1 + $0x318] sm:$0xff]
      %v2872 = vld [vmem:[%s1 + $0x320] sm:$0xff]
      %v2873 = vld [vmem:[%s1 + $0x328] sm:$0xff]
      %v2874 = vld [vmem:[%s1 + $0x330] sm:$0xff]
      %v2875 = vld [vmem:[%s1 + $0x338] sm:$0xff]
      %v2876 = vld [vmem:[%s1 + $0x340] sm:$0xff]
      %v2877 = vld [vmem:[%s1 + $0x348] sm:$0xff]
      %v2878 = vld [vmem:[%s1 + $0x350] sm:$0xff]
      %v2879 = vld [vmem:[%s1 + $0x358] sm:$0xff]
      %v2880 = vld [vmem:[%s1 + $0x360] sm:$0xff]
      %v2881 = vld [vmem:[%s1 + $0x368] sm:$0xff]
      %v2882 = vld [vmem:[%s1 + $0x370] sm:$0xff]
      %v2883 = vld [vmem:[%s1 + $0x378] sm:$0xff]
      %v2884 = vld [vmem:[%s1 + $0x380] sm:$0xff]
      %v2885 = vld [vmem:[%s1 + $0x388] sm:$0xff]
      %v2886 = vld [vmem:[%s1 + $0x390] sm:$0xff]
      %v2887 = vld [vmem:[%s1 + $0x398] sm:$0xff]
      %v2888 = vld [vmem:[%s1 + $0x3a0] sm:$0xff]
      %v2889 = vld [vmem:[%s1 + $0x3a8] sm:$0xff]
      %v2890 = vld [vmem:[%s1 + $0x3b0] sm:$0xff]
      %v2891 = vld [vmem:[%s1 + $0x3b8] sm:$0xff]
      %v2892 = vld [vmem:[%s1 + $0x3c0] sm:$0xff]
      %v2893 = vld [vmem:[%s1 + $0x3c8] sm:$0xff]
      %v2894 = vld [vmem:[%s1 + $0x3d0] sm:$0xff]
      %v2895 = vld [vmem:[%s1 + $0x3d8] sm:$0xff]
      %v2896 = vld [vmem:[%s1 + $0x3e0] sm:$0xff]
      %v2897 = vld [vmem:[%s1 + $0x3e8] sm:$0xff]
      %v2898 = vld [vmem:[%s1 + $0x3f0] sm:$0xff]
      %v2899 = vld [vmem:[%s1 + $0x3f8] sm:$0xff]
      %v2900 = vld [vmem:[%s1 + $0x400] sm:$0xff]
      %v2901 = vld [vmem:[%s1 + $0x408] sm:$0xff]
      %v2902 = vld [vmem:[%s1 + $0x410] sm:$0xff]
      %v2903 = vld [vmem:[%s1 + $0x418] sm:$0xff]
      %v2904 = vld [vmem:[%s1 + $0x420] sm:$0xff]
      %v2905 = vld [vmem:[%s1 + $0x428] sm:$0xff]
      %v2906 = vld [vmem:[%s1 + $0x430] sm:$0xff]
      %v2907 = vld [vmem:[%s1 + $0x438] sm:$0xff]
      %v2908 = vld [vmem:[%s1 + $0x440] sm:$0xff]
      %v2909 = vld [vmem:[%s1 + $0x448] sm:$0xff]
      %v2910 = vld [vmem:[%s1 + $0x450] sm:$0xff]
      %v2911 = vld [vmem:[%s1 + $0x458] sm:$0xff]
      %v2912 = vld [vmem:[%s1 + $0x460] sm:$0xff]
      %v2913 = vld [vmem:[%s1 + $0x468] sm:$0xff]
      %v2914 = vld [vmem:[%s1 + $0x470] sm:$0xff]
      %v2915 = vld [vmem:[%s1 + $0x478] sm:$0xff]
      %v2916 = vld [vmem:[%s2] sm:$0x1]
      %v2918 = vlaneseq
      %v2919 = vshrl.u32 %v2918, 7
      %v2920 = vsub.s32 0, %v2919
      %v2921 = vrot.slane %v2916, %v2920
      %2923 = vmatprep.subr.mxu0 0.0
      %2924 = vmatpush1.msra.mxu0 %v2772
      %2925 = vmatprep.subr.mxu0 0.0
      %2926 = vmatpush1.msra.mxu0 %v2773
      %2927 = vmatprep.subr.mxu0 0.0
      %2928 = vmatpush1.msra.mxu0 %v2774
      %2929 = vmatprep.subr.mxu0 0.0
      %2930 = vmatpush1.msra.mxu0 %v2775
      %2931 = vmatprep.subr.mxu0 0.0
      %2932 = vmatpush1.msra.mxu0 %v2776
      %2933 = vmatprep.subr.mxu0 0.0
      %2934 = vmatpush1.msra.mxu0 %v2777
      %2935 = vmatprep.subr.mxu0 0.0
      %2936 = vmatpush1.msra.mxu0 %v2778
      %2937 = vmatprep.subr.mxu0 0.0
      %2938 = vmatpush1.msra.mxu0 %v2779
      %2939 = vmatprep.subr.mxu0 0.0
      %2940 = vmatpush1.msra.mxu0 %v2780
      %2941 = vmatprep.subr.mxu0 0.0
      %2942 = vmatpush1.msra.mxu0 %v2781
      %2943 = vmatprep.subr.mxu0 0.0
      %2944 = vmatpush1.msra.mxu0 %v2782
      %2945 = vmatprep.subr.mxu0 0.0
      %2946 = vmatpush1.msra.mxu0 %v2783
      %2947 = vmatprep.subr.mxu0 0.0
      %2948 = vmatpush1.msra.mxu0 %v2784
      %2949 = vmatprep.subr.mxu0 0.0
      %2950 = vmatpush1.msra.mxu0 %v2785
      %2951 = vmatprep.subr.mxu0 0.0
      %2952 = vmatpush1.msra.mxu0 %v2786
      %2953 = vmatprep.subr.mxu0 0.0
      %2954 = vmatpush1.msra.mxu0 %v2787
      %2955 = vmatprep.subr.mxu0 0.0
      %2956 = vmatpush1.msra.mxu0 %v2788
      %2957 = vmatprep.subr.mxu0 0.0
      %2958 = vmatpush1.msra.mxu0 %v2789
      %2959 = vmatprep.subr.mxu0 0.0
      %2960 = vmatpush1.msra.mxu0 %v2790
      %2961 = vmatprep.subr.mxu0 0.0
      %2962 = vmatpush1.msra.mxu0 %v2791
      %2963 = vmatprep.subr.mxu0 0.0
      %2964 = vmatpush1.msra.mxu0 %v2792
      %2965 = vmatprep.subr.mxu0 0.0
      %2966 = vmatpush1.msra.mxu0 %v2793
      %2967 = vmatprep.subr.mxu0 0.0
      %2968 = vmatpush1.msra.mxu0 %v2794
      %2969 = vmatprep.subr.mxu0 0.0
      %2970 = vmatpush1.msra.mxu0 %v2795
      %2971 = vmatprep.subr.mxu0 0.0
      %2972 = vmatpush1.msra.mxu0 %v2796
      %2973 = vmatprep.subr.mxu0 0.0
      %2974 = vmatpush1.msra.mxu0 %v2797
      %2975 = vmatprep.subr.mxu0 0.0
      %2976 = vmatpush1.msra.mxu0 %v2798
      %2977 = vmatprep.subr.mxu0 0.0
      %2978 = vmatpush1.msra.mxu0 %v2799
      %2979 = vmatprep.subr.mxu0 0.0
      %2980 = vmatpush1.msra.mxu0 %v2800
      %2981 = vmatprep.subr.mxu0 0.0
      %2982 = vmatpush1.msra.mxu0 %v2801
      %2983 = vmatprep.subr.mxu0 0.0
      %2984 = vmatpush1.msra.mxu0 %v2802
      %2985 = vmatprep.subr.mxu0 0.0
      %2986 = vmatpush1.msra.mxu0 %v2803
      %2987 = vmatprep.mubr.f32.mxu0 %v2341
      %2988 = vmatmul.mubr.f32.gmra.mrb[0].mxu0 %v2340
      %v2989 = vpop.f32.mrb[0].mxu0
      %v2990 = vadd.f32 %v2921, %v2989
      %v2991 = vpop.f32.mrb[0].mxu0
      %2992 = vmatprep.mubr.f32.mxu0 %v2350
      %2993 = vmatmul.mubr.f32.gmra.mrb[0].mxu0 %v2349
      %v2994 = vpop.f32.mrb[0].mxu0
      %v2995 = vadd.f32 %v2921, %v2994
      %v2996 = vpop.f32.mrb[0].mxu0
      %2997 = vmatprep.mubr.f32.mxu0 %v2359
      %2998 = vmatmul.mubr.f32.gmra.mrb[0].mxu0 %v2358
      %v2999 = vpop.f32.mrb[0].mxu0
      %v3000 = vadd.f32 %v2921, %v2999
      %v3001 = vpop.f32.mrb[0].mxu0
      %3002 = vmatprep.mubr.f32.mxu0 %v2368
      %3003 = vmatmul.mubr.f32.gmra.mrb[0].mxu0 %v2367
      %v3004 = vpop.f32.mrb[0].mxu0
      %v3005 = vadd.f32 %v2921, %v3004
      %v3006 = vpop.f32.mrb[0].mxu0
      %3007 = vmatprep.mubr.f32.mxu0 %v2377
      %3008 = vmatmul.mubr.f32.gmra.mrb[0].mxu0 %v2376
      %v3009 = vpop.f32.mrb[0].mxu0
      %v3010 = vadd.f32 %v2921, %v3009
      %v3011 = vpop.f32.mrb[0].mxu0
      %3012 = vmatprep.mubr.f32.mxu0 %v2386
      %3013 = vmatmul.mubr.f32.gmra.mrb[0].mxu0 %v2385
      %v3014 = vpop.f32.mrb[0].mxu0
      %v3015 = vadd.f32 %v2921, %v3014
      %v3016 = vpop.f32.mrb[0].mxu0
      %3017 = vmatprep.mubr.f32.mxu0 %v2395
      %3018 = vmatmul.mubr.f32.gmra.mrb[0].mxu0 %v2394
      %v3019 = vpop.f32.mrb[0].mxu0
      %v3020 = vadd.f32 %v2921, %v3019
      %v3021 = vpop.f32.mrb[0].mxu0
      %3022 = vmatprep.mubr.f32.mxu0 %v2404
      %3023 = vmatmul.mubr.f32.gmra.mrb[0].mxu0 %v2403
      %v3024 = vpop.f32.mrb[0].mxu0
      %v3025 = vadd.f32 %v2921, %v3024
      %v3026 = vpop.f32.mrb[0].mxu0
      %3027 = vmatprep.mubr.f32.mxu0 %v2413
      %3028 = vmatmul.mubr.f32.gmra.mrb[0].mxu0 %v2412
      %v3029 = vpop.f32.mrb[0].mxu0
      %v3030 = vadd.f32 %v2921, %v3029
      %v3031 = vpop.f32.mrb[0].mxu0
      %3032 = vmatprep.mubr.f32.mxu0 %v2422
      %3033 = vmatmul.mubr.f32.gmra.mrb[0].mxu0 %v2421
      %v3034 = vpop.f32.mrb[0].mxu0
      %v3035 = vadd.f32 %v2921, %v3034
      %v3036 = vpop.f32.mrb[0].mxu0
      %3037 = vmatprep.mubr.f32.mxu0 %v2431
      %3038 = vmatmul.mubr.f32.gmra.mrb[0].mxu0 %v2430
      %v3039 = vpop.f32.mrb[0].mxu0
      %v3040 = vadd.f32 %v2921, %v3039
      %v3041 = vpop.f32.mrb[0].mxu0
      %3042 = vmatprep.mubr.f32.mxu0 %v2440
      %3043 = vmatmul.mubr.f32.gmra.mrb[0].mxu0 %v2439
      %v3044 = vpop.f32.mrb[0].mxu0
      %v3045 = vadd.f32 %v2921, %v3044
      %v3046 = vpop.f32.mrb[0].mxu0
      %3047 = vmatprep.mubr.f32.mxu0 %v2449
      %3048 = vmatmul.mubr.f32.gmra.mrb[0].mxu0 %v2448
      %v3049 = vpop.f32.mrb[0].mxu0
      %v3050 = vadd.f32 %v2921, %v3049
      %v3051 = vpop.f32.mrb[0].mxu0
      %3052 = vmatprep.mubr.f32.mxu0 %v2458
      %3053 = vmatmul.mubr.f32.gmra.mrb[0].mxu0 %v2457
      %v3054 = vpop.f32.mrb[0].mxu0
      %v3055 = vadd.f32 %v2921, %v3054
      %v3056 = vpop.f32.mrb[0].mxu0
      %3057 = vmatprep.mubr.f32.mxu0 %v2467
      %3058 = vmatmul.mubr.f32.gmra.mrb[0].mxu0 %v2466
      %v3059 = vpop.f32.mrb[0].mxu0
      %v3060 = vadd.f32 %v2921, %v3059
      %v3061 = vpop.f32.mrb[0].mxu0
      %3062 = vmatprep.mubr.f32.mxu0 %v2476
      %3063 = vmatmul.mubr.f32.gmra.mrb[0].mxu0 %v2475
      %v3064 = vpop.f32.mrb[0].mxu0
      %v3065 = vadd.f32 %v2921, %v3064
      %v3066 = vpop.f32.mrb[0].mxu0
      %3067 = vmatprep.mubr.f32.mxu0 %v2485
      %3068 = vmatmul.mubr.f32.gmra.mrb[0].mxu0 %v2484
      %v3069 = vpop.f32.mrb[0].mxu0
      %v3070 = vadd.f32 %v2921, %v3069
      %v3071 = vpop.f32.mrb[0].mxu0
      %3072 = vmatprep.mubr.f32.mxu0 %v2494
      %3073 = vmatmul.mubr.f32.gmra.mrb[0].mxu0 %v2493
      %v3074 = vpop.f32.mrb[0].mxu0
      %v3075 = vadd.f32 %v2921, %v3074
      %v3076 = vpop.f32.mrb[0].mxu0
      %3077 = vmatprep.mubr.f32.mxu0 %v2503
      %3078 = vmatmul.mubr.f32.gmra.mrb[0].mxu0 %v2502
      %v3079 = vpop.f32.mrb[0].mxu0
      %v3080 = vadd.f32 %v2921, %v3079
      %v3081 = vpop.f32.mrb[0].mxu0
      %3082 = vmatprep.mubr.f32.mxu0 %v2512
      %3083 = vmatmul.mubr.f32.gmra.mrb[0].mxu0 %v2511
      %v3084 = vpop.f32.mrb[0].mxu0
      %v3085 = vadd.f32 %v2921, %v3084
      %v3086 = vpop.f32.mrb[0].mxu0
      %3087 = vmatprep.mubr.f32.mxu0 %v2521
      %3088 = vmatmul.mubr.f32.gmra.mrb[0].mxu0 %v2520
      %v3089 = vpop.f32.mrb[0].mxu0
      %v3090 = vadd.f32 %v2921, %v3089
      %v3091 = vpop.f32.mrb[0].mxu0
      %3092 = vmatprep.mubr.f32.mxu0 %v2530
      %3093 = vmatmul.mubr.f32.gmra.mrb[0].mxu0 %v2529
      %v3094 = vpop.f32.mrb[0].mxu0
      %v3095 = vadd.f32 %v2921, %v3094
      %v3096 = vpop.f32.mrb[0].mxu0
      %3097 = vmatprep.mubr.f32.mxu0 %v2539
      %3098 = vmatmul.mubr.f32.gmra.mrb[0].mxu0 %v2538
      %v3099 = vpop.f32.mrb[0].mxu0
      %v3100 = vadd.f32 %v2921, %v3099
      %v3101 = vpop.f32.mrb[0].mxu0
      %3102 = vmatprep.mubr.f32.mxu0 %v2548
      %3103 = vmatmul.mubr.f32.gmra.mrb[0].mxu0 %v2547
      %v3104 = vpop.f32.mrb[0].mxu0
      %v3105 = vadd.f32 %v2921, %v3104
      %v3106 = vpop.f32.mrb[0].mxu0
      %3107 = vmatprep.mubr.f32.mxu0 %v2557
      %3108 = vmatmul.mubr.f32.gmra.mrb[0].mxu0 %v2556
      %v3109 = vpop.f32.mrb[0].mxu0
      %v3110 = vadd.f32 %v2921, %v3109
      %v3111 = vpop.f32.mrb[0].mxu0
      %3112 = vmatprep.mubr.f32.mxu0 %v2566
      %3113 = vmatmul.mubr.f32.gmra.mrb[0].mxu0 %v2565
      %v3114 = vpop.f32.mrb[0].mxu0
      %v3115 = vadd.f32 %v2921, %v3114
      %v3116 = vpop.f32.mrb[0].mxu0
      %3117 = vmatprep.mubr.f32.mxu0 %v2575
      %3118 = vmatmul.mubr.f32.gmra.mrb[0].mxu0 %v2574
      %v3119 = vpop.f32.mrb[0].mxu0
      %v3120 = vadd.f32 %v2921, %v3119
      %v3121 = vpop.f32.mrb[0].mxu0
      %3122 = vmatprep.mubr.f32.mxu0 %v2584
      %3123 = vmatmul.mubr.f32.gmra.mrb[0].mxu0 %v2583
      %v3124 = vpop.f32.mrb[0].mxu0
      %v3125 = vadd.f32 %v2921, %v3124
      %v3126 = vpop.f32.mrb[0].mxu0
      %3127 = vmatprep.mubr.f32.mxu0 %v2593
      %3128 = vmatmul.mubr.f32.gmra.mrb[0].mxu0 %v2592
      %v3129 = vpop.f32.mrb[0].mxu0
      %v3130 = vadd.f32 %v2921, %v3129
      %v3131 = vpop.f32.mrb[0].mxu0
      %3132 = vmatprep.mubr.f32.mxu0 %v2602
      %3133 = vmatmul.mubr.f32.gmra.mrb[0].mxu0 %v2601
      %v3134 = vpop.f32.mrb[0].mxu0
      %v3135 = vadd.f32 %v2921, %v3134
      %v3136 = vpop.f32.mrb[0].mxu0
      %3137 = vmatprep.mubr.f32.mxu0 %v2611
      %3138 = vmatmul.mubr.f32.gmra.mrb[0].mxu0 %v2610
      %v3139 = vpop.f32.mrb[0].mxu0
      %v3140 = vadd.f32 %v2921, %v3139
      %v3141 = vpop.f32.mrb[0].mxu0
      %3142 = vmatprep.mubr.f32.mxu0 %v2620
      %3143 = vmatmul.mubr.f32.gmra.mrb[0].mxu0 %v2619
      %v3144 = vpop.f32.mrb[0].mxu0
      %v3145 = vadd.f32 %v2921, %v3144
      %v3146 = vpop.f32.mrb[0].mxu0
      %3147 = vmatprep.mubr.f32.mxu0 %v2629
      %3148 = vmatmul.mubr.f32.gmra.mrb[0].mxu0 %v2628
      %v3149 = vpop.f32.mrb[0].mxu0
      %v3150 = vadd.f32 %v2921, %v3149
      %v3151 = vpop.f32.mrb[0].mxu0
      %3152 = vmatprep.mubr.f32.mxu0 %v2638
      %3153 = vmatmul.mubr.f32.gmra.mrb[0].mxu0 %v2637
      %v3154 = vpop.f32.mrb[0].mxu0
      %v3155 = vadd.f32 %v2921, %v3154
      %v3156 = vpop.f32.mrb[0].mxu0
      %3157 = vmatprep.mubr.f32.mxu0 %v2647
      %3158 = vmatmul.mubr.f32.gmra.mrb[0].mxu0 %v2646
      %v3159 = vpop.f32.mrb[0].mxu0
      %v3160 = vadd.f32 %v2921, %v3159
      %v3161 = vpop.f32.mrb[0].mxu0
      %3162 = vmatprep.mubr.f32.mxu0 %v2656
      %3163 = vmatmul.mubr.f32.gmra.mrb[0].mxu0 %v2655
      %v3164 = vpop.f32.mrb[0].mxu0
      %v3165 = vadd.f32 %v2921, %v3164
      %v3166 = vpop.f32.mrb[0].mxu0
      %3167 = vmatprep.mubr.f32.mxu0 %v2665
      %3168 = vmatmul.mubr.f32.gmra.mrb[0].mxu0 %v2664
      %v3169 = vpop.f32.mrb[0].mxu0
      %v3170 = vadd.f32 %v2921, %v3169
      %v3171 = vpop.f32.mrb[0].mxu0
      %3172 = vmatprep.mubr.f32.mxu0 %v2674
      %3173 = vmatmul.mubr.f32.gmra.mrb[0].mxu0 %v2673
      %v3174 = vpop.f32.mrb[0].mxu0
      %v3175 = vadd.f32 %v2921, %v3174
      %v3176 = vpop.f32.mrb[0].mxu0
      %3177 = vmatprep.mubr.f32.mxu0 %v2683
      %3178 = vmatmul.mubr.f32.gmra.mrb[0].mxu0 %v2682
      %v3179 = vpop.f32.mrb[0].mxu0
      %v3180 = vadd.f32 %v2921, %v3179
      %v3181 = vpop.f32.mrb[0].mxu0
      %3182 = vmatprep.mubr.f32.mxu0 %v2692
      %3183 = vmatmul.mubr.f32.gmra.mrb[0].mxu0 %v2691
      %v3184 = vpop.f32.mrb[0].mxu0
      %v3185 = vadd.f32 %v2921, %v3184
      %v3186 = vpop.f32.mrb[0].mxu0
      %3187 = vmatprep.mubr.f32.mxu0 %v2701
      %3188 = vmatmul.mubr.f32.gmra.mrb[0].mxu0 %v2700
      %v3189 = vpop.f32.mrb[0].mxu0
      %v3190 = vadd.f32 %v2921, %v3189
      %v3191 = vpop.f32.mrb[0].mxu0
      %3192 = vmatprep.mubr.f32.mxu0 %v2710
      %3193 = vmatmul.mubr.f32.gmra.mrb[0].mxu0 %v2709
      %v3194 = vpop.f32.mrb[0].mxu0
      %v3195 = vadd.f32 %v2921, %v3194
      %v3196 = vpop.f32.mrb[0].mxu0
      %3197 = vmatprep.mubr.f32.mxu0 %v2719
      %3198 = vmatmul.mubr.f32.gmra.mrb[0].mxu0 %v2718
      %v3199 = vpop.f32.mrb[0].mxu0
      %v3200 = vadd.f32 %v2921, %v3199
      %v3201 = vpop.f32.mrb[0].mxu0
      %3202 = vmatprep.mubr.f32.mxu0 %v2728
      %3203 = vmatmul.mubr.f32.gmra.mrb[0].mxu0 %v2727
      %v3204 = vpop.f32.mrb[0].mxu0
      %v3205 = vadd.f32 %v2921, %v3204
      %v3206 = vpop.f32.mrb[0].mxu0
      %3207 = vmatprep.mubr.f32.mxu0 %v2737
      %3208 = vmatmul.mubr.f32.gmra.mrb[0].mxu0 %v2736
      %v3209 = vpop.f32.mrb[0].mxu0
      %v3210 = vadd.f32 %v2921, %v3209
      %v3211 = vpop.f32.mrb[0].mxu0
      %3212 = vmatprep.mubr.f32.mxu0 %v2746
      %3213 = vmatmul.mubr.f32.gmra.mrb[0].mxu0 %v2745
      %v3214 = vpop.f32.mrb[0].mxu0
      %v3215 = vadd.f32 %v2921, %v3214
      %v3216 = vpop.f32.mrb[0].mxu0
      %3217 = vmatprep.mubr.f32.mxu0 %v2755
      %3218 = vmatmul.mubr.f32.gmra.mrb[0].mxu0 %v2754
      %v3219 = vpop.f32.mrb[0].mxu0
      %v3220 = vadd.f32 %v2921, %v3219
      %v3221 = vpop.f32.mrb[0].mxu0
      %3222 = vmatprep.mubr.f32.mxu0 %v2764
      %3223 = vmatmul.mubr.f32.gmra.mrb[0].mxu0 %v2763
      %v3224 = vpop.f32.mrb[0].mxu0
      %v3225 = vadd.f32 %v2921, %v3224
      %v3226 = vpop.f32.mrb[0].mxu0
      %3227 = vdwg.mxu0
      %3228 = vmatprep.subr.mxu0 0.0
      %3229 = vmatpush1.msra.mxu0 %v2804
      %3230 = vmatprep.subr.mxu0 0.0
      %3231 = vmatpush1.msra.mxu0 %v2805
      %3232 = vmatprep.subr.mxu0 0.0
      %3233 = vmatpush1.msra.mxu0 %v2806
      %3234 = vmatprep.subr.mxu0 0.0
      %3235 = vmatpush1.msra.mxu0 %v2807
      %3236 = vmatprep.subr.mxu0 0.0
      %3237 = vmatpush1.msra.mxu0 %v2808
      %3238 = vmatprep.subr.mxu0 0.0
      %3239 = vmatpush1.msra.mxu0 %v2809
      %3240 = vmatprep.subr.mxu0 0.0
      %3241 = vmatpush1.msra.mxu0 %v2810
      %3242 = vmatprep.subr.mxu0 0.0
      %3243 = vmatpush1.msra.mxu0 %v2811
      %3244 = vmatprep.subr.mxu0 0.0
      %3245 = vmatpush1.msra.mxu0 %v2812
      %3246 = vmatprep.subr.mxu0 0.0
      %3247 = vmatpush1.msra.mxu0 %v2813
      %3248 = vmatprep.subr.mxu0 0.0
      %3249 = vmatpush1.msra.mxu0 %v2814
      %3250 = vmatprep.subr.mxu0 0.0
      %3251 = vmatpush1.msra.mxu0 %v2815
      %3252 = vmatprep.subr.mxu0 0.0
      %3253 = vmatpush1.msra.mxu0 %v2816
      %3254 = vmatprep.subr.mxu0 0.0
      %3255 = vmatpush1.msra.mxu0 %v2817
      %3256 = vmatprep.subr.mxu0 0.0
      %3257 = vmatpush1.msra.mxu0 %v2818
      %3258 = vmatprep.subr.mxu0 0.0
      %3259 = vmatpush1.msra.mxu0 %v2819
      %3260 = vmatprep.subr.mxu0 0.0
      %3261 = vmatpush1.msra.mxu0 %v2820
      %3262 = vmatprep.subr.mxu0 0.0
      %3263 = vmatpush1.msra.mxu0 %v2821
      %3264 = vmatprep.subr.mxu0 0.0
      %3265 = vmatpush1.msra.mxu0 %v2822
      %3266 = vmatprep.subr.mxu0 0.0
      %3267 = vmatpush1.msra.mxu0 %v2823
      %3268 = vmatprep.subr.mxu0 0.0
      %3269 = vmatpush1.msra.mxu0 %v2824
      %3270 = vmatprep.subr.mxu0 0.0
      %3271 = vmatpush1.msra.mxu0 %v2825
      %3272 = vmatprep.subr.mxu0 0.0
      %3273 = vmatpush1.msra.mxu0 %v2826
      %3274 = vmatprep.subr.mxu0 0.0
      %3275 = vmatpush1.msra.mxu0 %v2827
      %3276 = vmatprep.subr.mxu0 0.0
      %3277 = vmatpush1.msra.mxu0 %v2828
      %3278 = vmatprep.subr.mxu0 0.0
      %3279 = vmatpush1.msra.mxu0 %v2829
      %3280 = vmatprep.subr.mxu0 0.0
      %3281 = vmatpush1.msra.mxu0 %v2830
      %3282 = vmatprep.subr.mxu0 0.0
      %3283 = vmatpush1.msra.mxu0 %v2831
      %3284 = vmatprep.subr.mxu0 0.0
      %3285 = vmatpush1.msra.mxu0 %v2832
      %3286 = vmatprep.subr.mxu0 0.0
      %3287 = vmatpush1.msra.mxu0 %v2833
      %3288 = vmatprep.subr.mxu0 0.0
      %3289 = vmatpush1.msra.mxu0 %v2834
      %3290 = vmatprep.subr.mxu0 0.0
      %3291 = vmatpush1.msra.mxu0 %v2835
      %3292 = vmatprep.mubr.f32.mxu0 %v2343
      %3293 = vmatmul.mubr.f32.gmra.mrb[0].mxu0 %v2342
      %v3294 = vpop.f32.mrb[0].mxu0
      %v3295 = vadd.f32 %v2990, %v3294
      %v3296 = vpop.f32.mrb[0].mxu0
      %3297 = vmatprep.mubr.f32.mxu0 %v2352
      %3298 = vmatmul.mubr.f32.gmra.mrb[0].mxu0 %v2351
      %v3299 = vpop.f32.mrb[0].mxu0
      %v3300 = vadd.f32 %v2995, %v3299
      %v3301 = vpop.f32.mrb[0].mxu0
      %3302 = vmatprep.mubr.f32.mxu0 %v2361
      %3303 = vmatmul.mubr.f32.gmra.mrb[0].mxu0 %v2360
      %v3304 = vpop.f32.mrb[0].mxu0
      %v3305 = vadd.f32 %v3000, %v3304
      %v3306 = vpop.f32.mrb[0].mxu0
      %3307 = vmatprep.mubr.f32.mxu0 %v2370
      %3308 = vmatmul.mubr.f32.gmra.mrb[0].mxu0 %v2369
      %v3309 = vpop.f32.mrb[0].mxu0
      %v3310 = vadd.f32 %v3005, %v3309
      %v3311 = vpop.f32.mrb[0].mxu0
      %3312 = vmatprep.mubr.f32.mxu0 %v2379
      %3313 = vmatmul.mubr.f32.gmra.mrb[0].mxu0 %v2378
      %v3314 = vpop.f32.mrb[0].mxu0
      %v3315 = vadd.f32 %v3010, %v3314
      %v3316 = vpop.f32.mrb[0].mxu0
      %3317 = vmatprep.mubr.f32.mxu0 %v2388
      %3318 = vmatmul.mubr.f32.gmra.mrb[0].mxu0 %v2387
      %v3319 = vpop.f32.mrb[0].mxu0
      %v3320 = vadd.f32 %v3015, %v3319
      %v3321 = vpop.f32.mrb[0].mxu0
      %3322 = vmatprep.mubr.f32.mxu0 %v2397
      %3323 = vmatmul.mubr.f32.gmra.mrb[0].mxu0 %v2396
      %v3324 = vpop.f32.mrb[0].mxu0
      %v3325 = vadd.f32 %v3020, %v3324
      %v3326 = vpop.f32.mrb[0].mxu0
      %3327 = vmatprep.mubr.f32.mxu0 %v2406
      %3328 = vmatmul.mubr.f32.gmra.mrb[0].mxu0 %v2405
      %v3329 = vpop.f32.mrb[0].mxu0
      %v3330 = vadd.f32 %v3025, %v3329
      %v3331 = vpop.f32.mrb[0].mxu0
      %3332 = vmatprep.mubr.f32.mxu0 %v2415
      %3333 = vmatmul.mubr.f32.gmra.mrb[0].mxu0 %v2414
      %v3334 = vpop.f32.mrb[0].mxu0
      %v3335 = vadd.f32 %v3030, %v3334
      %v3336 = vpop.f32.mrb[0].mxu0
      %3337 = vmatprep.mubr.f32.mxu0 %v2424
      %3338 = vmatmul.mubr.f32.gmra.mrb[0].mxu0 %v2423
      %v3339 = vpop.f32.mrb[0].mxu0
      %v3340 = vadd.f32 %v3035, %v3339
      %v3341 = vpop.f32.mrb[0].mxu0
      %3342 = vmatprep.mubr.f32.mxu0 %v2433
      %3343 = vmatmul.mubr.f32.gmra.mrb[0].mxu0 %v2432
      %v3344 = vpop.f32.mrb[0].mxu0
      %v3345 = vadd.f32 %v3040, %v3344
      %v3346 = vpop.f32.mrb[0].mxu0
      %3347 = vmatprep.mubr.f32.mxu0 %v2442
      %3348 = vmatmul.mubr.f32.gmra.mrb[0].mxu0 %v2441
      %v3349 = vpop.f32.mrb[0].mxu0
      %v3350 = vadd.f32 %v3045, %v3349
      %v3351 = vpop.f32.mrb[0].mxu0
      %3352 = vmatprep.mubr.f32.mxu0 %v2451
      %3353 = vmatmul.mubr.f32.gmra.mrb[0].mxu0 %v2450
      %v3354 = vpop.f32.mrb[0].mxu0
      %v3355 = vadd.f32 %v3050, %v3354
      %v3356 = vpop.f32.mrb[0].mxu0
      %3357 = vmatprep.mubr.f32.mxu0 %v2460
      %3358 = vmatmul.mubr.f32.gmra.mrb[0].mxu0 %v2459
      %v3359 = vpop.f32.mrb[0].mxu0
      %v3360 = vadd.f32 %v3055, %v3359
      %v3361 = vpop.f32.mrb[0].mxu0
      %3362 = vmatprep.mubr.f32.mxu0 %v2469
      %3363 = vmatmul.mubr.f32.gmra.mrb[0].mxu0 %v2468
      %v3364 = vpop.f32.mrb[0].mxu0
      %v3365 = vadd.f32 %v3060, %v3364
      %v3366 = vpop.f32.mrb[0].mxu0
      %3367 = vmatprep.mubr.f32.mxu0 %v2478
      %3368 = vmatmul.mubr.f32.gmra.mrb[0].mxu0 %v2477
      %v3369 = vpop.f32.mrb[0].mxu0
      %v3370 = vadd.f32 %v3065, %v3369
      %v3371 = vpop.f32.mrb[0].mxu0
      %3372 = vmatprep.mubr.f32.mxu0 %v2487
      %3373 = vmatmul.mubr.f32.gmra.mrb[0].mxu0 %v2486
      %v3374 = vpop.f32.mrb[0].mxu0
      %v3375 = vadd.f32 %v3070, %v3374
      %v3376 = vpop.f32.mrb[0].mxu0
      %3377 = vmatprep.mubr.f32.mxu0 %v2496
      %3378 = vmatmul.mubr.f32.gmra.mrb[0].mxu0 %v2495
      %v3379 = vpop.f32.mrb[0].mxu0
      %v3380 = vadd.f32 %v3075, %v3379
      %v3381 = vpop.f32.mrb[0].mxu0
      %3382 = vmatprep.mubr.f32.mxu0 %v2505
      %3383 = vmatmul.mubr.f32.gmra.mrb[0].mxu0 %v2504
      %v3384 = vpop.f32.mrb[0].mxu0
      %v3385 = vadd.f32 %v3080, %v3384
      %v3386 = vpop.f32.mrb[0].mxu0
      %3387 = vmatprep.mubr.f32.mxu0 %v2514
      %3388 = vmatmul.mubr.f32.gmra.mrb[0].mxu0 %v2513
      %v3389 = vpop.f32.mrb[0].mxu0
      %v3390 = vadd.f32 %v3085, %v3389
      %v3391 = vpop.f32.mrb[0].mxu0
      %3392 = vmatprep.mubr.f32.mxu0 %v2523
      %3393 = vmatmul.mubr.f32.gmra.mrb[0].mxu0 %v2522
      %v3394 = vpop.f32.mrb[0].mxu0
      %v3395 = vadd.f32 %v3090, %v3394
      %v3396 = vpop.f32.mrb[0].mxu0
      %3397 = vmatprep.mubr.f32.mxu0 %v2532
      %3398 = vmatmul.mubr.f32.gmra.mrb[0].mxu0 %v2531
      %v3399 = vpop.f32.mrb[0].mxu0
      %v3400 = vadd.f32 %v3095, %v3399
      %v3401 = vpop.f32.mrb[0].mxu0
      %3402 = vmatprep.mubr.f32.mxu0 %v2541
      %3403 = vmatmul.mubr.f32.gmra.mrb[0].mxu0 %v2540
      %v3404 = vpop.f32.mrb[0].mxu0
      %v3405 = vadd.f32 %v3100, %v3404
      %v3406 = vpop.f32.mrb[0].mxu0
      %3407 = vmatprep.mubr.f32.mxu0 %v2550
      %3408 = vmatmul.mubr.f32.gmra.mrb[0].mxu0 %v2549
      %v3409 = vpop.f32.mrb[0].mxu0
      %v3410 = vadd.f32 %v3105, %v3409
      %v3411 = vpop.f32.mrb[0].mxu0
      %3412 = vmatprep.mubr.f32.mxu0 %v2559
      %3413 = vmatmul.mubr.f32.gmra.mrb[0].mxu0 %v2558
      %v3414 = vpop.f32.mrb[0].mxu0
      %v3415 = vadd.f32 %v3110, %v3414
      %v3416 = vpop.f32.mrb[0].mxu0
      %3417 = vmatprep.mubr.f32.mxu0 %v2568
      %3418 = vmatmul.mubr.f32.gmra.mrb[0].mxu0 %v2567
      %v3419 = vpop.f32.mrb[0].mxu0
      %v3420 = vadd.f32 %v3115, %v3419
      %v3421 = vpop.f32.mrb[0].mxu0
      %3422 = vmatprep.mubr.f32.mxu0 %v2577
      %3423 = vmatmul.mubr.f32.gmra.mrb[0].mxu0 %v2576
      %v3424 = vpop.f32.mrb[0].mxu0
      %v3425 = vadd.f32 %v3120, %v3424
      %v3426 = vpop.f32.mrb[0].mxu0
      %3427 = vmatprep.mubr.f32.mxu0 %v2586
      %3428 = vmatmul.mubr.f32.gmra.mrb[0].mxu0 %v2585
      %v3429 = vpop.f32.mrb[0].mxu0
      %v3430 = vadd.f32 %v3125, %v3429
      %v3431 = vpop.f32.mrb[0].mxu0
      %3432 = vmatprep.mubr.f32.mxu0 %v2595
      %3433 = vmatmul.mubr.f32.gmra.mrb[0].mxu0 %v2594
      %v3434 = vpop.f32.mrb[0].mxu0
      %v3435 = vadd.f32 %v3130, %v3434
      %v3436 = vpop.f32.mrb[0].mxu0
      %3437 = vmatprep.mubr.f32.mxu0 %v2604
      %3438 = vmatmul.mubr.f32.gmra.mrb[0].mxu0 %v2603
      %v3439 = vpop.f32.mrb[0].mxu0
      %v3440 = vadd.f32 %v3135, %v3439
      %v3441 = vpop.f32.mrb[0].mxu0
      %3442 = vmatprep.mubr.f32.mxu0 %v2613
      %3443 = vmatmul.mubr.f32.gmra.mrb[0].mxu0 %v2612
      %v3444 = vpop.f32.mrb[0].mxu0
      %v3445 = vadd.f32 %v3140, %v3444
      %v3446 = vpop.f32.mrb[0].mxu0
      %3447 = vmatprep.mubr.f32.mxu0 %v2622
      %3448 = vmatmul.mubr.f32.gmra.mrb[0].mxu0 %v2621
      %v3449 = vpop.f32.mrb[0].mxu0
      %v3450 = vadd.f32 %v3145, %v3449
      %v3451 = vpop.f32.mrb[0].mxu0
      %3452 = vmatprep.mubr.f32.mxu0 %v2631
      %3453 = vmatmul.mubr.f32.gmra.mrb[0].mxu0 %v2630
      %v3454 = vpop.f32.mrb[0].mxu0
      %v3455 = vadd.f32 %v3150, %v3454
      %v3456 = vpop.f32.mrb[0].mxu0
      %3457 = vmatprep.mubr.f32.mxu0 %v2640
      %3458 = vmatmul.mubr.f32.gmra.mrb[0].mxu0 %v2639
      %v3459 = vpop.f32.mrb[0].mxu0
      %v3460 = vadd.f32 %v3155, %v3459
      %v3461 = vpop.f32.mrb[0].mxu0
      %3462 = vmatprep.mubr.f32.mxu0 %v2649
      %3463 = vmatmul.mubr.f32.gmra.mrb[0].mxu0 %v2648
      %v3464 = vpop.f32.mrb[0].mxu0
      %v3465 = vadd.f32 %v3160, %v3464
      %v3466 = vpop.f32.mrb[0].mxu0
      %3467 = vmatprep.mubr.f32.mxu0 %v2658
      %3468 = vmatmul.mubr.f32.gmra.mrb[0].mxu0 %v2657
      %v3469 = vpop.f32.mrb[0].mxu0
      %v3470 = vadd.f32 %v3165, %v3469
      %v3471 = vpop.f32.mrb[0].mxu0
      %3472 = vmatprep.mubr.f32.mxu0 %v2667
      %3473 = vmatmul.mubr.f32.gmra.mrb[0].mxu0 %v2666
      %v3474 = vpop.f32.mrb[0].mxu0
      %v3475 = vadd.f32 %v3170, %v3474
      %v3476 = vpop.f32.mrb[0].mxu0
      %3477 = vmatprep.mubr.f32.mxu0 %v2676
      %3478 = vmatmul.mubr.f32.gmra.mrb[0].mxu0 %v2675
      %v3479 = vpop.f32.mrb[0].mxu0
      %v3480 = vadd.f32 %v3175, %v3479
      %v3481 = vpop.f32.mrb[0].mxu0
      %3482 = vmatprep.mubr.f32.mxu0 %v2685
      %3483 = vmatmul.mubr.f32.gmra.mrb[0].mxu0 %v2684
      %v3484 = vpop.f32.mrb[0].mxu0
      %v3485 = vadd.f32 %v3180, %v3484
      %v3486 = vpop.f32.mrb[0].mxu0
      %3487 = vmatprep.mubr.f32.mxu0 %v2694
      %3488 = vmatmul.mubr.f32.gmra.mrb[0].mxu0 %v2693
      %v3489 = vpop.f32.mrb[0].mxu0
      %v3490 = vadd.f32 %v3185, %v3489
      %v3491 = vpop.f32.mrb[0].mxu0
      %3492 = vmatprep.mubr.f32.mxu0 %v2703
      %3493 = vmatmul.mubr.f32.gmra.mrb[0].mxu0 %v2702
      %v3494 = vpop.f32.mrb[0].mxu0
      %v3495 = vadd.f32 %v3190, %v3494
      %v3496 = vpop.f32.mrb[0].mxu0
      %3497 = vmatprep.mubr.f32.mxu0 %v2712
      %3498 = vmatmul.mubr.f32.gmra.mrb[0].mxu0 %v2711
      %v3499 = vpop.f32.mrb[0].mxu0
      %v3500 = vadd.f32 %v3195, %v3499
      %v3501 = vpop.f32.mrb[0].mxu0
      %3502 = vmatprep.mubr.f32.mxu0 %v2721
      %3503 = vmatmul.mubr.f32.gmra.mrb[0].mxu0 %v2720
      %v3504 = vpop.f32.mrb[0].mxu0
      %v3505 = vadd.f32 %v3200, %v3504
      %v3506 = vpop.f32.mrb[0].mxu0
      %3507 = vmatprep.mubr.f32.mxu0 %v2730
      %3508 = vmatmul.mubr.f32.gmra.mrb[0].mxu0 %v2729
      %v3509 = vpop.f32.mrb[0].mxu0
      %v3510 = vadd.f32 %v3205, %v3509
      %v3511 = vpop.f32.mrb[0].mxu0
      %3512 = vmatprep.mubr.f32.mxu0 %v2739
      %3513 = vmatmul.mubr.f32.gmra.mrb[0].mxu0 %v2738
      %v3514 = vpop.f32.mrb[0].mxu0
      %v3515 = vadd.f32 %v3210, %v3514
      %v3516 = vpop.f32.mrb[0].mxu0
      %3517 = vmatprep.mubr.f32.mxu0 %v2748
      %3518 = vmatmul.mubr.f32.gmra.mrb[0].mxu0 %v2747
      %v3519 = vpop.f32.mrb[0].mxu0
      %v3520 = vadd.f32 %v3215, %v3519
      %v3521 = vpop.f32.mrb[0].mxu0
      %3522 = vmatprep.mubr.f32.mxu0 %v2757
      %3523 = vmatmul.mubr.f32.gmra.mrb[0].mxu0 %v2756
      %v3524 = vpop.f32.mrb[0].mxu0
      %v3525 = vadd.f32 %v3220, %v3524
      %v3526 = vpop.f32.mrb[0].mxu0
      %3527 = vmatprep.mubr.f32.mxu0 %v2766
      %3528 = vmatmul.mubr.f32.gmra.mrb[0].mxu0 %v2765
      %v3529 = vpop.f32.mrb[0].mxu0
      %v3530 = vadd.f32 %v3225, %v3529
      %v3531 = vpop.f32.mrb[0].mxu0
      %3532 = vdwg.mxu0
      %3533 = vmatprep.subr.mxu0 0.0
      %3534 = vmatpush1.msra.mxu0 %v2836
      %3535 = vmatprep.subr.mxu0 0.0
      %3536 = vmatpush1.msra.mxu0 %v2837
      %3537 = vmatprep.subr.mxu0 0.0
      %3538 = vmatpush1.msra.mxu0 %v2838
      %3539 = vmatprep.subr.mxu0 0.0
      %3540 = vmatpush1.msra.mxu0 %v2839
      %3541 = vmatprep.subr.mxu0 0.0
      %3542 = vmatpush1.msra.mxu0 %v2840
      %3543 = vmatprep.subr.mxu0 0.0
      %3544 = vmatpush1.msra.mxu0 %v2841
      %3545 = vmatprep.subr.mxu0 0.0
      %3546 = vmatpush1.msra.mxu0 %v2842
      %3547 = vmatprep.subr.mxu0 0.0
      %3548 = vmatpush1.msra.mxu0 %v2843
      %3549 = vmatprep.subr.mxu0 0.0
      %3550 = vmatpush1.msra.mxu0 %v2844
      %3551 = vmatprep.subr.mxu0 0.0
      %3552 = vmatpush1.msra.mxu0 %v2845
      %3553 = vmatprep.subr.mxu0 0.0
      %3554 = vmatpush1.msra.mxu0 %v2846
      %3555 = vmatprep.subr.mxu0 0.0
      %3556 = vmatpush1.msra.mxu0 %v2847
      %3557 = vmatprep.subr.mxu0 0.0
      %3558 = vmatpush1.msra.mxu0 %v2848
      %3559 = vmatprep.subr.mxu0 0.0
      %3560 = vmatpush1.msra.mxu0 %v2849
      %3561 = vmatprep.subr.mxu0 0.0
      %3562 = vmatpush1.msra.mxu0 %v2850
      %3563 = vmatprep.subr.mxu0 0.0
      %3564 = vmatpush1.msra.mxu0 %v2851
      %3565 = vmatprep.subr.mxu0 0.0
      %3566 = vmatpush1.msra.mxu0 %v2852
      %3567 = vmatprep.subr.mxu0 0.0
      %3568 = vmatpush1.msra.mxu0 %v2853
      %3569 = vmatprep.subr.mxu0 0.0
      %3570 = vmatpush1.msra.mxu0 %v2854
      %3571 = vmatprep.subr.mxu0 0.0
      %3572 = vmatpush1.msra.mxu0 %v2855
      %3573 = vmatprep.subr.mxu0 0.0
      %3574 = vmatpush1.msra.mxu0 %v2856
      %3575 = vmatprep.subr.mxu0 0.0
      %3576 = vmatpush1.msra.mxu0 %v2857
      %3577 = vmatprep.subr.mxu0 0.0
      %3578 = vmatpush1.msra.mxu0 %v2858
      %3579 = vmatprep.subr.mxu0 0.0
      %3580 = vmatpush1.msra.mxu0 %v2859
      %3581 = vmatprep.subr.mxu0 0.0
      %3582 = vmatpush1.msra.mxu0 %v2860
      %3583 = vmatprep.subr.mxu0 0.0
      %3584 = vmatpush1.msra.mxu0 %v2861
      %3585 = vmatprep.subr.mxu0 0.0
      %3586 = vmatpush1.msra.mxu0 %v2862
      %3587 = vmatprep.subr.mxu0 0.0
      %3588 = vmatpush1.msra.mxu0 %v2863
      %3589 = vmatprep.subr.mxu0 0.0
      %3590 = vmatpush1.msra.mxu0 %v2864
      %3591 = vmatprep.subr.mxu0 0.0
      %3592 = vmatpush1.msra.mxu0 %v2865
      %3593 = vmatprep.subr.mxu0 0.0
      %3594 = vmatpush1.msra.mxu0 %v2866
      %3595 = vmatprep.subr.mxu0 0.0
      %3596 = vmatpush1.msra.mxu0 %v2867
      %3597 = vmatprep.mubr.f32.mxu0 %v2345
      %3598 = vmatmul.mubr.f32.gmra.mrb[0].mxu0 %v2344
      %v3599 = vpop.f32.mrb[0].mxu0
      %v3600 = vadd.f32 %v3295, %v3599
      %v3601 = vpop.f32.mrb[0].mxu0
      %3602 = vmatprep.mubr.f32.mxu0 %v2354
      %3603 = vmatmul.mubr.f32.gmra.mrb[0].mxu0 %v2353
      %v3604 = vpop.f32.mrb[0].mxu0
      %v3605 = vadd.f32 %v3300, %v3604
      %v3606 = vpop.f32.mrb[0].mxu0
      %3607 = vmatprep.mubr.f32.mxu0 %v2363
      %3608 = vmatmul.mubr.f32.gmra.mrb[0].mxu0 %v2362
      %v3609 = vpop.f32.mrb[0].mxu0
      %v3610 = vadd.f32 %v3305, %v3609
      %v3611 = vpop.f32.mrb[0].mxu0
      %3612 = vmatprep.mubr.f32.mxu0 %v2372
      %3613 = vmatmul.mubr.f32.gmra.mrb[0].mxu0 %v2371
      %v3614 = vpop.f32.mrb[0].mxu0
      %v3615 = vadd.f32 %v3310, %v3614
      %v3616 = vpop.f32.mrb[0].mxu0
      %3617 = vmatprep.mubr.f32.mxu0 %v2381
      %3618 = vmatmul.mubr.f32.gmra.mrb[0].mxu0 %v2380
      %v3619 = vpop.f32.mrb[0].mxu0
      %v3620 = vadd.f32 %v3315, %v3619
      %v3621 = vpop.f32.mrb[0].mxu0
      %3622 = vmatprep.mubr.f32.mxu0 %v2390
      %3623 = vmatmul.mubr.f32.gmra.mrb[0].mxu0 %v2389
      %v3624 = vpop.f32.mrb[0].mxu0
      %v3625 = vadd.f32 %v3320, %v3624
      %v3626 = vpop.f32.mrb[0].mxu0
      %3627 = vmatprep.mubr.f32.mxu0 %v2399
      %3628 = vmatmul.mubr.f32.gmra.mrb[0].mxu0 %v2398
      %v3629 = vpop.f32.mrb[0].mxu0
      %v3630 = vadd.f32 %v3325, %v3629
      %v3631 = vpop.f32.mrb[0].mxu0
      %3632 = vmatprep.mubr.f32.mxu0 %v2408
      %3633 = vmatmul.mubr.f32.gmra.mrb[0].mxu0 %v2407
      %v3634 = vpop.f32.mrb[0].mxu0
      %v3635 = vadd.f32 %v3330, %v3634
      %v3636 = vpop.f32.mrb[0].mxu0
      %3637 = vmatprep.mubr.f32.mxu0 %v2417
      %3638 = vmatmul.mubr.f32.gmra.mrb[0].mxu0 %v2416
      %v3639 = vpop.f32.mrb[0].mxu0
      %v3640 = vadd.f32 %v3335, %v3639
      %v3641 = vpop.f32.mrb[0].mxu0
      %3642 = vmatprep.mubr.f32.mxu0 %v2426
      %3643 = vmatmul.mubr.f32.gmra.mrb[0].mxu0 %v2425
      %v3644 = vpop.f32.mrb[0].mxu0
      %v3645 = vadd.f32 %v3340, %v3644
      %v3646 = vpop.f32.mrb[0].mxu0
      %3647 = vmatprep.mubr.f32.mxu0 %v2435
      %3648 = vmatmul.mubr.f32.gmra.mrb[0].mxu0 %v2434
      %v3649 = vpop.f32.mrb[0].mxu0
      %v3650 = vadd.f32 %v3345, %v3649
      %v3651 = vpop.f32.mrb[0].mxu0
      %3652 = vmatprep.mubr.f32.mxu0 %v2444
      %3653 = vmatmul.mubr.f32.gmra.mrb[0].mxu0 %v2443
      %v3654 = vpop.f32.mrb[0].mxu0
      %v3655 = vadd.f32 %v3350, %v3654
      %v3656 = vpop.f32.mrb[0].mxu0
      %3657 = vmatprep.mubr.f32.mxu0 %v2453
      %3658 = vmatmul.mubr.f32.gmra.mrb[0].mxu0 %v2452
      %v3659 = vpop.f32.mrb[0].mxu0
      %v3660 = vadd.f32 %v3355, %v3659
      %v3661 = vpop.f32.mrb[0].mxu0
      %3662 = vmatprep.mubr.f32.mxu0 %v2462
      %3663 = vmatmul.mubr.f32.gmra.mrb[0].mxu0 %v2461
      %v3664 = vpop.f32.mrb[0].mxu0
      %v3665 = vadd.f32 %v3360, %v3664
      %v3666 = vpop.f32.mrb[0].mxu0
      %3667 = vmatprep.mubr.f32.mxu0 %v2471
      %3668 = vmatmul.mubr.f32.gmra.mrb[0].mxu0 %v2470
      %v3669 = vpop.f32.mrb[0].mxu0
      %v3670 = vadd.f32 %v3365, %v3669
      %v3671 = vpop.f32.mrb[0].mxu0
      %3672 = vmatprep.mubr.f32.mxu0 %v2480
      %3673 = vmatmul.mubr.f32.gmra.mrb[0].mxu0 %v2479
      %v3674 = vpop.f32.mrb[0].mxu0
      %v3675 = vadd.f32 %v3370, %v3674
      %v3676 = vpop.f32.mrb[0].mxu0
      %3677 = vmatprep.mubr.f32.mxu0 %v2489
      %3678 = vmatmul.mubr.f32.gmra.mrb[0].mxu0 %v2488
      %v3679 = vpop.f32.mrb[0].mxu0
      %v3680 = vadd.f32 %v3375, %v3679
      %v3681 = vpop.f32.mrb[0].mxu0
      %3682 = vmatprep.mubr.f32.mxu0 %v2498
      %3683 = vmatmul.mubr.f32.gmra.mrb[0].mxu0 %v2497
      %v3684 = vpop.f32.mrb[0].mxu0
      %v3685 = vadd.f32 %v3380, %v3684
      %v3686 = vpop.f32.mrb[0].mxu0
      %3687 = vmatprep.mubr.f32.mxu0 %v2507
      %3688 = vmatmul.mubr.f32.gmra.mrb[0].mxu0 %v2506
      %v3689 = vpop.f32.mrb[0].mxu0
      %v3690 = vadd.f32 %v3385, %v3689
      %v3691 = vpop.f32.mrb[0].mxu0
      %3692 = vmatprep.mubr.f32.mxu0 %v2516
      %3693 = vmatmul.mubr.f32.gmra.mrb[0].mxu0 %v2515
      %v3694 = vpop.f32.mrb[0].mxu0
      %v3695 = vadd.f32 %v3390, %v3694
      %v3696 = vpop.f32.mrb[0].mxu0
      %3697 = vmatprep.mubr.f32.mxu0 %v2525
      %3698 = vmatmul.mubr.f32.gmra.mrb[0].mxu0 %v2524
      %v3699 = vpop.f32.mrb[0].mxu0
      %v3700 = vadd.f32 %v3395, %v3699
      %v3701 = vpop.f32.mrb[0].mxu0
      %3702 = vmatprep.mubr.f32.mxu0 %v2534
      %3703 = vmatmul.mubr.f32.gmra.mrb[0].mxu0 %v2533
      %v3704 = vpop.f32.mrb[0].mxu0
      %v3705 = vadd.f32 %v3400, %v3704
      %v3706 = vpop.f32.mrb[0].mxu0
      %3707 = vmatprep.mubr.f32.mxu0 %v2543
      %3708 = vmatmul.mubr.f32.gmra.mrb[0].mxu0 %v2542
      %v3709 = vpop.f32.mrb[0].mxu0
      %v3710 = vadd.f32 %v3405, %v3709
      %v3711 = vpop.f32.mrb[0].mxu0
      %3712 = vmatprep.mubr.f32.mxu0 %v2552
      %3713 = vmatmul.mubr.f32.gmra.mrb[0].mxu0 %v2551
      %v3714 = vpop.f32.mrb[0].mxu0
      %v3715 = vadd.f32 %v3410, %v3714
      %v3716 = vpop.f32.mrb[0].mxu0
      %3717 = vmatprep.mubr.f32.mxu0 %v2561
      %3718 = vmatmul.mubr.f32.gmra.mrb[0].mxu0 %v2560
      %v3719 = vpop.f32.mrb[0].mxu0
      %v3720 = vadd.f32 %v3415, %v3719
      %v3721 = vpop.f32.mrb[0].mxu0
      %3722 = vmatprep.mubr.f32.mxu0 %v2570
      %3723 = vmatmul.mubr.f32.gmra.mrb[0].mxu0 %v2569
      %v3724 = vpop.f32.mrb[0].mxu0
      %v3725 = vadd.f32 %v3420, %v3724
      %v3726 = vpop.f32.mrb[0].mxu0
      %3727 = vmatprep.mubr.f32.mxu0 %v2579
      %3728 = vmatmul.mubr.f32.gmra.mrb[0].mxu0 %v2578
      %v3729 = vpop.f32.mrb[0].mxu0
      %v3730 = vadd.f32 %v3425, %v3729
      %v3731 = vpop.f32.mrb[0].mxu0
      %3732 = vmatprep.mubr.f32.mxu0 %v2588
      %3733 = vmatmul.mubr.f32.gmra.mrb[0].mxu0 %v2587
      %v3734 = vpop.f32.mrb[0].mxu0
      %v3735 = vadd.f32 %v3430, %v3734
      %v3736 = vpop.f32.mrb[0].mxu0
      %3737 = vmatprep.mubr.f32.mxu0 %v2597
      %3738 = vmatmul.mubr.f32.gmra.mrb[0].mxu0 %v2596
      %v3739 = vpop.f32.mrb[0].mxu0
      %v3740 = vadd.f32 %v3435, %v3739
      %v3741 = vpop.f32.mrb[0].mxu0
      %3742 = vmatprep.mubr.f32.mxu0 %v2606
      %3743 = vmatmul.mubr.f32.gmra.mrb[0].mxu0 %v2605
      %v3744 = vpop.f32.mrb[0].mxu0
      %v3745 = vadd.f32 %v3440, %v3744
      %v3746 = vpop.f32.mrb[0].mxu0
      %3747 = vmatprep.mubr.f32.mxu0 %v2615
      %3748 = vmatmul.mubr.f32.gmra.mrb[0].mxu0 %v2614
      %v3749 = vpop.f32.mrb[0].mxu0
      %v3750 = vadd.f32 %v3445, %v3749
      %v3751 = vpop.f32.mrb[0].mxu0
      %3752 = vmatprep.mubr.f32.mxu0 %v2624
      %3753 = vmatmul.mubr.f32.gmra.mrb[0].mxu0 %v2623
      %v3754 = vpop.f32.mrb[0].mxu0
      %v3755 = vadd.f32 %v3450, %v3754
      %v3756 = vpop.f32.mrb[0].mxu0
      %3757 = vmatprep.mubr.f32.mxu0 %v2633
      %3758 = vmatmul.mubr.f32.gmra.mrb[0].mxu0 %v2632
      %v3759 = vpop.f32.mrb[0].mxu0
      %v3760 = vadd.f32 %v3455, %v3759
      %v3761 = vpop.f32.mrb[0].mxu0
      %3762 = vmatprep.mubr.f32.mxu0 %v2642
      %3763 = vmatmul.mubr.f32.gmra.mrb[0].mxu0 %v2641
      %v3764 = vpop.f32.mrb[0].mxu0
      %v3765 = vadd.f32 %v3460, %v3764
      %v3766 = vpop.f32.mrb[0].mxu0
      %3767 = vmatprep.mubr.f32.mxu0 %v2651
      %3768 = vmatmul.mubr.f32.gmra.mrb[0].mxu0 %v2650
      %v3769 = vpop.f32.mrb[0].mxu0
      %v3770 = vadd.f32 %v3465, %v3769
      %v3771 = vpop.f32.mrb[0].mxu0
      %3772 = vmatprep.mubr.f32.mxu0 %v2660
      %3773 = vmatmul.mubr.f32.gmra.mrb[0].mxu0 %v2659
      %v3774 = vpop.f32.mrb[0].mxu0
      %v3775 = vadd.f32 %v3470, %v3774
      %v3776 = vpop.f32.mrb[0].mxu0
      %3777 = vmatprep.mubr.f32.mxu0 %v2669
      %3778 = vmatmul.mubr.f32.gmra.mrb[0].mxu0 %v2668
      %v3779 = vpop.f32.mrb[0].mxu0
      %v3780 = vadd.f32 %v3475, %v3779
      %v3781 = vpop.f32.mrb[0].mxu0
      %3782 = vmatprep.mubr.f32.mxu0 %v2678
      %3783 = vmatmul.mubr.f32.gmra.mrb[0].mxu0 %v2677
      %v3784 = vpop.f32.mrb[0].mxu0
      %v3785 = vadd.f32 %v3480, %v3784
      %v3786 = vpop.f32.mrb[0].mxu0
      %3787 = vmatprep.mubr.f32.mxu0 %v2687
      %3788 = vmatmul.mubr.f32.gmra.mrb[0].mxu0 %v2686
      %v3789 = vpop.f32.mrb[0].mxu0
      %v3790 = vadd.f32 %v3485, %v3789
      %v3791 = vpop.f32.mrb[0].mxu0
      %3792 = vmatprep.mubr.f32.mxu0 %v2696
      %3793 = vmatmul.mubr.f32.gmra.mrb[0].mxu0 %v2695
      %v3794 = vpop.f32.mrb[0].mxu0
      %v3795 = vadd.f32 %v3490, %v3794
      %v3796 = vpop.f32.mrb[0].mxu0
      %3797 = vmatprep.mubr.f32.mxu0 %v2705
      %3798 = vmatmul.mubr.f32.gmra.mrb[0].mxu0 %v2704
      %v3799 = vpop.f32.mrb[0].mxu0
      %v3800 = vadd.f32 %v3495, %v3799
      %v3801 = vpop.f32.mrb[0].mxu0
      %3802 = vmatprep.mubr.f32.mxu0 %v2714
      %3803 = vmatmul.mubr.f32.gmra.mrb[0].mxu0 %v2713
      %v3804 = vpop.f32.mrb[0].mxu0
      %v3805 = vadd.f32 %v3500, %v3804
      %v3806 = vpop.f32.mrb[0].mxu0
      %3807 = vmatprep.mubr.f32.mxu0 %v2723
      %3808 = vmatmul.mubr.f32.gmra.mrb[0].mxu0 %v2722
      %v3809 = vpop.f32.mrb[0].mxu0
      %v3810 = vadd.f32 %v3505, %v3809
      %v3811 = vpop.f32.mrb[0].mxu0
      %3812 = vmatprep.mubr.f32.mxu0 %v2732
      %3813 = vmatmul.mubr.f32.gmra.mrb[0].mxu0 %v2731
      %v3814 = vpop.f32.mrb[0].mxu0
      %v3815 = vadd.f32 %v3510, %v3814
      %v3816 = vpop.f32.mrb[0].mxu0
      %3817 = vmatprep.mubr.f32.mxu0 %v2741
      %3818 = vmatmul.mubr.f32.gmra.mrb[0].mxu0 %v2740
      %v3819 = vpop.f32.mrb[0].mxu0
      %v3820 = vadd.f32 %v3515, %v3819
      %v3821 = vpop.f32.mrb[0].mxu0
      %3822 = vmatprep.mubr.f32.mxu0 %v2750
      %3823 = vmatmul.mubr.f32.gmra.mrb[0].mxu0 %v2749
      %v3824 = vpop.f32.mrb[0].mxu0
      %v3825 = vadd.f32 %v3520, %v3824
      %v3826 = vpop.f32.mrb[0].mxu0
      %3827 = vmatprep.mubr.f32.mxu0 %v2759
      %3828 = vmatmul.mubr.f32.gmra.mrb[0].mxu0 %v2758
      %v3829 = vpop.f32.mrb[0].mxu0
      %v3830 = vadd.f32 %v3525, %v3829
      %v3831 = vpop.f32.mrb[0].mxu0
      %3832 = vmatprep.mubr.f32.mxu0 %v2768
      %3833 = vmatmul.mubr.f32.gmra.mrb[0].mxu0 %v2767
      %v3834 = vpop.f32.mrb[0].mxu0
      %v3835 = vadd.f32 %v3530, %v3834
      %v3836 = vpop.f32.mrb[0].mxu0
      %3837 = vdwg.mxu0
      %3838 = vmatprep.subr.mxu0 0.0
      %3839 = vmatpush1.msra.mxu0 %v2868
      %3840 = vmatprep.subr.mxu0 0.0
      %3841 = vmatpush1.msra.mxu0 %v2869
      %3842 = vmatprep.subr.mxu0 0.0
      %3843 = vmatpush1.msra.mxu0 %v2870
      %3844 = vmatprep.subr.mxu0 0.0
      %3845 = vmatpush1.msra.mxu0 %v2871
      %3846 = vmatprep.subr.mxu0 0.0
      %3847 = vmatpush1.msra.mxu0 %v2872
      %3848 = vmatprep.subr.mxu0 0.0
      %3849 = vmatpush1.msra.mxu0 %v2873
      %3850 = vmatprep.subr.mxu0 0.0
      %3851 = vmatpush1.msra.mxu0 %v2874
      %3852 = vmatprep.subr.mxu0 0.0
      %3853 = vmatpush1.msra.mxu0 %v2875
      %3854 = vmatprep.subr.mxu0 0.0
      %3855 = vmatpush1.msra.mxu0 %v2876
      %3856 = vmatprep.subr.mxu0 0.0
      %3857 = vmatpush1.msra.mxu0 %v2877
      %3858 = vmatprep.subr.mxu0 0.0
      %3859 = vmatpush1.msra.mxu0 %v2878
      %3860 = vmatprep.subr.mxu0 0.0
      %3861 = vmatpush1.msra.mxu0 %v2879
      %3862 = vmatprep.subr.mxu0 0.0
      %3863 = vmatpush1.msra.mxu0 %v2880
      %3864 = vmatprep.subr.mxu0 0.0
      %3865 = vmatpush1.msra.mxu0 %v2881
      %3866 = vmatprep.subr.mxu0 0.0
      %3867 = vmatpush1.msra.mxu0 %v2882
      %3868 = vmatprep.subr.mxu0 0.0
      %3869 = vmatpush1.msra.mxu0 %v2883
      %3870 = vmatprep.subr.mxu0 0.0
      %3871 = vmatpush1.msra.mxu0 %v2884
      %3872 = vmatprep.subr.mxu0 0.0
      %3873 = vmatpush1.msra.mxu0 %v2885
      %3874 = vmatprep.subr.mxu0 0.0
      %3875 = vmatpush1.msra.mxu0 %v2886
      %3876 = vmatprep.subr.mxu0 0.0
      %3877 = vmatpush1.msra.mxu0 %v2887
      %3878 = vmatprep.subr.mxu0 0.0
      %3879 = vmatpush1.msra.mxu0 %v2888
      %3880 = vmatprep.subr.mxu0 0.0
      %3881 = vmatpush1.msra.mxu0 %v2889
      %3882 = vmatprep.subr.mxu0 0.0
      %3883 = vmatpush1.msra.mxu0 %v2890
      %3884 = vmatprep.subr.mxu0 0.0
      %3885 = vmatpush1.msra.mxu0 %v2891
      %3886 = vmatprep.subr.mxu0 0.0
      %3887 = vmatpush1.msra.mxu0 %v2892
      %3888 = vmatprep.subr.mxu0 0.0
      %3889 = vmatpush1.msra.mxu0 %v2893
      %3890 = vmatprep.subr.mxu0 0.0
      %3891 = vmatpush1.msra.mxu0 %v2894
      %3892 = vmatprep.subr.mxu0 0.0
      %3893 = vmatpush1.msra.mxu0 %v2895
      %3894 = vmatprep.subr.mxu0 0.0
      %3895 = vmatpush1.msra.mxu0 %v2896
      %3896 = vmatprep.subr.mxu0 0.0
      %3897 = vmatpush1.msra.mxu0 %v2897
      %3898 = vmatprep.subr.mxu0 0.0
      %3899 = vmatpush1.msra.mxu0 %v2898
      %3900 = vmatprep.subr.mxu0 0.0
      %3901 = vmatpush1.msra.mxu0 %v2899
      %3902 = vmatprep.mubr.f32.mxu0 %v2347
      %3903 = vmatmul.mubr.f32.gmra.mrb[0].mxu0 %v2346
      %v3904 = vpop.f32.mrb[0].mxu0
      %v3905 = vadd.f32 %v3600, %v3904
      %v3906 = vpop.f32.mrb[0].mxu0
      %3907 = vmatprep.mubr.f32.mxu0 %v2356
      %3908 = vmatmul.mubr.f32.gmra.mrb[0].mxu0 %v2355
      %v3909 = vpop.f32.mrb[0].mxu0
      %v3910 = vadd.f32 %v3605, %v3909
      %v3911 = vpop.f32.mrb[0].mxu0
      %3912 = vmatprep.mubr.f32.mxu0 %v2365
      %3913 = vmatmul.mubr.f32.gmra.mrb[0].mxu0 %v2364
      %v3914 = vpop.f32.mrb[0].mxu0
      %v3915 = vadd.f32 %v3610, %v3914
      %v3916 = vpop.f32.mrb[0].mxu0
      %3917 = vmatprep.mubr.f32.mxu0 %v2374
      %3918 = vmatmul.mubr.f32.gmra.mrb[0].mxu0 %v2373
      %v3919 = vpop.f32.mrb[0].mxu0
      %v3920 = vadd.f32 %v3615, %v3919
      %v3921 = vpop.f32.mrb[0].mxu0
      %3922 = vmatprep.mubr.f32.mxu0 %v2383
      %3923 = vmatmul.mubr.f32.gmra.mrb[0].mxu0 %v2382
      %v3924 = vpop.f32.mrb[0].mxu0
      %v3925 = vadd.f32 %v3620, %v3924
      %v3926 = vpop.f32.mrb[0].mxu0
      %3927 = vmatprep.mubr.f32.mxu0 %v2392
      %3928 = vmatmul.mubr.f32.gmra.mrb[0].mxu0 %v2391
      %v3929 = vpop.f32.mrb[0].mxu0
      %v3930 = vadd.f32 %v3625, %v3929
      %v3931 = vpop.f32.mrb[0].mxu0
      %3932 = vmatprep.mubr.f32.mxu0 %v2401
      %3933 = vmatmul.mubr.f32.gmra.mrb[0].mxu0 %v2400
      %v3934 = vpop.f32.mrb[0].mxu0
      %v3935 = vadd.f32 %v3630, %v3934
      %v3936 = vpop.f32.mrb[0].mxu0
      %3937 = vmatprep.mubr.f32.mxu0 %v2410
      %3938 = vmatmul.mubr.f32.gmra.mrb[0].mxu0 %v2409
      %v3939 = vpop.f32.mrb[0].mxu0
      %v3940 = vadd.f32 %v3635, %v3939
      %v3941 = vpop.f32.mrb[0].mxu0
      %3942 = vmatprep.mubr.f32.mxu0 %v2419
      %3943 = vmatmul.mubr.f32.gmra.mrb[0].mxu0 %v2418
      %v3944 = vpop.f32.mrb[0].mxu0
      %v3945 = vadd.f32 %v3640, %v3944
      %v3946 = vpop.f32.mrb[0].mxu0
      %3947 = vmatprep.mubr.f32.mxu0 %v2428
      %3948 = vmatmul.mubr.f32.gmra.mrb[0].mxu0 %v2427
      %v3949 = vpop.f32.mrb[0].mxu0
      %v3950 = vadd.f32 %v3645, %v3949
      %v3951 = vpop.f32.mrb[0].mxu0
      %3952 = vmatprep.mubr.f32.mxu0 %v2437
      %3953 = vmatmul.mubr.f32.gmra.mrb[0].mxu0 %v2436
      %v3954 = vpop.f32.mrb[0].mxu0
      %v3955 = vadd.f32 %v3650, %v3954
      %v3956 = vpop.f32.mrb[0].mxu0
      %3957 = vmatprep.mubr.f32.mxu0 %v2446
      %3958 = vmatmul.mubr.f32.gmra.mrb[0].mxu0 %v2445
      %v3959 = vpop.f32.mrb[0].mxu0
      %v3960 = vadd.f32 %v3655, %v3959
      %v3961 = vpop.f32.mrb[0].mxu0
      %3962 = vmatprep.mubr.f32.mxu0 %v2455
      %3963 = vmatmul.mubr.f32.gmra.mrb[0].mxu0 %v2454
      %v3964 = vpop.f32.mrb[0].mxu0
      %v3965 = vadd.f32 %v3660, %v3964
      %v3966 = vpop.f32.mrb[0].mxu0
      %3967 = vmatprep.mubr.f32.mxu0 %v2464
      %3968 = vmatmul.mubr.f32.gmra.mrb[0].mxu0 %v2463
      %v3969 = vpop.f32.mrb[0].mxu0
      %v3970 = vadd.f32 %v3665, %v3969
      %v3971 = vpop.f32.mrb[0].mxu0
      %3972 = vmatprep.mubr.f32.mxu0 %v2473
      %3973 = vmatmul.mubr.f32.gmra.mrb[0].mxu0 %v2472
      %v3974 = vpop.f32.mrb[0].mxu0
      %v3975 = vadd.f32 %v3670, %v3974
      %v3976 = vpop.f32.mrb[0].mxu0
      %3977 = vmatprep.mubr.f32.mxu0 %v2482
      %3978 = vmatmul.mubr.f32.gmra.mrb[0].mxu0 %v2481
      %v3979 = vpop.f32.mrb[0].mxu0
      %v3980 = vadd.f32 %v3675, %v3979
      %v3981 = vpop.f32.mrb[0].mxu0
      %3982 = vmatprep.mubr.f32.mxu0 %v2491
      %3983 = vmatmul.mubr.f32.gmra.mrb[0].mxu0 %v2490
      %v3984 = vpop.f32.mrb[0].mxu0
      %v3985 = vadd.f32 %v3680, %v3984
      %v3986 = vpop.f32.mrb[0].mxu0
      %3987 = vmatprep.mubr.f32.mxu0 %v2500
      %3988 = vmatmul.mubr.f32.gmra.mrb[0].mxu0 %v2499
      %v3989 = vpop.f32.mrb[0].mxu0
      %v3990 = vadd.f32 %v3685, %v3989
      %v3991 = vpop.f32.mrb[0].mxu0
      %3992 = vmatprep.mubr.f32.mxu0 %v2509
      %3993 = vmatmul.mubr.f32.gmra.mrb[0].mxu0 %v2508
      %v3994 = vpop.f32.mrb[0].mxu0
      %v3995 = vadd.f32 %v3690, %v3994
      %v3996 = vpop.f32.mrb[0].mxu0
      %3997 = vmatprep.mubr.f32.mxu0 %v2518
      %3998 = vmatmul.mubr.f32.gmra.mrb[0].mxu0 %v2517
      %v3999 = vpop.f32.mrb[0].mxu0
      %v4000 = vadd.f32 %v3695, %v3999
      %v4001 = vpop.f32.mrb[0].mxu0
      %4002 = vmatprep.mubr.f32.mxu0 %v2527
      %4003 = vmatmul.mubr.f32.gmra.mrb[0].mxu0 %v2526
      %v4004 = vpop.f32.mrb[0].mxu0
      %v4005 = vadd.f32 %v3700, %v4004
      %v4006 = vpop.f32.mrb[0].mxu0
      %4007 = vmatprep.mubr.f32.mxu0 %v2536
      %4008 = vmatmul.mubr.f32.gmra.mrb[0].mxu0 %v2535
      %v4009 = vpop.f32.mrb[0].mxu0
      %v4010 = vadd.f32 %v3705, %v4009
      %v4011 = vpop.f32.mrb[0].mxu0
      %4012 = vmatprep.mubr.f32.mxu0 %v2545
      %4013 = vmatmul.mubr.f32.gmra.mrb[0].mxu0 %v2544
      %v4014 = vpop.f32.mrb[0].mxu0
      %v4015 = vadd.f32 %v3710, %v4014
      %v4016 = vpop.f32.mrb[0].mxu0
      %4017 = vmatprep.mubr.f32.mxu0 %v2554
      %4018 = vmatmul.mubr.f32.gmra.mrb[0].mxu0 %v2553
      %v4019 = vpop.f32.mrb[0].mxu0
      %v4020 = vadd.f32 %v3715, %v4019
      %v4021 = vpop.f32.mrb[0].mxu0
      %4022 = vmatprep.mubr.f32.mxu0 %v2563
      %4023 = vmatmul.mubr.f32.gmra.mrb[0].mxu0 %v2562
      %v4024 = vpop.f32.mrb[0].mxu0
      %v4025 = vadd.f32 %v3720, %v4024
      %v4026 = vpop.f32.mrb[0].mxu0
      %4027 = vmatprep.mubr.f32.mxu0 %v2572
      %4028 = vmatmul.mubr.f32.gmra.mrb[0].mxu0 %v2571
      %v4029 = vpop.f32.mrb[0].mxu0
      %v4030 = vadd.f32 %v3725, %v4029
      %v4031 = vpop.f32.mrb[0].mxu0
      %4032 = vmatprep.mubr.f32.mxu0 %v2581
      %4033 = vmatmul.mubr.f32.gmra.mrb[0].mxu0 %v2580
      %v4034 = vpop.f32.mrb[0].mxu0
      %v4035 = vadd.f32 %v3730, %v4034
      %v4036 = vpop.f32.mrb[0].mxu0
      %4037 = vmatprep.mubr.f32.mxu0 %v2590
      %4038 = vmatmul.mubr.f32.gmra.mrb[0].mxu0 %v2589
      %v4039 = vpop.f32.mrb[0].mxu0
      %v4040 = vadd.f32 %v3735, %v4039
      %v4041 = vpop.f32.mrb[0].mxu0
      %4042 = vmatprep.mubr.f32.mxu0 %v2599
      %4043 = vmatmul.mubr.f32.gmra.mrb[0].mxu0 %v2598
      %v4044 = vpop.f32.mrb[0].mxu0
      %v4045 = vadd.f32 %v3740, %v4044
      %v4046 = vpop.f32.mrb[0].mxu0
      %4047 = vmatprep.mubr.f32.mxu0 %v2608
      %4048 = vmatmul.mubr.f32.gmra.mrb[0].mxu0 %v2607
      %v4049 = vpop.f32.mrb[0].mxu0
      %v4050 = vadd.f32 %v3745, %v4049
      %v4051 = vpop.f32.mrb[0].mxu0
      %4052 = vmatprep.mubr.f32.mxu0 %v2617
      %4053 = vmatmul.mubr.f32.gmra.mrb[0].mxu0 %v2616
      %v4054 = vpop.f32.mrb[0].mxu0
      %v4055 = vadd.f32 %v3750, %v4054
      %v4056 = vpop.f32.mrb[0].mxu0
      %4057 = vmatprep.mubr.f32.mxu0 %v2626
      %4058 = vmatmul.mubr.f32.gmra.mrb[0].mxu0 %v2625
      %v4059 = vpop.f32.mrb[0].mxu0
      %v4060 = vadd.f32 %v3755, %v4059
      %v4061 = vpop.f32.mrb[0].mxu0
      %4062 = vmatprep.mubr.f32.mxu0 %v2635
      %4063 = vmatmul.mubr.f32.gmra.mrb[0].mxu0 %v2634
      %v4064 = vpop.f32.mrb[0].mxu0
      %v4065 = vadd.f32 %v3760, %v4064
      %v4066 = vpop.f32.mrb[0].mxu0
      %4067 = vmatprep.mubr.f32.mxu0 %v2644
      %4068 = vmatmul.mubr.f32.gmra.mrb[0].mxu0 %v2643
      %v4069 = vpop.f32.mrb[0].mxu0
      %v4070 = vadd.f32 %v3765, %v4069
      %v4071 = vpop.f32.mrb[0].mxu0
      %4072 = vmatprep.mubr.f32.mxu0 %v2653
      %4073 = vmatmul.mubr.f32.gmra.mrb[0].mxu0 %v2652
      %v4074 = vpop.f32.mrb[0].mxu0
      %v4075 = vadd.f32 %v3770, %v4074
      %v4076 = vpop.f32.mrb[0].mxu0
      %4077 = vmatprep.mubr.f32.mxu0 %v2662
      %4078 = vmatmul.mubr.f32.gmra.mrb[0].mxu0 %v2661
      %v4079 = vpop.f32.mrb[0].mxu0
      %v4080 = vadd.f32 %v3775, %v4079
      %v4081 = vpop.f32.mrb[0].mxu0
      %4082 = vmatprep.mubr.f32.mxu0 %v2671
      %4083 = vmatmul.mubr.f32.gmra.mrb[0].mxu0 %v2670
      %v4084 = vpop.f32.mrb[0].mxu0
      %v4085 = vadd.f32 %v3780, %v4084
      %v4086 = vpop.f32.mrb[0].mxu0
      %4087 = vmatprep.mubr.f32.mxu0 %v2680
      %4088 = vmatmul.mubr.f32.gmra.mrb[0].mxu0 %v2679
      %v4089 = vpop.f32.mrb[0].mxu0
      %v4090 = vadd.f32 %v3785, %v4089
      %v4091 = vpop.f32.mrb[0].mxu0
      %4092 = vmatprep.mubr.f32.mxu0 %v2689
      %4093 = vmatmul.mubr.f32.gmra.mrb[0].mxu0 %v2688
      %v4094 = vpop.f32.mrb[0].mxu0
      %v4095 = vadd.f32 %v3790, %v4094
      %v4096 = vpop.f32.mrb[0].mxu0
      %4097 = vmatprep.mubr.f32.mxu0 %v2698
      %4098 = vmatmul.mubr.f32.gmra.mrb[0].mxu0 %v2697
      %v4099 = vpop.f32.mrb[0].mxu0
      %v4100 = vadd.f32 %v3795, %v4099
      %v4101 = vpop.f32.mrb[0].mxu0
      %4102 = vmatprep.mubr.f32.mxu0 %v2707
      %4103 = vmatmul.mubr.f32.gmra.mrb[0].mxu0 %v2706
      %v4104 = vpop.f32.mrb[0].mxu0
      %v4105 = vadd.f32 %v3800, %v4104
      %v4106 = vpop.f32.mrb[0].mxu0
      %4107 = vmatprep.mubr.f32.mxu0 %v2716
      %4108 = vmatmul.mubr.f32.gmra.mrb[0].mxu0 %v2715
      %v4109 = vpop.f32.mrb[0].mxu0
      %v4110 = vadd.f32 %v3805, %v4109
      %v4111 = vpop.f32.mrb[0].mxu0
      %4112 = vmatprep.mubr.f32.mxu0 %v2725
      %4113 = vmatmul.mubr.f32.gmra.mrb[0].mxu0 %v2724
      %v4114 = vpop.f32.mrb[0].mxu0
      %v4115 = vadd.f32 %v3810, %v4114
      %v4116 = vpop.f32.mrb[0].mxu0
      %4117 = vmatprep.mubr.f32.mxu0 %v2734
      %4118 = vmatmul.mubr.f32.gmra.mrb[0].mxu0 %v2733
      %v4119 = vpop.f32.mrb[0].mxu0
      %v4120 = vadd.f32 %v3815, %v4119
      %v4121 = vpop.f32.mrb[0].mxu0
      %4122 = vmatprep.mubr.f32.mxu0 %v2743
      %4123 = vmatmul.mubr.f32.gmra.mrb[0].mxu0 %v2742
      %v4124 = vpop.f32.mrb[0].mxu0
      %v4125 = vadd.f32 %v3820, %v4124
      %v4126 = vpop.f32.mrb[0].mxu0
      %4127 = vmatprep.mubr.f32.mxu0 %v2752
      %4128 = vmatmul.mubr.f32.gmra.mrb[0].mxu0 %v2751
      %v4129 = vpop.f32.mrb[0].mxu0
      %v4130 = vadd.f32 %v3825, %v4129
      %v4131 = vpop.f32.mrb[0].mxu0
      %4132 = vmatprep.mubr.f32.mxu0 %v2761
      %4133 = vmatmul.mubr.f32.gmra.mrb[0].mxu0 %v2760
      %v4134 = vpop.f32.mrb[0].mxu0
      %v4135 = vadd.f32 %v3830, %v4134
      %v4136 = vpop.f32.mrb[0].mxu0
      %4137 = vmatprep.mubr.f32.mxu0 %v2770
      %4138 = vmatmul.mubr.f32.gmra.mrb[0].mxu0 %v2769
      %v4139 = vpop.f32.mrb[0].mxu0
      %v4140 = vadd.f32 %v3835, %v4139
      %v4141 = vpop.f32.mrb[0].mxu0
      %4142 = vdwg.mxu0
      %4143 = vmatprep.subr.mxu0 0.0
      %4144 = vmatpush1.msra.mxu0 %v2900
      %4145 = vmatprep.subr.mxu0 0.0
      %4146 = vmatpush1.msra.mxu0 %v2901
      %4147 = vmatprep.subr.mxu0 0.0
      %4148 = vmatpush1.msra.mxu0 %v2902
      %4149 = vmatprep.subr.mxu0 0.0
      %4150 = vmatpush1.msra.mxu0 %v2903
      %4151 = vmatprep.subr.mxu0 0.0
      %4152 = vmatpush1.msra.mxu0 %v2904
      %4153 = vmatprep.subr.mxu0 0.0
      %4154 = vmatpush1.msra.mxu0 %v2905
      %4155 = vmatprep.subr.mxu0 0.0
      %4156 = vmatpush1.msra.mxu0 %v2906
      %4157 = vmatprep.subr.mxu0 0.0
      %4158 = vmatpush1.msra.mxu0 %v2907
      %4159 = vmatprep.subr.mxu0 0.0
      %4160 = vmatpush1.msra.mxu0 %v2908
      %4161 = vmatprep.subr.mxu0 0.0
      %4162 = vmatpush1.msra.mxu0 %v2909
      %4163 = vmatprep.subr.mxu0 0.0
      %4164 = vmatpush1.msra.mxu0 %v2910
      %4165 = vmatprep.subr.mxu0 0.0
      %4166 = vmatpush1.msra.mxu0 %v2911
      %4167 = vmatprep.subr.mxu0 0.0
      %4168 = vmatpush1.msra.mxu0 %v2912
      %4169 = vmatprep.subr.mxu0 0.0
      %4170 = vmatpush1.msra.mxu0 %v2913
      %4171 = vmatprep.subr.mxu0 0.0
      %4172 = vmatpush1.msra.mxu0 %v2914
      %4173 = vmatprep.subr.mxu0 0.0
      %4174 = vmatpush1.msra.mxu0 %v2915
      %4175 = vmatprep.subr.mxu0 0.0
      %4176 = vmatpush1.msra.mxu0 0.0
      %4177 = vmatprep.subr.mxu0 0.0
      %4178 = vmatpush1.msra.mxu0 0.0
      %4179 = vmatprep.subr.mxu0 0.0
      %4180 = vmatpush1.msra.mxu0 0.0
      %4181 = vmatprep.subr.mxu0 0.0
      %4182 = vmatpush1.msra.mxu0 0.0
      %4183 = vmatprep.subr.mxu0 0.0
      %4184 = vmatpush1.msra.mxu0 0.0
      %4185 = vmatprep.subr.mxu0 0.0
      %4186 = vmatpush1.msra.mxu0 0.0
      %4187 = vmatprep.subr.mxu0 0.0
      %4188 = vmatpush1.msra.mxu0 0.0
      %4189 = vmatprep.subr.mxu0 0.0
      %4190 = vmatpush1.msra.mxu0 0.0
      %4191 = vmatprep.subr.mxu0 0.0
      %4192 = vmatpush1.msra.mxu0 0.0
      %4193 = vmatprep.subr.mxu0 0.0
      %4194 = vmatpush1.msra.mxu0 0.0
      %4195 = vmatprep.subr.mxu0 0.0
      %4196 = vmatpush1.msra.mxu0 0.0
      %4197 = vmatprep.subr.mxu0 0.0
      %4198 = vmatpush1.msra.mxu0 0.0
      %4199 = vmatprep.subr.mxu0 0.0
      %4200 = vmatpush1.msra.mxu0 0.0
      %4201 = vmatprep.subr.mxu0 0.0
      %4202 = vmatpush1.msra.mxu0 0.0
      %4203 = vmatprep.subr.mxu0 0.0
      %4204 = vmatpush1.msra.mxu0 0.0
      %4205 = vmatprep.subr.mxu0 0.0
      %4206 = vmatpush1.msra.mxu0 0.0
      %4207 = vmatprep.mubr.f32.mxu0 0.0
      %4208 = vmatmul.mubr.f32.gmra.mrb[0].mxu0 %v2348
      %v4209 = vpop.f32.mrb[0].mxu0
      %v4210 = vadd.f32 %v3905, %v4209
      %v4211 = vpop.f32.mrb[0].mxu0
      %4212 = vmatprep.mubr.f32.mxu0 0.0
      %4213 = vmatmul.mubr.f32.gmra.mrb[0].mxu0 %v2357
      %v4214 = vpop.f32.mrb[0].mxu0
      %v4215 = vadd.f32 %v3910, %v4214
      %v4216 = vpop.f32.mrb[0].mxu0
      %4217 = vmatprep.mubr.f32.mxu0 0.0
      %4218 = vmatmul.mubr.f32.gmra.mrb[0].mxu0 %v2366
      %v4219 = vpop.f32.mrb[0].mxu0
      %v4220 = vadd.f32 %v3915, %v4219
      %v4221 = vpop.f32.mrb[0].mxu0
      %4222 = vmatprep.mubr.f32.mxu0 0.0
      %4223 = vmatmul.mubr.f32.gmra.mrb[0].mxu0 %v2375
      %v4224 = vpop.f32.mrb[0].mxu0
      %v4225 = vadd.f32 %v3920, %v4224
      %v4226 = vpop.f32.mrb[0].mxu0
      %4227 = vmatprep.mubr.f32.mxu0 0.0
      %4228 = vmatmul.mubr.f32.gmra.mrb[0].mxu0 %v2384
      %v4229 = vpop.f32.mrb[0].mxu0
      %v4230 = vadd.f32 %v3925, %v4229
      %v4231 = vpop.f32.mrb[0].mxu0
      %4232 = vmatprep.mubr.f32.mxu0 0.0
      %4233 = vmatmul.mubr.f32.gmra.mrb[0].mxu0 %v2393
      %v4234 = vpop.f32.mrb[0].mxu0
      %v4235 = vadd.f32 %v3930, %v4234
      %v4236 = vpop.f32.mrb[0].mxu0
      %4237 = vmatprep.mubr.f32.mxu0 0.0
      %4238 = vmatmul.mubr.f32.gmra.mrb[0].mxu0 %v2402
      %v4239 = vpop.f32.mrb[0].mxu0
      %v4240 = vadd.f32 %v3935, %v4239
      %v4241 = vpop.f32.mrb[0].mxu0
      %4242 = vmatprep.mubr.f32.mxu0 0.0
      %4243 = vmatmul.mubr.f32.gmra.mrb[0].mxu0 %v2411
      %v4244 = vpop.f32.mrb[0].mxu0
      %v4245 = vadd.f32 %v3940, %v4244
      %v4246 = vpop.f32.mrb[0].mxu0
      %4247 = vmatprep.mubr.f32.mxu0 0.0
      %4248 = vmatmul.mubr.f32.gmra.mrb[0].mxu0 %v2420
      %v4249 = vpop.f32.mrb[0].mxu0
      %v4250 = vadd.f32 %v3945, %v4249
      %v4251 = vpop.f32.mrb[0].mxu0
      %4252 = vmatprep.mubr.f32.mxu0 0.0
      %4253 = vmatmul.mubr.f32.gmra.mrb[0].mxu0 %v2429
      %v4254 = vpop.f32.mrb[0].mxu0
      %v4255 = vadd.f32 %v3950, %v4254
      %v4256 = vpop.f32.mrb[0].mxu0
      %4257 = vmatprep.mubr.f32.mxu0 0.0
      %4258 = vmatmul.mubr.f32.gmra.mrb[0].mxu0 %v2438
      %v4259 = vpop.f32.mrb[0].mxu0
      %v4260 = vadd.f32 %v3955, %v4259
      %v4261 = vpop.f32.mrb[0].mxu0
      %4262 = vmatprep.mubr.f32.mxu0 0.0
      %4263 = vmatmul.mubr.f32.gmra.mrb[0].mxu0 %v2447
      %v4264 = vpop.f32.mrb[0].mxu0
      %v4265 = vadd.f32 %v3960, %v4264
      %v4266 = vpop.f32.mrb[0].mxu0
      %4267 = vmatprep.mubr.f32.mxu0 0.0
      %4268 = vmatmul.mubr.f32.gmra.mrb[0].mxu0 %v2456
      %v4269 = vpop.f32.mrb[0].mxu0
      %v4270 = vadd.f32 %v3965, %v4269
      %v4271 = vpop.f32.mrb[0].mxu0
      %4272 = vmatprep.mubr.f32.mxu0 0.0
      %4273 = vmatmul.mubr.f32.gmra.mrb[0].mxu0 %v2465
      %v4274 = vpop.f32.mrb[0].mxu0
      %v4275 = vadd.f32 %v3970, %v4274
      %v4276 = vpop.f32.mrb[0].mxu0
      %4277 = vmatprep.mubr.f32.mxu0 0.0
      %4278 = vmatmul.mubr.f32.gmra.mrb[0].mxu0 %v2474
      %v4279 = vpop.f32.mrb[0].mxu0
      %v4280 = vadd.f32 %v3975, %v4279
      %v4281 = vpop.f32.mrb[0].mxu0
      %4282 = vmatprep.mubr.f32.mxu0 0.0
      %4283 = vmatmul.mubr.f32.gmra.mrb[0].mxu0 %v2483
      %v4284 = vpop.f32.mrb[0].mxu0
      %v4285 = vadd.f32 %v3980, %v4284
      %v4286 = vpop.f32.mrb[0].mxu0
      %4287 = vmatprep.mubr.f32.mxu0 0.0
      %4288 = vmatmul.mubr.f32.gmra.mrb[0].mxu0 %v2492
      %v4289 = vpop.f32.mrb[0].mxu0
      %v4290 = vadd.f32 %v3985, %v4289
      %v4291 = vpop.f32.mrb[0].mxu0
      %4292 = vmatprep.mubr.f32.mxu0 0.0
      %4293 = vmatmul.mubr.f32.gmra.mrb[0].mxu0 %v2501
      %v4294 = vpop.f32.mrb[0].mxu0
      %v4295 = vadd.f32 %v3990, %v4294
      %v4296 = vpop.f32.mrb[0].mxu0
      %4297 = vmatprep.mubr.f32.mxu0 0.0
      %4298 = vmatmul.mubr.f32.gmra.mrb[0].mxu0 %v2510
      %v4299 = vpop.f32.mrb[0].mxu0
      %v4300 = vadd.f32 %v3995, %v4299
      %v4301 = vpop.f32.mrb[0].mxu0
      %4302 = vmatprep.mubr.f32.mxu0 0.0
      %4303 = vmatmul.mubr.f32.gmra.mrb[0].mxu0 %v2519
      %v4304 = vpop.f32.mrb[0].mxu0
      %v4305 = vadd.f32 %v4000, %v4304
      %v4306 = vpop.f32.mrb[0].mxu0
      %4307 = vmatprep.mubr.f32.mxu0 0.0
      %4308 = vmatmul.mubr.f32.gmra.mrb[0].mxu0 %v2528
      %v4309 = vpop.f32.mrb[0].mxu0
      %v4310 = vadd.f32 %v4005, %v4309
      %v4311 = vpop.f32.mrb[0].mxu0
      %4312 = vmatprep.mubr.f32.mxu0 0.0
      %4313 = vmatmul.mubr.f32.gmra.mrb[0].mxu0 %v2537
      %v4314 = vpop.f32.mrb[0].mxu0
      %v4315 = vadd.f32 %v4010, %v4314
      %v4316 = vpop.f32.mrb[0].mxu0
      %4317 = vmatprep.mubr.f32.mxu0 0.0
      %4318 = vmatmul.mubr.f32.gmra.mrb[0].mxu0 %v2546
      %v4319 = vpop.f32.mrb[0].mxu0
      %v4320 = vadd.f32 %v4015, %v4319
      %v4321 = vpop.f32.mrb[0].mxu0
      %4322 = vmatprep.mubr.f32.mxu0 0.0
      %4323 = vmatmul.mubr.f32.gmra.mrb[0].mxu0 %v2555
      %v4324 = vpop.f32.mrb[0].mxu0
      %v4325 = vadd.f32 %v4020, %v4324
      %v4326 = vpop.f32.mrb[0].mxu0
      %4327 = vmatprep.mubr.f32.mxu0 0.0
      %4328 = vmatmul.mubr.f32.gmra.mrb[0].mxu0 %v2564
      %v4329 = vpop.f32.mrb[0].mxu0
      %v4330 = vadd.f32 %v4025, %v4329
      %v4331 = vpop.f32.mrb[0].mxu0
      %4332 = vmatprep.mubr.f32.mxu0 0.0
      %4333 = vmatmul.mubr.f32.gmra.mrb[0].mxu0 %v2573
      %v4334 = vpop.f32.mrb[0].mxu0
      %v4335 = vadd.f32 %v4030, %v4334
      %v4336 = vpop.f32.mrb[0].mxu0
      %4337 = vmatprep.mubr.f32.mxu0 0.0
      %4338 = vmatmul.mubr.f32.gmra.mrb[0].mxu0 %v2582
      %v4339 = vpop.f32.mrb[0].mxu0
      %v4340 = vadd.f32 %v4035, %v4339
      %v4341 = vpop.f32.mrb[0].mxu0
      %4342 = vmatprep.mubr.f32.mxu0 0.0
      %4343 = vmatmul.mubr.f32.gmra.mrb[0].mxu0 %v2591
      %v4344 = vpop.f32.mrb[0].mxu0
      %v4345 = vadd.f32 %v4040, %v4344
      %v4346 = vpop.f32.mrb[0].mxu0
      %4347 = vmatprep.mubr.f32.mxu0 0.0
      %4348 = vmatmul.mubr.f32.gmra.mrb[0].mxu0 %v2600
      %v4349 = vpop.f32.mrb[0].mxu0
      %v4350 = vadd.f32 %v4045, %v4349
      %v4351 = vpop.f32.mrb[0].mxu0
      %4352 = vmatprep.mubr.f32.mxu0 0.0
      %4353 = vmatmul.mubr.f32.gmra.mrb[0].mxu0 %v2609
      %v4354 = vpop.f32.mrb[0].mxu0
      %v4355 = vadd.f32 %v4050, %v4354
      %v4356 = vpop.f32.mrb[0].mxu0
      %4357 = vmatprep.mubr.f32.mxu0 0.0
      %4358 = vmatmul.mubr.f32.gmra.mrb[0].mxu0 %v2618
      %v4359 = vpop.f32.mrb[0].mxu0
      %v4360 = vadd.f32 %v4055, %v4359
      %v4361 = vpop.f32.mrb[0].mxu0
      %4362 = vmatprep.mubr.f32.mxu0 0.0
      %4363 = vmatmul.mubr.f32.gmra.mrb[0].mxu0 %v2627
      %v4364 = vpop.f32.mrb[0].mxu0
      %v4365 = vadd.f32 %v4060, %v4364
      %v4366 = vpop.f32.mrb[0].mxu0
      %4367 = vmatprep.mubr.f32.mxu0 0.0
      %4368 = vmatmul.mubr.f32.gmra.mrb[0].mxu0 %v2636
      %v4369 = vpop.f32.mrb[0].mxu0
      %v4370 = vadd.f32 %v4065, %v4369
      %v4371 = vpop.f32.mrb[0].mxu0
      %4372 = vmatprep.mubr.f32.mxu0 0.0
      %4373 = vmatmul.mubr.f32.gmra.mrb[0].mxu0 %v2645
      %v4374 = vpop.f32.mrb[0].mxu0
      %v4375 = vadd.f32 %v4070, %v4374
      %v4376 = vpop.f32.mrb[0].mxu0
      %4377 = vmatprep.mubr.f32.mxu0 0.0
      %4378 = vmatmul.mubr.f32.gmra.mrb[0].mxu0 %v2654
      %v4379 = vpop.f32.mrb[0].mxu0
      %v4380 = vadd.f32 %v4075, %v4379
      %v4381 = vpop.f32.mrb[0].mxu0
      %4382 = vmatprep.mubr.f32.mxu0 0.0
      %4383 = vmatmul.mubr.f32.gmra.mrb[0].mxu0 %v2663
      %v4384 = vpop.f32.mrb[0].mxu0
      %v4385 = vadd.f32 %v4080, %v4384
      %v4386 = vpop.f32.mrb[0].mxu0
      %4387 = vmatprep.mubr.f32.mxu0 0.0
      %4388 = vmatmul.mubr.f32.gmra.mrb[0].mxu0 %v2672
      %v4389 = vpop.f32.mrb[0].mxu0
      %v4390 = vadd.f32 %v4085, %v4389
      %v4391 = vpop.f32.mrb[0].mxu0
      %4392 = vmatprep.mubr.f32.mxu0 0.0
      %4393 = vmatmul.mubr.f32.gmra.mrb[0].mxu0 %v2681
      %v4394 = vpop.f32.mrb[0].mxu0
      %v4395 = vadd.f32 %v4090, %v4394
      %v4396 = vpop.f32.mrb[0].mxu0
      %4397 = vmatprep.mubr.f32.mxu0 0.0
      %4398 = vmatmul.mubr.f32.gmra.mrb[0].mxu0 %v2690
      %v4399 = vpop.f32.mrb[0].mxu0
      %v4400 = vadd.f32 %v4095, %v4399
      %v4401 = vpop.f32.mrb[0].mxu0
      %4402 = vmatprep.mubr.f32.mxu0 0.0
      %4403 = vmatmul.mubr.f32.gmra.mrb[0].mxu0 %v2699
      %v4404 = vpop.f32.mrb[0].mxu0
      %v4405 = vadd.f32 %v4100, %v4404
      %v4406 = vpop.f32.mrb[0].mxu0
      %4407 = vmatprep.mubr.f32.mxu0 0.0
      %4408 = vmatmul.mubr.f32.gmra.mrb[0].mxu0 %v2708
      %v4409 = vpop.f32.mrb[0].mxu0
      %v4410 = vadd.f32 %v4105, %v4409
      %v4411 = vpop.f32.mrb[0].mxu0
      %4412 = vmatprep.mubr.f32.mxu0 0.0
      %4413 = vmatmul.mubr.f32.gmra.mrb[0].mxu0 %v2717
      %v4414 = vpop.f32.mrb[0].mxu0
      %v4415 = vadd.f32 %v4110, %v4414
      %v4416 = vpop.f32.mrb[0].mxu0
      %4417 = vmatprep.mubr.f32.mxu0 0.0
      %4418 = vmatmul.mubr.f32.gmra.mrb[0].mxu0 %v2726
      %v4419 = vpop.f32.mrb[0].mxu0
      %v4420 = vadd.f32 %v4115, %v4419
      %v4421 = vpop.f32.mrb[0].mxu0
      %4422 = vmatprep.mubr.f32.mxu0 0.0
      %4423 = vmatmul.mubr.f32.gmra.mrb[0].mxu0 %v2735
      %v4424 = vpop.f32.mrb[0].mxu0
      %v4425 = vadd.f32 %v4120, %v4424
      %v4426 = vpop.f32.mrb[0].mxu0
      %4427 = vmatprep.mubr.f32.mxu0 0.0
      %4428 = vmatmul.mubr.f32.gmra.mrb[0].mxu0 %v2744
      %v4429 = vpop.f32.mrb[0].mxu0
      %v4430 = vadd.f32 %v4125, %v4429
      %v4431 = vpop.f32.mrb[0].mxu0
      %4432 = vmatprep.mubr.f32.mxu0 0.0
      %4433 = vmatmul.mubr.f32.gmra.mrb[0].mxu0 %v2753
      %v4434 = vpop.f32.mrb[0].mxu0
      %v4435 = vadd.f32 %v4130, %v4434
      %v4436 = vpop.f32.mrb[0].mxu0
      %4437 = vmatprep.mubr.f32.mxu0 0.0
      %4438 = vmatmul.mubr.f32.gmra.mrb[0].mxu0 %v2762
      %v4439 = vpop.f32.mrb[0].mxu0
      %v4440 = vadd.f32 %v4135, %v4439
      %v4441 = vpop.f32.mrb[0].mxu0
      %4442 = vmatprep.mubr.f32.mxu0 0.0
      %4443 = vmatmul.mubr.f32.gmra.mrb[0].mxu0 %v2771
      %v4444 = vpop.f32.mrb[0].mxu0
      %v4445 = vadd.f32 %v4140, %v4444
      %v4446 = vpop.f32.mrb[0].mxu0
      %4447 = vdwg.mxu0
      %v4448 = vmax.f32 %v4210, 0.0
      %v4449 = vmax.f32 %v4215, 0.0
      %v4450 = vmax.f32 %v4220, 0.0
      %v4451 = vmax.f32 %v4225, 0.0
      %v4452 = vmax.f32 %v4230, 0.0
      %v4453 = vmax.f32 %v4235, 0.0
      %v4454 = vmax.f32 %v4240, 0.0
      %v4455 = vmax.f32 %v4245, 0.0
      %v4456 = vmax.f32 %v4250, 0.0
      %v4457 = vmax.f32 %v4255, 0.0
      %v4458 = vmax.f32 %v4260, 0.0
      %v4459 = vmax.f32 %v4265, 0.0
      %v4460 = vmax.f32 %v4270, 0.0
      %v4461 = vmax.f32 %v4275, 0.0
      %v4462 = vmax.f32 %v4280, 0.0
      %v4463 = vmax.f32 %v4285, 0.0
      %v4464 = vmax.f32 %v4290, 0.0
      %v4465 = vmax.f32 %v4295, 0.0
      %v4466 = vmax.f32 %v4300, 0.0
      %v4467 = vmax.f32 %v4305, 0.0
      %v4468 = vmax.f32 %v4310, 0.0
      %v4469 = vmax.f32 %v4315, 0.0
      %v4470 = vmax.f32 %v4320, 0.0
      %v4471 = vmax.f32 %v4325, 0.0
      %v4472 = vmax.f32 %v4330, 0.0
      %v4473 = vmax.f32 %v4335, 0.0
      %v4474 = vmax.f32 %v4340, 0.0
      %v4475 = vmax.f32 %v4345, 0.0
      %v4476 = vmax.f32 %v4350, 0.0
      %v4477 = vmax.f32 %v4355, 0.0
      %v4478 = vmax.f32 %v4360, 0.0
      %v4479 = vmax.f32 %v4365, 0.0
      %v4480 = vmax.f32 %v4370, 0.0
      %v4481 = vmax.f32 %v4375, 0.0
      %v4482 = vmax.f32 %v4380, 0.0
      %v4483 = vmax.f32 %v4385, 0.0
      %v4484 = vmax.f32 %v4390, 0.0
      %v4485 = vmax.f32 %v4395, 0.0
      %v4486 = vmax.f32 %v4400, 0.0
      %v4487 = vmax.f32 %v4405, 0.0
      %v4488 = vmax.f32 %v4410, 0.0
      %v4489 = vmax.f32 %v4415, 0.0
      %v4490 = vmax.f32 %v4420, 0.0
      %v4491 = vmax.f32 %v4425, 0.0
      %v4492 = vmax.f32 %v4430, 0.0
      %v4493 = vmax.f32 %v4435, 0.0
      %v4494 = vmax.f32 %v4440, 0.0
      %v4495 = vmax.f32 %v4445, 0.0
      %v4496 = vsel %vm1138, 1, 0
      %v4497 = vsel %vm1139, 1, 0
      %v4498 = vsel %vm1140, 1, 0
      %v4499 = vsel %vm1141, 1, 0
      %v4500 = vsel %vm1142, 1, 0
      %v4501 = vsel %vm1143, 1, 0
      %v4502 = vsel %vm1144, 1, 0
      %v4503 = vsel %vm1145, 1, 0
      %v4504 = vsel %vm1146, 1, 0
      %v4505 = vsel %vm1147, 1, 0
      %v4506 = vsel %vm1148, 1, 0
      %v4507 = vsel %vm1149, 1, 0
      %v4508 = vsel %vm1150, 1, 0
      %v4509 = vsel %vm1151, 1, 0
      %v4510 = vsel %vm1152, 1, 0
      %v4511 = vsel %vm1153, 1, 0
      %v4512 = vsel %vm1154, 1, 0
      %v4513 = vsel %vm1155, 1, 0
      %v4514 = vsel %vm1156, 1, 0
      %v4515 = vsel %vm1157, 1, 0
      %v4516 = vsel %vm1158, 1, 0
      %v4517 = vsel %vm1159, 1, 0
      %v4518 = vsel %vm1160, 1, 0
      %v4519 = vsel %vm1161, 1, 0
      %v4520 = vsel %vm1162, 1, 0
      %v4521 = vsel %vm1163, 1, 0
      %v4522 = vsel %vm1164, 1, 0
      %v4523 = vsel %vm1165, 1, 0
      %v4524 = vsel %vm1166, 1, 0
      %v4525 = vsel %vm1167, 1, 0
      %v4526 = vsel %vm1168, 1, 0
      %v4527 = vsel %vm1169, 1, 0
      %v4528 = vsel %vm1170, 1, 0
      %v4529 = vsel %vm1171, 1, 0
      %v4530 = vsel %vm1172, 1, 0
      %v4531 = vsel %vm1173, 1, 0
      %v4532 = vsel %vm1174, 1, 0
      %v4533 = vsel %vm1175, 1, 0
      %v4534 = vsel %vm1176, 1, 0
      %v4535 = vsel %vm1177, 1, 0
      %v4536 = vsel %vm1178, 1, 0
      %v4537 = vsel %vm1179, 1, 0
      %v4538 = vsel %vm1180, 1, 0
      %v4539 = vsel %vm1181, 1, 0
      %v4540 = vsel %vm1182, 1, 0
      %v4541 = vsel %vm1183, 1, 0
      %v4542 = vsel %vm1184, 1, 0
      %v4543 = vsel %vm1185, 1, 0
      %vm4544 = vcmp.eq.s32.totalorder %v4496, 1
      %vm4545 = vcmp.eq.s32.totalorder %v4497, 1
      %vm4546 = vcmp.eq.s32.totalorder %v4498, 1
      %vm4547 = vcmp.eq.s32.totalorder %v4499, 1
      %vm4548 = vcmp.eq.s32.totalorder %v4500, 1
      %vm4549 = vcmp.eq.s32.totalorder %v4501, 1
      %vm4550 = vcmp.eq.s32.totalorder %v4502, 1
      %vm4551 = vcmp.eq.s32.totalorder %v4503, 1
      %vm4552 = vcmp.eq.s32.totalorder %v4504, 1
      %vm4553 = vcmp.eq.s32.totalorder %v4505, 1
      %vm4554 = vcmp.eq.s32.totalorder %v4506, 1
      %vm4555 = vcmp.eq.s32.totalorder %v4507, 1
      %vm4556 = vcmp.eq.s32.totalorder %v4508, 1
      %vm4557 = vcmp.eq.s32.totalorder %v4509, 1
      %vm4558 = vcmp.eq.s32.totalorder %v4510, 1
      %vm4559 = vcmp.eq.s32.totalorder %v4511, 1
      %vm4560 = vcmp.eq.s32.totalorder %v4512, 1
      %vm4561 = vcmp.eq.s32.totalorder %v4513, 1
      %vm4562 = vcmp.eq.s32.totalorder %v4514, 1
      %vm4563 = vcmp.eq.s32.totalorder %v4515, 1
      %vm4564 = vcmp.eq.s32.totalorder %v4516, 1
      %vm4565 = vcmp.eq.s32.totalorder %v4517, 1
      %vm4566 = vcmp.eq.s32.totalorder %v4518, 1
      %vm4567 = vcmp.eq.s32.totalorder %v4519, 1
      %vm4568 = vcmp.eq.s32.totalorder %v4520, 1
      %vm4569 = vcmp.eq.s32.totalorder %v4521, 1
      %vm4570 = vcmp.eq.s32.totalorder %v4522, 1
      %vm4571 = vcmp.eq.s32.totalorder %v4523, 1
      %vm4572 = vcmp.eq.s32.totalorder %v4524, 1
      %vm4573 = vcmp.eq.s32.totalorder %v4525, 1
      %vm4574 = vcmp.eq.s32.totalorder %v4526, 1
      %vm4575 = vcmp.eq.s32.totalorder %v4527, 1
      %vm4576 = vcmp.eq.s32.totalorder %v4528, 1
      %vm4577 = vcmp.eq.s32.totalorder %v4529, 1
      %vm4578 = vcmp.eq.s32.totalorder %v4530, 1
      %vm4579 = vcmp.eq.s32.totalorder %v4531, 1
      %vm4580 = vcmp.eq.s32.totalorder %v4532, 1
      %vm4581 = vcmp.eq.s32.totalorder %v4533, 1
      %vm4582 = vcmp.eq.s32.totalorder %v4534, 1
      %vm4583 = vcmp.eq.s32.totalorder %v4535, 1
      %vm4584 = vcmp.eq.s32.totalorder %v4536, 1
      %vm4585 = vcmp.eq.s32.totalorder %v4537, 1
      %vm4586 = vcmp.eq.s32.totalorder %v4538, 1
      %vm4587 = vcmp.eq.s32.totalorder %v4539, 1
      %vm4588 = vcmp.eq.s32.totalorder %v4540, 1
      %vm4589 = vcmp.eq.s32.totalorder %v4541, 1
      %vm4590 = vcmp.eq.s32.totalorder %v4542, 1
      %vm4591 = vcmp.eq.s32.totalorder %v4543, 1
      %v4592 = vsel %vm4544, %v4448, 0.0
      %v4593 = vsel %vm4545, %v4449, 0.0
      %v4594 = vsel %vm4546, %v4450, 0.0
      %v4595 = vsel %vm4547, %v4451, 0.0
      %v4596 = vsel %vm4548, %v4452, 0.0
      %v4597 = vsel %vm4549, %v4453, 0.0
      %v4598 = vsel %vm4550, %v4454, 0.0
      %v4599 = vsel %vm4551, %v4455, 0.0
      %v4600 = vsel %vm4552, %v4456, 0.0
      %v4601 = vsel %vm4553, %v4457, 0.0
      %v4602 = vsel %vm4554, %v4458, 0.0
      %v4603 = vsel %vm4555, %v4459, 0.0
      %v4604 = vsel %vm4556, %v4460, 0.0
      %v4605 = vsel %vm4557, %v4461, 0.0
      %v4606 = vsel %vm4558, %v4462, 0.0
      %v4607 = vsel %vm4559, %v4463, 0.0
      %v4608 = vsel %vm4560, %v4464, 0.0
      %v4609 = vsel %vm4561, %v4465, 0.0
      %v4610 = vsel %vm4562, %v4466, 0.0
      %v4611 = vsel %vm4563, %v4467, 0.0
      %v4612 = vsel %vm4564, %v4468, 0.0
      %v4613 = vsel %vm4565, %v4469, 0.0
      %v4614 = vsel %vm4566, %v4470, 0.0
      %v4615 = vsel %vm4567, %v4471, 0.0
      %v4616 = vsel %vm4568, %v4472, 0.0
      %v4617 = vsel %vm4569, %v4473, 0.0
      %v4618 = vsel %vm4570, %v4474, 0.0
      %v4619 = vsel %vm4571, %v4475, 0.0
      %v4620 = vsel %vm4572, %v4476, 0.0
      %v4621 = vsel %vm4573, %v4477, 0.0
      %v4622 = vsel %vm4574, %v4478, 0.0
      %v4623 = vsel %vm4575, %v4479, 0.0
      %v4624 = vsel %vm4576, %v4480, 0.0
      %v4625 = vsel %vm4577, %v4481, 0.0
      %v4626 = vsel %vm4578, %v4482, 0.0
      %v4627 = vsel %vm4579, %v4483, 0.0
      %v4628 = vsel %vm4580, %v4484, 0.0
      %v4629 = vsel %vm4581, %v4485, 0.0
      %v4630 = vsel %vm4582, %v4486, 0.0
      %v4631 = vsel %vm4583, %v4487, 0.0
      %v4632 = vsel %vm4584, %v4488, 0.0
      %v4633 = vsel %vm4585, %v4489, 0.0
      %v4634 = vsel %vm4586, %v4490, 0.0
      %v4635 = vsel %vm4587, %v4491, 0.0
      %v4636 = vsel %vm4588, %v4492, 0.0
      %v4637 = vsel %vm4589, %v4493, 0.0
      %v4638 = vsel %vm4590, %v4494, 0.0
      %v4639 = vsel %vm4591, %v4495, 0.0
      %4640 = vst [vmem:[#allocation2] sm:$0xff] 0.0
      %4641 = vst [vmem:[#allocation2 + $0x8] sm:$0xff] 0.0
      %4642 = vst [vmem:[#allocation2 + $0x10] sm:$0xff] 0.0
      %4643 = vst [vmem:[#allocation2 + $0x198] sm:$0xff] 0.0
      %4644 = vst [vmem:[#allocation2 + $0x1a0] sm:$0xff] 0.0
      %4645 = vst [vmem:[#allocation2 + $0x1a8] sm:$0xff] 0.0
      %4646 = vst [vmem:[#allocation2 + $0x18] sm:$0xff] %v4592
      %4647 = vst [vmem:[#allocation2 + $0x20] sm:$0xff] %v4593
      %4648 = vst [vmem:[#allocation2 + $0x28] sm:$0xff] %v4594
      %4649 = vst [vmem:[#allocation2 + $0x30] sm:$0xff] %v4595
      %4650 = vst [vmem:[#allocation2 + $0x38] sm:$0xff] %v4596
      %4651 = vst [vmem:[#allocation2 + $0x40] sm:$0xff] %v4597
      %4652 = vst [vmem:[#allocation2 + $0x48] sm:$0xff] %v4598
      %4653 = vst [vmem:[#allocation2 + $0x50] sm:$0xff] %v4599
      %4654 = vst [vmem:[#allocation2 + $0x58] sm:$0xff] %v4600
      %4655 = vst [vmem:[#allocation2 + $0x60] sm:$0xff] %v4601
      %4656 = vst [vmem:[#allocation2 + $0x68] sm:$0xff] %v4602
      %4657 = vst [vmem:[#allocation2 + $0x70] sm:$0xff] %v4603
      %4658 = vst [vmem:[#allocation2 + $0x78] sm:$0xff] %v4604
      %4659 = vst [vmem:[#allocation2 + $0x80] sm:$0xff] %v4605
      %4660 = vst [vmem:[#allocation2 + $0x88] sm:$0xff] %v4606
      %4661 = vst [vmem:[#allocation2 + $0x90] sm:$0xff] %v4607
      %4662 = vst [vmem:[#allocation2 + $0x98] sm:$0xff] %v4608
      %4663 = vst [vmem:[#allocation2 + $0xa0] sm:$0xff] %v4609
      %4664 = vst [vmem:[#allocation2 + $0xa8] sm:$0xff] %v4610
      %4665 = vst [vmem:[#allocation2 + $0xb0] sm:$0xff] %v4611
      %4666 = vst [vmem:[#allocation2 + $0xb8] sm:$0xff] %v4612
      %4667 = vst [vmem:[#allocation2 + $0xc0] sm:$0xff] %v4613
      %4668 = vst [vmem:[#allocation2 + $0xc8] sm:$0xff] %v4614
      %4669 = vst [vmem:[#allocation2 + $0xd0] sm:$0xff] %v4615
      %4670 = vst [vmem:[#allocation2 + $0xd8] sm:$0xff] %v4616
      %4671 = vst [vmem:[#allocation2 + $0xe0] sm:$0xff] %v4617
      %4672 = vst [vmem:[#allocation2 + $0xe8] sm:$0xff] %v4618
      %4673 = vst [vmem:[#allocation2 + $0xf0] sm:$0xff] %v4619
      %4674 = vst [vmem:[#allocation2 + $0xf8] sm:$0xff] %v4620
      %4675 = vst [vmem:[#allocation2 + $0x100] sm:$0xff] %v4621
      %4676 = vst [vmem:[#allocation2 + $0x108] sm:$0xff] %v4622
      %4677 = vst [vmem:[#allocation2 + $0x110] sm:$0xff] %v4623
      %4678 = vst [vmem:[#allocation2 + $0x118] sm:$0xff] %v4624
      %4679 = vst [vmem:[#allocation2 + $0x120] sm:$0xff] %v4625
      %4680 = vst [vmem:[#allocation2 + $0x128] sm:$0xff] %v4626
      %4681 = vst [vmem:[#allocation2 + $0x130] sm:$0xff] %v4627
      %4682 = vst [vmem:[#allocation2 + $0x138] sm:$0xff] %v4628
      %4683 = vst [vmem:[#allocation2 + $0x140] sm:$0xff] %v4629
      %4684 = vst [vmem:[#allocation2 + $0x148] sm:$0xff] %v4630
      %4685 = vst [vmem:[#allocation2 + $0x150] sm:$0xff] %v4631
      %4686 = vst [vmem:[#allocation2 + $0x158] sm:$0xff] %v4632
      %4687 = vst [vmem:[#allocation2 + $0x160] sm:$0xff] %v4633
      %4688 = vst [vmem:[#allocation2 + $0x168] sm:$0xff] %v4634
      %4689 = vst [vmem:[#allocation2 + $0x170] sm:$0xff] %v4635
      %4690 = vst [vmem:[#allocation2 + $0x178] sm:$0xff] %v4636
      %4691 = vst [vmem:[#allocation2 + $0x180] sm:$0xff] %v4637
      %4692 = vst [vmem:[#allocation2 + $0x188] sm:$0xff] %v4638
      %4693 = vst [vmem:[#allocation2 + $0x190] sm:$0xff] %v4639
      %v4694 = vld [vmem:[#allocation2] sm:$0xff]
      %v4695 = vld [vmem:[#allocation2 + $0x8] sm:$0xff]
      %v4696 = vld [vmem:[#allocation2 + $0x10] sm:$0xff]
      %v4697 = vld [vmem:[#allocation2 + $0x18] sm:$0xff]
      %v4698 = vld [vmem:[#allocation2 + $0x20] sm:$0xff]
      %v4699 = vld [vmem:[#allocation2 + $0x28] sm:$0xff]
      %v4700 = vld [vmem:[#allocation2 + $0x30] sm:$0xff]
      %v4701 = vld [vmem:[#allocation2 + $0x38] sm:$0xff]
      %v4702 = vld [vmem:[#allocation2 + $0x40] sm:$0xff]
      %v4703 = vld [vmem:[#allocation2 + $0x48] sm:$0xff]
      %v4704 = vld [vmem:[#allocation2 + $0x50] sm:$0xff]
      %v4705 = vld [vmem:[#allocation2 + $0x58] sm:$0xff]
      %v4706 = vld [vmem:[#allocation2 + $0x60] sm:$0xff]
      %v4707 = vld [vmem:[#allocation2 + $0x68] sm:$0xff]
      %v4708 = vld [vmem:[#allocation2 + $0x70] sm:$0xff]
      %v4709 = vld [vmem:[#allocation2 + $0x78] sm:$0xff]
      %v4710 = vld [vmem:[#allocation2 + $0x80] sm:$0xff]
      %v4711 = vld [vmem:[#allocation2 + $0x88] sm:$0xff]
      %v4712 = vld [vmem:[#allocation2 + $0x90] sm:$0xff]
      %v4713 = vld [vmem:[#allocation2 + $0x98] sm:$0xff]
      %v4714 = vld [vmem:[#allocation2 + $0xa0] sm:$0xff]
      %v4715 = vld [vmem:[#allocation2 + $0xa8] sm:$0xff]
      %v4716 = vld [vmem:[#allocation2 + $0xb0] sm:$0xff]
      %v4717 = vld [vmem:[#allocation2 + $0xb8] sm:$0xff]
      %v4718 = vld [vmem:[#allocation2 + $0xc0] sm:$0xff]
      %v4719 = vld [vmem:[#allocation2 + $0xc8] sm:$0xff]
      %v4720 = vld [vmem:[#allocation2 + $0xd0] sm:$0xff]
      %v4721 = vld [vmem:[#allocation2 + $0xd8] sm:$0xff]
      %v4722 = vld [vmem:[#allocation2 + $0xe0] sm:$0xff]
      %v4723 = vld [vmem:[#allocation2 + $0xe8] sm:$0xff]
      %v4724 = vld [vmem:[#allocation2 + $0xf0] sm:$0xff]
      %v4725 = vld [vmem:[#allocation2 + $0xf8] sm:$0xff]
      %v4726 = vld [vmem:[#allocation2 + $0x100] sm:$0xff]
      %v4727 = vld [vmem:[#allocation2 + $0x108] sm:$0xff]
      %v4728 = vld [vmem:[#allocation2 + $0x110] sm:$0xff]
      %v4729 = vld [vmem:[#allocation2 + $0x118] sm:$0xff]
      %v4730 = vld [vmem:[#allocation2 + $0x120] sm:$0xff]
      %v4731 = vld [vmem:[#allocation2 + $0x128] sm:$0xff]
      %v4732 = vld [vmem:[#allocation2 + $0x130] sm:$0xff]
      %v4733 = vld [vmem:[#allocation2 + $0x138] sm:$0xff]
      %v4734 = vld [vmem:[#allocation2 + $0x140] sm:$0xff]
      %v4735 = vld [vmem:[#allocation2 + $0x148] sm:$0xff]
      %v4736 = vld [vmem:[#allocation2 + $0x150] sm:$0xff]
      %v4737 = vld [vmem:[#allocation2 + $0x158] sm:$0xff]
      %v4738 = vld [vmem:[#allocation2 + $0x160] sm:$0xff]
      %v4739 = vld [vmem:[#allocation2 + $0x168] sm:$0xff]
      %v4740 = vld [vmem:[#allocation2 + $0x170] sm:$0xff]
      %v4741 = vld [vmem:[#allocation2 + $0x178] sm:$0xff]
      %v4742 = vrot.slane %v4694, 7
      %v4743 = vrot.slane %v4695, 7
      %v4744 = vrot.slane %v4696, 7
      %v4745 = vrot.slane %v4697, 7
      %v4746 = vrot.slane %v4698, 7
      %v4747 = vrot.slane %v4699, 7
      %v4748 = vrot.slane %v4700, 7
      %v4749 = vrot.slane %v4701, 7
      %v4750 = vrot.slane %v4702, 7
      %v4751 = vrot.slane %v4703, 7
      %v4752 = vrot.slane %v4704, 7
      %v4753 = vrot.slane %v4705, 7
      %v4754 = vrot.slane %v4706, 7
      %v4755 = vrot.slane %v4707, 7
      %v4756 = vrot.slane %v4708, 7
      %v4757 = vrot.slane %v4709, 7
      %v4758 = vrot.slane %v4710, 7
      %v4759 = vrot.slane %v4711, 7
      %v4760 = vrot.slane %v4712, 7
      %v4761 = vrot.slane %v4713, 7
      %v4762 = vrot.slane %v4714, 7
      %v4763 = vrot.slane %v4715, 7
      %v4764 = vrot.slane %v4716, 7
      %v4765 = vrot.slane %v4717, 7
      %v4766 = vrot.slane %v4718, 7
      %v4767 = vrot.slane %v4719, 7
      %v4768 = vrot.slane %v4720, 7
      %v4769 = vrot.slane %v4721, 7
      %v4770 = vrot.slane %v4722, 7
      %v4771 = vrot.slane %v4723, 7
      %v4772 = vrot.slane %v4724, 7
      %v4773 = vrot.slane %v4725, 7
      %v4774 = vrot.slane %v4726, 7
      %v4775 = vrot.slane %v4727, 7
      %v4776 = vrot.slane %v4728, 7
      %v4777 = vrot.slane %v4729, 7
      %v4778 = vrot.slane %v4730, 7
      %v4779 = vrot.slane %v4731, 7
      %v4780 = vrot.slane %v4732, 7
      %v4781 = vrot.slane %v4733, 7
      %v4782 = vrot.slane %v4734, 7
      %v4783 = vrot.slane %v4735, 7
      %v4784 = vrot.slane %v4736, 7
      %v4785 = vrot.slane %v4737, 7
      %v4786 = vrot.slane %v4738, 7
      %v4787 = vrot.slane %v4739, 7
      %v4788 = vrot.slane %v4740, 7
      %v4789 = vrot.slane %v4741, 7
      %v4790 = vsel %vm1282, %v4788, %v4789
      %v4791 = vsel %vm1282, %v4787, %v4788
      %v4792 = vsel %vm1282, %v4786, %v4787
      %v4793 = vsel %vm1282, %v4785, %v4786
      %v4794 = vsel %vm1282, %v4784, %v4785
      %v4795 = vsel %vm1282, %v4783, %v4784
      %v4796 = vsel %vm1282, %v4782, %v4783
      %v4797 = vsel %vm1282, %v4781, %v4782
      %v4798 = vsel %vm1282, %v4780, %v4781
      %v4799 = vsel %vm1282, %v4779, %v4780
      %v4800 = vsel %vm1282, %v4778, %v4779
      %v4801 = vsel %vm1282, %v4777, %v4778
      %v4802 = vsel %vm1282, %v4776, %v4777
      %v4803 = vsel %vm1282, %v4775, %v4776
      %v4804 = vsel %vm1282, %v4774, %v4775
      %v4805 = vsel %vm1282, %v4773, %v4774
      %v4806 = vsel %vm1282, %v4772, %v4773
      %v4807 = vsel %vm1282, %v4771, %v4772
      %v4808 = vsel %vm1282, %v4770, %v4771
      %v4809 = vsel %vm1282, %v4769, %v4770
      %v4810 = vsel %vm1282, %v4768, %v4769
      %v4811 = vsel %vm1282, %v4767, %v4768
      %v4812 = vsel %vm1282, %v4766, %v4767
      %v4813 = vsel %vm1282, %v4765, %v4766
      %v4814 = vsel %vm1282, %v4764, %v4765
      %v4815 = vsel %vm1282, %v4763, %v4764
      %v4816 = vsel %vm1282, %v4762, %v4763
      %v4817 = vsel %vm1282, %v4761, %v4762
      %v4818 = vsel %vm1282, %v4760, %v4761
      %v4819 = vsel %vm1282, %v4759, %v4760
      %v4820 = vsel %vm1282, %v4758, %v4759
      %v4821 = vsel %vm1282, %v4757, %v4758
      %v4822 = vsel %vm1282, %v4756, %v4757
      %v4823 = vsel %vm1282, %v4755, %v4756
      %v4824 = vsel %vm1282, %v4754, %v4755
      %v4825 = vsel %vm1282, %v4753, %v4754
      %v4826 = vsel %vm1282, %v4752, %v4753
      %v4827 = vsel %vm1282, %v4751, %v4752
      %v4828 = vsel %vm1282, %v4750, %v4751
      %v4829 = vsel %vm1282, %v4749, %v4750
      %v4830 = vsel %vm1282, %v4748, %v4749
      %v4831 = vsel %vm1282, %v4747, %v4748
      %v4832 = vsel %vm1282, %v4746, %v4747
      %v4833 = vsel %vm1282, %v4745, %v4746
      %v4834 = vsel %vm1282, %v4744, %v4745
      %v4835 = vsel %vm1282, %v4743, %v4744
      %v4836 = vsel %vm1282, %v4742, %v4743
      %v4837 = vsel %vm1282, %v4789, %v4742
      %4838 = vst [vmem:[#allocation3] sm:$0xff] %v4837
      %4839 = vst [vmem:[#allocation3 + $0x48] sm:$0xff] %v4836
      %4840 = vst [vmem:[#allocation3 + $0x90] sm:$0xff] %v4835
      %4841 = vst [vmem:[#allocation3 + $0xd8] sm:$0xff] %v4834
      %4842 = vst [vmem:[#allocation3 + $0x120] sm:$0xff] %v4833
      %4843 = vst [vmem:[#allocation3 + $0x168] sm:$0xff] %v4832
      %4844 = vst [vmem:[#allocation3 + $0x1b0] sm:$0xff] %v4831
      %4845 = vst [vmem:[#allocation3 + $0x1f8] sm:$0xff] %v4830
      %4846 = vst [vmem:[#allocation3 + $0x240] sm:$0xff] %v4829
      %4847 = vst [vmem:[#allocation3 + $0x288] sm:$0xff] %v4828
      %4848 = vst [vmem:[#allocation3 + $0x2d0] sm:$0xff] %v4827
      %4849 = vst [vmem:[#allocation3 + $0x318] sm:$0xff] %v4826
      %4850 = vst [vmem:[#allocation3 + $0x360] sm:$0xff] %v4825
      %4851 = vst [vmem:[#allocation3 + $0x3a8] sm:$0xff] %v4824
      %4852 = vst [vmem:[#allocation3 + $0x3f0] sm:$0xff] %v4823
      %4853 = vst [vmem:[#allocation3 + $0x438] sm:$0xff] %v4822
      %4854 = vst [vmem:[#allocation3 + $0x480] sm:$0xff] %v4821
      %4855 = vst [vmem:[#allocation3 + $0x4c8] sm:$0xff] %v4820
      %4856 = vst [vmem:[#allocation3 + $0x510] sm:$0xff] %v4819
      %4857 = vst [vmem:[#allocation3 + $0x558] sm:$0xff] %v4818
      %4858 = vst [vmem:[#allocation3 + $0x5a0] sm:$0xff] %v4817
      %4859 = vst [vmem:[#allocation3 + $0x5e8] sm:$0xff] %v4816
      %4860 = vst [vmem:[#allocation3 + $0x630] sm:$0xff] %v4815
      %4861 = vst [vmem:[#allocation3 + $0x678] sm:$0xff] %v4814
      %4862 = vst [vmem:[#allocation3 + $0x6c0] sm:$0xff] %v4813
      %4863 = vst [vmem:[#allocation3 + $0x708] sm:$0xff] %v4812
      %4864 = vst [vmem:[#allocation3 + $0x750] sm:$0xff] %v4811
      %4865 = vst [vmem:[#allocation3 + $0x798] sm:$0xff] %v4810
      %4866 = vst [vmem:[#allocation3 + $0x7e0] sm:$0xff] %v4809
      %4867 = vst [vmem:[#allocation3 + $0x828] sm:$0xff] %v4808
      %4868 = vst [vmem:[#allocation3 + $0x870] sm:$0xff] %v4807
      %4869 = vst [vmem:[#allocation3 + $0x8b8] sm:$0xff] %v4806
      %4870 = vst [vmem:[#allocation3 + $0x900] sm:$0xff] %v4805
      %4871 = vst [vmem:[#allocation3 + $0x948] sm:$0xff] %v4804
      %4872 = vst [vmem:[#allocation3 + $0x990] sm:$0xff] %v4803
      %4873 = vst [vmem:[#allocation3 + $0x9d8] sm:$0xff] %v4802
      %4874 = vst [vmem:[#allocation3 + $0xa20] sm:$0xff] %v4801
      %4875 = vst [vmem:[#allocation3 + $0xa68] sm:$0xff] %v4800
      %4876 = vst [vmem:[#allocation3 + $0xab0] sm:$0xff] %v4799
      %4877 = vst [vmem:[#allocation3 + $0xaf8] sm:$0xff] %v4798
      %4878 = vst [vmem:[#allocation3 + $0xb40] sm:$0xff] %v4797
      %4879 = vst [vmem:[#allocation3 + $0xb88] sm:$0xff] %v4796
      %4880 = vst [vmem:[#allocation3 + $0xbd0] sm:$0xff] %v4795
      %4881 = vst [vmem:[#allocation3 + $0xc18] sm:$0xff] %v4794
      %4882 = vst [vmem:[#allocation3 + $0xc60] sm:$0xff] %v4793
      %4883 = vst [vmem:[#allocation3 + $0xca8] sm:$0xff] %v4792
      %4884 = vst [vmem:[#allocation3 + $0xcf0] sm:$0xff] %v4791
      %4885 = vst [vmem:[#allocation3 + $0xd38] sm:$0xff] %v4790
      %4886 = vst [vmem:[#allocation3 + $0x8] sm:$0xff] %v4694
      %4887 = vst [vmem:[#allocation3 + $0x50] sm:$0xff] %v4695
      %4888 = vst [vmem:[#allocation3 + $0x98] sm:$0xff] %v4696
      %4889 = vst [vmem:[#allocation3 + $0xe0] sm:$0xff] %v4697
      %4890 = vst [vmem:[#allocation3 + $0x128] sm:$0xff] %v4698
      %4891 = vst [vmem:[#allocation3 + $0x170] sm:$0xff] %v4699
      %4892 = vst [vmem:[#allocation3 + $0x1b8] sm:$0xff] %v4700
      %4893 = vst [vmem:[#allocation3 + $0x200] sm:$0xff] %v4701
      %4894 = vst [vmem:[#allocation3 + $0x248] sm:$0xff] %v4702
      %4895 = vst [vmem:[#allocation3 + $0x290] sm:$0xff] %v4703
      %4896 = vst [vmem:[#allocation3 + $0x2d8] sm:$0xff] %v4704
      %4897 = vst [vmem:[#allocation3 + $0x320] sm:$0xff] %v4705
      %4898 = vst [vmem:[#allocation3 + $0x368] sm:$0xff] %v4706
      %4899 = vst [vmem:[#allocation3 + $0x3b0] sm:$0xff] %v4707
      %4900 = vst [vmem:[#allocation3 + $0x3f8] sm:$0xff] %v4708
      %4901 = vst [vmem:[#allocation3 + $0x440] sm:$0xff] %v4709
      %4902 = vst [vmem:[#allocation3 + $0x488] sm:$0xff] %v4710
      %4903 = vst [vmem:[#allocation3 + $0x4d0] sm:$0xff] %v4711
      %4904 = vst [vmem:[#allocation3 + $0x518] sm:$0xff] %v4712
      %4905 = vst [vmem:[#allocation3 + $0x560] sm:$0xff] %v4713
      %4906 = vst [vmem:[#allocation3 + $0x5a8] sm:$0xff] %v4714
      %4907 = vst [vmem:[#allocation3 + $0x5f0] sm:$0xff] %v4715
      %4908 = vst [vmem:[#allocation3 + $0x638] sm:$0xff] %v4716
      %4909 = vst [vmem:[#allocation3 + $0x680] sm:$0xff] %v4717
      %4910 = vst [vmem:[#allocation3 + $0x6c8] sm:$0xff] %v4718
      %4911 = vst [vmem:[#allocation3 + $0x710] sm:$0xff] %v4719
      %4912 = vst [vmem:[#allocation3 + $0x758] sm:$0xff] %v4720
      %4913 = vst [vmem:[#allocation3 + $0x7a0] sm:$0xff] %v4721
      %4914 = vst [vmem:[#allocation3 + $0x7e8] sm:$0xff] %v4722
      %4915 = vst [vmem:[#allocation3 + $0x830] sm:$0xff] %v4723
      %4916 = vst [vmem:[#allocation3 + $0x878] sm:$0xff] %v4724
      %4917 = vst [vmem:[#allocation3 + $0x8c0] sm:$0xff] %v4725
      %4918 = vst [vmem:[#allocation3 + $0x908] sm:$0xff] %v4726
      %4919 = vst [vmem:[#allocation3 + $0x950] sm:$0xff] %v4727
      %4920 = vst [vmem:[#allocation3 + $0x998] sm:$0xff] %v4728
      %4921 = vst [vmem:[#allocation3 + $0x9e0] sm:$0xff] %v4729
      %4922 = vst [vmem:[#allocation3 + $0xa28] sm:$0xff] %v4730
      %4923 = vst [vmem:[#allocation3 + $0xa70] sm:$0xff] %v4731
      %4924 = vst [vmem:[#allocation3 + $0xab8] sm:$0xff] %v4732
      %4925 = vst [vmem:[#allocation3 + $0xb00] sm:$0xff] %v4733
      %4926 = vst [vmem:[#allocation3 + $0xb48] sm:$0xff] %v4734
      %4927 = vst [vmem:[#allocation3 + $0xb90] sm:$0xff] %v4735
      %4928 = vst [vmem:[#allocation3 + $0xbd8] sm:$0xff] %v4736
      %4929 = vst [vmem:[#allocation3 + $0xc20] sm:$0xff] %v4737
      %4930 = vst [vmem:[#allocation3 + $0xc68] sm:$0xff] %v4738
      %4931 = vst [vmem:[#allocation3 + $0xcb0] sm:$0xff] %v4739
      %4932 = vst [vmem:[#allocation3 + $0xcf8] sm:$0xff] %v4740
      %4933 = vst [vmem:[#allocation3 + $0xd40] sm:$0xff] %v4741
      %v4934 = vrot.slane %v4694, 1
      %v4935 = vrot.slane %v4695, 1
      %v4936 = vrot.slane %v4696, 1
      %v4937 = vrot.slane %v4697, 1
      %v4938 = vrot.slane %v4698, 1
      %v4939 = vrot.slane %v4699, 1
      %v4940 = vrot.slane %v4700, 1
      %v4941 = vrot.slane %v4701, 1
      %v4942 = vrot.slane %v4702, 1
      %v4943 = vrot.slane %v4703, 1
      %v4944 = vrot.slane %v4704, 1
      %v4945 = vrot.slane %v4705, 1
      %v4946 = vrot.slane %v4706, 1
      %v4947 = vrot.slane %v4707, 1
      %v4948 = vrot.slane %v4708, 1
      %v4949 = vrot.slane %v4709, 1
      %v4950 = vrot.slane %v4710, 1
      %v4951 = vrot.slane %v4711, 1
      %v4952 = vrot.slane %v4712, 1
      %v4953 = vrot.slane %v4713, 1
      %v4954 = vrot.slane %v4714, 1
      %v4955 = vrot.slane %v4715, 1
      %v4956 = vrot.slane %v4716, 1
      %v4957 = vrot.slane %v4717, 1
      %v4958 = vrot.slane %v4718, 1
      %v4959 = vrot.slane %v4719, 1
      %v4960 = vrot.slane %v4720, 1
      %v4961 = vrot.slane %v4721, 1
      %v4962 = vrot.slane %v4722, 1
      %v4963 = vrot.slane %v4723, 1
      %v4964 = vrot.slane %v4724, 1
      %v4965 = vrot.slane %v4725, 1
      %v4966 = vrot.slane %v4726, 1
      %v4967 = vrot.slane %v4727, 1
      %v4968 = vrot.slane %v4728, 1
      %v4969 = vrot.slane %v4729, 1
      %v4970 = vrot.slane %v4730, 1
      %v4971 = vrot.slane %v4731, 1
      %v4972 = vrot.slane %v4732, 1
      %v4973 = vrot.slane %v4733, 1
      %v4974 = vrot.slane %v4734, 1
      %v4975 = vrot.slane %v4735, 1
      %v4976 = vrot.slane %v4736, 1
      %v4977 = vrot.slane %v4737, 1
      %v4978 = vrot.slane %v4738, 1
      %v4979 = vrot.slane %v4739, 1
      %v4980 = vrot.slane %v4740, 1
      %v4981 = vrot.slane %v4741, 1
      %v4982 = vsel %vm1475, %v4980, %v4981
      %v4983 = vsel %vm1475, %v4979, %v4980
      %v4984 = vsel %vm1475, %v4978, %v4979
      %v4985 = vsel %vm1475, %v4977, %v4978
      %v4986 = vsel %vm1475, %v4976, %v4977
      %v4987 = vsel %vm1475, %v4975, %v4976
      %v4988 = vsel %vm1475, %v4974, %v4975
      %v4989 = vsel %vm1475, %v4973, %v4974
      %v4990 = vsel %vm1475, %v4972, %v4973
      %v4991 = vsel %vm1475, %v4971, %v4972
      %v4992 = vsel %vm1475, %v4970, %v4971
      %v4993 = vsel %vm1475, %v4969, %v4970
      %v4994 = vsel %vm1475, %v4968, %v4969
      %v4995 = vsel %vm1475, %v4967, %v4968
      %v4996 = vsel %vm1475, %v4966, %v4967
      %v4997 = vsel %vm1475, %v4965, %v4966
      %v4998 = vsel %vm1475, %v4964, %v4965
      %v4999 = vsel %vm1475, %v4963, %v4964
      %v5000 = vsel %vm1475, %v4962, %v4963
      %v5001 = vsel %vm1475, %v4961, %v4962
      %v5002 = vsel %vm1475, %v4960, %v4961
      %v5003 = vsel %vm1475, %v4959, %v4960
      %v5004 = vsel %vm1475, %v4958, %v4959
      %v5005 = vsel %vm1475, %v4957, %v4958
      %v5006 = vsel %vm1475, %v4956, %v4957
      %v5007 = vsel %vm1475, %v4955, %v4956
      %v5008 = vsel %vm1475, %v4954, %v4955
      %v5009 = vsel %vm1475, %v4953, %v4954
      %v5010 = vsel %vm1475, %v4952, %v4953
      %v5011 = vsel %vm1475, %v4951, %v4952
      %v5012 = vsel %vm1475, %v4950, %v4951
      %v5013 = vsel %vm1475, %v4949, %v4950
      %v5014 = vsel %vm1475, %v4948, %v4949
      %v5015 = vsel %vm1475, %v4947, %v4948
      %v5016 = vsel %vm1475, %v4946, %v4947
      %v5017 = vsel %vm1475, %v4945, %v4946
      %v5018 = vsel %vm1475, %v4944, %v4945
      %v5019 = vsel %vm1475, %v4943, %v4944
      %v5020 = vsel %vm1475, %v4942, %v4943
      %v5021 = vsel %vm1475, %v4941, %v4942
      %v5022 = vsel %vm1475, %v4940, %v4941
      %v5023 = vsel %vm1475, %v4939, %v4940
      %v5024 = vsel %vm1475, %v4938, %v4939
      %v5025 = vsel %vm1475, %v4937, %v4938
      %v5026 = vsel %vm1475, %v4936, %v4937
      %v5027 = vsel %vm1475, %v4935, %v4936
      %v5028 = vsel %vm1475, %v4934, %v4935
      %v5029 = vsel %vm1475, %v4981, %v4934
      %5030 = vst [vmem:[#allocation3 + $0x10] sm:$0xff] %v5028
      %5031 = vst [vmem:[#allocation3 + $0x58] sm:$0xff] %v5027
      %5032 = vst [vmem:[#allocation3 + $0xa0] sm:$0xff] %v5026
      %5033 = vst [vmem:[#allocation3 + $0xe8] sm:$0xff] %v5025
      %5034 = vst [vmem:[#allocation3 + $0x130] sm:$0xff] %v5024
      %5035 = vst [vmem:[#allocation3 + $0x178] sm:$0xff] %v5023
      %5036 = vst [vmem:[#allocation3 + $0x1c0] sm:$0xff] %v5022
      %5037 = vst [vmem:[#allocation3 + $0x208] sm:$0xff] %v5021
      %5038 = vst [vmem:[#allocation3 + $0x250] sm:$0xff] %v5020
      %5039 = vst [vmem:[#allocation3 + $0x298] sm:$0xff] %v5019
      %5040 = vst [vmem:[#allocation3 + $0x2e0] sm:$0xff] %v5018
      %5041 = vst [vmem:[#allocation3 + $0x328] sm:$0xff] %v5017
      %5042 = vst [vmem:[#allocation3 + $0x370] sm:$0xff] %v5016
      %5043 = vst [vmem:[#allocation3 + $0x3b8] sm:$0xff] %v5015
      %5044 = vst [vmem:[#allocation3 + $0x400] sm:$0xff] %v5014
      %5045 = vst [vmem:[#allocation3 + $0x448] sm:$0xff] %v5013
      %5046 = vst [vmem:[#allocation3 + $0x490] sm:$0xff] %v5012
      %5047 = vst [vmem:[#allocation3 + $0x4d8] sm:$0xff] %v5011
      %5048 = vst [vmem:[#allocation3 + $0x520] sm:$0xff] %v5010
      %5049 = vst [vmem:[#allocation3 + $0x568] sm:$0xff] %v5009
      %5050 = vst [vmem:[#allocation3 + $0x5b0] sm:$0xff] %v5008
      %5051 = vst [vmem:[#allocation3 + $0x5f8] sm:$0xff] %v5007
      %5052 = vst [vmem:[#allocation3 + $0x640] sm:$0xff] %v5006
      %5053 = vst [vmem:[#allocation3 + $0x688] sm:$0xff] %v5005
      %5054 = vst [vmem:[#allocation3 + $0x6d0] sm:$0xff] %v5004
      %5055 = vst [vmem:[#allocation3 + $0x718] sm:$0xff] %v5003
      %5056 = vst [vmem:[#allocation3 + $0x760] sm:$0xff] %v5002
      %5057 = vst [vmem:[#allocation3 + $0x7a8] sm:$0xff] %v5001
      %5058 = vst [vmem:[#allocation3 + $0x7f0] sm:$0xff] %v5000
      %5059 = vst [vmem:[#allocation3 + $0x838] sm:$0xff] %v4999
      %5060 = vst [vmem:[#allocation3 + $0x880] sm:$0xff] %v4998
      %5061 = vst [vmem:[#allocation3 + $0x8c8] sm:$0xff] %v4997
      %5062 = vst [vmem:[#allocation3 + $0x910] sm:$0xff] %v4996
      %5063 = vst [vmem:[#allocation3 + $0x958] sm:$0xff] %v4995
      %5064 = vst [vmem:[#allocation3 + $0x9a0] sm:$0xff] %v4994
      %5065 = vst [vmem:[#allocation3 + $0x9e8] sm:$0xff] %v4993
      %5066 = vst [vmem:[#allocation3 + $0xa30] sm:$0xff] %v4992
      %5067 = vst [vmem:[#allocation3 + $0xa78] sm:$0xff] %v4991
      %5068 = vst [vmem:[#allocation3 + $0xac0] sm:$0xff] %v4990
      %5069 = vst [vmem:[#allocation3 + $0xb08] sm:$0xff] %v4989
      %5070 = vst [vmem:[#allocation3 + $0xb50] sm:$0xff] %v4988
      %5071 = vst [vmem:[#allocation3 + $0xb98] sm:$0xff] %v4987
      %5072 = vst [vmem:[#allocation3 + $0xbe0] sm:$0xff] %v4986
      %5073 = vst [vmem:[#allocation3 + $0xc28] sm:$0xff] %v4985
      %5074 = vst [vmem:[#allocation3 + $0xc70] sm:$0xff] %v4984
      %5075 = vst [vmem:[#allocation3 + $0xcb8] sm:$0xff] %v4983
      %5076 = vst [vmem:[#allocation3 + $0xd00] sm:$0xff] %v4982
      %5077 = vst [vmem:[#allocation3 + $0xd48] sm:$0xff] %v5029
      %v5078 = vld [vmem:[#allocation2 + $0x18] sm:$0xff]
      %v5079 = vld [vmem:[#allocation2 + $0x20] sm:$0xff]
      %v5080 = vld [vmem:[#allocation2 + $0x28] sm:$0xff]
      %v5081 = vld [vmem:[#allocation2 + $0x30] sm:$0xff]
      %v5082 = vld [vmem:[#allocation2 + $0x38] sm:$0xff]
      %v5083 = vld [vmem:[#allocation2 + $0x40] sm:$0xff]
      %v5084 = vld [vmem:[#allocation2 + $0x48] sm:$0xff]
      %v5085 = vld [vmem:[#allocation2 + $0x50] sm:$0xff]
      %v5086 = vld [vmem:[#allocation2 + $0x58] sm:$0xff]
      %v5087 = vld [vmem:[#allocation2 + $0x60] sm:$0xff]
      %v5088 = vld [vmem:[#allocation2 + $0x68] sm:$0xff]
      %v5089 = vld [vmem:[#allocation2 + $0x70] sm:$0xff]
      %v5090 = vld [vmem:[#allocation2 + $0x78] sm:$0xff]
      %v5091 = vld [vmem:[#allocation2 + $0x80] sm:$0xff]
      %v5092 = vld [vmem:[#allocation2 + $0x88] sm:$0xff]
      %v5093 = vld [vmem:[#allocation2 + $0x90] sm:$0xff]
      %v5094 = vld [vmem:[#allocation2 + $0x98] sm:$0xff]
      %v5095 = vld [vmem:[#allocation2 + $0xa0] sm:$0xff]
      %v5096 = vld [vmem:[#allocation2 + $0xa8] sm:$0xff]
      %v5097 = vld [vmem:[#allocation2 + $0xb0] sm:$0xff]
      %v5098 = vld [vmem:[#allocation2 + $0xb8] sm:$0xff]
      %v5099 = vld [vmem:[#allocation2 + $0xc0] sm:$0xff]
      %v5100 = vld [vmem:[#allocation2 + $0xc8] sm:$0xff]
      %v5101 = vld [vmem:[#allocation2 + $0xd0] sm:$0xff]
      %v5102 = vld [vmem:[#allocation2 + $0xd8] sm:$0xff]
      %v5103 = vld [vmem:[#allocation2 + $0xe0] sm:$0xff]
      %v5104 = vld [vmem:[#allocation2 + $0xe8] sm:$0xff]
      %v5105 = vld [vmem:[#allocation2 + $0xf0] sm:$0xff]
      %v5106 = vld [vmem:[#allocation2 + $0xf8] sm:$0xff]
      %v5107 = vld [vmem:[#allocation2 + $0x100] sm:$0xff]
      %v5108 = vld [vmem:[#allocation2 + $0x108] sm:$0xff]
      %v5109 = vld [vmem:[#allocation2 + $0x110] sm:$0xff]
      %v5110 = vld [vmem:[#allocation2 + $0x118] sm:$0xff]
      %v5111 = vld [vmem:[#allocation2 + $0x120] sm:$0xff]
      %v5112 = vld [vmem:[#allocation2 + $0x128] sm:$0xff]
      %v5113 = vld [vmem:[#allocation2 + $0x130] sm:$0xff]
      %v5114 = vld [vmem:[#allocation2 + $0x138] sm:$0xff]
      %v5115 = vld [vmem:[#allocation2 + $0x140] sm:$0xff]
      %v5116 = vld [vmem:[#allocation2 + $0x148] sm:$0xff]
      %v5117 = vld [vmem:[#allocation2 + $0x150] sm:$0xff]
      %v5118 = vld [vmem:[#allocation2 + $0x158] sm:$0xff]
      %v5119 = vld [vmem:[#allocation2 + $0x160] sm:$0xff]
      %v5120 = vld [vmem:[#allocation2 + $0x168] sm:$0xff]
      %v5121 = vld [vmem:[#allocation2 + $0x170] sm:$0xff]
      %v5122 = vld [vmem:[#allocation2 + $0x178] sm:$0xff]
      %v5123 = vld [vmem:[#allocation2 + $0x180] sm:$0xff]
      %v5124 = vld [vmem:[#allocation2 + $0x188] sm:$0xff]
      %v5125 = vld [vmem:[#allocation2 + $0x190] sm:$0xff]
      %v5126 = vrot.slane %v5078, 7
      %v5127 = vrot.slane %v5079, 7
      %v5128 = vrot.slane %v5080, 7
      %v5129 = vrot.slane %v5081, 7
      %v5130 = vrot.slane %v5082, 7
      %v5131 = vrot.slane %v5083, 7
      %v5132 = vrot.slane %v5084, 7
      %v5133 = vrot.slane %v5085, 7
      %v5134 = vrot.slane %v5086, 7
      %v5135 = vrot.slane %v5087, 7
      %v5136 = vrot.slane %v5088, 7
      %v5137 = vrot.slane %v5089, 7
      %v5138 = vrot.slane %v5090, 7
      %v5139 = vrot.slane %v5091, 7
      %v5140 = vrot.slane %v5092, 7
      %v5141 = vrot.slane %v5093, 7
      %v5142 = vrot.slane %v5094, 7
      %v5143 = vrot.slane %v5095, 7
      %v5144 = vrot.slane %v5096, 7
      %v5145 = vrot.slane %v5097, 7
      %v5146 = vrot.slane %v5098, 7
      %v5147 = vrot.slane %v5099, 7
      %v5148 = vrot.slane %v5100, 7
      %v5149 = vrot.slane %v5101, 7
      %v5150 = vrot.slane %v5102, 7
      %v5151 = vrot.slane %v5103, 7
      %v5152 = vrot.slane %v5104, 7
      %v5153 = vrot.slane %v5105, 7
      %v5154 = vrot.slane %v5106, 7
      %v5155 = vrot.slane %v5107, 7
      %v5156 = vrot.slane %v5108, 7
      %v5157 = vrot.slane %v5109, 7
      %v5158 = vrot.slane %v5110, 7
      %v5159 = vrot.slane %v5111, 7
      %v5160 = vrot.slane %v5112, 7
      %v5161 = vrot.slane %v5113, 7
      %v5162 = vrot.slane %v5114, 7
      %v5163 = vrot.slane %v5115, 7
      %v5164 = vrot.slane %v5116, 7
      %v5165 = vrot.slane %v5117, 7
      %v5166 = vrot.slane %v5118, 7
      %v5167 = vrot.slane %v5119, 7
      %v5168 = vrot.slane %v5120, 7
      %v5169 = vrot.slane %v5121, 7
      %v5170 = vrot.slane %v5122, 7
      %v5171 = vrot.slane %v5123, 7
      %v5172 = vrot.slane %v5124, 7
      %v5173 = vrot.slane %v5125, 7
      %v5174 = vsel %vm1282, %v5172, %v5173
      %v5175 = vsel %vm1282, %v5171, %v5172
      %v5176 = vsel %vm1282, %v5170, %v5171
      %v5177 = vsel %vm1282, %v5169, %v5170
      %v5178 = vsel %vm1282, %v5168, %v5169
      %v5179 = vsel %vm1282, %v5167, %v5168
      %v5180 = vsel %vm1282, %v5166, %v5167
      %v5181 = vsel %vm1282, %v5165, %v5166
      %v5182 = vsel %vm1282, %v5164, %v5165
      %v5183 = vsel %vm1282, %v5163, %v5164
      %v5184 = vsel %vm1282, %v5162, %v5163
      %v5185 = vsel %vm1282, %v5161, %v5162
      %v5186 = vsel %vm1282, %v5160, %v5161
      %v5187 = vsel %vm1282, %v5159, %v5160
      %v5188 = vsel %vm1282, %v5158, %v5159
      %v5189 = vsel %vm1282, %v5157, %v5158
      %v5190 = vsel %vm1282, %v5156, %v5157
      %v5191 = vsel %vm1282, %v5155, %v5156
      %v5192 = vsel %vm1282, %v5154, %v5155
      %v5193 = vsel %vm1282, %v5153, %v5154
      %v5194 = vsel %vm1282, %v5152, %v5153
      %v5195 = vsel %vm1282, %v5151, %v5152
      %v5196 = vsel %vm1282, %v5150, %v5151
      %v5197 = vsel %vm1282, %v5149, %v5150
      %v5198 = vsel %vm1282, %v5148, %v5149
      %v5199 = vsel %vm1282, %v5147, %v5148
      %v5200 = vsel %vm1282, %v5146, %v5147
      %v5201 = vsel %vm1282, %v5145, %v5146
      %v5202 = vsel %vm1282, %v5144, %v5145
      %v5203 = vsel %vm1282, %v5143, %v5144
      %v5204 = vsel %vm1282, %v5142, %v5143
      %v5205 = vsel %vm1282, %v5141, %v5142
      %v5206 = vsel %vm1282, %v5140, %v5141
      %v5207 = vsel %vm1282, %v5139, %v5140
      %v5208 = vsel %vm1282, %v5138, %v5139
      %v5209 = vsel %vm1282, %v5137, %v5138
      %v5210 = vsel %vm1282, %v5136, %v5137
      %v5211 = vsel %vm1282, %v5135, %v5136
      %v5212 = vsel %vm1282, %v5134, %v5135
      %v5213 = vsel %vm1282, %v5133, %v5134
      %v5214 = vsel %vm1282, %v5132, %v5133
      %v5215 = vsel %vm1282, %v5131, %v5132
      %v5216 = vsel %vm1282, %v5130, %v5131
      %v5217 = vsel %vm1282, %v5129, %v5130
      %v5218 = vsel %vm1282, %v5128, %v5129
      %v5219 = vsel %vm1282, %v5127, %v5128
      %v5220 = vsel %vm1282, %v5126, %v5127
      %v5221 = vsel %vm1282, %v5173, %v5126
      %5222 = vst [vmem:[#allocation3 + $0x18] sm:$0xff] %v5221
      %5223 = vst [vmem:[#allocation3 + $0x60] sm:$0xff] %v5220
      %5224 = vst [vmem:[#allocation3 + $0xa8] sm:$0xff] %v5219
      %5225 = vst [vmem:[#allocation3 + $0xf0] sm:$0xff] %v5218
      %5226 = vst [vmem:[#allocation3 + $0x138] sm:$0xff] %v5217
      %5227 = vst [vmem:[#allocation3 + $0x180] sm:$0xff] %v5216
      %5228 = vst [vmem:[#allocation3 + $0x1c8] sm:$0xff] %v5215
      %5229 = vst [vmem:[#allocation3 + $0x210] sm:$0xff] %v5214
      %5230 = vst [vmem:[#allocation3 + $0x258] sm:$0xff] %v5213
      %5231 = vst [vmem:[#allocation3 + $0x2a0] sm:$0xff] %v5212
      %5232 = vst [vmem:[#allocation3 + $0x2e8] sm:$0xff] %v5211
      %5233 = vst [vmem:[#allocation3 + $0x330] sm:$0xff] %v5210
      %5234 = vst [vmem:[#allocation3 + $0x378] sm:$0xff] %v5209
      %5235 = vst [vmem:[#allocation3 + $0x3c0] sm:$0xff] %v5208
      %5236 = vst [vmem:[#allocation3 + $0x408] sm:$0xff] %v5207
      %5237 = vst [vmem:[#allocation3 + $0x450] sm:$0xff] %v5206
      %5238 = vst [vmem:[#allocation3 + $0x498] sm:$0xff] %v5205
      %5239 = vst [vmem:[#allocation3 + $0x4e0] sm:$0xff] %v5204
      %5240 = vst [vmem:[#allocation3 + $0x528] sm:$0xff] %v5203
      %5241 = vst [vmem:[#allocation3 + $0x570] sm:$0xff] %v5202
      %5242 = vst [vmem:[#allocation3 + $0x5b8] sm:$0xff] %v5201
      %5243 = vst [vmem:[#allocation3 + $0x600] sm:$0xff] %v5200
      %5244 = vst [vmem:[#allocation3 + $0x648] sm:$0xff] %v5199
      %5245 = vst [vmem:[#allocation3 + $0x690] sm:$0xff] %v5198
      %5246 = vst [vmem:[#allocation3 + $0x6d8] sm:$0xff] %v5197
      %5247 = vst [vmem:[#allocation3 + $0x720] sm:$0xff] %v5196
      %5248 = vst [vmem:[#allocation3 + $0x768] sm:$0xff] %v5195
      %5249 = vst [vmem:[#allocation3 + $0x7b0] sm:$0xff] %v5194
      %5250 = vst [vmem:[#allocation3 + $0x7f8] sm:$0xff] %v5193
      %5251 = vst [vmem:[#allocation3 + $0x840] sm:$0xff] %v5192
      %5252 = vst [vmem:[#allocation3 + $0x888] sm:$0xff] %v5191
      %5253 = vst [vmem:[#allocation3 + $0x8d0] sm:$0xff] %v5190
      %5254 = vst [vmem:[#allocation3 + $0x918] sm:$0xff] %v5189
      %5255 = vst [vmem:[#allocation3 + $0x960] sm:$0xff] %v5188
      %5256 = vst [vmem:[#allocation3 + $0x9a8] sm:$0xff] %v5187
      %5257 = vst [vmem:[#allocation3 + $0x9f0] sm:$0xff] %v5186
      %5258 = vst [vmem:[#allocation3 + $0xa38] sm:$0xff] %v5185
      %5259 = vst [vmem:[#allocation3 + $0xa80] sm:$0xff] %v5184
      %5260 = vst [vmem:[#allocation3 + $0xac8] sm:$0xff] %v5183
      %5261 = vst [vmem:[#allocation3 + $0xb10] sm:$0xff] %v5182
      %5262 = vst [vmem:[#allocation3 + $0xb58] sm:$0xff] %v5181
      %5263 = vst [vmem:[#allocation3 + $0xba0] sm:$0xff] %v5180
      %5264 = vst [vmem:[#allocation3 + $0xbe8] sm:$0xff] %v5179
      %5265 = vst [vmem:[#allocation3 + $0xc30] sm:$0xff] %v5178
      %5266 = vst [vmem:[#allocation3 + $0xc78] sm:$0xff] %v5177
      %5267 = vst [vmem:[#allocation3 + $0xcc0] sm:$0xff] %v5176
      %5268 = vst [vmem:[#allocation3 + $0xd08] sm:$0xff] %v5175
      %5269 = vst [vmem:[#allocation3 + $0xd50] sm:$0xff] %v5174
      %5270 = vst [vmem:[#allocation3 + $0x20] sm:$0xff] %v5078
      %5271 = vst [vmem:[#allocation3 + $0x68] sm:$0xff] %v5079
      %5272 = vst [vmem:[#allocation3 + $0xb0] sm:$0xff] %v5080
      %5273 = vst [vmem:[#allocation3 + $0xf8] sm:$0xff] %v5081
      %5274 = vst [vmem:[#allocation3 + $0x140] sm:$0xff] %v5082
      %5275 = vst [vmem:[#allocation3 + $0x188] sm:$0xff] %v5083
      %5276 = vst [vmem:[#allocation3 + $0x1d0] sm:$0xff] %v5084
      %5277 = vst [vmem:[#allocation3 + $0x218] sm:$0xff] %v5085
      %5278 = vst [vmem:[#allocation3 + $0x260] sm:$0xff] %v5086
      %5279 = vst [vmem:[#allocation3 + $0x2a8] sm:$0xff] %v5087
      %5280 = vst [vmem:[#allocation3 + $0x2f0] sm:$0xff] %v5088
      %5281 = vst [vmem:[#allocation3 + $0x338] sm:$0xff] %v5089
      %5282 = vst [vmem:[#allocation3 + $0x380] sm:$0xff] %v5090
      %5283 = vst [vmem:[#allocation3 + $0x3c8] sm:$0xff] %v5091
      %5284 = vst [vmem:[#allocation3 + $0x410] sm:$0xff] %v5092
      %5285 = vst [vmem:[#allocation3 + $0x458] sm:$0xff] %v5093
      %5286 = vst [vmem:[#allocation3 + $0x4a0] sm:$0xff] %v5094
      %5287 = vst [vmem:[#allocation3 + $0x4e8] sm:$0xff] %v5095
      %5288 = vst [vmem:[#allocation3 + $0x530] sm:$0xff] %v5096
      %5289 = vst [vmem:[#allocation3 + $0x578] sm:$0xff] %v5097
      %5290 = vst [vmem:[#allocation3 + $0x5c0] sm:$0xff] %v5098
      %5291 = vst [vmem:[#allocation3 + $0x608] sm:$0xff] %v5099
      %5292 = vst [vmem:[#allocation3 + $0x650] sm:$0xff] %v5100
      %5293 = vst [vmem:[#allocation3 + $0x698] sm:$0xff] %v5101
      %5294 = vst [vmem:[#allocation3 + $0x6e0] sm:$0xff] %v5102
      %5295 = vst [vmem:[#allocation3 + $0x728] sm:$0xff] %v5103
      %5296 = vst [vmem:[#allocation3 + $0x770] sm:$0xff] %v5104
      %5297 = vst [vmem:[#allocation3 + $0x7b8] sm:$0xff] %v5105
      %5298 = vst [vmem:[#allocation3 + $0x800] sm:$0xff] %v5106
      %5299 = vst [vmem:[#allocation3 + $0x848] sm:$0xff] %v5107
      %5300 = vst [vmem:[#allocation3 + $0x890] sm:$0xff] %v5108
      %5301 = vst [vmem:[#allocation3 + $0x8d8] sm:$0xff] %v5109
      %5302 = vst [vmem:[#allocation3 + $0x920] sm:$0xff] %v5110
      %5303 = vst [vmem:[#allocation3 + $0x968] sm:$0xff] %v5111
      %5304 = vst [vmem:[#allocation3 + $0x9b0] sm:$0xff] %v5112
      %5305 = vst [vmem:[#allocation3 + $0x9f8] sm:$0xff] %v5113
      %5306 = vst [vmem:[#allocation3 + $0xa40] sm:$0xff] %v5114
      %5307 = vst [vmem:[#allocation3 + $0xa88] sm:$0xff] %v5115
      %5308 = vst [vmem:[#allocation3 + $0xad0] sm:$0xff] %v5116
      %5309 = vst [vmem:[#allocation3 + $0xb18] sm:$0xff] %v5117
      %5310 = vst [vmem:[#allocation3 + $0xb60] sm:$0xff] %v5118
      %5311 = vst [vmem:[#allocation3 + $0xba8] sm:$0xff] %v5119
      %5312 = vst [vmem:[#allocation3 + $0xbf0] sm:$0xff] %v5120
      %5313 = vst [vmem:[#allocation3 + $0xc38] sm:$0xff] %v5121
      %5314 = vst [vmem:[#allocation3 + $0xc80] sm:$0xff] %v5122
      %5315 = vst [vmem:[#allocation3 + $0xcc8] sm:$0xff] %v5123
      %5316 = vst [vmem:[#allocation3 + $0xd10] sm:$0xff] %v5124
      %5317 = vst [vmem:[#allocation3 + $0xd58] sm:$0xff] %v5125
      %v5318 = vrot.slane %v5078, 1
      %v5319 = vrot.slane %v5079, 1
      %v5320 = vrot.slane %v5080, 1
      %v5321 = vrot.slane %v5081, 1
      %v5322 = vrot.slane %v5082, 1
      %v5323 = vrot.slane %v5083, 1
      %v5324 = vrot.slane %v5084, 1
      %v5325 = vrot.slane %v5085, 1
      %v5326 = vrot.slane %v5086, 1
      %v5327 = vrot.slane %v5087, 1
      %v5328 = vrot.slane %v5088, 1
      %v5329 = vrot.slane %v5089, 1
      %v5330 = vrot.slane %v5090, 1
      %v5331 = vrot.slane %v5091, 1
      %v5332 = vrot.slane %v5092, 1
      %v5333 = vrot.slane %v5093, 1
      %v5334 = vrot.slane %v5094, 1
      %v5335 = vrot.slane %v5095, 1
      %v5336 = vrot.slane %v5096, 1
      %v5337 = vrot.slane %v5097, 1
      %v5338 = vrot.slane %v5098, 1
      %v5339 = vrot.slane %v5099, 1
      %v5340 = vrot.slane %v5100, 1
      %v5341 = vrot.slane %v5101, 1
      %v5342 = vrot.slane %v5102, 1
      %v5343 = vrot.slane %v5103, 1
      %v5344 = vrot.slane %v5104, 1
      %v5345 = vrot.slane %v5105, 1
      %v5346 = vrot.slane %v5106, 1
      %v5347 = vrot.slane %v5107, 1
      %v5348 = vrot.slane %v5108, 1
      %v5349 = vrot.slane %v5109, 1
      %v5350 = vrot.slane %v5110, 1
      %v5351 = vrot.slane %v5111, 1
      %v5352 = vrot.slane %v5112, 1
      %v5353 = vrot.slane %v5113, 1
      %v5354 = vrot.slane %v5114, 1
      %v5355 = vrot.slane %v5115, 1
      %v5356 = vrot.slane %v5116, 1
      %v5357 = vrot.slane %v5117, 1
      %v5358 = vrot.slane %v5118, 1
      %v5359 = vrot.slane %v5119, 1
      %v5360 = vrot.slane %v5120, 1
      %v5361 = vrot.slane %v5121, 1
      %v5362 = vrot.slane %v5122, 1
      %v5363 = vrot.slane %v5123, 1
      %v5364 = vrot.slane %v5124, 1
      %v5365 = vrot.slane %v5125, 1
      %v5366 = vsel %vm1475, %v5364, %v5365
      %v5367 = vsel %vm1475, %v5363, %v5364
      %v5368 = vsel %vm1475, %v5362, %v5363
      %v5369 = vsel %vm1475, %v5361, %v5362
      %v5370 = vsel %vm1475, %v5360, %v5361
      %v5371 = vsel %vm1475, %v5359, %v5360
      %v5372 = vsel %vm1475, %v5358, %v5359
      %v5373 = vsel %vm1475, %v5357, %v5358
      %v5374 = vsel %vm1475, %v5356, %v5357
      %v5375 = vsel %vm1475, %v5355, %v5356
      %v5376 = vsel %vm1475, %v5354, %v5355
      %v5377 = vsel %vm1475, %v5353, %v5354
      %v5378 = vsel %vm1475, %v5352, %v5353
      %v5379 = vsel %vm1475, %v5351, %v5352
      %v5380 = vsel %vm1475, %v5350, %v5351
      %v5381 = vsel %vm1475, %v5349, %v5350
      %v5382 = vsel %vm1475, %v5348, %v5349
      %v5383 = vsel %vm1475, %v5347, %v5348
      %v5384 = vsel %vm1475, %v5346, %v5347
      %v5385 = vsel %vm1475, %v5345, %v5346
      %v5386 = vsel %vm1475, %v5344, %v5345
      %v5387 = vsel %vm1475, %v5343, %v5344
      %v5388 = vsel %vm1475, %v5342, %v5343
      %v5389 = vsel %vm1475, %v5341, %v5342
      %v5390 = vsel %vm1475, %v5340, %v5341
      %v5391 = vsel %vm1475, %v5339, %v5340
      %v5392 = vsel %vm1475, %v5338, %v5339
      %v5393 = vsel %vm1475, %v5337, %v5338
      %v5394 = vsel %vm1475, %v5336, %v5337
      %v5395 = vsel %vm1475, %v5335, %v5336
      %v5396 = vsel %vm1475, %v5334, %v5335
      %v5397 = vsel %vm1475, %v5333, %v5334
      %v5398 = vsel %vm1475, %v5332, %v5333
      %v5399 = vsel %vm1475, %v5331, %v5332
      %v5400 = vsel %vm1475, %v5330, %v5331
      %v5401 = vsel %vm1475, %v5329, %v5330
      %v5402 = vsel %vm1475, %v5328, %v5329
      %v5403 = vsel %vm1475, %v5327, %v5328
      %v5404 = vsel %vm1475, %v5326, %v5327
      %v5405 = vsel %vm1475, %v5325, %v5326
      %v5406 = vsel %vm1475, %v5324, %v5325
      %v5407 = vsel %vm1475, %v5323, %v5324
      %v5408 = vsel %vm1475, %v5322, %v5323
      %v5409 = vsel %vm1475, %v5321, %v5322
      %v5410 = vsel %vm1475, %v5320, %v5321
      %v5411 = vsel %vm1475, %v5319, %v5320
      %v5412 = vsel %vm1475, %v5318, %v5319
      %v5413 = vsel %vm1475, %v5365, %v5318
      %5414 = vst [vmem:[#allocation3 + $0x28] sm:$0xff] %v5412
      %5415 = vst [vmem:[#allocation3 + $0x70] sm:$0xff] %v5411
      %5416 = vst [vmem:[#allocation3 + $0xb8] sm:$0xff] %v5410
      %5417 = vst [vmem:[#allocation3 + $0x100] sm:$0xff] %v5409
      %5418 = vst [vmem:[#allocation3 + $0x148] sm:$0xff] %v5408
      %5419 = vst [vmem:[#allocation3 + $0x190] sm:$0xff] %v5407
      %5420 = vst [vmem:[#allocation3 + $0x1d8] sm:$0xff] %v5406
      %5421 = vst [vmem:[#allocation3 + $0x220] sm:$0xff] %v5405
      %5422 = vst [vmem:[#allocation3 + $0x268] sm:$0xff] %v5404
      %5423 = vst [vmem:[#allocation3 + $0x2b0] sm:$0xff] %v5403
      %5424 = vst [vmem:[#allocation3 + $0x2f8] sm:$0xff] %v5402
      %5425 = vst [vmem:[#allocation3 + $0x340] sm:$0xff] %v5401
      %5426 = vst [vmem:[#allocation3 + $0x388] sm:$0xff] %v5400
      %5427 = vst [vmem:[#allocation3 + $0x3d0] sm:$0xff] %v5399
      %5428 = vst [vmem:[#allocation3 + $0x418] sm:$0xff] %v5398
      %5429 = vst [vmem:[#allocation3 + $0x460] sm:$0xff] %v5397
      %5430 = vst [vmem:[#allocation3 + $0x4a8] sm:$0xff] %v5396
      %5431 = vst [vmem:[#allocation3 + $0x4f0] sm:$0xff] %v5395
      %5432 = vst [vmem:[#allocation3 + $0x538] sm:$0xff] %v5394
      %5433 = vst [vmem:[#allocation3 + $0x580] sm:$0xff] %v5393
      %5434 = vst [vmem:[#allocation3 + $0x5c8] sm:$0xff] %v5392
      %5435 = vst [vmem:[#allocation3 + $0x610] sm:$0xff] %v5391
      %5436 = vst [vmem:[#allocation3 + $0x658] sm:$0xff] %v5390
      %5437 = vst [vmem:[#allocation3 + $0x6a0] sm:$0xff] %v5389
      %5438 = vst [vmem:[#allocation3 + $0x6e8] sm:$0xff] %v5388
      %5439 = vst [vmem:[#allocation3 + $0x730] sm:$0xff] %v5387
      %5440 = vst [vmem:[#allocation3 + $0x778] sm:$0xff] %v5386
      %5441 = vst [vmem:[#allocation3 + $0x7c0] sm:$0xff] %v5385
      %5442 = vst [vmem:[#allocation3 + $0x808] sm:$0xff] %v5384
      %5443 = vst [vmem:[#allocation3 + $0x850] sm:$0xff] %v5383
      %5444 = vst [vmem:[#allocation3 + $0x898] sm:$0xff] %v5382
      %5445 = vst [vmem:[#allocation3 + $0x8e0] sm:$0xff] %v5381
      %5446 = vst [vmem:[#allocation3 + $0x928] sm:$0xff] %v5380
      %5447 = vst [vmem:[#allocation3 + $0x970] sm:$0xff] %v5379
      %5448 = vst [vmem:[#allocation3 + $0x9b8] sm:$0xff] %v5378
      %5449 = vst [vmem:[#allocation3 + $0xa00] sm:$0xff] %v5377
      %5450 = vst [vmem:[#allocation3 + $0xa48] sm:$0xff] %v5376
      %5451 = vst [vmem:[#allocation3 + $0xa90] sm:$0xff] %v5375
      %5452 = vst [vmem:[#allocation3 + $0xad8] sm:$0xff] %v5374
      %5453 = vst [vmem:[#allocation3 + $0xb20] sm:$0xff] %v5373
      %5454 = vst [vmem:[#allocation3 + $0xb68] sm:$0xff] %v5372
      %5455 = vst [vmem:[#allocation3 + $0xbb0] sm:$0xff] %v5371
      %5456 = vst [vmem:[#allocation3 + $0xbf8] sm:$0xff] %v5370
      %5457 = vst [vmem:[#allocation3 + $0xc40] sm:$0xff] %v5369
      %5458 = vst [vmem:[#allocation3 + $0xc88] sm:$0xff] %v5368
      %5459 = vst [vmem:[#allocation3 + $0xcd0] sm:$0xff] %v5367
      %5460 = vst [vmem:[#allocation3 + $0xd18] sm:$0xff] %v5366
      %5461 = vst [vmem:[#allocation3 + $0xd60] sm:$0xff] %v5413
      %v5462 = vld [vmem:[#allocation2 + $0x30] sm:$0xff]
      %v5463 = vld [vmem:[#allocation2 + $0x38] sm:$0xff]
      %v5464 = vld [vmem:[#allocation2 + $0x40] sm:$0xff]
      %v5465 = vld [vmem:[#allocation2 + $0x48] sm:$0xff]
      %v5466 = vld [vmem:[#allocation2 + $0x50] sm:$0xff]
      %v5467 = vld [vmem:[#allocation2 + $0x58] sm:$0xff]
      %v5468 = vld [vmem:[#allocation2 + $0x60] sm:$0xff]
      %v5469 = vld [vmem:[#allocation2 + $0x68] sm:$0xff]
      %v5470 = vld [vmem:[#allocation2 + $0x70] sm:$0xff]
      %v5471 = vld [vmem:[#allocation2 + $0x78] sm:$0xff]
      %v5472 = vld [vmem:[#allocation2 + $0x80] sm:$0xff]
      %v5473 = vld [vmem:[#allocation2 + $0x88] sm:$0xff]
      %v5474 = vld [vmem:[#allocation2 + $0x90] sm:$0xff]
      %v5475 = vld [vmem:[#allocation2 + $0x98] sm:$0xff]
      %v5476 = vld [vmem:[#allocation2 + $0xa0] sm:$0xff]
      %v5477 = vld [vmem:[#allocation2 + $0xa8] sm:$0xff]
      %v5478 = vld [vmem:[#allocation2 + $0xb0] sm:$0xff]
      %v5479 = vld [vmem:[#allocation2 + $0xb8] sm:$0xff]
      %v5480 = vld [vmem:[#allocation2 + $0xc0] sm:$0xff]
      %v5481 = vld [vmem:[#allocation2 + $0xc8] sm:$0xff]
      %v5482 = vld [vmem:[#allocation2 + $0xd0] sm:$0xff]
      %v5483 = vld [vmem:[#allocation2 + $0xd8] sm:$0xff]
      %v5484 = vld [vmem:[#allocation2 + $0xe0] sm:$0xff]
      %v5485 = vld [vmem:[#allocation2 + $0xe8] sm:$0xff]
      %v5486 = vld [vmem:[#allocation2 + $0xf0] sm:$0xff]
      %v5487 = vld [vmem:[#allocation2 + $0xf8] sm:$0xff]
      %v5488 = vld [vmem:[#allocation2 + $0x100] sm:$0xff]
      %v5489 = vld [vmem:[#allocation2 + $0x108] sm:$0xff]
      %v5490 = vld [vmem:[#allocation2 + $0x110] sm:$0xff]
      %v5491 = vld [vmem:[#allocation2 + $0x118] sm:$0xff]
      %v5492 = vld [vmem:[#allocation2 + $0x120] sm:$0xff]
      %v5493 = vld [vmem:[#allocation2 + $0x128] sm:$0xff]
      %v5494 = vld [vmem:[#allocation2 + $0x130] sm:$0xff]
      %v5495 = vld [vmem:[#allocation2 + $0x138] sm:$0xff]
      %v5496 = vld [vmem:[#allocation2 + $0x140] sm:$0xff]
      %v5497 = vld [vmem:[#allocation2 + $0x148] sm:$0xff]
      %v5498 = vld [vmem:[#allocation2 + $0x150] sm:$0xff]
      %v5499 = vld [vmem:[#allocation2 + $0x158] sm:$0xff]
      %v5500 = vld [vmem:[#allocation2 + $0x160] sm:$0xff]
      %v5501 = vld [vmem:[#allocation2 + $0x168] sm:$0xff]
      %v5502 = vld [vmem:[#allocation2 + $0x170] sm:$0xff]
      %v5503 = vld [vmem:[#allocation2 + $0x178] sm:$0xff]
      %v5504 = vld [vmem:[#allocation2 + $0x180] sm:$0xff]
      %v5505 = vld [vmem:[#allocation2 + $0x188] sm:$0xff]
      %v5506 = vld [vmem:[#allocation2 + $0x190] sm:$0xff]
      %v5507 = vld [vmem:[#allocation2 + $0x198] sm:$0xff]
      %v5508 = vld [vmem:[#allocation2 + $0x1a0] sm:$0xff]
      %v5509 = vld [vmem:[#allocation2 + $0x1a8] sm:$0xff]
      %v5510 = vrot.slane %v5462, 7
      %v5511 = vrot.slane %v5463, 7
      %v5512 = vrot.slane %v5464, 7
      %v5513 = vrot.slane %v5465, 7
      %v5514 = vrot.slane %v5466, 7
      %v5515 = vrot.slane %v5467, 7
      %v5516 = vrot.slane %v5468, 7
      %v5517 = vrot.slane %v5469, 7
      %v5518 = vrot.slane %v5470, 7
      %v5519 = vrot.slane %v5471, 7
      %v5520 = vrot.slane %v5472, 7
      %v5521 = vrot.slane %v5473, 7
      %v5522 = vrot.slane %v5474, 7
      %v5523 = vrot.slane %v5475, 7
      %v5524 = vrot.slane %v5476, 7
      %v5525 = vrot.slane %v5477, 7
      %v5526 = vrot.slane %v5478, 7
      %v5527 = vrot.slane %v5479, 7
      %v5528 = vrot.slane %v5480, 7
      %v5529 = vrot.slane %v5481, 7
      %v5530 = vrot.slane %v5482, 7
      %v5531 = vrot.slane %v5483, 7
      %v5532 = vrot.slane %v5484, 7
      %v5533 = vrot.slane %v5485, 7
      %v5534 = vrot.slane %v5486, 7
      %v5535 = vrot.slane %v5487, 7
      %v5536 = vrot.slane %v5488, 7
      %v5537 = vrot.slane %v5489, 7
      %v5538 = vrot.slane %v5490, 7
      %v5539 = vrot.slane %v5491, 7
      %v5540 = vrot.slane %v5492, 7
      %v5541 = vrot.slane %v5493, 7
      %v5542 = vrot.slane %v5494, 7
      %v5543 = vrot.slane %v5495, 7
      %v5544 = vrot.slane %v5496, 7
      %v5545 = vrot.slane %v5497, 7
      %v5546 = vrot.slane %v5498, 7
      %v5547 = vrot.slane %v5499, 7
      %v5548 = vrot.slane %v5500, 7
      %v5549 = vrot.slane %v5501, 7
      %v5550 = vrot.slane %v5502, 7
      %v5551 = vrot.slane %v5503, 7
      %v5552 = vrot.slane %v5504, 7
      %v5553 = vrot.slane %v5505, 7
      %v5554 = vrot.slane %v5506, 7
      %v5555 = vrot.slane %v5507, 7
      %v5556 = vrot.slane %v5508, 7
      %v5557 = vrot.slane %v5509, 7
      %v5558 = vsel %vm1282, %v5556, %v5557
      %v5559 = vsel %vm1282, %v5555, %v5556
      %v5560 = vsel %vm1282, %v5554, %v5555
      %v5561 = vsel %vm1282, %v5553, %v5554
      %v5562 = vsel %vm1282, %v5552, %v5553
      %v5563 = vsel %vm1282, %v5551, %v5552
      %v5564 = vsel %vm1282, %v5550, %v5551
      %v5565 = vsel %vm1282, %v5549, %v5550
      %v5566 = vsel %vm1282, %v5548, %v5549
      %v5567 = vsel %vm1282, %v5547, %v5548
      %v5568 = vsel %vm1282, %v5546, %v5547
      %v5569 = vsel %vm1282, %v5545, %v5546
      %v5570 = vsel %vm1282, %v5544, %v5545
      %v5571 = vsel %vm1282, %v5543, %v5544
      %v5572 = vsel %vm1282, %v5542, %v5543
      %v5573 = vsel %vm1282, %v5541, %v5542
      %v5574 = vsel %vm1282, %v5540, %v5541
      %v5575 = vsel %vm1282, %v5539, %v5540
      %v5576 = vsel %vm1282, %v5538, %v5539
      %v5577 = vsel %vm1282, %v5537, %v5538
      %v5578 = vsel %vm1282, %v5536, %v5537
      %v5579 = vsel %vm1282, %v5535, %v5536
      %v5580 = vsel %vm1282, %v5534, %v5535
      %v5581 = vsel %vm1282, %v5533, %v5534
      %v5582 = vsel %vm1282, %v5532, %v5533
      %v5583 = vsel %vm1282, %v5531, %v5532
      %v5584 = vsel %vm1282, %v5530, %v5531
      %v5585 = vsel %vm1282, %v5529, %v5530
      %v5586 = vsel %vm1282, %v5528, %v5529
      %v5587 = vsel %vm1282, %v5527, %v5528
      %v5588 = vsel %vm1282, %v5526, %v5527
      %v5589 = vsel %vm1282, %v5525, %v5526
      %v5590 = vsel %vm1282, %v5524, %v5525
      %v5591 = vsel %vm1282, %v5523, %v5524
      %v5592 = vsel %vm1282, %v5522, %v5523
      %v5593 = vsel %vm1282, %v5521, %v5522
      %v5594 = vsel %vm1282, %v5520, %v5521
      %v5595 = vsel %vm1282, %v5519, %v5520
      %v5596 = vsel %vm1282, %v5518, %v5519
      %v5597 = vsel %vm1282, %v5517, %v5518
      %v5598 = vsel %vm1282, %v5516, %v5517
      %v5599 = vsel %vm1282, %v5515, %v5516
      %v5600 = vsel %vm1282, %v5514, %v5515
      %v5601 = vsel %vm1282, %v5513, %v5514
      %v5602 = vsel %vm1282, %v5512, %v5513
      %v5603 = vsel %vm1282, %v5511, %v5512
      %v5604 = vsel %vm1282, %v5510, %v5511
      %v5605 = vsel %vm1282, %v5557, %v5510
      %5606 = vst [vmem:[#allocation3 + $0x30] sm:$0xff] %v5605
      %5607 = vst [vmem:[#allocation3 + $0x78] sm:$0xff] %v5604
      %5608 = vst [vmem:[#allocation3 + $0xc0] sm:$0xff] %v5603
      %5609 = vst [vmem:[#allocation3 + $0x108] sm:$0xff] %v5602
      %5610 = vst [vmem:[#allocation3 + $0x150] sm:$0xff] %v5601
      %5611 = vst [vmem:[#allocation3 + $0x198] sm:$0xff] %v5600
      %5612 = vst [vmem:[#allocation3 + $0x1e0] sm:$0xff] %v5599
      %5613 = vst [vmem:[#allocation3 + $0x228] sm:$0xff] %v5598
      %5614 = vst [vmem:[#allocation3 + $0x270] sm:$0xff] %v5597
      %5615 = vst [vmem:[#allocation3 + $0x2b8] sm:$0xff] %v5596
      %5616 = vst [vmem:[#allocation3 + $0x300] sm:$0xff] %v5595
      %5617 = vst [vmem:[#allocation3 + $0x348] sm:$0xff] %v5594
      %5618 = vst [vmem:[#allocation3 + $0x390] sm:$0xff] %v5593
      %5619 = vst [vmem:[#allocation3 + $0x3d8] sm:$0xff] %v5592
      %5620 = vst [vmem:[#allocation3 + $0x420] sm:$0xff] %v5591
      %5621 = vst [vmem:[#allocation3 + $0x468] sm:$0xff] %v5590
      %5622 = vst [vmem:[#allocation3 + $0x4b0] sm:$0xff] %v5589
      %5623 = vst [vmem:[#allocation3 + $0x4f8] sm:$0xff] %v5588
      %5624 = vst [vmem:[#allocation3 + $0x540] sm:$0xff] %v5587
      %5625 = vst [vmem:[#allocation3 + $0x588] sm:$0xff] %v5586
      %5626 = vst [vmem:[#allocation3 + $0x5d0] sm:$0xff] %v5585
      %5627 = vst [vmem:[#allocation3 + $0x618] sm:$0xff] %v5584
      %5628 = vst [vmem:[#allocation3 + $0x660] sm:$0xff] %v5583
      %5629 = vst [vmem:[#allocation3 + $0x6a8] sm:$0xff] %v5582
      %5630 = vst [vmem:[#allocation3 + $0x6f0] sm:$0xff] %v5581
      %5631 = vst [vmem:[#allocation3 + $0x738] sm:$0xff] %v5580
      %5632 = vst [vmem:[#allocation3 + $0x780] sm:$0xff] %v5579
      %5633 = vst [vmem:[#allocation3 + $0x7c8] sm:$0xff] %v5578
      %5634 = vst [vmem:[#allocation3 + $0x810] sm:$0xff] %v5577
      %5635 = vst [vmem:[#allocation3 + $0x858] sm:$0xff] %v5576
      %5636 = vst [vmem:[#allocation3 + $0x8a0] sm:$0xff] %v5575
      %5637 = vst [vmem:[#allocation3 + $0x8e8] sm:$0xff] %v5574
      %5638 = vst [vmem:[#allocation3 + $0x930] sm:$0xff] %v5573
      %5639 = vst [vmem:[#allocation3 + $0x978] sm:$0xff] %v5572
      %5640 = vst [vmem:[#allocation3 + $0x9c0] sm:$0xff] %v5571
      %5641 = vst [vmem:[#allocation3 + $0xa08] sm:$0xff] %v5570
      %5642 = vst [vmem:[#allocation3 + $0xa50] sm:$0xff] %v5569
      %5643 = vst [vmem:[#allocation3 + $0xa98] sm:$0xff] %v5568
      %5644 = vst [vmem:[#allocation3 + $0xae0] sm:$0xff] %v5567
      %5645 = vst [vmem:[#allocation3 + $0xb28] sm:$0xff] %v5566
      %5646 = vst [vmem:[#allocation3 + $0xb70] sm:$0xff] %v5565
      %5647 = vst [vmem:[#allocation3 + $0xbb8] sm:$0xff] %v5564
      %5648 = vst [vmem:[#allocation3 + $0xc00] sm:$0xff] %v5563
      %5649 = vst [vmem:[#allocation3 + $0xc48] sm:$0xff] %v5562
      %5650 = vst [vmem:[#allocation3 + $0xc90] sm:$0xff] %v5561
      %5651 = vst [vmem:[#allocation3 + $0xcd8] sm:$0xff] %v5560
      %5652 = vst [vmem:[#allocation3 + $0xd20] sm:$0xff] %v5559
      %5653 = vst [vmem:[#allocation3 + $0xd68] sm:$0xff] %v5558
      %5654 = vst [vmem:[#allocation3 + $0x38] sm:$0xff] %v5462
      %5655 = vst [vmem:[#allocation3 + $0x80] sm:$0xff] %v5463
      %5656 = vst [vmem:[#allocation3 + $0xc8] sm:$0xff] %v5464
      %5657 = vst [vmem:[#allocation3 + $0x110] sm:$0xff] %v5465
      %5658 = vst [vmem:[#allocation3 + $0x158] sm:$0xff] %v5466
      %5659 = vst [vmem:[#allocation3 + $0x1a0] sm:$0xff] %v5467
      %5660 = vst [vmem:[#allocation3 + $0x1e8] sm:$0xff] %v5468
      %5661 = vst [vmem:[#allocation3 + $0x230] sm:$0xff] %v5469
      %5662 = vst [vmem:[#allocation3 + $0x278] sm:$0xff] %v5470
      %5663 = vst [vmem:[#allocation3 + $0x2c0] sm:$0xff] %v5471
      %5664 = vst [vmem:[#allocation3 + $0x308] sm:$0xff] %v5472
      %5665 = vst [vmem:[#allocation3 + $0x350] sm:$0xff] %v5473
      %5666 = vst [vmem:[#allocation3 + $0x398] sm:$0xff] %v5474
      %5667 = vst [vmem:[#allocation3 + $0x3e0] sm:$0xff] %v5475
      %5668 = vst [vmem:[#allocation3 + $0x428] sm:$0xff] %v5476
      %5669 = vst [vmem:[#allocation3 + $0x470] sm:$0xff] %v5477
      %5670 = vst [vmem:[#allocation3 + $0x4b8] sm:$0xff] %v5478
      %5671 = vst [vmem:[#allocation3 + $0x500] sm:$0xff] %v5479
      %5672 = vst [vmem:[#allocation3 + $0x548] sm:$0xff] %v5480
      %5673 = vst [vmem:[#allocation3 + $0x590] sm:$0xff] %v5481
      %5674 = vst [vmem:[#allocation3 + $0x5d8] sm:$0xff] %v5482
      %5675 = vst [vmem:[#allocation3 + $0x620] sm:$0xff] %v5483
      %5676 = vst [vmem:[#allocation3 + $0x668] sm:$0xff] %v5484
      %5677 = vst [vmem:[#allocation3 + $0x6b0] sm:$0xff] %v5485
      %5678 = vst [vmem:[#allocation3 + $0x6f8] sm:$0xff] %v5486
      %5679 = vst [vmem:[#allocation3 + $0x740] sm:$0xff] %v5487
      %5680 = vst [vmem:[#allocation3 + $0x788] sm:$0xff] %v5488
      %5681 = vst [vmem:[#allocation3 + $0x7d0] sm:$0xff] %v5489
      %5682 = vst [vmem:[#allocation3 + $0x818] sm:$0xff] %v5490
      %5683 = vst [vmem:[#allocation3 + $0x860] sm:$0xff] %v5491
      %5684 = vst [vmem:[#allocation3 + $0x8a8] sm:$0xff] %v5492
      %5685 = vst [vmem:[#allocation3 + $0x8f0] sm:$0xff] %v5493
      %5686 = vst [vmem:[#allocation3 + $0x938] sm:$0xff] %v5494
      %5687 = vst [vmem:[#allocation3 + $0x980] sm:$0xff] %v5495
      %5688 = vst [vmem:[#allocation3 + $0x9c8] sm:$0xff] %v5496
      %5689 = vst [vmem:[#allocation3 + $0xa10] sm:$0xff] %v5497
      %5690 = vst [vmem:[#allocation3 + $0xa58] sm:$0xff] %v5498
      %5691 = vst [vmem:[#allocation3 + $0xaa0] sm:$0xff] %v5499
      %5692 = vst [vmem:[#allocation3 + $0xae8] sm:$0xff] %v5500
      %5693 = vst [vmem:[#allocation3 + $0xb30] sm:$0xff] %v5501
      %5694 = vst [vmem:[#allocation3 + $0xb78] sm:$0xff] %v5502
      %5695 = vst [vmem:[#allocation3 + $0xbc0] sm:$0xff] %v5503
      %5696 = vst [vmem:[#allocation3 + $0xc08] sm:$0xff] %v5504
      %5697 = vst [vmem:[#allocation3 + $0xc50] sm:$0xff] %v5505
      %5698 = vst [vmem:[#allocation3 + $0xc98] sm:$0xff] %v5506
      %5699 = vst [vmem:[#allocation3 + $0xce0] sm:$0xff] %v5507
      %5700 = vst [vmem:[#allocation3 + $0xd28] sm:$0xff] %v5508
      %5701 = vst [vmem:[#allocation3 + $0xd70] sm:$0xff] %v5509
      %v5702 = vrot.slane %v5462, 1
      %v5703 = vrot.slane %v5463, 1
      %v5704 = vrot.slane %v5464, 1
      %v5705 = vrot.slane %v5465, 1
      %v5706 = vrot.slane %v5466, 1
      %v5707 = vrot.slane %v5467, 1
      %v5708 = vrot.slane %v5468, 1
      %v5709 = vrot.slane %v5469, 1
      %v5710 = vrot.slane %v5470, 1
      %v5711 = vrot.slane %v5471, 1
      %v5712 = vrot.slane %v5472, 1
      %v5713 = vrot.slane %v5473, 1
      %v5714 = vrot.slane %v5474, 1
      %v5715 = vrot.slane %v5475, 1
      %v5716 = vrot.slane %v5476, 1
      %v5717 = vrot.slane %v5477, 1
      %v5718 = vrot.slane %v5478, 1
      %v5719 = vrot.slane %v5479, 1
      %v5720 = vrot.slane %v5480, 1
      %v5721 = vrot.slane %v5481, 1
      %v5722 = vrot.slane %v5482, 1
      %v5723 = vrot.slane %v5483, 1
      %v5724 = vrot.slane %v5484, 1
      %v5725 = vrot.slane %v5485, 1
      %v5726 = vrot.slane %v5486, 1
      %v5727 = vrot.slane %v5487, 1
      %v5728 = vrot.slane %v5488, 1
      %v5729 = vrot.slane %v5489, 1
      %v5730 = vrot.slane %v5490, 1
      %v5731 = vrot.slane %v5491, 1
      %v5732 = vrot.slane %v5492, 1
      %v5733 = vrot.slane %v5493, 1
      %v5734 = vrot.slane %v5494, 1
      %v5735 = vrot.slane %v5495, 1
      %v5736 = vrot.slane %v5496, 1
      %v5737 = vrot.slane %v5497, 1
      %v5738 = vrot.slane %v5498, 1
      %v5739 = vrot.slane %v5499, 1
      %v5740 = vrot.slane %v5500, 1
      %v5741 = vrot.slane %v5501, 1
      %v5742 = vrot.slane %v5502, 1
      %v5743 = vrot.slane %v5503, 1
      %v5744 = vrot.slane %v5504, 1
      %v5745 = vrot.slane %v5505, 1
      %v5746 = vrot.slane %v5506, 1
      %v5747 = vrot.slane %v5507, 1
      %v5748 = vrot.slane %v5508, 1
      %v5749 = vrot.slane %v5509, 1
      %v5750 = vsel %vm1475, %v5748, %v5749
      %v5751 = vsel %vm1475, %v5747, %v5748
      %v5752 = vsel %vm1475, %v5746, %v5747
      %v5753 = vsel %vm1475, %v5745, %v5746
      %v5754 = vsel %vm1475, %v5744, %v5745
      %v5755 = vsel %vm1475, %v5743, %v5744
      %v5756 = vsel %vm1475, %v5742, %v5743
      %v5757 = vsel %vm1475, %v5741, %v5742
      %v5758 = vsel %vm1475, %v5740, %v5741
      %v5759 = vsel %vm1475, %v5739, %v5740
      %v5760 = vsel %vm1475, %v5738, %v5739
      %v5761 = vsel %vm1475, %v5737, %v5738
      %v5762 = vsel %vm1475, %v5736, %v5737
      %v5763 = vsel %vm1475, %v5735, %v5736
      %v5764 = vsel %vm1475, %v5734, %v5735
      %v5765 = vsel %vm1475, %v5733, %v5734
      %v5766 = vsel %vm1475, %v5732, %v5733
      %v5767 = vsel %vm1475, %v5731, %v5732
      %v5768 = vsel %vm1475, %v5730, %v5731
      %v5769 = vsel %vm1475, %v5729, %v5730
      %v5770 = vsel %vm1475, %v5728, %v5729
      %v5771 = vsel %vm1475, %v5727, %v5728
      %v5772 = vsel %vm1475, %v5726, %v5727
      %v5773 = vsel %vm1475, %v5725, %v5726
      %v5774 = vsel %vm1475, %v5724, %v5725
      %v5775 = vsel %vm1475, %v5723, %v5724
      %v5776 = vsel %vm1475, %v5722, %v5723
      %v5777 = vsel %vm1475, %v5721, %v5722
      %v5778 = vsel %vm1475, %v5720, %v5721
      %v5779 = vsel %vm1475, %v5719, %v5720
      %v5780 = vsel %vm1475, %v5718, %v5719
      %v5781 = vsel %vm1475, %v5717, %v5718
      %v5782 = vsel %vm1475, %v5716, %v5717
      %v5783 = vsel %vm1475, %v5715, %v5716
      %v5784 = vsel %vm1475, %v5714, %v5715
      %v5785 = vsel %vm1475, %v5713, %v5714
      %v5786 = vsel %vm1475, %v5712, %v5713
      %v5787 = vsel %vm1475, %v5711, %v5712
      %v5788 = vsel %vm1475, %v5710, %v5711
      %v5789 = vsel %vm1475, %v5709, %v5710
      %v5790 = vsel %vm1475, %v5708, %v5709
      %v5791 = vsel %vm1475, %v5707, %v5708
      %v5792 = vsel %vm1475, %v5706, %v5707
      %v5793 = vsel %vm1475, %v5705, %v5706
      %v5794 = vsel %vm1475, %v5704, %v5705
      %v5795 = vsel %vm1475, %v5703, %v5704
      %v5796 = vsel %vm1475, %v5702, %v5703
      %v5797 = vsel %vm1475, %v5749, %v5702
      %5798 = vst [vmem:[#allocation3 + $0x40] sm:$0xff] %v5796
      %5799 = vst [vmem:[#allocation3 + $0x88] sm:$0xff] %v5795
      %5800 = vst [vmem:[#allocation3 + $0xd0] sm:$0xff] %v5794
      %5801 = vst [vmem:[#allocation3 + $0x118] sm:$0xff] %v5793
      %5802 = vst [vmem:[#allocation3 + $0x160] sm:$0xff] %v5792
      %5803 = vst [vmem:[#allocation3 + $0x1a8] sm:$0xff] %v5791
      %5804 = vst [vmem:[#allocation3 + $0x1f0] sm:$0xff] %v5790
      %5805 = vst [vmem:[#allocation3 + $0x238] sm:$0xff] %v5789
      %5806 = vst [vmem:[#allocation3 + $0x280] sm:$0xff] %v5788
      %5807 = vst [vmem:[#allocation3 + $0x2c8] sm:$0xff] %v5787
      %5808 = vst [vmem:[#allocation3 + $0x310] sm:$0xff] %v5786
      %5809 = vst [vmem:[#allocation3 + $0x358] sm:$0xff] %v5785
      %5810 = vst [vmem:[#allocation3 + $0x3a0] sm:$0xff] %v5784
      %5811 = vst [vmem:[#allocation3 + $0x3e8] sm:$0xff] %v5783
      %5812 = vst [vmem:[#allocation3 + $0x430] sm:$0xff] %v5782
      %5813 = vst [vmem:[#allocation3 + $0x478] sm:$0xff] %v5781
      %5814 = vst [vmem:[#allocation3 + $0x4c0] sm:$0xff] %v5780
      %5815 = vst [vmem:[#allocation3 + $0x508] sm:$0xff] %v5779
      %5816 = vst [vmem:[#allocation3 + $0x550] sm:$0xff] %v5778
      %5817 = vst [vmem:[#allocation3 + $0x598] sm:$0xff] %v5777
      %5818 = vst [vmem:[#allocation3 + $0x5e0] sm:$0xff] %v5776
      %5819 = vst [vmem:[#allocation3 + $0x628] sm:$0xff] %v5775
      %5820 = vst [vmem:[#allocation3 + $0x670] sm:$0xff] %v5774
      %5821 = vst [vmem:[#allocation3 + $0x6b8] sm:$0xff] %v5773
      %5822 = vst [vmem:[#allocation3 + $0x700] sm:$0xff] %v5772
      %5823 = vst [vmem:[#allocation3 + $0x748] sm:$0xff] %v5771
      %5824 = vst [vmem:[#allocation3 + $0x790] sm:$0xff] %v5770
      %5825 = vst [vmem:[#allocation3 + $0x7d8] sm:$0xff] %v5769
      %5826 = vst [vmem:[#allocation3 + $0x820] sm:$0xff] %v5768
      %5827 = vst [vmem:[#allocation3 + $0x868] sm:$0xff] %v5767
      %5828 = vst [vmem:[#allocation3 + $0x8b0] sm:$0xff] %v5766
      %5829 = vst [vmem:[#allocation3 + $0x8f8] sm:$0xff] %v5765
      %5830 = vst [vmem:[#allocation3 + $0x940] sm:$0xff] %v5764
      %5831 = vst [vmem:[#allocation3 + $0x988] sm:$0xff] %v5763
      %5832 = vst [vmem:[#allocation3 + $0x9d0] sm:$0xff] %v5762
      %5833 = vst [vmem:[#allocation3 + $0xa18] sm:$0xff] %v5761
      %5834 = vst [vmem:[#allocation3 + $0xa60] sm:$0xff] %v5760
      %5835 = vst [vmem:[#allocation3 + $0xaa8] sm:$0xff] %v5759
      %5836 = vst [vmem:[#allocation3 + $0xaf0] sm:$0xff] %v5758
      %5837 = vst [vmem:[#allocation3 + $0xb38] sm:$0xff] %v5757
      %5838 = vst [vmem:[#allocation3 + $0xb80] sm:$0xff] %v5756
      %5839 = vst [vmem:[#allocation3 + $0xbc8] sm:$0xff] %v5755
      %5840 = vst [vmem:[#allocation3 + $0xc10] sm:$0xff] %v5754
      %5841 = vst [vmem:[#allocation3 + $0xc58] sm:$0xff] %v5753
      %5842 = vst [vmem:[#allocation3 + $0xca0] sm:$0xff] %v5752
      %5843 = vst [vmem:[#allocation3 + $0xce8] sm:$0xff] %v5751
      %5844 = vst [vmem:[#allocation3 + $0xd30] sm:$0xff] %v5750
      %5845 = vst [vmem:[#allocation3 + $0xd78] sm:$0xff] %v5797
      %v5846 = vld [vmem:[#allocation3] sm:$0xff]
      %v5847 = vld [vmem:[#allocation3 + $0x8] sm:$0xff]
      %v5848 = vld [vmem:[#allocation3 + $0x10] sm:$0xff]
      %v5849 = vld [vmem:[#allocation3 + $0x18] sm:$0xff]
      %v5850 = vld [vmem:[#allocation3 + $0x20] sm:$0xff]
      %v5851 = vld [vmem:[#allocation3 + $0x28] sm:$0xff]
      %v5852 = vld [vmem:[#allocation3 + $0x30] sm:$0xff]
      %v5853 = vld [vmem:[#allocation3 + $0x38] sm:$0xff]
      %v5854 = vld [vmem:[#allocation3 + $0x40] sm:$0xff]
      %v5855 = vld [vmem:[#allocation3 + $0x48] sm:$0xff]
      %v5856 = vld [vmem:[#allocation3 + $0x50] sm:$0xff]
      %v5857 = vld [vmem:[#allocation3 + $0x58] sm:$0xff]
      %v5858 = vld [vmem:[#allocation3 + $0x60] sm:$0xff]
      %v5859 = vld [vmem:[#allocation3 + $0x68] sm:$0xff]
      %v5860 = vld [vmem:[#allocation3 + $0x70] sm:$0xff]
      %v5861 = vld [vmem:[#allocation3 + $0x78] sm:$0xff]
      %v5862 = vld [vmem:[#allocation3 + $0x80] sm:$0xff]
      %v5863 = vld [vmem:[#allocation3 + $0x88] sm:$0xff]
      %v5864 = vld [vmem:[#allocation3 + $0x90] sm:$0xff]
      %v5865 = vld [vmem:[#allocation3 + $0x98] sm:$0xff]
      %v5866 = vld [vmem:[#allocation3 + $0xa0] sm:$0xff]
      %v5867 = vld [vmem:[#allocation3 + $0xa8] sm:$0xff]
      %v5868 = vld [vmem:[#allocation3 + $0xb0] sm:$0xff]
      %v5869 = vld [vmem:[#allocation3 + $0xb8] sm:$0xff]
      %v5870 = vld [vmem:[#allocation3 + $0xc0] sm:$0xff]
      %v5871 = vld [vmem:[#allocation3 + $0xc8] sm:$0xff]
      %v5872 = vld [vmem:[#allocation3 + $0xd0] sm:$0xff]
      %v5873 = vld [vmem:[#allocation3 + $0xd8] sm:$0xff]
      %v5874 = vld [vmem:[#allocation3 + $0xe0] sm:$0xff]
      %v5875 = vld [vmem:[#allocation3 + $0xe8] sm:$0xff]
      %v5876 = vld [vmem:[#allocation3 + $0xf0] sm:$0xff]
      %v5877 = vld [vmem:[#allocation3 + $0xf8] sm:$0xff]
      %v5878 = vld [vmem:[#allocation3 + $0x100] sm:$0xff]
      %v5879 = vld [vmem:[#allocation3 + $0x108] sm:$0xff]
      %v5880 = vld [vmem:[#allocation3 + $0x110] sm:$0xff]
      %v5881 = vld [vmem:[#allocation3 + $0x118] sm:$0xff]
      %v5882 = vld [vmem:[#allocation3 + $0x120] sm:$0xff]
      %v5883 = vld [vmem:[#allocation3 + $0x128] sm:$0xff]
      %v5884 = vld [vmem:[#allocation3 + $0x130] sm:$0xff]
      %v5885 = vld [vmem:[#allocation3 + $0x138] sm:$0xff]
      %v5886 = vld [vmem:[#allocation3 + $0x140] sm:$0xff]
      %v5887 = vld [vmem:[#allocation3 + $0x148] sm:$0xff]
      %v5888 = vld [vmem:[#allocation3 + $0x150] sm:$0xff]
      %v5889 = vld [vmem:[#allocation3 + $0x158] sm:$0xff]
      %v5890 = vld [vmem:[#allocation3 + $0x160] sm:$0xff]
      %v5891 = vld [vmem:[#allocation3 + $0x168] sm:$0xff]
      %v5892 = vld [vmem:[#allocation3 + $0x170] sm:$0xff]
      %v5893 = vld [vmem:[#allocation3 + $0x178] sm:$0xff]
      %v5894 = vld [vmem:[#allocation3 + $0x180] sm:$0xff]
      %v5895 = vld [vmem:[#allocation3 + $0x188] sm:$0xff]
      %v5896 = vld [vmem:[#allocation3 + $0x190] sm:$0xff]
      %v5897 = vld [vmem:[#allocation3 + $0x198] sm:$0xff]
      %v5898 = vld [vmem:[#allocation3 + $0x1a0] sm:$0xff]
      %v5899 = vld [vmem:[#allocation3 + $0x1a8] sm:$0xff]
      %v5900 = vld [vmem:[#allocation3 + $0x1b0] sm:$0xff]
      %v5901 = vld [vmem:[#allocation3 + $0x1b8] sm:$0xff]
      %v5902 = vld [vmem:[#allocation3 + $0x1c0] sm:$0xff]
      %v5903 = vld [vmem:[#allocation3 + $0x1c8] sm:$0xff]
      %v5904 = vld [vmem:[#allocation3 + $0x1d0] sm:$0xff]
      %v5905 = vld [vmem:[#allocation3 + $0x1d8] sm:$0xff]
      %v5906 = vld [vmem:[#allocation3 + $0x1e0] sm:$0xff]
      %v5907 = vld [vmem:[#allocation3 + $0x1e8] sm:$0xff]
      %v5908 = vld [vmem:[#allocation3 + $0x1f0] sm:$0xff]
      %v5909 = vld [vmem:[#allocation3 + $0x1f8] sm:$0xff]
      %v5910 = vld [vmem:[#allocation3 + $0x200] sm:$0xff]
      %v5911 = vld [vmem:[#allocation3 + $0x208] sm:$0xff]
      %v5912 = vld [vmem:[#allocation3 + $0x210] sm:$0xff]
      %v5913 = vld [vmem:[#allocation3 + $0x218] sm:$0xff]
      %v5914 = vld [vmem:[#allocation3 + $0x220] sm:$0xff]
      %v5915 = vld [vmem:[#allocation3 + $0x228] sm:$0xff]
      %v5916 = vld [vmem:[#allocation3 + $0x230] sm:$0xff]
      %v5917 = vld [vmem:[#allocation3 + $0x238] sm:$0xff]
      %v5918 = vld [vmem:[#allocation3 + $0x240] sm:$0xff]
      %v5919 = vld [vmem:[#allocation3 + $0x248] sm:$0xff]
      %v5920 = vld [vmem:[#allocation3 + $0x250] sm:$0xff]
      %v5921 = vld [vmem:[#allocation3 + $0x258] sm:$0xff]
      %v5922 = vld [vmem:[#allocation3 + $0x260] sm:$0xff]
      %v5923 = vld [vmem:[#allocation3 + $0x268] sm:$0xff]
      %v5924 = vld [vmem:[#allocation3 + $0x270] sm:$0xff]
      %v5925 = vld [vmem:[#allocation3 + $0x278] sm:$0xff]
      %v5926 = vld [vmem:[#allocation3 + $0x280] sm:$0xff]
      %v5927 = vld [vmem:[#allocation3 + $0x288] sm:$0xff]
      %v5928 = vld [vmem:[#allocation3 + $0x290] sm:$0xff]
      %v5929 = vld [vmem:[#allocation3 + $0x298] sm:$0xff]
      %v5930 = vld [vmem:[#allocation3 + $0x2a0] sm:$0xff]
      %v5931 = vld [vmem:[#allocation3 + $0x2a8] sm:$0xff]
      %v5932 = vld [vmem:[#allocation3 + $0x2b0] sm:$0xff]
      %v5933 = vld [vmem:[#allocation3 + $0x2b8] sm:$0xff]
      %v5934 = vld [vmem:[#allocation3 + $0x2c0] sm:$0xff]
      %v5935 = vld [vmem:[#allocation3 + $0x2c8] sm:$0xff]
      %v5936 = vld [vmem:[#allocation3 + $0x2d0] sm:$0xff]
      %v5937 = vld [vmem:[#allocation3 + $0x2d8] sm:$0xff]
      %v5938 = vld [vmem:[#allocation3 + $0x2e0] sm:$0xff]
      %v5939 = vld [vmem:[#allocation3 + $0x2e8] sm:$0xff]
      %v5940 = vld [vmem:[#allocation3 + $0x2f0] sm:$0xff]
      %v5941 = vld [vmem:[#allocation3 + $0x2f8] sm:$0xff]
      %v5942 = vld [vmem:[#allocation3 + $0x300] sm:$0xff]
      %v5943 = vld [vmem:[#allocation3 + $0x308] sm:$0xff]
      %v5944 = vld [vmem:[#allocation3 + $0x310] sm:$0xff]
      %v5945 = vld [vmem:[#allocation3 + $0x318] sm:$0xff]
      %v5946 = vld [vmem:[#allocation3 + $0x320] sm:$0xff]
      %v5947 = vld [vmem:[#allocation3 + $0x328] sm:$0xff]
      %v5948 = vld [vmem:[#allocation3 + $0x330] sm:$0xff]
      %v5949 = vld [vmem:[#allocation3 + $0x338] sm:$0xff]
      %v5950 = vld [vmem:[#allocation3 + $0x340] sm:$0xff]
      %v5951 = vld [vmem:[#allocation3 + $0x348] sm:$0xff]
      %v5952 = vld [vmem:[#allocation3 + $0x350] sm:$0xff]
      %v5953 = vld [vmem:[#allocation3 + $0x358] sm:$0xff]
      %v5954 = vld [vmem:[#allocation3 + $0x360] sm:$0xff]
      %v5955 = vld [vmem:[#allocation3 + $0x368] sm:$0xff]
      %v5956 = vld [vmem:[#allocation3 + $0x370] sm:$0xff]
      %v5957 = vld [vmem:[#allocation3 + $0x378] sm:$0xff]
      %v5958 = vld [vmem:[#allocation3 + $0x380] sm:$0xff]
      %v5959 = vld [vmem:[#allocation3 + $0x388] sm:$0xff]
      %v5960 = vld [vmem:[#allocation3 + $0x390] sm:$0xff]
      %v5961 = vld [vmem:[#allocation3 + $0x398] sm:$0xff]
      %v5962 = vld [vmem:[#allocation3 + $0x3a0] sm:$0xff]
      %v5963 = vld [vmem:[#allocation3 + $0x3a8] sm:$0xff]
      %v5964 = vld [vmem:[#allocation3 + $0x3b0] sm:$0xff]
      %v5965 = vld [vmem:[#allocation3 + $0x3b8] sm:$0xff]
      %v5966 = vld [vmem:[#allocation3 + $0x3c0] sm:$0xff]
      %v5967 = vld [vmem:[#allocation3 + $0x3c8] sm:$0xff]
      %v5968 = vld [vmem:[#allocation3 + $0x3d0] sm:$0xff]
      %v5969 = vld [vmem:[#allocation3 + $0x3d8] sm:$0xff]
      %v5970 = vld [vmem:[#allocation3 + $0x3e0] sm:$0xff]
      %v5971 = vld [vmem:[#allocation3 + $0x3e8] sm:$0xff]
      %v5972 = vld [vmem:[#allocation3 + $0x3f0] sm:$0xff]
      %v5973 = vld [vmem:[#allocation3 + $0x3f8] sm:$0xff]
      %v5974 = vld [vmem:[#allocation3 + $0x400] sm:$0xff]
      %v5975 = vld [vmem:[#allocation3 + $0x408] sm:$0xff]
      %v5976 = vld [vmem:[#allocation3 + $0x410] sm:$0xff]
      %v5977 = vld [vmem:[#allocation3 + $0x418] sm:$0xff]
      %v5978 = vld [vmem:[#allocation3 + $0x420] sm:$0xff]
      %v5979 = vld [vmem:[#allocation3 + $0x428] sm:$0xff]
      %v5980 = vld [vmem:[#allocation3 + $0x430] sm:$0xff]
      %v5981 = vld [vmem:[#allocation3 + $0x438] sm:$0xff]
      %v5982 = vld [vmem:[#allocation3 + $0x440] sm:$0xff]
      %v5983 = vld [vmem:[#allocation3 + $0x448] sm:$0xff]
      %v5984 = vld [vmem:[#allocation3 + $0x450] sm:$0xff]
      %v5985 = vld [vmem:[#allocation3 + $0x458] sm:$0xff]
      %v5986 = vld [vmem:[#allocation3 + $0x460] sm:$0xff]
      %v5987 = vld [vmem:[#allocation3 + $0x468] sm:$0xff]
      %v5988 = vld [vmem:[#allocation3 + $0x470] sm:$0xff]
      %v5989 = vld [vmem:[#allocation3 + $0x478] sm:$0xff]
      %v5990 = vld [vmem:[#allocation3 + $0x480] sm:$0xff]
      %v5991 = vld [vmem:[#allocation3 + $0x488] sm:$0xff]
      %v5992 = vld [vmem:[#allocation3 + $0x490] sm:$0xff]
      %v5993 = vld [vmem:[#allocation3 + $0x498] sm:$0xff]
      %v5994 = vld [vmem:[#allocation3 + $0x4a0] sm:$0xff]
      %v5995 = vld [vmem:[#allocation3 + $0x4a8] sm:$0xff]
      %v5996 = vld [vmem:[#allocation3 + $0x4b0] sm:$0xff]
      %v5997 = vld [vmem:[#allocation3 + $0x4b8] sm:$0xff]
      %v5998 = vld [vmem:[#allocation3 + $0x4c0] sm:$0xff]
      %v5999 = vld [vmem:[#allocation3 + $0x4c8] sm:$0xff]
      %v6000 = vld [vmem:[#allocation3 + $0x4d0] sm:$0xff]
      %v6001 = vld [vmem:[#allocation3 + $0x4d8] sm:$0xff]
      %v6002 = vld [vmem:[#allocation3 + $0x4e0] sm:$0xff]
      %v6003 = vld [vmem:[#allocation3 + $0x4e8] sm:$0xff]
      %v6004 = vld [vmem:[#allocation3 + $0x4f0] sm:$0xff]
      %v6005 = vld [vmem:[#allocation3 + $0x4f8] sm:$0xff]
      %v6006 = vld [vmem:[#allocation3 + $0x500] sm:$0xff]
      %v6007 = vld [vmem:[#allocation3 + $0x508] sm:$0xff]
      %v6008 = vld [vmem:[#allocation3 + $0x510] sm:$0xff]
      %v6009 = vld [vmem:[#allocation3 + $0x518] sm:$0xff]
      %v6010 = vld [vmem:[#allocation3 + $0x520] sm:$0xff]
      %v6011 = vld [vmem:[#allocation3 + $0x528] sm:$0xff]
      %v6012 = vld [vmem:[#allocation3 + $0x530] sm:$0xff]
      %v6013 = vld [vmem:[#allocation3 + $0x538] sm:$0xff]
      %v6014 = vld [vmem:[#allocation3 + $0x540] sm:$0xff]
      %v6015 = vld [vmem:[#allocation3 + $0x548] sm:$0xff]
      %v6016 = vld [vmem:[#allocation3 + $0x550] sm:$0xff]
      %v6017 = vld [vmem:[#allocation3 + $0x558] sm:$0xff]
      %v6018 = vld [vmem:[#allocation3 + $0x560] sm:$0xff]
      %v6019 = vld [vmem:[#allocation3 + $0x568] sm:$0xff]
      %v6020 = vld [vmem:[#allocation3 + $0x570] sm:$0xff]
      %v6021 = vld [vmem:[#allocation3 + $0x578] sm:$0xff]
      %v6022 = vld [vmem:[#allocation3 + $0x580] sm:$0xff]
      %v6023 = vld [vmem:[#allocation3 + $0x588] sm:$0xff]
      %v6024 = vld [vmem:[#allocation3 + $0x590] sm:$0xff]
      %v6025 = vld [vmem:[#allocation3 + $0x598] sm:$0xff]
      %v6026 = vld [vmem:[#allocation3 + $0x5a0] sm:$0xff]
      %v6027 = vld [vmem:[#allocation3 + $0x5a8] sm:$0xff]
      %v6028 = vld [vmem:[#allocation3 + $0x5b0] sm:$0xff]
      %v6029 = vld [vmem:[#allocation3 + $0x5b8] sm:$0xff]
      %v6030 = vld [vmem:[#allocation3 + $0x5c0] sm:$0xff]
      %v6031 = vld [vmem:[#allocation3 + $0x5c8] sm:$0xff]
      %v6032 = vld [vmem:[#allocation3 + $0x5d0] sm:$0xff]
      %v6033 = vld [vmem:[#allocation3 + $0x5d8] sm:$0xff]
      %v6034 = vld [vmem:[#allocation3 + $0x5e0] sm:$0xff]
      %v6035 = vld [vmem:[#allocation3 + $0x5e8] sm:$0xff]
      %v6036 = vld [vmem:[#allocation3 + $0x5f0] sm:$0xff]
      %v6037 = vld [vmem:[#allocation3 + $0x5f8] sm:$0xff]
      %v6038 = vld [vmem:[#allocation3 + $0x600] sm:$0xff]
      %v6039 = vld [vmem:[#allocation3 + $0x608] sm:$0xff]
      %v6040 = vld [vmem:[#allocation3 + $0x610] sm:$0xff]
      %v6041 = vld [vmem:[#allocation3 + $0x618] sm:$0xff]
      %v6042 = vld [vmem:[#allocation3 + $0x620] sm:$0xff]
      %v6043 = vld [vmem:[#allocation3 + $0x628] sm:$0xff]
      %v6044 = vld [vmem:[#allocation3 + $0x630] sm:$0xff]
      %v6045 = vld [vmem:[#allocation3 + $0x638] sm:$0xff]
      %v6046 = vld [vmem:[#allocation3 + $0x640] sm:$0xff]
      %v6047 = vld [vmem:[#allocation3 + $0x648] sm:$0xff]
      %v6048 = vld [vmem:[#allocation3 + $0x650] sm:$0xff]
      %v6049 = vld [vmem:[#allocation3 + $0x658] sm:$0xff]
      %v6050 = vld [vmem:[#allocation3 + $0x660] sm:$0xff]
      %v6051 = vld [vmem:[#allocation3 + $0x668] sm:$0xff]
      %v6052 = vld [vmem:[#allocation3 + $0x670] sm:$0xff]
      %v6053 = vld [vmem:[#allocation3 + $0x678] sm:$0xff]
      %v6054 = vld [vmem:[#allocation3 + $0x680] sm:$0xff]
      %v6055 = vld [vmem:[#allocation3 + $0x688] sm:$0xff]
      %v6056 = vld [vmem:[#allocation3 + $0x690] sm:$0xff]
      %v6057 = vld [vmem:[#allocation3 + $0x698] sm:$0xff]
      %v6058 = vld [vmem:[#allocation3 + $0x6a0] sm:$0xff]
      %v6059 = vld [vmem:[#allocation3 + $0x6a8] sm:$0xff]
      %v6060 = vld [vmem:[#allocation3 + $0x6b0] sm:$0xff]
      %v6061 = vld [vmem:[#allocation3 + $0x6b8] sm:$0xff]
      %v6062 = vld [vmem:[#allocation3 + $0x6c0] sm:$0xff]
      %v6063 = vld [vmem:[#allocation3 + $0x6c8] sm:$0xff]
      %v6064 = vld [vmem:[#allocation3 + $0x6d0] sm:$0xff]
      %v6065 = vld [vmem:[#allocation3 + $0x6d8] sm:$0xff]
      %v6066 = vld [vmem:[#allocation3 + $0x6e0] sm:$0xff]
      %v6067 = vld [vmem:[#allocation3 + $0x6e8] sm:$0xff]
      %v6068 = vld [vmem:[#allocation3 + $0x6f0] sm:$0xff]
      %v6069 = vld [vmem:[#allocation3 + $0x6f8] sm:$0xff]
      %v6070 = vld [vmem:[#allocation3 + $0x700] sm:$0xff]
      %v6071 = vld [vmem:[#allocation3 + $0x708] sm:$0xff]
      %v6072 = vld [vmem:[#allocation3 + $0x710] sm:$0xff]
      %v6073 = vld [vmem:[#allocation3 + $0x718] sm:$0xff]
      %v6074 = vld [vmem:[#allocation3 + $0x720] sm:$0xff]
      %v6075 = vld [vmem:[#allocation3 + $0x728] sm:$0xff]
      %v6076 = vld [vmem:[#allocation3 + $0x730] sm:$0xff]
      %v6077 = vld [vmem:[#allocation3 + $0x738] sm:$0xff]
      %v6078 = vld [vmem:[#allocation3 + $0x740] sm:$0xff]
      %v6079 = vld [vmem:[#allocation3 + $0x748] sm:$0xff]
      %v6080 = vld [vmem:[#allocation3 + $0x750] sm:$0xff]
      %v6081 = vld [vmem:[#allocation3 + $0x758] sm:$0xff]
      %v6082 = vld [vmem:[#allocation3 + $0x760] sm:$0xff]
      %v6083 = vld [vmem:[#allocation3 + $0x768] sm:$0xff]
      %v6084 = vld [vmem:[#allocation3 + $0x770] sm:$0xff]
      %v6085 = vld [vmem:[#allocation3 + $0x778] sm:$0xff]
      %v6086 = vld [vmem:[#allocation3 + $0x780] sm:$0xff]
      %v6087 = vld [vmem:[#allocation3 + $0x788] sm:$0xff]
      %v6088 = vld [vmem:[#allocation3 + $0x790] sm:$0xff]
      %v6089 = vld [vmem:[#allocation3 + $0x798] sm:$0xff]
      %v6090 = vld [vmem:[#allocation3 + $0x7a0] sm:$0xff]
      %v6091 = vld [vmem:[#allocation3 + $0x7a8] sm:$0xff]
      %v6092 = vld [vmem:[#allocation3 + $0x7b0] sm:$0xff]
      %v6093 = vld [vmem:[#allocation3 + $0x7b8] sm:$0xff]
      %v6094 = vld [vmem:[#allocation3 + $0x7c0] sm:$0xff]
      %v6095 = vld [vmem:[#allocation3 + $0x7c8] sm:$0xff]
      %v6096 = vld [vmem:[#allocation3 + $0x7d0] sm:$0xff]
      %v6097 = vld [vmem:[#allocation3 + $0x7d8] sm:$0xff]
      %v6098 = vld [vmem:[#allocation3 + $0x7e0] sm:$0xff]
      %v6099 = vld [vmem:[#allocation3 + $0x7e8] sm:$0xff]
      %v6100 = vld [vmem:[#allocation3 + $0x7f0] sm:$0xff]
      %v6101 = vld [vmem:[#allocation3 + $0x7f8] sm:$0xff]
      %v6102 = vld [vmem:[#allocation3 + $0x800] sm:$0xff]
      %v6103 = vld [vmem:[#allocation3 + $0x808] sm:$0xff]
      %v6104 = vld [vmem:[#allocation3 + $0x810] sm:$0xff]
      %v6105 = vld [vmem:[#allocation3 + $0x818] sm:$0xff]
      %v6106 = vld [vmem:[#allocation3 + $0x820] sm:$0xff]
      %v6107 = vld [vmem:[#allocation3 + $0x828] sm:$0xff]
      %v6108 = vld [vmem:[#allocation3 + $0x830] sm:$0xff]
      %v6109 = vld [vmem:[#allocation3 + $0x838] sm:$0xff]
      %v6110 = vld [vmem:[#allocation3 + $0x840] sm:$0xff]
      %v6111 = vld [vmem:[#allocation3 + $0x848] sm:$0xff]
      %v6112 = vld [vmem:[#allocation3 + $0x850] sm:$0xff]
      %v6113 = vld [vmem:[#allocation3 + $0x858] sm:$0xff]
      %v6114 = vld [vmem:[#allocation3 + $0x860] sm:$0xff]
      %v6115 = vld [vmem:[#allocation3 + $0x868] sm:$0xff]
      %v6116 = vld [vmem:[#allocation3 + $0x870] sm:$0xff]
      %v6117 = vld [vmem:[#allocation3 + $0x878] sm:$0xff]
      %v6118 = vld [vmem:[#allocation3 + $0x880] sm:$0xff]
      %v6119 = vld [vmem:[#allocation3 + $0x888] sm:$0xff]
      %v6120 = vld [vmem:[#allocation3 + $0x890] sm:$0xff]
      %v6121 = vld [vmem:[#allocation3 + $0x898] sm:$0xff]
      %v6122 = vld [vmem:[#allocation3 + $0x8a0] sm:$0xff]
      %v6123 = vld [vmem:[#allocation3 + $0x8a8] sm:$0xff]
      %v6124 = vld [vmem:[#allocation3 + $0x8b0] sm:$0xff]
      %v6125 = vld [vmem:[#allocation3 + $0x8b8] sm:$0xff]
      %v6126 = vld [vmem:[#allocation3 + $0x8c0] sm:$0xff]
      %v6127 = vld [vmem:[#allocation3 + $0x8c8] sm:$0xff]
      %v6128 = vld [vmem:[#allocation3 + $0x8d0] sm:$0xff]
      %v6129 = vld [vmem:[#allocation3 + $0x8d8] sm:$0xff]
      %v6130 = vld [vmem:[#allocation3 + $0x8e0] sm:$0xff]
      %v6131 = vld [vmem:[#allocation3 + $0x8e8] sm:$0xff]
      %v6132 = vld [vmem:[#allocation3 + $0x8f0] sm:$0xff]
      %v6133 = vld [vmem:[#allocation3 + $0x8f8] sm:$0xff]
      %v6134 = vld [vmem:[#allocation3 + $0x900] sm:$0xff]
      %v6135 = vld [vmem:[#allocation3 + $0x908] sm:$0xff]
      %v6136 = vld [vmem:[#allocation3 + $0x910] sm:$0xff]
      %v6137 = vld [vmem:[#allocation3 + $0x918] sm:$0xff]
      %v6138 = vld [vmem:[#allocation3 + $0x920] sm:$0xff]
      %v6139 = vld [vmem:[#allocation3 + $0x928] sm:$0xff]
      %v6140 = vld [vmem:[#allocation3 + $0x930] sm:$0xff]
      %v6141 = vld [vmem:[#allocation3 + $0x938] sm:$0xff]
      %v6142 = vld [vmem:[#allocation3 + $0x940] sm:$0xff]
      %v6143 = vld [vmem:[#allocation3 + $0x948] sm:$0xff]
      %v6144 = vld [vmem:[#allocation3 + $0x950] sm:$0xff]
      %v6145 = vld [vmem:[#allocation3 + $0x958] sm:$0xff]
      %v6146 = vld [vmem:[#allocation3 + $0x960] sm:$0xff]
      %v6147 = vld [vmem:[#allocation3 + $0x968] sm:$0xff]
      %v6148 = vld [vmem:[#allocation3 + $0x970] sm:$0xff]
      %v6149 = vld [vmem:[#allocation3 + $0x978] sm:$0xff]
      %v6150 = vld [vmem:[#allocation3 + $0x980] sm:$0xff]
      %v6151 = vld [vmem:[#allocation3 + $0x988] sm:$0xff]
      %v6152 = vld [vmem:[#allocation3 + $0x990] sm:$0xff]
      %v6153 = vld [vmem:[#allocation3 + $0x998] sm:$0xff]
      %v6154 = vld [vmem:[#allocation3 + $0x9a0] sm:$0xff]
      %v6155 = vld [vmem:[#allocation3 + $0x9a8] sm:$0xff]
      %v6156 = vld [vmem:[#allocation3 + $0x9b0] sm:$0xff]
      %v6157 = vld [vmem:[#allocation3 + $0x9b8] sm:$0xff]
      %v6158 = vld [vmem:[#allocation3 + $0x9c0] sm:$0xff]
      %v6159 = vld [vmem:[#allocation3 + $0x9c8] sm:$0xff]
      %v6160 = vld [vmem:[#allocation3 + $0x9d0] sm:$0xff]
      %v6161 = vld [vmem:[#allocation3 + $0x9d8] sm:$0xff]
      %v6162 = vld [vmem:[#allocation3 + $0x9e0] sm:$0xff]
      %v6163 = vld [vmem:[#allocation3 + $0x9e8] sm:$0xff]
      %v6164 = vld [vmem:[#allocation3 + $0x9f0] sm:$0xff]
      %v6165 = vld [vmem:[#allocation3 + $0x9f8] sm:$0xff]
      %v6166 = vld [vmem:[#allocation3 + $0xa00] sm:$0xff]
      %v6167 = vld [vmem:[#allocation3 + $0xa08] sm:$0xff]
      %v6168 = vld [vmem:[#allocation3 + $0xa10] sm:$0xff]
      %v6169 = vld [vmem:[#allocation3 + $0xa18] sm:$0xff]
      %v6170 = vld [vmem:[#allocation3 + $0xa20] sm:$0xff]
      %v6171 = vld [vmem:[#allocation3 + $0xa28] sm:$0xff]
      %v6172 = vld [vmem:[#allocation3 + $0xa30] sm:$0xff]
      %v6173 = vld [vmem:[#allocation3 + $0xa38] sm:$0xff]
      %v6174 = vld [vmem:[#allocation3 + $0xa40] sm:$0xff]
      %v6175 = vld [vmem:[#allocation3 + $0xa48] sm:$0xff]
      %v6176 = vld [vmem:[#allocation3 + $0xa50] sm:$0xff]
      %v6177 = vld [vmem:[#allocation3 + $0xa58] sm:$0xff]
      %v6178 = vld [vmem:[#allocation3 + $0xa60] sm:$0xff]
      %v6179 = vld [vmem:[#allocation3 + $0xa68] sm:$0xff]
      %v6180 = vld [vmem:[#allocation3 + $0xa70] sm:$0xff]
      %v6181 = vld [vmem:[#allocation3 + $0xa78] sm:$0xff]
      %v6182 = vld [vmem:[#allocation3 + $0xa80] sm:$0xff]
      %v6183 = vld [vmem:[#allocation3 + $0xa88] sm:$0xff]
      %v6184 = vld [vmem:[#allocation3 + $0xa90] sm:$0xff]
      %v6185 = vld [vmem:[#allocation3 + $0xa98] sm:$0xff]
      %v6186 = vld [vmem:[#allocation3 + $0xaa0] sm:$0xff]
      %v6187 = vld [vmem:[#allocation3 + $0xaa8] sm:$0xff]
      %v6188 = vld [vmem:[#allocation3 + $0xab0] sm:$0xff]
      %v6189 = vld [vmem:[#allocation3 + $0xab8] sm:$0xff]
      %v6190 = vld [vmem:[#allocation3 + $0xac0] sm:$0xff]
      %v6191 = vld [vmem:[#allocation3 + $0xac8] sm:$0xff]
      %v6192 = vld [vmem:[#allocation3 + $0xad0] sm:$0xff]
      %v6193 = vld [vmem:[#allocation3 + $0xad8] sm:$0xff]
      %v6194 = vld [vmem:[#allocation3 + $0xae0] sm:$0xff]
      %v6195 = vld [vmem:[#allocation3 + $0xae8] sm:$0xff]
      %v6196 = vld [vmem:[#allocation3 + $0xaf0] sm:$0xff]
      %v6197 = vld [vmem:[#allocation3 + $0xaf8] sm:$0xff]
      %v6198 = vld [vmem:[#allocation3 + $0xb00] sm:$0xff]
      %v6199 = vld [vmem:[#allocation3 + $0xb08] sm:$0xff]
      %v6200 = vld [vmem:[#allocation3 + $0xb10] sm:$0xff]
      %v6201 = vld [vmem:[#allocation3 + $0xb18] sm:$0xff]
      %v6202 = vld [vmem:[#allocation3 + $0xb20] sm:$0xff]
      %v6203 = vld [vmem:[#allocation3 + $0xb28] sm:$0xff]
      %v6204 = vld [vmem:[#allocation3 + $0xb30] sm:$0xff]
      %v6205 = vld [vmem:[#allocation3 + $0xb38] sm:$0xff]
      %v6206 = vld [vmem:[#allocation3 + $0xb40] sm:$0xff]
      %v6207 = vld [vmem:[#allocation3 + $0xb48] sm:$0xff]
      %v6208 = vld [vmem:[#allocation3 + $0xb50] sm:$0xff]
      %v6209 = vld [vmem:[#allocation3 + $0xb58] sm:$0xff]
      %v6210 = vld [vmem:[#allocation3 + $0xb60] sm:$0xff]
      %v6211 = vld [vmem:[#allocation3 + $0xb68] sm:$0xff]
      %v6212 = vld [vmem:[#allocation3 + $0xb70] sm:$0xff]
      %v6213 = vld [vmem:[#allocation3 + $0xb78] sm:$0xff]
      %v6214 = vld [vmem:[#allocation3 + $0xb80] sm:$0xff]
      %v6215 = vld [vmem:[#allocation3 + $0xb88] sm:$0xff]
      %v6216 = vld [vmem:[#allocation3 + $0xb90] sm:$0xff]
      %v6217 = vld [vmem:[#allocation3 + $0xb98] sm:$0xff]
      %v6218 = vld [vmem:[#allocation3 + $0xba0] sm:$0xff]
      %v6219 = vld [vmem:[#allocation3 + $0xba8] sm:$0xff]
      %v6220 = vld [vmem:[#allocation3 + $0xbb0] sm:$0xff]
      %v6221 = vld [vmem:[#allocation3 + $0xbb8] sm:$0xff]
      %v6222 = vld [vmem:[#allocation3 + $0xbc0] sm:$0xff]
      %v6223 = vld [vmem:[#allocation3 + $0xbc8] sm:$0xff]
      %v6224 = vld [vmem:[#allocation3 + $0xbd0] sm:$0xff]
      %v6225 = vld [vmem:[#allocation3 + $0xbd8] sm:$0xff]
      %v6226 = vld [vmem:[#allocation3 + $0xbe0] sm:$0xff]
      %v6227 = vld [vmem:[#allocation3 + $0xbe8] sm:$0xff]
      %v6228 = vld [vmem:[#allocation3 + $0xbf0] sm:$0xff]
      %v6229 = vld [vmem:[#allocation3 + $0xbf8] sm:$0xff]
      %v6230 = vld [vmem:[#allocation3 + $0xc00] sm:$0xff]
      %v6231 = vld [vmem:[#allocation3 + $0xc08] sm:$0xff]
      %v6232 = vld [vmem:[#allocation3 + $0xc10] sm:$0xff]
      %v6233 = vld [vmem:[#allocation3 + $0xc18] sm:$0xff]
      %v6234 = vld [vmem:[#allocation3 + $0xc20] sm:$0xff]
      %v6235 = vld [vmem:[#allocation3 + $0xc28] sm:$0xff]
      %v6236 = vld [vmem:[#allocation3 + $0xc30] sm:$0xff]
      %v6237 = vld [vmem:[#allocation3 + $0xc38] sm:$0xff]
      %v6238 = vld [vmem:[#allocation3 + $0xc40] sm:$0xff]
      %v6239 = vld [vmem:[#allocation3 + $0xc48] sm:$0xff]
      %v6240 = vld [vmem:[#allocation3 + $0xc50] sm:$0xff]
      %v6241 = vld [vmem:[#allocation3 + $0xc58] sm:$0xff]
      %v6242 = vld [vmem:[#allocation3 + $0xc60] sm:$0xff]
      %v6243 = vld [vmem:[#allocation3 + $0xc68] sm:$0xff]
      %v6244 = vld [vmem:[#allocation3 + $0xc70] sm:$0xff]
      %v6245 = vld [vmem:[#allocation3 + $0xc78] sm:$0xff]
      %v6246 = vld [vmem:[#allocation3 + $0xc80] sm:$0xff]
      %v6247 = vld [vmem:[#allocation3 + $0xc88] sm:$0xff]
      %v6248 = vld [vmem:[#allocation3 + $0xc90] sm:$0xff]
      %v6249 = vld [vmem:[#allocation3 + $0xc98] sm:$0xff]
      %v6250 = vld [vmem:[#allocation3 + $0xca0] sm:$0xff]
      %v6251 = vld [vmem:[#allocation3 + $0xca8] sm:$0xff]
      %v6252 = vld [vmem:[#allocation3 + $0xcb0] sm:$0xff]
      %v6253 = vld [vmem:[#allocation3 + $0xcb8] sm:$0xff]
      %v6254 = vld [vmem:[#allocation3 + $0xcc0] sm:$0xff]
      %v6255 = vld [vmem:[#allocation3 + $0xcc8] sm:$0xff]
      %v6256 = vld [vmem:[#allocation3 + $0xcd0] sm:$0xff]
      %v6257 = vld [vmem:[#allocation3 + $0xcd8] sm:$0xff]
      %v6258 = vld [vmem:[#allocation3 + $0xce0] sm:$0xff]
      %v6259 = vld [vmem:[#allocation3 + $0xce8] sm:$0xff]
      %v6260 = vld [vmem:[#allocation3 + $0xcf0] sm:$0xff]
      %v6261 = vld [vmem:[#allocation3 + $0xcf8] sm:$0xff]
      %v6262 = vld [vmem:[#allocation3 + $0xd00] sm:$0xff]
      %v6263 = vld [vmem:[#allocation3 + $0xd08] sm:$0xff]
      %v6264 = vld [vmem:[#allocation3 + $0xd10] sm:$0xff]
      %v6265 = vld [vmem:[#allocation3 + $0xd18] sm:$0xff]
      %v6266 = vld [vmem:[#allocation3 + $0xd20] sm:$0xff]
      %v6267 = vld [vmem:[#allocation3 + $0xd28] sm:$0xff]
      %v6268 = vld [vmem:[#allocation3 + $0xd30] sm:$0xff]
      %v6269 = vld [vmem:[#allocation3 + $0xd38] sm:$0xff]
      %v6270 = vld [vmem:[#allocation3 + $0xd40] sm:$0xff]
      %v6271 = vld [vmem:[#allocation3 + $0xd48] sm:$0xff]
      %v6272 = vld [vmem:[#allocation3 + $0xd50] sm:$0xff]
      %v6273 = vld [vmem:[#allocation3 + $0xd58] sm:$0xff]
      %v6274 = vld [vmem:[#allocation3 + $0xd60] sm:$0xff]
      %v6275 = vld [vmem:[#allocation3 + $0xd68] sm:$0xff]
      %v6276 = vld [vmem:[#allocation3 + $0xd70] sm:$0xff]
      %v6277 = vld [vmem:[#allocation3 + $0xd78] sm:$0xff]
      %v6278 = vld [vmem:[%s3] sm:$0xff]
      %v6279 = vld [vmem:[%s3 + $0x8] sm:$0xff]
      %v6280 = vld [vmem:[%s3 + $0x10] sm:$0xff]
      %v6281 = vld [vmem:[%s3 + $0x18] sm:$0xff]
      %v6282 = vld [vmem:[%s3 + $0x20] sm:$0xff]
      %v6283 = vld [vmem:[%s3 + $0x28] sm:$0xff]
      %v6284 = vld [vmem:[%s3 + $0x30] sm:$0xff]
      %v6285 = vld [vmem:[%s3 + $0x38] sm:$0xff]
      %v6286 = vld [vmem:[%s3 + $0x40] sm:$0xff]
      %v6287 = vld [vmem:[%s3 + $0x48] sm:$0xff]
      %v6288 = vld [vmem:[%s3 + $0x50] sm:$0xff]
      %v6289 = vld [vmem:[%s3 + $0x58] sm:$0xff]
      %v6290 = vld [vmem:[%s3 + $0x60] sm:$0xff]
      %v6291 = vld [vmem:[%s3 + $0x68] sm:$0xff]
      %v6292 = vld [vmem:[%s3 + $0x70] sm:$0xff]
      %v6293 = vld [vmem:[%s3 + $0x78] sm:$0xff]
      %v6294 = vld [vmem:[%s3 + $0x80] sm:$0xff]
      %v6295 = vld [vmem:[%s3 + $0x88] sm:$0xff]
      %v6296 = vld [vmem:[%s3 + $0x90] sm:$0xff]
      %v6297 = vld [vmem:[%s3 + $0x98] sm:$0xff]
      %v6298 = vld [vmem:[%s3 + $0xa0] sm:$0xff]
      %v6299 = vld [vmem:[%s3 + $0xa8] sm:$0xff]
      %v6300 = vld [vmem:[%s3 + $0xb0] sm:$0xff]
      %v6301 = vld [vmem:[%s3 + $0xb8] sm:$0xff]
      %v6302 = vld [vmem:[%s3 + $0xc0] sm:$0xff]
      %v6303 = vld [vmem:[%s3 + $0xc8] sm:$0xff]
      %v6304 = vld [vmem:[%s3 + $0xd0] sm:$0xff]
      %v6305 = vld [vmem:[%s3 + $0xd8] sm:$0xff]
      %v6306 = vld [vmem:[%s3 + $0xe0] sm:$0xff]
      %v6307 = vld [vmem:[%s3 + $0xe8] sm:$0xff]
      %v6308 = vld [vmem:[%s3 + $0xf0] sm:$0xff]
      %v6309 = vld [vmem:[%s3 + $0xf8] sm:$0xff]
      %v6310 = vld [vmem:[%s3 + $0x100] sm:$0xff]
      %v6311 = vld [vmem:[%s3 + $0x108] sm:$0xff]
      %v6312 = vld [vmem:[%s3 + $0x110] sm:$0xff]
      %v6313 = vld [vmem:[%s3 + $0x118] sm:$0xff]
      %v6314 = vld [vmem:[%s3 + $0x120] sm:$0xff]
      %v6315 = vld [vmem:[%s3 + $0x128] sm:$0xff]
      %v6316 = vld [vmem:[%s3 + $0x130] sm:$0xff]
      %v6317 = vld [vmem:[%s3 + $0x138] sm:$0xff]
      %v6318 = vld [vmem:[%s3 + $0x140] sm:$0xff]
      %v6319 = vld [vmem:[%s3 + $0x148] sm:$0xff]
      %v6320 = vld [vmem:[%s3 + $0x150] sm:$0xff]
      %v6321 = vld [vmem:[%s3 + $0x158] sm:$0xff]
      %v6322 = vld [vmem:[%s3 + $0x160] sm:$0xff]
      %v6323 = vld [vmem:[%s3 + $0x168] sm:$0xff]
      %v6324 = vld [vmem:[%s3 + $0x170] sm:$0xff]
      %v6325 = vld [vmem:[%s3 + $0x178] sm:$0xff]
      %v6326 = vld [vmem:[%s3 + $0x180] sm:$0xff]
      %v6327 = vld [vmem:[%s3 + $0x188] sm:$0xff]
      %v6328 = vld [vmem:[%s3 + $0x190] sm:$0xff]
      %v6329 = vld [vmem:[%s3 + $0x198] sm:$0xff]
      %v6330 = vld [vmem:[%s3 + $0x1a0] sm:$0xff]
      %v6331 = vld [vmem:[%s3 + $0x1a8] sm:$0xff]
      %v6332 = vld [vmem:[%s3 + $0x1b0] sm:$0xff]
      %v6333 = vld [vmem:[%s3 + $0x1b8] sm:$0xff]
      %v6334 = vld [vmem:[%s3 + $0x1c0] sm:$0xff]
      %v6335 = vld [vmem:[%s3 + $0x1c8] sm:$0xff]
      %v6336 = vld [vmem:[%s3 + $0x1d0] sm:$0xff]
      %v6337 = vld [vmem:[%s3 + $0x1d8] sm:$0xff]
      %v6338 = vld [vmem:[%s3 + $0x1e0] sm:$0xff]
      %v6339 = vld [vmem:[%s3 + $0x1e8] sm:$0xff]
      %v6340 = vld [vmem:[%s3 + $0x1f0] sm:$0xff]
      %v6341 = vld [vmem:[%s3 + $0x1f8] sm:$0xff]
      %v6342 = vld [vmem:[%s3 + $0x200] sm:$0xff]
      %v6343 = vld [vmem:[%s3 + $0x208] sm:$0xff]
      %v6344 = vld [vmem:[%s3 + $0x210] sm:$0xff]
      %v6345 = vld [vmem:[%s3 + $0x218] sm:$0xff]
      %v6346 = vld [vmem:[%s3 + $0x220] sm:$0xff]
      %v6347 = vld [vmem:[%s3 + $0x228] sm:$0xff]
      %v6348 = vld [vmem:[%s3 + $0x230] sm:$0xff]
      %v6349 = vld [vmem:[%s3 + $0x238] sm:$0xff]
      %v6350 = vld [vmem:[%s3 + $0x240] sm:$0xff]
      %v6351 = vld [vmem:[%s3 + $0x248] sm:$0xff]
      %v6352 = vld [vmem:[%s3 + $0x250] sm:$0xff]
      %v6353 = vld [vmem:[%s3 + $0x258] sm:$0xff]
      %v6354 = vld [vmem:[%s3 + $0x260] sm:$0xff]
      %v6355 = vld [vmem:[%s3 + $0x268] sm:$0xff]
      %v6356 = vld [vmem:[%s3 + $0x270] sm:$0xff]
      %v6357 = vld [vmem:[%s3 + $0x278] sm:$0xff]
      %v6358 = vld [vmem:[%s3 + $0x280] sm:$0xff]
      %v6359 = vld [vmem:[%s3 + $0x288] sm:$0xff]
      %v6360 = vld [vmem:[%s3 + $0x290] sm:$0xff]
      %v6361 = vld [vmem:[%s3 + $0x298] sm:$0xff]
      %v6362 = vld [vmem:[%s3 + $0x2a0] sm:$0xff]
      %v6363 = vld [vmem:[%s3 + $0x2a8] sm:$0xff]
      %v6364 = vld [vmem:[%s3 + $0x2b0] sm:$0xff]
      %v6365 = vld [vmem:[%s3 + $0x2b8] sm:$0xff]
      %v6366 = vld [vmem:[%s3 + $0x2c0] sm:$0xff]
      %v6367 = vld [vmem:[%s3 + $0x2c8] sm:$0xff]
      %v6368 = vld [vmem:[%s3 + $0x2d0] sm:$0xff]
      %v6369 = vld [vmem:[%s3 + $0x2d8] sm:$0xff]
      %v6370 = vld [vmem:[%s3 + $0x2e0] sm:$0xff]
      %v6371 = vld [vmem:[%s3 + $0x2e8] sm:$0xff]
      %v6372 = vld [vmem:[%s3 + $0x2f0] sm:$0xff]
      %v6373 = vld [vmem:[%s3 + $0x2f8] sm:$0xff]
      %v6374 = vld [vmem:[%s3 + $0x300] sm:$0xff]
      %v6375 = vld [vmem:[%s3 + $0x308] sm:$0xff]
      %v6376 = vld [vmem:[%s3 + $0x310] sm:$0xff]
      %v6377 = vld [vmem:[%s3 + $0x318] sm:$0xff]
      %v6378 = vld [vmem:[%s3 + $0x320] sm:$0xff]
      %v6379 = vld [vmem:[%s3 + $0x328] sm:$0xff]
      %v6380 = vld [vmem:[%s3 + $0x330] sm:$0xff]
      %v6381 = vld [vmem:[%s3 + $0x338] sm:$0xff]
      %v6382 = vld [vmem:[%s3 + $0x340] sm:$0xff]
      %v6383 = vld [vmem:[%s3 + $0x348] sm:$0xff]
      %v6384 = vld [vmem:[%s3 + $0x350] sm:$0xff]
      %v6385 = vld [vmem:[%s3 + $0x358] sm:$0xff]
      %v6386 = vld [vmem:[%s3 + $0x360] sm:$0xff]
      %v6387 = vld [vmem:[%s3 + $0x368] sm:$0xff]
      %v6388 = vld [vmem:[%s3 + $0x370] sm:$0xff]
      %v6389 = vld [vmem:[%s3 + $0x378] sm:$0xff]
      %v6390 = vld [vmem:[%s3 + $0x380] sm:$0xff]
      %v6391 = vld [vmem:[%s3 + $0x388] sm:$0xff]
      %v6392 = vld [vmem:[%s3 + $0x390] sm:$0xff]
      %v6393 = vld [vmem:[%s3 + $0x398] sm:$0xff]
      %v6394 = vld [vmem:[%s3 + $0x3a0] sm:$0xff]
      %v6395 = vld [vmem:[%s3 + $0x3a8] sm:$0xff]
      %v6396 = vld [vmem:[%s3 + $0x3b0] sm:$0xff]
      %v6397 = vld [vmem:[%s3 + $0x3b8] sm:$0xff]
      %v6398 = vld [vmem:[%s3 + $0x3c0] sm:$0xff]
      %v6399 = vld [vmem:[%s3 + $0x3c8] sm:$0xff]
      %v6400 = vld [vmem:[%s3 + $0x3d0] sm:$0xff]
      %v6401 = vld [vmem:[%s3 + $0x3d8] sm:$0xff]
      %v6402 = vld [vmem:[%s3 + $0x3e0] sm:$0xff]
      %v6403 = vld [vmem:[%s3 + $0x3e8] sm:$0xff]
      %v6404 = vld [vmem:[%s3 + $0x3f0] sm:$0xff]
      %v6405 = vld [vmem:[%s3 + $0x3f8] sm:$0xff]
      %v6406 = vld [vmem:[%s3 + $0x400] sm:$0xff]
      %v6407 = vld [vmem:[%s3 + $0x408] sm:$0xff]
      %v6408 = vld [vmem:[%s3 + $0x410] sm:$0xff]
      %v6409 = vld [vmem:[%s3 + $0x418] sm:$0xff]
      %v6410 = vld [vmem:[%s3 + $0x420] sm:$0xff]
      %v6411 = vld [vmem:[%s3 + $0x428] sm:$0xff]
      %v6412 = vld [vmem:[%s3 + $0x430] sm:$0xff]
      %v6413 = vld [vmem:[%s3 + $0x438] sm:$0xff]
      %v6414 = vld [vmem:[%s3 + $0x440] sm:$0xff]
      %v6415 = vld [vmem:[%s3 + $0x448] sm:$0xff]
      %v6416 = vld [vmem:[%s3 + $0x450] sm:$0xff]
      %v6417 = vld [vmem:[%s3 + $0x458] sm:$0xff]
      %v6418 = vld [vmem:[%s3 + $0x460] sm:$0xff]
      %v6419 = vld [vmem:[%s3 + $0x468] sm:$0xff]
      %v6420 = vld [vmem:[%s3 + $0x470] sm:$0xff]
      %v6421 = vld [vmem:[%s3 + $0x478] sm:$0xff]
      %v6422 = vld [vmem:[%s219 + $0x18] sm:$0xff]
      %v6423 = vld [vmem:[%s219 + $0x20] sm:$0xff]
      %v6424 = vld [vmem:[%s219 + $0x28] sm:$0xff]
      %v6425 = vld [vmem:[%s219 + $0x30] sm:$0xff]
      %v6426 = vld [vmem:[%s219 + $0x38] sm:$0xff]
      %v6427 = vld [vmem:[%s219 + $0x40] sm:$0xff]
      %v6428 = vld [vmem:[%s219 + $0x48] sm:$0xff]
      %v6429 = vld [vmem:[%s219 + $0x50] sm:$0xff]
      %v6430 = vld [vmem:[%s219 + $0x58] sm:$0xff]
      %v6431 = vld [vmem:[%s219 + $0x60] sm:$0xff]
      %v6432 = vld [vmem:[%s219 + $0x68] sm:$0xff]
      %v6433 = vld [vmem:[%s219 + $0x70] sm:$0xff]
      %v6434 = vld [vmem:[%s219 + $0x78] sm:$0xff]
      %v6435 = vld [vmem:[%s219 + $0x80] sm:$0xff]
      %v6436 = vld [vmem:[%s219 + $0x88] sm:$0xff]
      %v6437 = vld [vmem:[%s219 + $0x90] sm:$0xff]
      %v6438 = vld [vmem:[%s219 + $0x98] sm:$0xff]
      %v6439 = vld [vmem:[%s219 + $0xa0] sm:$0xff]
      %v6440 = vld [vmem:[%s219 + $0xa8] sm:$0xff]
      %v6441 = vld [vmem:[%s219 + $0xb0] sm:$0xff]
      %v6442 = vld [vmem:[%s219 + $0xb8] sm:$0xff]
      %v6443 = vld [vmem:[%s219 + $0xc0] sm:$0xff]
      %v6444 = vld [vmem:[%s219 + $0xc8] sm:$0xff]
      %v6445 = vld [vmem:[%s219 + $0xd0] sm:$0xff]
      %v6446 = vld [vmem:[%s219 + $0xd8] sm:$0xff]
      %v6447 = vld [vmem:[%s219 + $0xe0] sm:$0xff]
      %v6448 = vld [vmem:[%s219 + $0xe8] sm:$0xff]
      %v6449 = vld [vmem:[%s219 + $0xf0] sm:$0xff]
      %v6450 = vld [vmem:[%s219 + $0xf8] sm:$0xff]
      %v6451 = vld [vmem:[%s219 + $0x100] sm:$0xff]
      %v6452 = vld [vmem:[%s219 + $0x108] sm:$0xff]
      %v6453 = vld [vmem:[%s219 + $0x110] sm:$0xff]
      %v6454 = vld [vmem:[%s219 + $0x118] sm:$0xff]
      %v6455 = vld [vmem:[%s219 + $0x120] sm:$0xff]
      %v6456 = vld [vmem:[%s219 + $0x128] sm:$0xff]
      %v6457 = vld [vmem:[%s219 + $0x130] sm:$0xff]
      %v6458 = vld [vmem:[%s219 + $0x138] sm:$0xff]
      %v6459 = vld [vmem:[%s219 + $0x140] sm:$0xff]
      %v6460 = vld [vmem:[%s219 + $0x148] sm:$0xff]
      %v6461 = vld [vmem:[%s219 + $0x150] sm:$0xff]
      %v6462 = vld [vmem:[%s219 + $0x158] sm:$0xff]
      %v6463 = vld [vmem:[%s219 + $0x160] sm:$0xff]
      %v6464 = vld [vmem:[%s219 + $0x168] sm:$0xff]
      %v6465 = vld [vmem:[%s219 + $0x170] sm:$0xff]
      %v6466 = vld [vmem:[%s219 + $0x178] sm:$0xff]
      %v6467 = vld [vmem:[%s219 + $0x180] sm:$0xff]
      %v6468 = vld [vmem:[%s219 + $0x188] sm:$0xff]
      %v6469 = vld [vmem:[%s219 + $0x190] sm:$0xff]
      %v6470 = vld [vmem:[%s4] sm:$0x1]
      %v6472 = vlaneseq
      %v6473 = vshrl.u32 %v6472, 7
      %v6474 = vsub.s32 0, %v6473
      %v6475 = vrot.slane %v6470, %v6474
      %6477 = vmatprep.subr.mxu0 0.0
      %6478 = vmatpush1.msra.mxu0 %v6278
      %6479 = vmatprep.subr.mxu0 0.0
      %6480 = vmatpush1.msra.mxu0 %v6279
      %6481 = vmatprep.subr.mxu0 0.0
      %6482 = vmatpush1.msra.mxu0 %v6280
      %6483 = vmatprep.subr.mxu0 0.0
      %6484 = vmatpush1.msra.mxu0 %v6281
      %6485 = vmatprep.subr.mxu0 0.0
      %6486 = vmatpush1.msra.mxu0 %v6282
      %6487 = vmatprep.subr.mxu0 0.0
      %6488 = vmatpush1.msra.mxu0 %v6283
      %6489 = vmatprep.subr.mxu0 0.0
      %6490 = vmatpush1.msra.mxu0 %v6284
      %6491 = vmatprep.subr.mxu0 0.0
      %6492 = vmatpush1.msra.mxu0 %v6285
      %6493 = vmatprep.subr.mxu0 0.0
      %6494 = vmatpush1.msra.mxu0 %v6286
      %6495 = vmatprep.subr.mxu0 0.0
      %6496 = vmatpush1.msra.mxu0 %v6287
      %6497 = vmatprep.subr.mxu0 0.0
      %6498 = vmatpush1.msra.mxu0 %v6288
      %6499 = vmatprep.subr.mxu0 0.0
      %6500 = vmatpush1.msra.mxu0 %v6289
      %6501 = vmatprep.subr.mxu0 0.0
      %6502 = vmatpush1.msra.mxu0 %v6290
      %6503 = vmatprep.subr.mxu0 0.0
      %6504 = vmatpush1.msra.mxu0 %v6291
      %6505 = vmatprep.subr.mxu0 0.0
      %6506 = vmatpush1.msra.mxu0 %v6292
      %6507 = vmatprep.subr.mxu0 0.0
      %6508 = vmatpush1.msra.mxu0 %v6293
      %6509 = vmatprep.subr.mxu0 0.0
      %6510 = vmatpush1.msra.mxu0 %v6294
      %6511 = vmatprep.subr.mxu0 0.0
      %6512 = vmatpush1.msra.mxu0 %v6295
      %6513 = vmatprep.subr.mxu0 0.0
      %6514 = vmatpush1.msra.mxu0 %v6296
      %6515 = vmatprep.subr.mxu0 0.0
      %6516 = vmatpush1.msra.mxu0 %v6297
      %6517 = vmatprep.subr.mxu0 0.0
      %6518 = vmatpush1.msra.mxu0 %v6298
      %6519 = vmatprep.subr.mxu0 0.0
      %6520 = vmatpush1.msra.mxu0 %v6299
      %6521 = vmatprep.subr.mxu0 0.0
      %6522 = vmatpush1.msra.mxu0 %v6300
      %6523 = vmatprep.subr.mxu0 0.0
      %6524 = vmatpush1.msra.mxu0 %v6301
      %6525 = vmatprep.subr.mxu0 0.0
      %6526 = vmatpush1.msra.mxu0 %v6302
      %6527 = vmatprep.subr.mxu0 0.0
      %6528 = vmatpush1.msra.mxu0 %v6303
      %6529 = vmatprep.subr.mxu0 0.0
      %6530 = vmatpush1.msra.mxu0 %v6304
      %6531 = vmatprep.subr.mxu0 0.0
      %6532 = vmatpush1.msra.mxu0 %v6305
      %6533 = vmatprep.subr.mxu0 0.0
      %6534 = vmatpush1.msra.mxu0 %v6306
      %6535 = vmatprep.subr.mxu0 0.0
      %6536 = vmatpush1.msra.mxu0 %v6307
      %6537 = vmatprep.subr.mxu0 0.0
      %6538 = vmatpush1.msra.mxu0 %v6308
      %6539 = vmatprep.subr.mxu0 0.0
      %6540 = vmatpush1.msra.mxu0 %v6309
      %6541 = vmatprep.mubr.f32.mxu0 %v5847
      %6542 = vmatmul.mubr.f32.gmra.mrb[0].mxu0 %v5846
      %v6543 = vpop.f32.mrb[0].mxu0
      %v6544 = vadd.f32 %v6475, %v6543
      %v6545 = vpop.f32.mrb[0].mxu0
      %6546 = vmatprep.mubr.f32.mxu0 %v5856
      %6547 = vmatmul.mubr.f32.gmra.mrb[0].mxu0 %v5855
      %v6548 = vpop.f32.mrb[0].mxu0
      %v6549 = vadd.f32 %v6475, %v6548
      %v6550 = vpop.f32.mrb[0].mxu0
      %6551 = vmatprep.mubr.f32.mxu0 %v5865
      %6552 = vmatmul.mubr.f32.gmra.mrb[0].mxu0 %v5864
      %v6553 = vpop.f32.mrb[0].mxu0
      %v6554 = vadd.f32 %v6475, %v6553
      %v6555 = vpop.f32.mrb[0].mxu0
      %6556 = vmatprep.mubr.f32.mxu0 %v5874
      %6557 = vmatmul.mubr.f32.gmra.mrb[0].mxu0 %v5873
      %v6558 = vpop.f32.mrb[0].mxu0
      %v6559 = vadd.f32 %v6475, %v6558
      %v6560 = vpop.f32.mrb[0].mxu0
      %6561 = vmatprep.mubr.f32.mxu0 %v5883
      %6562 = vmatmul.mubr.f32.gmra.mrb[0].mxu0 %v5882
      %v6563 = vpop.f32.mrb[0].mxu0
      %v6564 = vadd.f32 %v6475, %v6563
      %v6565 = vpop.f32.mrb[0].mxu0
      %6566 = vmatprep.mubr.f32.mxu0 %v5892
      %6567 = vmatmul.mubr.f32.gmra.mrb[0].mxu0 %v5891
      %v6568 = vpop.f32.mrb[0].mxu0
      %v6569 = vadd.f32 %v6475, %v6568
      %v6570 = vpop.f32.mrb[0].mxu0
      %6571 = vmatprep.mubr.f32.mxu0 %v5901
      %6572 = vmatmul.mubr.f32.gmra.mrb[0].mxu0 %v5900
      %v6573 = vpop.f32.mrb[0].mxu0
      %v6574 = vadd.f32 %v6475, %v6573
      %v6575 = vpop.f32.mrb[0].mxu0
      %6576 = vmatprep.mubr.f32.mxu0 %v5910
      %6577 = vmatmul.mubr.f32.gmra.mrb[0].mxu0 %v5909
      %v6578 = vpop.f32.mrb[0].mxu0
      %v6579 = vadd.f32 %v6475, %v6578
      %v6580 = vpop.f32.mrb[0].mxu0
      %6581 = vmatprep.mubr.f32.mxu0 %v5919
      %6582 = vmatmul.mubr.f32.gmra.mrb[0].mxu0 %v5918
      %v6583 = vpop.f32.mrb[0].mxu0
      %v6584 = vadd.f32 %v6475, %v6583
      %v6585 = vpop.f32.mrb[0].mxu0
      %6586 = vmatprep.mubr.f32.mxu0 %v5928
      %6587 = vmatmul.mubr.f32.gmra.mrb[0].mxu0 %v5927
      %v6588 = vpop.f32.mrb[0].mxu0
      %v6589 = vadd.f32 %v6475, %v6588
      %v6590 = vpop.f32.mrb[0].mxu0
      %6591 = vmatprep.mubr.f32.mxu0 %v5937
      %6592 = vmatmul.mubr.f32.gmra.mrb[0].mxu0 %v5936
      %v6593 = vpop.f32.mrb[0].mxu0
      %v6594 = vadd.f32 %v6475, %v6593
      %v6595 = vpop.f32.mrb[0].mxu0
      %6596 = vmatprep.mubr.f32.mxu0 %v5946
      %6597 = vmatmul.mubr.f32.gmra.mrb[0].mxu0 %v5945
      %v6598 = vpop.f32.mrb[0].mxu0
      %v6599 = vadd.f32 %v6475, %v6598
      %v6600 = vpop.f32.mrb[0].mxu0
      %6601 = vmatprep.mubr.f32.mxu0 %v5955
      %6602 = vmatmul.mubr.f32.gmra.mrb[0].mxu0 %v5954
      %v6603 = vpop.f32.mrb[0].mxu0
      %v6604 = vadd.f32 %v6475, %v6603
      %v6605 = vpop.f32.mrb[0].mxu0
      %6606 = vmatprep.mubr.f32.mxu0 %v5964
      %6607 = vmatmul.mubr.f32.gmra.mrb[0].mxu0 %v5963
      %v6608 = vpop.f32.mrb[0].mxu0
      %v6609 = vadd.f32 %v6475, %v6608
      %v6610 = vpop.f32.mrb[0].mxu0
      %6611 = vmatprep.mubr.f32.mxu0 %v5973
      %6612 = vmatmul.mubr.f32.gmra.mrb[0].mxu0 %v5972
      %v6613 = vpop.f32.mrb[0].mxu0
      %v6614 = vadd.f32 %v6475, %v6613
      %v6615 = vpop.f32.mrb[0].mxu0
      %6616 = vmatprep.mubr.f32.mxu0 %v5982
      %6617 = vmatmul.mubr.f32.gmra.mrb[0].mxu0 %v5981
      %v6618 = vpop.f32.mrb[0].mxu0
      %v6619 = vadd.f32 %v6475, %v6618
      %v6620 = vpop.f32.mrb[0].mxu0
      %6621 = vmatprep.mubr.f32.mxu0 %v5991
      %6622 = vmatmul.mubr.f32.gmra.mrb[0].mxu0 %v5990
      %v6623 = vpop.f32.mrb[0].mxu0
      %v6624 = vadd.f32 %v6475, %v6623
      %v6625 = vpop.f32.mrb[0].mxu0
      %6626 = vmatprep.mubr.f32.mxu0 %v6000
      %6627 = vmatmul.mubr.f32.gmra.mrb[0].mxu0 %v5999
      %v6628 = vpop.f32.mrb[0].mxu0
      %v6629 = vadd.f32 %v6475, %v6628
      %v6630 = vpop.f32.mrb[0].mxu0
      %6631 = vmatprep.mubr.f32.mxu0 %v6009
      %6632 = vmatmul.mubr.f32.gmra.mrb[0].mxu0 %v6008
      %v6633 = vpop.f32.mrb[0].mxu0
      %v6634 = vadd.f32 %v6475, %v6633
      %v6635 = vpop.f32.mrb[0].mxu0
      %6636 = vmatprep.mubr.f32.mxu0 %v6018
      %6637 = vmatmul.mubr.f32.gmra.mrb[0].mxu0 %v6017
      %v6638 = vpop.f32.mrb[0].mxu0
      %v6639 = vadd.f32 %v6475, %v6638
      %v6640 = vpop.f32.mrb[0].mxu0
      %6641 = vmatprep.mubr.f32.mxu0 %v6027
      %6642 = vmatmul.mubr.f32.gmra.mrb[0].mxu0 %v6026
      %v6643 = vpop.f32.mrb[0].mxu0
      %v6644 = vadd.f32 %v6475, %v6643
      %v6645 = vpop.f32.mrb[0].mxu0
      %6646 = vmatprep.mubr.f32.mxu0 %v6036
      %6647 = vmatmul.mubr.f32.gmra.mrb[0].mxu0 %v6035
      %v6648 = vpop.f32.mrb[0].mxu0
      %v6649 = vadd.f32 %v6475, %v6648
      %v6650 = vpop.f32.mrb[0].mxu0
      %6651 = vmatprep.mubr.f32.mxu0 %v6045
      %6652 = vmatmul.mubr.f32.gmra.mrb[0].mxu0 %v6044
      %v6653 = vpop.f32.mrb[0].mxu0
      %v6654 = vadd.f32 %v6475, %v6653
      %v6655 = vpop.f32.mrb[0].mxu0
      %6656 = vmatprep.mubr.f32.mxu0 %v6054
      %6657 = vmatmul.mubr.f32.gmra.mrb[0].mxu0 %v6053
      %v6658 = vpop.f32.mrb[0].mxu0
      %v6659 = vadd.f32 %v6475, %v6658
      %v6660 = vpop.f32.mrb[0].mxu0
      %6661 = vmatprep.mubr.f32.mxu0 %v6063
      %6662 = vmatmul.mubr.f32.gmra.mrb[0].mxu0 %v6062
      %v6663 = vpop.f32.mrb[0].mxu0
      %v6664 = vadd.f32 %v6475, %v6663
      %v6665 = vpop.f32.mrb[0].mxu0
      %6666 = vmatprep.mubr.f32.mxu0 %v6072
      %6667 = vmatmul.mubr.f32.gmra.mrb[0].mxu0 %v6071
      %v6668 = vpop.f32.mrb[0].mxu0
      %v6669 = vadd.f32 %v6475, %v6668
      %v6670 = vpop.f32.mrb[0].mxu0
      %6671 = vmatprep.mubr.f32.mxu0 %v6081
      %6672 = vmatmul.mubr.f32.gmra.mrb[0].mxu0 %v6080
      %v6673 = vpop.f32.mrb[0].mxu0
      %v6674 = vadd.f32 %v6475, %v6673
      %v6675 = vpop.f32.mrb[0].mxu0
      %6676 = vmatprep.mubr.f32.mxu0 %v6090
      %6677 = vmatmul.mubr.f32.gmra.mrb[0].mxu0 %v6089
      %v6678 = vpop.f32.mrb[0].mxu0
      %v6679 = vadd.f32 %v6475, %v6678
      %v6680 = vpop.f32.mrb[0].mxu0
      %6681 = vmatprep.mubr.f32.mxu0 %v6099
      %6682 = vmatmul.mubr.f32.gmra.mrb[0].mxu0 %v6098
      %v6683 = vpop.f32.mrb[0].mxu0
      %v6684 = vadd.f32 %v6475, %v6683
      %v6685 = vpop.f32.mrb[0].mxu0
      %6686 = vmatprep.mubr.f32.mxu0 %v6108
      %6687 = vmatmul.mubr.f32.gmra.mrb[0].mxu0 %v6107
      %v6688 = vpop.f32.mrb[0].mxu0
      %v6689 = vadd.f32 %v6475, %v6688
      %v6690 = vpop.f32.mrb[0].mxu0
      %6691 = vmatprep.mubr.f32.mxu0 %v6117
      %6692 = vmatmul.mubr.f32.gmra.mrb[0].mxu0 %v6116
      %v6693 = vpop.f32.mrb[0].mxu0
      %v6694 = vadd.f32 %v6475, %v6693
      %v6695 = vpop.f32.mrb[0].mxu0
      %6696 = vmatprep.mubr.f32.mxu0 %v6126
      %6697 = vmatmul.mubr.f32.gmra.mrb[0].mxu0 %v6125
      %v6698 = vpop.f32.mrb[0].mxu0
      %v6699 = vadd.f32 %v6475, %v6698
      %v6700 = vpop.f32.mrb[0].mxu0
      %6701 = vmatprep.mubr.f32.mxu0 %v6135
      %6702 = vmatmul.mubr.f32.gmra.mrb[0].mxu0 %v6134
      %v6703 = vpop.f32.mrb[0].mxu0
      %v6704 = vadd.f32 %v6475, %v6703
      %v6705 = vpop.f32.mrb[0].mxu0
      %6706 = vmatprep.mubr.f32.mxu0 %v6144
      %6707 = vmatmul.mubr.f32.gmra.mrb[0].mxu0 %v6143
      %v6708 = vpop.f32.mrb[0].mxu0
      %v6709 = vadd.f32 %v6475, %v6708
      %v6710 = vpop.f32.mrb[0].mxu0
      %6711 = vmatprep.mubr.f32.mxu0 %v6153
      %6712 = vmatmul.mubr.f32.gmra.mrb[0].mxu0 %v6152
      %v6713 = vpop.f32.mrb[0].mxu0
      %v6714 = vadd.f32 %v6475, %v6713
      %v6715 = vpop.f32.mrb[0].mxu0
      %6716 = vmatprep.mubr.f32.mxu0 %v6162
      %6717 = vmatmul.mubr.f32.gmra.mrb[0].mxu0 %v6161
      %v6718 = vpop.f32.mrb[0].mxu0
      %v6719 = vadd.f32 %v6475, %v6718
      %v6720 = vpop.f32.mrb[0].mxu0
      %6721 = vmatprep.mubr.f32.mxu0 %v6171
      %6722 = vmatmul.mubr.f32.gmra.mrb[0].mxu0 %v6170
      %v6723 = vpop.f32.mrb[0].mxu0
      %v6724 = vadd.f32 %v6475, %v6723
      %v6725 = vpop.f32.mrb[0].mxu0
      %6726 = vmatprep.mubr.f32.mxu0 %v6180
      %6727 = vmatmul.mubr.f32.gmra.mrb[0].mxu0 %v6179
      %v6728 = vpop.f32.mrb[0].mxu0
      %v6729 = vadd.f32 %v6475, %v6728
      %v6730 = vpop.f32.mrb[0].mxu0
      %6731 = vmatprep.mubr.f32.mxu0 %v6189
      %6732 = vmatmul.mubr.f32.gmra.mrb[0].mxu0 %v6188
      %v6733 = vpop.f32.mrb[0].mxu0
      %v6734 = vadd.f32 %v6475, %v6733
      %v6735 = vpop.f32.mrb[0].mxu0
      %6736 = vmatprep.mubr.f32.mxu0 %v6198
      %6737 = vmatmul.mubr.f32.gmra.mrb[0].mxu0 %v6197
      %v6738 = vpop.f32.mrb[0].mxu0
      %v6739 = vadd.f32 %v6475, %v6738
      %v6740 = vpop.f32.mrb[0].mxu0
      %6741 = vmatprep.mubr.f32.mxu0 %v6207
      %6742 = vmatmul.mubr.f32.gmra.mrb[0].mxu0 %v6206
      %v6743 = vpop.f32.mrb[0].mxu0
      %v6744 = vadd.f32 %v6475, %v6743
      %v6745 = vpop.f32.mrb[0].mxu0
      %6746 = vmatprep.mubr.f32.mxu0 %v6216
      %6747 = vmatmul.mubr.f32.gmra.mrb[0].mxu0 %v6215
      %v6748 = vpop.f32.mrb[0].mxu0
      %v6749 = vadd.f32 %v6475, %v6748
      %v6750 = vpop.f32.mrb[0].mxu0
      %6751 = vmatprep.mubr.f32.mxu0 %v6225
      %6752 = vmatmul.mubr.f32.gmra.mrb[0].mxu0 %v6224
      %v6753 = vpop.f32.mrb[0].mxu0
      %v6754 = vadd.f32 %v6475, %v6753
      %v6755 = vpop.f32.mrb[0].mxu0
      %6756 = vmatprep.mubr.f32.mxu0 %v6234
      %6757 = vmatmul.mubr.f32.gmra.mrb[0].mxu0 %v6233
      %v6758 = vpop.f32.mrb[0].mxu0
      %v6759 = vadd.f32 %v6475, %v6758
      %v6760 = vpop.f32.mrb[0].mxu0
      %6761 = vmatprep.mubr.f32.mxu0 %v6243
      %6762 = vmatmul.mubr.f32.gmra.mrb[0].mxu0 %v6242
      %v6763 = vpop.f32.mrb[0].mxu0
      %v6764 = vadd.f32 %v6475, %v6763
      %v6765 = vpop.f32.mrb[0].mxu0
      %6766 = vmatprep.mubr.f32.mxu0 %v6252
      %6767 = vmatmul.mubr.f32.gmra.mrb[0].mxu0 %v6251
      %v6768 = vpop.f32.mrb[0].mxu0
      %v6769 = vadd.f32 %v6475, %v6768
      %v6770 = vpop.f32.mrb[0].mxu0
      %6771 = vmatprep.mubr.f32.mxu0 %v6261
      %6772 = vmatmul.mubr.f32.gmra.mrb[0].mxu0 %v6260
      %v6773 = vpop.f32.mrb[0].mxu0
      %v6774 = vadd.f32 %v6475, %v6773
      %v6775 = vpop.f32.mrb[0].mxu0
      %6776 = vmatprep.mubr.f32.mxu0 %v6270
      %6777 = vmatmul.mubr.f32.gmra.mrb[0].mxu0 %v6269
      %v6778 = vpop.f32.mrb[0].mxu0
      %v6779 = vadd.f32 %v6475, %v6778
      %v6780 = vpop.f32.mrb[0].mxu0
      %6781 = vdwg.mxu0
      %6782 = vmatprep.subr.mxu0 0.0
      %6783 = vmatpush1.msra.mxu0 %v6310
      %6784 = vmatprep.subr.mxu0 0.0
      %6785 = vmatpush1.msra.mxu0 %v6311
      %6786 = vmatprep.subr.mxu0 0.0
      %6787 = vmatpush1.msra.mxu0 %v6312
      %6788 = vmatprep.subr.mxu0 0.0
      %6789 = vmatpush1.msra.mxu0 %v6313
      %6790 = vmatprep.subr.mxu0 0.0
      %6791 = vmatpush1.msra.mxu0 %v6314
      %6792 = vmatprep.subr.mxu0 0.0
      %6793 = vmatpush1.msra.mxu0 %v6315
      %6794 = vmatprep.subr.mxu0 0.0
      %6795 = vmatpush1.msra.mxu0 %v6316
      %6796 = vmatprep.subr.mxu0 0.0
      %6797 = vmatpush1.msra.mxu0 %v6317
      %6798 = vmatprep.subr.mxu0 0.0
      %6799 = vmatpush1.msra.mxu0 %v6318
      %6800 = vmatprep.subr.mxu0 0.0
      %6801 = vmatpush1.msra.mxu0 %v6319
      %6802 = vmatprep.subr.mxu0 0.0
      %6803 = vmatpush1.msra.mxu0 %v6320
      %6804 = vmatprep.subr.mxu0 0.0
      %6805 = vmatpush1.msra.mxu0 %v6321
      %6806 = vmatprep.subr.mxu0 0.0
      %6807 = vmatpush1.msra.mxu0 %v6322
      %6808 = vmatprep.subr.mxu0 0.0
      %6809 = vmatpush1.msra.mxu0 %v6323
      %6810 = vmatprep.subr.mxu0 0.0
      %6811 = vmatpush1.msra.mxu0 %v6324
      %6812 = vmatprep.subr.mxu0 0.0
      %6813 = vmatpush1.msra.mxu0 %v6325
      %6814 = vmatprep.subr.mxu0 0.0
      %6815 = vmatpush1.msra.mxu0 %v6326
      %6816 = vmatprep.subr.mxu0 0.0
      %6817 = vmatpush1.msra.mxu0 %v6327
      %6818 = vmatprep.subr.mxu0 0.0
      %6819 = vmatpush1.msra.mxu0 %v6328
      %6820 = vmatprep.subr.mxu0 0.0
      %6821 = vmatpush1.msra.mxu0 %v6329
      %6822 = vmatprep.subr.mxu0 0.0
      %6823 = vmatpush1.msra.mxu0 %v6330
      %6824 = vmatprep.subr.mxu0 0.0
      %6825 = vmatpush1.msra.mxu0 %v6331
      %6826 = vmatprep.subr.mxu0 0.0
      %6827 = vmatpush1.msra.mxu0 %v6332
      %6828 = vmatprep.subr.mxu0 0.0
      %6829 = vmatpush1.msra.mxu0 %v6333
      %6830 = vmatprep.subr.mxu0 0.0
      %6831 = vmatpush1.msra.mxu0 %v6334
      %6832 = vmatprep.subr.mxu0 0.0
      %6833 = vmatpush1.msra.mxu0 %v6335
      %6834 = vmatprep.subr.mxu0 0.0
      %6835 = vmatpush1.msra.mxu0 %v6336
      %6836 = vmatprep.subr.mxu0 0.0
      %6837 = vmatpush1.msra.mxu0 %v6337
      %6838 = vmatprep.subr.mxu0 0.0
      %6839 = vmatpush1.msra.mxu0 %v6338
      %6840 = vmatprep.subr.mxu0 0.0
      %6841 = vmatpush1.msra.mxu0 %v6339
      %6842 = vmatprep.subr.mxu0 0.0
      %6843 = vmatpush1.msra.mxu0 %v6340
      %6844 = vmatprep.subr.mxu0 0.0
      %6845 = vmatpush1.msra.mxu0 %v6341
      %6846 = vmatprep.mubr.f32.mxu0 %v5849
      %6847 = vmatmul.mubr.f32.gmra.mrb[0].mxu0 %v5848
      %v6848 = vpop.f32.mrb[0].mxu0
      %v6849 = vadd.f32 %v6544, %v6848
      %v6850 = vpop.f32.mrb[0].mxu0
      %6851 = vmatprep.mubr.f32.mxu0 %v5858
      %6852 = vmatmul.mubr.f32.gmra.mrb[0].mxu0 %v5857
      %v6853 = vpop.f32.mrb[0].mxu0
      %v6854 = vadd.f32 %v6549, %v6853
      %v6855 = vpop.f32.mrb[0].mxu0
      %6856 = vmatprep.mubr.f32.mxu0 %v5867
      %6857 = vmatmul.mubr.f32.gmra.mrb[0].mxu0 %v5866
      %v6858 = vpop.f32.mrb[0].mxu0
      %v6859 = vadd.f32 %v6554, %v6858
      %v6860 = vpop.f32.mrb[0].mxu0
      %6861 = vmatprep.mubr.f32.mxu0 %v5876
      %6862 = vmatmul.mubr.f32.gmra.mrb[0].mxu0 %v5875
      %v6863 = vpop.f32.mrb[0].mxu0
      %v6864 = vadd.f32 %v6559, %v6863
      %v6865 = vpop.f32.mrb[0].mxu0
      %6866 = vmatprep.mubr.f32.mxu0 %v5885
      %6867 = vmatmul.mubr.f32.gmra.mrb[0].mxu0 %v5884
      %v6868 = vpop.f32.mrb[0].mxu0
      %v6869 = vadd.f32 %v6564, %v6868
      %v6870 = vpop.f32.mrb[0].mxu0
      %6871 = vmatprep.mubr.f32.mxu0 %v5894
      %6872 = vmatmul.mubr.f32.gmra.mrb[0].mxu0 %v5893
      %v6873 = vpop.f32.mrb[0].mxu0
      %v6874 = vadd.f32 %v6569, %v6873
      %v6875 = vpop.f32.mrb[0].mxu0
      %6876 = vmatprep.mubr.f32.mxu0 %v5903
      %6877 = vmatmul.mubr.f32.gmra.mrb[0].mxu0 %v5902
      %v6878 = vpop.f32.mrb[0].mxu0
      %v6879 = vadd.f32 %v6574, %v6878
      %v6880 = vpop.f32.mrb[0].mxu0
      %6881 = vmatprep.mubr.f32.mxu0 %v5912
      %6882 = vmatmul.mubr.f32.gmra.mrb[0].mxu0 %v5911
      %v6883 = vpop.f32.mrb[0].mxu0
      %v6884 = vadd.f32 %v6579, %v6883
      %v6885 = vpop.f32.mrb[0].mxu0
      %6886 = vmatprep.mubr.f32.mxu0 %v5921
      %6887 = vmatmul.mubr.f32.gmra.mrb[0].mxu0 %v5920
      %v6888 = vpop.f32.mrb[0].mxu0
      %v6889 = vadd.f32 %v6584, %v6888
      %v6890 = vpop.f32.mrb[0].mxu0
      %6891 = vmatprep.mubr.f32.mxu0 %v5930
      %6892 = vmatmul.mubr.f32.gmra.mrb[0].mxu0 %v5929
      %v6893 = vpop.f32.mrb[0].mxu0
      %v6894 = vadd.f32 %v6589, %v6893
      %v6895 = vpop.f32.mrb[0].mxu0
      %6896 = vmatprep.mubr.f32.mxu0 %v5939
      %6897 = vmatmul.mubr.f32.gmra.mrb[0].mxu0 %v5938
      %v6898 = vpop.f32.mrb[0].mxu0
      %v6899 = vadd.f32 %v6594, %v6898
      %v6900 = vpop.f32.mrb[0].mxu0
      %6901 = vmatprep.mubr.f32.mxu0 %v5948
      %6902 = vmatmul.mubr.f32.gmra.mrb[0].mxu0 %v5947
      %v6903 = vpop.f32.mrb[0].mxu0
      %v6904 = vadd.f32 %v6599, %v6903
      %v6905 = vpop.f32.mrb[0].mxu0
      %6906 = vmatprep.mubr.f32.mxu0 %v5957
      %6907 = vmatmul.mubr.f32.gmra.mrb[0].mxu0 %v5956
      %v6908 = vpop.f32.mrb[0].mxu0
      %v6909 = vadd.f32 %v6604, %v6908
      %v6910 = vpop.f32.mrb[0].mxu0
      %6911 = vmatprep.mubr.f32.mxu0 %v5966
      %6912 = vmatmul.mubr.f32.gmra.mrb[0].mxu0 %v5965
      %v6913 = vpop.f32.mrb[0].mxu0
      %v6914 = vadd.f32 %v6609, %v6913
      %v6915 = vpop.f32.mrb[0].mxu0
      %6916 = vmatprep.mubr.f32.mxu0 %v5975
      %6917 = vmatmul.mubr.f32.gmra.mrb[0].mxu0 %v5974
      %v6918 = vpop.f32.mrb[0].mxu0
      %v6919 = vadd.f32 %v6614, %v6918
      %v6920 = vpop.f32.mrb[0].mxu0
      %6921 = vmatprep.mubr.f32.mxu0 %v5984
      %6922 = vmatmul.mubr.f32.gmra.mrb[0].mxu0 %v5983
      %v6923 = vpop.f32.mrb[0].mxu0
      %v6924 = vadd.f32 %v6619, %v6923
      %v6925 = vpop.f32.mrb[0].mxu0
      %6926 = vmatprep.mubr.f32.mxu0 %v5993
      %6927 = vmatmul.mubr.f32.gmra.mrb[0].mxu0 %v5992
      %v6928 = vpop.f32.mrb[0].mxu0
      %v6929 = vadd.f32 %v6624, %v6928
      %v6930 = vpop.f32.mrb[0].mxu0
      %6931 = vmatprep.mubr.f32.mxu0 %v6002
      %6932 = vmatmul.mubr.f32.gmra.mrb[0].mxu0 %v6001
      %v6933 = vpop.f32.mrb[0].mxu0
      %v6934 = vadd.f32 %v6629, %v6933
      %v6935 = vpop.f32.mrb[0].mxu0
      %6936 = vmatprep.mubr.f32.mxu0 %v6011
      %6937 = vmatmul.mubr.f32.gmra.mrb[0].mxu0 %v6010
      %v6938 = vpop.f32.mrb[0].mxu0
      %v6939 = vadd.f32 %v6634, %v6938
      %v6940 = vpop.f32.mrb[0].mxu0
      %6941 = vmatprep.mubr.f32.mxu0 %v6020
      %6942 = vmatmul.mubr.f32.gmra.mrb[0].mxu0 %v6019
      %v6943 = vpop.f32.mrb[0].mxu0
      %v6944 = vadd.f32 %v6639, %v6943
      %v6945 = vpop.f32.mrb[0].mxu0
      %6946 = vmatprep.mubr.f32.mxu0 %v6029
      %6947 = vmatmul.mubr.f32.gmra.mrb[0].mxu0 %v6028
      %v6948 = vpop.f32.mrb[0].mxu0
      %v6949 = vadd.f32 %v6644, %v6948
      %v6950 = vpop.f32.mrb[0].mxu0
      %6951 = vmatprep.mubr.f32.mxu0 %v6038
      %6952 = vmatmul.mubr.f32.gmra.mrb[0].mxu0 %v6037
      %v6953 = vpop.f32.mrb[0].mxu0
      %v6954 = vadd.f32 %v6649, %v6953
      %v6955 = vpop.f32.mrb[0].mxu0
      %6956 = vmatprep.mubr.f32.mxu0 %v6047
      %6957 = vmatmul.mubr.f32.gmra.mrb[0].mxu0 %v6046
      %v6958 = vpop.f32.mrb[0].mxu0
      %v6959 = vadd.f32 %v6654, %v6958
      %v6960 = vpop.f32.mrb[0].mxu0
      %6961 = vmatprep.mubr.f32.mxu0 %v6056
      %6962 = vmatmul.mubr.f32.gmra.mrb[0].mxu0 %v6055
      %v6963 = vpop.f32.mrb[0].mxu0
      %v6964 = vadd.f32 %v6659, %v6963
      %v6965 = vpop.f32.mrb[0].mxu0
      %6966 = vmatprep.mubr.f32.mxu0 %v6065
      %6967 = vmatmul.mubr.f32.gmra.mrb[0].mxu0 %v6064
      %v6968 = vpop.f32.mrb[0].mxu0
      %v6969 = vadd.f32 %v6664, %v6968
      %v6970 = vpop.f32.mrb[0].mxu0
      %6971 = vmatprep.mubr.f32.mxu0 %v6074
      %6972 = vmatmul.mubr.f32.gmra.mrb[0].mxu0 %v6073
      %v6973 = vpop.f32.mrb[0].mxu0
      %v6974 = vadd.f32 %v6669, %v6973
      %v6975 = vpop.f32.mrb[0].mxu0
      %6976 = vmatprep.mubr.f32.mxu0 %v6083
      %6977 = vmatmul.mubr.f32.gmra.mrb[0].mxu0 %v6082
      %v6978 = vpop.f32.mrb[0].mxu0
      %v6979 = vadd.f32 %v6674, %v6978
      %v6980 = vpop.f32.mrb[0].mxu0
      %6981 = vmatprep.mubr.f32.mxu0 %v6092
      %6982 = vmatmul.mubr.f32.gmra.mrb[0].mxu0 %v6091
      %v6983 = vpop.f32.mrb[0].mxu0
      %v6984 = vadd.f32 %v6679, %v6983
      %v6985 = vpop.f32.mrb[0].mxu0
      %6986 = vmatprep.mubr.f32.mxu0 %v6101
      %6987 = vmatmul.mubr.f32.gmra.mrb[0].mxu0 %v6100
      %v6988 = vpop.f32.mrb[0].mxu0
      %v6989 = vadd.f32 %v6684, %v6988
      %v6990 = vpop.f32.mrb[0].mxu0
      %6991 = vmatprep.mubr.f32.mxu0 %v6110
      %6992 = vmatmul.mubr.f32.gmra.mrb[0].mxu0 %v6109
      %v6993 = vpop.f32.mrb[0].mxu0
      %v6994 = vadd.f32 %v6689, %v6993
      %v6995 = vpop.f32.mrb[0].mxu0
      %6996 = vmatprep.mubr.f32.mxu0 %v6119
      %6997 = vmatmul.mubr.f32.gmra.mrb[0].mxu0 %v6118
      %v6998 = vpop.f32.mrb[0].mxu0
      %v6999 = vadd.f32 %v6694, %v6998
      %v7000 = vpop.f32.mrb[0].mxu0
      %7001 = vmatprep.mubr.f32.mxu0 %v6128
      %7002 = vmatmul.mubr.f32.gmra.mrb[0].mxu0 %v6127
      %v7003 = vpop.f32.mrb[0].mxu0
      %v7004 = vadd.f32 %v6699, %v7003
      %v7005 = vpop.f32.mrb[0].mxu0
      %7006 = vmatprep.mubr.f32.mxu0 %v6137
      %7007 = vmatmul.mubr.f32.gmra.mrb[0].mxu0 %v6136
      %v7008 = vpop.f32.mrb[0].mxu0
      %v7009 = vadd.f32 %v6704, %v7008
      %v7010 = vpop.f32.mrb[0].mxu0
      %7011 = vmatprep.mubr.f32.mxu0 %v6146
      %7012 = vmatmul.mubr.f32.gmra.mrb[0].mxu0 %v6145
      %v7013 = vpop.f32.mrb[0].mxu0
      %v7014 = vadd.f32 %v6709, %v7013
      %v7015 = vpop.f32.mrb[0].mxu0
      %7016 = vmatprep.mubr.f32.mxu0 %v6155
      %7017 = vmatmul.mubr.f32.gmra.mrb[0].mxu0 %v6154
      %v7018 = vpop.f32.mrb[0].mxu0
      %v7019 = vadd.f32 %v6714, %v7018
      %v7020 = vpop.f32.mrb[0].mxu0
      %7021 = vmatprep.mubr.f32.mxu0 %v6164
      %7022 = vmatmul.mubr.f32.gmra.mrb[0].mxu0 %v6163
      %v7023 = vpop.f32.mrb[0].mxu0
      %v7024 = vadd.f32 %v6719, %v7023
      %v7025 = vpop.f32.mrb[0].mxu0
      %7026 = vmatprep.mubr.f32.mxu0 %v6173
      %7027 = vmatmul.mubr.f32.gmra.mrb[0].mxu0 %v6172
      %v7028 = vpop.f32.mrb[0].mxu0
      %v7029 = vadd.f32 %v6724, %v7028
      %v7030 = vpop.f32.mrb[0].mxu0
      %7031 = vmatprep.mubr.f32.mxu0 %v6182
      %7032 = vmatmul.mubr.f32.gmra.mrb[0].mxu0 %v6181
      %v7033 = vpop.f32.mrb[0].mxu0
      %v7034 = vadd.f32 %v6729, %v7033
      %v7035 = vpop.f32.mrb[0].mxu0
      %7036 = vmatprep.mubr.f32.mxu0 %v6191
      %7037 = vmatmul.mubr.f32.gmra.mrb[0].mxu0 %v6190
      %v7038 = vpop.f32.mrb[0].mxu0
      %v7039 = vadd.f32 %v6734, %v7038
      %v7040 = vpop.f32.mrb[0].mxu0
      %7041 = vmatprep.mubr.f32.mxu0 %v6200
      %7042 = vmatmul.mubr.f32.gmra.mrb[0].mxu0 %v6199
      %v7043 = vpop.f32.mrb[0].mxu0
      %v7044 = vadd.f32 %v6739, %v7043
      %v7045 = vpop.f32.mrb[0].mxu0
      %7046 = vmatprep.mubr.f32.mxu0 %v6209
      %7047 = vmatmul.mubr.f32.gmra.mrb[0].mxu0 %v6208
      %v7048 = vpop.f32.mrb[0].mxu0
      %v7049 = vadd.f32 %v6744, %v7048
      %v7050 = vpop.f32.mrb[0].mxu0
      %7051 = vmatprep.mubr.f32.mxu0 %v6218
      %7052 = vmatmul.mubr.f32.gmra.mrb[0].mxu0 %v6217
      %v7053 = vpop.f32.mrb[0].mxu0
      %v7054 = vadd.f32 %v6749, %v7053
      %v7055 = vpop.f32.mrb[0].mxu0
      %7056 = vmatprep.mubr.f32.mxu0 %v6227
      %7057 = vmatmul.mubr.f32.gmra.mrb[0].mxu0 %v6226
      %v7058 = vpop.f32.mrb[0].mxu0
      %v7059 = vadd.f32 %v6754, %v7058
      %v7060 = vpop.f32.mrb[0].mxu0
      %7061 = vmatprep.mubr.f32.mxu0 %v6236
      %7062 = vmatmul.mubr.f32.gmra.mrb[0].mxu0 %v6235
      %v7063 = vpop.f32.mrb[0].mxu0
      %v7064 = vadd.f32 %v6759, %v7063
      %v7065 = vpop.f32.mrb[0].mxu0
      %7066 = vmatprep.mubr.f32.mxu0 %v6245
      %7067 = vmatmul.mubr.f32.gmra.mrb[0].mxu0 %v6244
      %v7068 = vpop.f32.mrb[0].mxu0
      %v7069 = vadd.f32 %v6764, %v7068
      %v7070 = vpop.f32.mrb[0].mxu0
      %7071 = vmatprep.mubr.f32.mxu0 %v6254
      %7072 = vmatmul.mubr.f32.gmra.mrb[0].mxu0 %v6253
      %v7073 = vpop.f32.mrb[0].mxu0
      %v7074 = vadd.f32 %v6769, %v7073
      %v7075 = vpop.f32.mrb[0].mxu0
      %7076 = vmatprep.mubr.f32.mxu0 %v6263
      %7077 = vmatmul.mubr.f32.gmra.mrb[0].mxu0 %v6262
      %v7078 = vpop.f32.mrb[0].mxu0
      %v7079 = vadd.f32 %v6774, %v7078
      %v7080 = vpop.f32.mrb[0].mxu0
      %7081 = vmatprep.mubr.f32.mxu0 %v6272
      %7082 = vmatmul.mubr.f32.gmra.mrb[0].mxu0 %v6271
      %v7083 = vpop.f32.mrb[0].mxu0
      %v7084 = vadd.f32 %v6779, %v7083
      %v7085 = vpop.f32.mrb[0].mxu0
      %7086 = vdwg.mxu0
      %7087 = vmatprep.subr.mxu0 0.0
      %7088 = vmatpush1.msra.mxu0 %v6342
      %7089 = vmatprep.subr.mxu0 0.0
      %7090 = vmatpush1.msra.mxu0 %v6343
      %7091 = vmatprep.subr.mxu0 0.0
      %7092 = vmatpush1.msra.mxu0 %v6344
      %7093 = vmatprep.subr.mxu0 0.0
      %7094 = vmatpush1.msra.mxu0 %v6345
      %7095 = vmatprep.subr.mxu0 0.0
      %7096 = vmatpush1.msra.mxu0 %v6346
      %7097 = vmatprep.subr.mxu0 0.0
      %7098 = vmatpush1.msra.mxu0 %v6347
      %7099 = vmatprep.subr.mxu0 0.0
      %7100 = vmatpush1.msra.mxu0 %v6348
      %7101 = vmatprep.subr.mxu0 0.0
      %7102 = vmatpush1.msra.mxu0 %v6349
      %7103 = vmatprep.subr.mxu0 0.0
      %7104 = vmatpush1.msra.mxu0 %v6350
      %7105 = vmatprep.subr.mxu0 0.0
      %7106 = vmatpush1.msra.mxu0 %v6351
      %7107 = vmatprep.subr.mxu0 0.0
      %7108 = vmatpush1.msra.mxu0 %v6352
      %7109 = vmatprep.subr.mxu0 0.0
      %7110 = vmatpush1.msra.mxu0 %v6353
      %7111 = vmatprep.subr.mxu0 0.0
      %7112 = vmatpush1.msra.mxu0 %v6354
      %7113 = vmatprep.subr.mxu0 0.0
      %7114 = vmatpush1.msra.mxu0 %v6355
      %7115 = vmatprep.subr.mxu0 0.0
      %7116 = vmatpush1.msra.mxu0 %v6356
      %7117 = vmatprep.subr.mxu0 0.0
      %7118 = vmatpush1.msra.mxu0 %v6357
      %7119 = vmatprep.subr.mxu0 0.0
      %7120 = vmatpush1.msra.mxu0 %v6358
      %7121 = vmatprep.subr.mxu0 0.0
      %7122 = vmatpush1.msra.mxu0 %v6359
      %7123 = vmatprep.subr.mxu0 0.0
      %7124 = vmatpush1.msra.mxu0 %v6360
      %7125 = vmatprep.subr.mxu0 0.0
      %7126 = vmatpush1.msra.mxu0 %v6361
      %7127 = vmatprep.subr.mxu0 0.0
      %7128 = vmatpush1.msra.mxu0 %v6362
      %7129 = vmatprep.subr.mxu0 0.0
      %7130 = vmatpush1.msra.mxu0 %v6363
      %7131 = vmatprep.subr.mxu0 0.0
      %7132 = vmatpush1.msra.mxu0 %v6364
      %7133 = vmatprep.subr.mxu0 0.0
      %7134 = vmatpush1.msra.mxu0 %v6365
      %7135 = vmatprep.subr.mxu0 0.0
      %7136 = vmatpush1.msra.mxu0 %v6366
      %7137 = vmatprep.subr.mxu0 0.0
      %7138 = vmatpush1.msra.mxu0 %v6367
      %7139 = vmatprep.subr.mxu0 0.0
      %7140 = vmatpush1.msra.mxu0 %v6368
      %7141 = vmatprep.subr.mxu0 0.0
      %7142 = vmatpush1.msra.mxu0 %v6369
      %7143 = vmatprep.subr.mxu0 0.0
      %7144 = vmatpush1.msra.mxu0 %v6370
      %7145 = vmatprep.subr.mxu0 0.0
      %7146 = vmatpush1.msra.mxu0 %v6371
      %7147 = vmatprep.subr.mxu0 0.0
      %7148 = vmatpush1.msra.mxu0 %v6372
      %7149 = vmatprep.subr.mxu0 0.0
      %7150 = vmatpush1.msra.mxu0 %v6373
      %7151 = vmatprep.mubr.f32.mxu0 %v5851
      %7152 = vmatmul.mubr.f32.gmra.mrb[0].mxu0 %v5850
      %v7153 = vpop.f32.mrb[0].mxu0
      %v7154 = vadd.f32 %v6849, %v7153
      %v7155 = vpop.f32.mrb[0].mxu0
      %7156 = vmatprep.mubr.f32.mxu0 %v5860
      %7157 = vmatmul.mubr.f32.gmra.mrb[0].mxu0 %v5859
      %v7158 = vpop.f32.mrb[0].mxu0
      %v7159 = vadd.f32 %v6854, %v7158
      %v7160 = vpop.f32.mrb[0].mxu0
      %7161 = vmatprep.mubr.f32.mxu0 %v5869
      %7162 = vmatmul.mubr.f32.gmra.mrb[0].mxu0 %v5868
      %v7163 = vpop.f32.mrb[0].mxu0
      %v7164 = vadd.f32 %v6859, %v7163
      %v7165 = vpop.f32.mrb[0].mxu0
      %7166 = vmatprep.mubr.f32.mxu0 %v5878
      %7167 = vmatmul.mubr.f32.gmra.mrb[0].mxu0 %v5877
      %v7168 = vpop.f32.mrb[0].mxu0
      %v7169 = vadd.f32 %v6864, %v7168
      %v7170 = vpop.f32.mrb[0].mxu0
      %7171 = vmatprep.mubr.f32.mxu0 %v5887
      %7172 = vmatmul.mubr.f32.gmra.mrb[0].mxu0 %v5886
      %v7173 = vpop.f32.mrb[0].mxu0
      %v7174 = vadd.f32 %v6869, %v7173
      %v7175 = vpop.f32.mrb[0].mxu0
      %7176 = vmatprep.mubr.f32.mxu0 %v5896
      %7177 = vmatmul.mubr.f32.gmra.mrb[0].mxu0 %v5895
      %v7178 = vpop.f32.mrb[0].mxu0
      %v7179 = vadd.f32 %v6874, %v7178
      %v7180 = vpop.f32.mrb[0].mxu0
      %7181 = vmatprep.mubr.f32.mxu0 %v5905
      %7182 = vmatmul.mubr.f32.gmra.mrb[0].mxu0 %v5904
      %v7183 = vpop.f32.mrb[0].mxu0
      %v7184 = vadd.f32 %v6879, %v7183
      %v7185 = vpop.f32.mrb[0].mxu0
      %7186 = vmatprep.mubr.f32.mxu0 %v5914
      %7187 = vmatmul.mubr.f32.gmra.mrb[0].mxu0 %v5913
      %v7188 = vpop.f32.mrb[0].mxu0
      %v7189 = vadd.f32 %v6884, %v7188
      %v7190 = vpop.f32.mrb[0].mxu0
      %7191 = vmatprep.mubr.f32.mxu0 %v5923
      %7192 = vmatmul.mubr.f32.gmra.mrb[0].mxu0 %v5922
      %v7193 = vpop.f32.mrb[0].mxu0
      %v7194 = vadd.f32 %v6889, %v7193
      %v7195 = vpop.f32.mrb[0].mxu0
      %7196 = vmatprep.mubr.f32.mxu0 %v5932
      %7197 = vmatmul.mubr.f32.gmra.mrb[0].mxu0 %v5931
      %v7198 = vpop.f32.mrb[0].mxu0
      %v7199 = vadd.f32 %v6894, %v7198
      %v7200 = vpop.f32.mrb[0].mxu0
      %7201 = vmatprep.mubr.f32.mxu0 %v5941
      %7202 = vmatmul.mubr.f32.gmra.mrb[0].mxu0 %v5940
      %v7203 = vpop.f32.mrb[0].mxu0
      %v7204 = vadd.f32 %v6899, %v7203
      %v7205 = vpop.f32.mrb[0].mxu0
      %7206 = vmatprep.mubr.f32.mxu0 %v5950
      %7207 = vmatmul.mubr.f32.gmra.mrb[0].mxu0 %v5949
      %v7208 = vpop.f32.mrb[0].mxu0
      %v7209 = vadd.f32 %v6904, %v7208
      %v7210 = vpop.f32.mrb[0].mxu0
      %7211 = vmatprep.mubr.f32.mxu0 %v5959
      %7212 = vmatmul.mubr.f32.gmra.mrb[0].mxu0 %v5958
      %v7213 = vpop.f32.mrb[0].mxu0
      %v7214 = vadd.f32 %v6909, %v7213
      %v7215 = vpop.f32.mrb[0].mxu0
      %7216 = vmatprep.mubr.f32.mxu0 %v5968
      %7217 = vmatmul.mubr.f32.gmra.mrb[0].mxu0 %v5967
      %v7218 = vpop.f32.mrb[0].mxu0
      %v7219 = vadd.f32 %v6914, %v7218
      %v7220 = vpop.f32.mrb[0].mxu0
      %7221 = vmatprep.mubr.f32.mxu0 %v5977
      %7222 = vmatmul.mubr.f32.gmra.mrb[0].mxu0 %v5976
      %v7223 = vpop.f32.mrb[0].mxu0
      %v7224 = vadd.f32 %v6919, %v7223
      %v7225 = vpop.f32.mrb[0].mxu0
      %7226 = vmatprep.mubr.f32.mxu0 %v5986
      %7227 = vmatmul.mubr.f32.gmra.mrb[0].mxu0 %v5985
      %v7228 = vpop.f32.mrb[0].mxu0
      %v7229 = vadd.f32 %v6924, %v7228
      %v7230 = vpop.f32.mrb[0].mxu0
      %7231 = vmatprep.mubr.f32.mxu0 %v5995
      %7232 = vmatmul.mubr.f32.gmra.mrb[0].mxu0 %v5994
      %v7233 = vpop.f32.mrb[0].mxu0
      %v7234 = vadd.f32 %v6929, %v7233
      %v7235 = vpop.f32.mrb[0].mxu0
      %7236 = vmatprep.mubr.f32.mxu0 %v6004
      %7237 = vmatmul.mubr.f32.gmra.mrb[0].mxu0 %v6003
      %v7238 = vpop.f32.mrb[0].mxu0
      %v7239 = vadd.f32 %v6934, %v7238
      %v7240 = vpop.f32.mrb[0].mxu0
      %7241 = vmatprep.mubr.f32.mxu0 %v6013
      %7242 = vmatmul.mubr.f32.gmra.mrb[0].mxu0 %v6012
      %v7243 = vpop.f32.mrb[0].mxu0
      %v7244 = vadd.f32 %v6939, %v7243
      %v7245 = vpop.f32.mrb[0].mxu0
      %7246 = vmatprep.mubr.f32.mxu0 %v6022
      %7247 = vmatmul.mubr.f32.gmra.mrb[0].mxu0 %v6021
      %v7248 = vpop.f32.mrb[0].mxu0
      %v7249 = vadd.f32 %v6944, %v7248
      %v7250 = vpop.f32.mrb[0].mxu0
      %7251 = vmatprep.mubr.f32.mxu0 %v6031
      %7252 = vmatmul.mubr.f32.gmra.mrb[0].mxu0 %v6030
      %v7253 = vpop.f32.mrb[0].mxu0
      %v7254 = vadd.f32 %v6949, %v7253
      %v7255 = vpop.f32.mrb[0].mxu0
      %7256 = vmatprep.mubr.f32.mxu0 %v6040
      %7257 = vmatmul.mubr.f32.gmra.mrb[0].mxu0 %v6039
      %v7258 = vpop.f32.mrb[0].mxu0
      %v7259 = vadd.f32 %v6954, %v7258
      %v7260 = vpop.f32.mrb[0].mxu0
      %7261 = vmatprep.mubr.f32.mxu0 %v6049
      %7262 = vmatmul.mubr.f32.gmra.mrb[0].mxu0 %v6048
      %v7263 = vpop.f32.mrb[0].mxu0
      %v7264 = vadd.f32 %v6959, %v7263
      %v7265 = vpop.f32.mrb[0].mxu0
      %7266 = vmatprep.mubr.f32.mxu0 %v6058
      %7267 = vmatmul.mubr.f32.gmra.mrb[0].mxu0 %v6057
      %v7268 = vpop.f32.mrb[0].mxu0
      %v7269 = vadd.f32 %v6964, %v7268
      %v7270 = vpop.f32.mrb[0].mxu0
      %7271 = vmatprep.mubr.f32.mxu0 %v6067
      %7272 = vmatmul.mubr.f32.gmra.mrb[0].mxu0 %v6066
      %v7273 = vpop.f32.mrb[0].mxu0
      %v7274 = vadd.f32 %v6969, %v7273
      %v7275 = vpop.f32.mrb[0].mxu0
      %7276 = vmatprep.mubr.f32.mxu0 %v6076
      %7277 = vmatmul.mubr.f32.gmra.mrb[0].mxu0 %v6075
      %v7278 = vpop.f32.mrb[0].mxu0
      %v7279 = vadd.f32 %v6974, %v7278
      %v7280 = vpop.f32.mrb[0].mxu0
      %7281 = vmatprep.mubr.f32.mxu0 %v6085
      %7282 = vmatmul.mubr.f32.gmra.mrb[0].mxu0 %v6084
      %v7283 = vpop.f32.mrb[0].mxu0
      %v7284 = vadd.f32 %v6979, %v7283
      %v7285 = vpop.f32.mrb[0].mxu0
      %7286 = vmatprep.mubr.f32.mxu0 %v6094
      %7287 = vmatmul.mubr.f32.gmra.mrb[0].mxu0 %v6093
      %v7288 = vpop.f32.mrb[0].mxu0
      %v7289 = vadd.f32 %v6984, %v7288
      %v7290 = vpop.f32.mrb[0].mxu0
      %7291 = vmatprep.mubr.f32.mxu0 %v6103
      %7292 = vmatmul.mubr.f32.gmra.mrb[0].mxu0 %v6102
      %v7293 = vpop.f32.mrb[0].mxu0
      %v7294 = vadd.f32 %v6989, %v7293
      %v7295 = vpop.f32.mrb[0].mxu0
      %7296 = vmatprep.mubr.f32.mxu0 %v6112
      %7297 = vmatmul.mubr.f32.gmra.mrb[0].mxu0 %v6111
      %v7298 = vpop.f32.mrb[0].mxu0
      %v7299 = vadd.f32 %v6994, %v7298
      %v7300 = vpop.f32.mrb[0].mxu0
      %7301 = vmatprep.mubr.f32.mxu0 %v6121
      %7302 = vmatmul.mubr.f32.gmra.mrb[0].mxu0 %v6120
      %v7303 = vpop.f32.mrb[0].mxu0
      %v7304 = vadd.f32 %v6999, %v7303
      %v7305 = vpop.f32.mrb[0].mxu0
      %7306 = vmatprep.mubr.f32.mxu0 %v6130
      %7307 = vmatmul.mubr.f32.gmra.mrb[0].mxu0 %v6129
      %v7308 = vpop.f32.mrb[0].mxu0
      %v7309 = vadd.f32 %v7004, %v7308
      %v7310 = vpop.f32.mrb[0].mxu0
      %7311 = vmatprep.mubr.f32.mxu0 %v6139
      %7312 = vmatmul.mubr.f32.gmra.mrb[0].mxu0 %v6138
      %v7313 = vpop.f32.mrb[0].mxu0
      %v7314 = vadd.f32 %v7009, %v7313
      %v7315 = vpop.f32.mrb[0].mxu0
      %7316 = vmatprep.mubr.f32.mxu0 %v6148
      %7317 = vmatmul.mubr.f32.gmra.mrb[0].mxu0 %v6147
      %v7318 = vpop.f32.mrb[0].mxu0
      %v7319 = vadd.f32 %v7014, %v7318
      %v7320 = vpop.f32.mrb[0].mxu0
      %7321 = vmatprep.mubr.f32.mxu0 %v6157
      %7322 = vmatmul.mubr.f32.gmra.mrb[0].mxu0 %v6156
      %v7323 = vpop.f32.mrb[0].mxu0
      %v7324 = vadd.f32 %v7019, %v7323
      %v7325 = vpop.f32.mrb[0].mxu0
      %7326 = vmatprep.mubr.f32.mxu0 %v6166
      %7327 = vmatmul.mubr.f32.gmra.mrb[0].mxu0 %v6165
      %v7328 = vpop.f32.mrb[0].mxu0
      %v7329 = vadd.f32 %v7024, %v7328
      %v7330 = vpop.f32.mrb[0].mxu0
      %7331 = vmatprep.mubr.f32.mxu0 %v6175
      %7332 = vmatmul.mubr.f32.gmra.mrb[0].mxu0 %v6174
      %v7333 = vpop.f32.mrb[0].mxu0
      %v7334 = vadd.f32 %v7029, %v7333
      %v7335 = vpop.f32.mrb[0].mxu0
      %7336 = vmatprep.mubr.f32.mxu0 %v6184
      %7337 = vmatmul.mubr.f32.gmra.mrb[0].mxu0 %v6183
      %v7338 = vpop.f32.mrb[0].mxu0
      %v7339 = vadd.f32 %v7034, %v7338
      %v7340 = vpop.f32.mrb[0].mxu0
      %7341 = vmatprep.mubr.f32.mxu0 %v6193
      %7342 = vmatmul.mubr.f32.gmra.mrb[0].mxu0 %v6192
      %v7343 = vpop.f32.mrb[0].mxu0
      %v7344 = vadd.f32 %v7039, %v7343
      %v7345 = vpop.f32.mrb[0].mxu0
      %7346 = vmatprep.mubr.f32.mxu0 %v6202
      %7347 = vmatmul.mubr.f32.gmra.mrb[0].mxu0 %v6201
      %v7348 = vpop.f32.mrb[0].mxu0
      %v7349 = vadd.f32 %v7044, %v7348
      %v7350 = vpop.f32.mrb[0].mxu0
      %7351 = vmatprep.mubr.f32.mxu0 %v6211
      %7352 = vmatmul.mubr.f32.gmra.mrb[0].mxu0 %v6210
      %v7353 = vpop.f32.mrb[0].mxu0
      %v7354 = vadd.f32 %v7049, %v7353
      %v7355 = vpop.f32.mrb[0].mxu0
      %7356 = vmatprep.mubr.f32.mxu0 %v6220
      %7357 = vmatmul.mubr.f32.gmra.mrb[0].mxu0 %v6219
      %v7358 = vpop.f32.mrb[0].mxu0
      %v7359 = vadd.f32 %v7054, %v7358
      %v7360 = vpop.f32.mrb[0].mxu0
      %7361 = vmatprep.mubr.f32.mxu0 %v6229
      %7362 = vmatmul.mubr.f32.gmra.mrb[0].mxu0 %v6228
      %v7363 = vpop.f32.mrb[0].mxu0
      %v7364 = vadd.f32 %v7059, %v7363
      %v7365 = vpop.f32.mrb[0].mxu0
      %7366 = vmatprep.mubr.f32.mxu0 %v6238
      %7367 = vmatmul.mubr.f32.gmra.mrb[0].mxu0 %v6237
      %v7368 = vpop.f32.mrb[0].mxu0
      %v7369 = vadd.f32 %v7064, %v7368
      %v7370 = vpop.f32.mrb[0].mxu0
      %7371 = vmatprep.mubr.f32.mxu0 %v6247
      %7372 = vmatmul.mubr.f32.gmra.mrb[0].mxu0 %v6246
      %v7373 = vpop.f32.mrb[0].mxu0
      %v7374 = vadd.f32 %v7069, %v7373
      %v7375 = vpop.f32.mrb[0].mxu0
      %7376 = vmatprep.mubr.f32.mxu0 %v6256
      %7377 = vmatmul.mubr.f32.gmra.mrb[0].mxu0 %v6255
      %v7378 = vpop.f32.mrb[0].mxu0
      %v7379 = vadd.f32 %v7074, %v7378
      %v7380 = vpop.f32.mrb[0].mxu0
      %7381 = vmatprep.mubr.f32.mxu0 %v6265
      %7382 = vmatmul.mubr.f32.gmra.mrb[0].mxu0 %v6264
      %v7383 = vpop.f32.mrb[0].mxu0
      %v7384 = vadd.f32 %v7079, %v7383
      %v7385 = vpop.f32.mrb[0].mxu0
      %7386 = vmatprep.mubr.f32.mxu0 %v6274
      %7387 = vmatmul.mubr.f32.gmra.mrb[0].mxu0 %v6273
      %v7388 = vpop.f32.mrb[0].mxu0
      %v7389 = vadd.f32 %v7084, %v7388
      %v7390 = vpop.f32.mrb[0].mxu0
      %7391 = vdwg.mxu0
      %7392 = vmatprep.subr.mxu0 0.0
      %7393 = vmatpush1.msra.mxu0 %v6374
      %7394 = vmatprep.subr.mxu0 0.0
      %7395 = vmatpush1.msra.mxu0 %v6375
      %7396 = vmatprep.subr.mxu0 0.0
      %7397 = vmatpush1.msra.mxu0 %v6376
      %7398 = vmatprep.subr.mxu0 0.0
      %7399 = vmatpush1.msra.mxu0 %v6377
      %7400 = vmatprep.subr.mxu0 0.0
      %7401 = vmatpush1.msra.mxu0 %v6378
      %7402 = vmatprep.subr.mxu0 0.0
      %7403 = vmatpush1.msra.mxu0 %v6379
      %7404 = vmatprep.subr.mxu0 0.0
      %7405 = vmatpush1.msra.mxu0 %v6380
      %7406 = vmatprep.subr.mxu0 0.0
      %7407 = vmatpush1.msra.mxu0 %v6381
      %7408 = vmatprep.subr.mxu0 0.0
      %7409 = vmatpush1.msra.mxu0 %v6382
      %7410 = vmatprep.subr.mxu0 0.0
      %7411 = vmatpush1.msra.mxu0 %v6383
      %7412 = vmatprep.subr.mxu0 0.0
      %7413 = vmatpush1.msra.mxu0 %v6384
      %7414 = vmatprep.subr.mxu0 0.0
      %7415 = vmatpush1.msra.mxu0 %v6385
      %7416 = vmatprep.subr.mxu0 0.0
      %7417 = vmatpush1.msra.mxu0 %v6386
      %7418 = vmatprep.subr.mxu0 0.0
      %7419 = vmatpush1.msra.mxu0 %v6387
      %7420 = vmatprep.subr.mxu0 0.0
      %7421 = vmatpush1.msra.mxu0 %v6388
      %7422 = vmatprep.subr.mxu0 0.0
      %7423 = vmatpush1.msra.mxu0 %v6389
      %7424 = vmatprep.subr.mxu0 0.0
      %7425 = vmatpush1.msra.mxu0 %v6390
      %7426 = vmatprep.subr.mxu0 0.0
      %7427 = vmatpush1.msra.mxu0 %v6391
      %7428 = vmatprep.subr.mxu0 0.0
      %7429 = vmatpush1.msra.mxu0 %v6392
      %7430 = vmatprep.subr.mxu0 0.0
      %7431 = vmatpush1.msra.mxu0 %v6393
      %7432 = vmatprep.subr.mxu0 0.0
      %7433 = vmatpush1.msra.mxu0 %v6394
      %7434 = vmatprep.subr.mxu0 0.0
      %7435 = vmatpush1.msra.mxu0 %v6395
      %7436 = vmatprep.subr.mxu0 0.0
      %7437 = vmatpush1.msra.mxu0 %v6396
      %7438 = vmatprep.subr.mxu0 0.0
      %7439 = vmatpush1.msra.mxu0 %v6397
      %7440 = vmatprep.subr.mxu0 0.0
      %7441 = vmatpush1.msra.mxu0 %v6398
      %7442 = vmatprep.subr.mxu0 0.0
      %7443 = vmatpush1.msra.mxu0 %v6399
      %7444 = vmatprep.subr.mxu0 0.0
      %7445 = vmatpush1.msra.mxu0 %v6400
      %7446 = vmatprep.subr.mxu0 0.0
      %7447 = vmatpush1.msra.mxu0 %v6401
      %7448 = vmatprep.subr.mxu0 0.0
      %7449 = vmatpush1.msra.mxu0 %v6402
      %7450 = vmatprep.subr.mxu0 0.0
      %7451 = vmatpush1.msra.mxu0 %v6403
      %7452 = vmatprep.subr.mxu0 0.0
      %7453 = vmatpush1.msra.mxu0 %v6404
      %7454 = vmatprep.subr.mxu0 0.0
      %7455 = vmatpush1.msra.mxu0 %v6405
      %7456 = vmatprep.mubr.f32.mxu0 %v5853
      %7457 = vmatmul.mubr.f32.gmra.mrb[0].mxu0 %v5852
      %v7458 = vpop.f32.mrb[0].mxu0
      %v7459 = vadd.f32 %v7154, %v7458
      %v7460 = vpop.f32.mrb[0].mxu0
      %7461 = vmatprep.mubr.f32.mxu0 %v5862
      %7462 = vmatmul.mubr.f32.gmra.mrb[0].mxu0 %v5861
      %v7463 = vpop.f32.mrb[0].mxu0
      %v7464 = vadd.f32 %v7159, %v7463
      %v7465 = vpop.f32.mrb[0].mxu0
      %7466 = vmatprep.mubr.f32.mxu0 %v5871
      %7467 = vmatmul.mubr.f32.gmra.mrb[0].mxu0 %v5870
      %v7468 = vpop.f32.mrb[0].mxu0
      %v7469 = vadd.f32 %v7164, %v7468
      %v7470 = vpop.f32.mrb[0].mxu0
      %7471 = vmatprep.mubr.f32.mxu0 %v5880
      %7472 = vmatmul.mubr.f32.gmra.mrb[0].mxu0 %v5879
      %v7473 = vpop.f32.mrb[0].mxu0
      %v7474 = vadd.f32 %v7169, %v7473
      %v7475 = vpop.f32.mrb[0].mxu0
      %7476 = vmatprep.mubr.f32.mxu0 %v5889
      %7477 = vmatmul.mubr.f32.gmra.mrb[0].mxu0 %v5888
      %v7478 = vpop.f32.mrb[0].mxu0
      %v7479 = vadd.f32 %v7174, %v7478
      %v7480 = vpop.f32.mrb[0].mxu0
      %7481 = vmatprep.mubr.f32.mxu0 %v5898
      %7482 = vmatmul.mubr.f32.gmra.mrb[0].mxu0 %v5897
      %v7483 = vpop.f32.mrb[0].mxu0
      %v7484 = vadd.f32 %v7179, %v7483
      %v7485 = vpop.f32.mrb[0].mxu0
      %7486 = vmatprep.mubr.f32.mxu0 %v5907
      %7487 = vmatmul.mubr.f32.gmra.mrb[0].mxu0 %v5906
      %v7488 = vpop.f32.mrb[0].mxu0
      %v7489 = vadd.f32 %v7184, %v7488
      %v7490 = vpop.f32.mrb[0].mxu0
      %7491 = vmatprep.mubr.f32.mxu0 %v5916
      %7492 = vmatmul.mubr.f32.gmra.mrb[0].mxu0 %v5915
      %v7493 = vpop.f32.mrb[0].mxu0
      %v7494 = vadd.f32 %v7189, %v7493
      %v7495 = vpop.f32.mrb[0].mxu0
      %7496 = vmatprep.mubr.f32.mxu0 %v5925
      %7497 = vmatmul.mubr.f32.gmra.mrb[0].mxu0 %v5924
      %v7498 = vpop.f32.mrb[0].mxu0
      %v7499 = vadd.f32 %v7194, %v7498
      %v7500 = vpop.f32.mrb[0].mxu0
      %7501 = vmatprep.mubr.f32.mxu0 %v5934
      %7502 = vmatmul.mubr.f32.gmra.mrb[0].mxu0 %v5933
      %v7503 = vpop.f32.mrb[0].mxu0
      %v7504 = vadd.f32 %v7199, %v7503
      %v7505 = vpop.f32.mrb[0].mxu0
      %7506 = vmatprep.mubr.f32.mxu0 %v5943
      %7507 = vmatmul.mubr.f32.gmra.mrb[0].mxu0 %v5942
      %v7508 = vpop.f32.mrb[0].mxu0
      %v7509 = vadd.f32 %v7204, %v7508
      %v7510 = vpop.f32.mrb[0].mxu0
      %7511 = vmatprep.mubr.f32.mxu0 %v5952
      %7512 = vmatmul.mubr.f32.gmra.mrb[0].mxu0 %v5951
      %v7513 = vpop.f32.mrb[0].mxu0
      %v7514 = vadd.f32 %v7209, %v7513
      %v7515 = vpop.f32.mrb[0].mxu0
      %7516 = vmatprep.mubr.f32.mxu0 %v5961
      %7517 = vmatmul.mubr.f32.gmra.mrb[0].mxu0 %v5960
      %v7518 = vpop.f32.mrb[0].mxu0
      %v7519 = vadd.f32 %v7214, %v7518
      %v7520 = vpop.f32.mrb[0].mxu0
      %7521 = vmatprep.mubr.f32.mxu0 %v5970
      %7522 = vmatmul.mubr.f32.gmra.mrb[0].mxu0 %v5969
      %v7523 = vpop.f32.mrb[0].mxu0
      %v7524 = vadd.f32 %v7219, %v7523
      %v7525 = vpop.f32.mrb[0].mxu0
      %7526 = vmatprep.mubr.f32.mxu0 %v5979
      %7527 = vmatmul.mubr.f32.gmra.mrb[0].mxu0 %v5978
      %v7528 = vpop.f32.mrb[0].mxu0
      %v7529 = vadd.f32 %v7224, %v7528
      %v7530 = vpop.f32.mrb[0].mxu0
      %7531 = vmatprep.mubr.f32.mxu0 %v5988
      %7532 = vmatmul.mubr.f32.gmra.mrb[0].mxu0 %v5987
      %v7533 = vpop.f32.mrb[0].mxu0
      %v7534 = vadd.f32 %v7229, %v7533
      %v7535 = vpop.f32.mrb[0].mxu0
      %7536 = vmatprep.mubr.f32.mxu0 %v5997
      %7537 = vmatmul.mubr.f32.gmra.mrb[0].mxu0 %v5996
      %v7538 = vpop.f32.mrb[0].mxu0
      %v7539 = vadd.f32 %v7234, %v7538
      %v7540 = vpop.f32.mrb[0].mxu0
      %7541 = vmatprep.mubr.f32.mxu0 %v6006
      %7542 = vmatmul.mubr.f32.gmra.mrb[0].mxu0 %v6005
      %v7543 = vpop.f32.mrb[0].mxu0
      %v7544 = vadd.f32 %v7239, %v7543
      %v7545 = vpop.f32.mrb[0].mxu0
      %7546 = vmatprep.mubr.f32.mxu0 %v6015
      %7547 = vmatmul.mubr.f32.gmra.mrb[0].mxu0 %v6014
      %v7548 = vpop.f32.mrb[0].mxu0
      %v7549 = vadd.f32 %v7244, %v7548
      %v7550 = vpop.f32.mrb[0].mxu0
      %7551 = vmatprep.mubr.f32.mxu0 %v6024
      %7552 = vmatmul.mubr.f32.gmra.mrb[0].mxu0 %v6023
      %v7553 = vpop.f32.mrb[0].mxu0
      %v7554 = vadd.f32 %v7249, %v7553
      %v7555 = vpop.f32.mrb[0].mxu0
      %7556 = vmatprep.mubr.f32.mxu0 %v6033
      %7557 = vmatmul.mubr.f32.gmra.mrb[0].mxu0 %v6032
      %v7558 = vpop.f32.mrb[0].mxu0
      %v7559 = vadd.f32 %v7254, %v7558
      %v7560 = vpop.f32.mrb[0].mxu0
      %7561 = vmatprep.mubr.f32.mxu0 %v6042
      %7562 = vmatmul.mubr.f32.gmra.mrb[0].mxu0 %v6041
      %v7563 = vpop.f32.mrb[0].mxu0
      %v7564 = vadd.f32 %v7259, %v7563
      %v7565 = vpop.f32.mrb[0].mxu0
      %7566 = vmatprep.mubr.f32.mxu0 %v6051
      %7567 = vmatmul.mubr.f32.gmra.mrb[0].mxu0 %v6050
      %v7568 = vpop.f32.mrb[0].mxu0
      %v7569 = vadd.f32 %v7264, %v7568
      %v7570 = vpop.f32.mrb[0].mxu0
      %7571 = vmatprep.mubr.f32.mxu0 %v6060
      %7572 = vmatmul.mubr.f32.gmra.mrb[0].mxu0 %v6059
      %v7573 = vpop.f32.mrb[0].mxu0
      %v7574 = vadd.f32 %v7269, %v7573
      %v7575 = vpop.f32.mrb[0].mxu0
      %7576 = vmatprep.mubr.f32.mxu0 %v6069
      %7577 = vmatmul.mubr.f32.gmra.mrb[0].mxu0 %v6068
      %v7578 = vpop.f32.mrb[0].mxu0
      %v7579 = vadd.f32 %v7274, %v7578
      %v7580 = vpop.f32.mrb[0].mxu0
      %7581 = vmatprep.mubr.f32.mxu0 %v6078
      %7582 = vmatmul.mubr.f32.gmra.mrb[0].mxu0 %v6077
      %v7583 = vpop.f32.mrb[0].mxu0
      %v7584 = vadd.f32 %v7279, %v7583
      %v7585 = vpop.f32.mrb[0].mxu0
      %7586 = vmatprep.mubr.f32.mxu0 %v6087
      %7587 = vmatmul.mubr.f32.gmra.mrb[0].mxu0 %v6086
      %v7588 = vpop.f32.mrb[0].mxu0
      %v7589 = vadd.f32 %v7284, %v7588
      %v7590 = vpop.f32.mrb[0].mxu0
      %7591 = vmatprep.mubr.f32.mxu0 %v6096
      %7592 = vmatmul.mubr.f32.gmra.mrb[0].mxu0 %v6095
      %v7593 = vpop.f32.mrb[0].mxu0
      %v7594 = vadd.f32 %v7289, %v7593
      %v7595 = vpop.f32.mrb[0].mxu0
      %7596 = vmatprep.mubr.f32.mxu0 %v6105
      %7597 = vmatmul.mubr.f32.gmra.mrb[0].mxu0 %v6104
      %v7598 = vpop.f32.mrb[0].mxu0
      %v7599 = vadd.f32 %v7294, %v7598
      %v7600 = vpop.f32.mrb[0].mxu0
      %7601 = vmatprep.mubr.f32.mxu0 %v6114
      %7602 = vmatmul.mubr.f32.gmra.mrb[0].mxu0 %v6113
      %v7603 = vpop.f32.mrb[0].mxu0
      %v7604 = vadd.f32 %v7299, %v7603
      %v7605 = vpop.f32.mrb[0].mxu0
      %7606 = vmatprep.mubr.f32.mxu0 %v6123
      %7607 = vmatmul.mubr.f32.gmra.mrb[0].mxu0 %v6122
      %v7608 = vpop.f32.mrb[0].mxu0
      %v7609 = vadd.f32 %v7304, %v7608
      %v7610 = vpop.f32.mrb[0].mxu0
      %7611 = vmatprep.mubr.f32.mxu0 %v6132
      %7612 = vmatmul.mubr.f32.gmra.mrb[0].mxu0 %v6131
      %v7613 = vpop.f32.mrb[0].mxu0
      %v7614 = vadd.f32 %v7309, %v7613
      %v7615 = vpop.f32.mrb[0].mxu0
      %7616 = vmatprep.mubr.f32.mxu0 %v6141
      %7617 = vmatmul.mubr.f32.gmra.mrb[0].mxu0 %v6140
      %v7618 = vpop.f32.mrb[0].mxu0
      %v7619 = vadd.f32 %v7314, %v7618
      %v7620 = vpop.f32.mrb[0].mxu0
      %7621 = vmatprep.mubr.f32.mxu0 %v6150
      %7622 = vmatmul.mubr.f32.gmra.mrb[0].mxu0 %v6149
      %v7623 = vpop.f32.mrb[0].mxu0
      %v7624 = vadd.f32 %v7319, %v7623
      %v7625 = vpop.f32.mrb[0].mxu0
      %7626 = vmatprep.mubr.f32.mxu0 %v6159
      %7627 = vmatmul.mubr.f32.gmra.mrb[0].mxu0 %v6158
      %v7628 = vpop.f32.mrb[0].mxu0
      %v7629 = vadd.f32 %v7324, %v7628
      %v7630 = vpop.f32.mrb[0].mxu0
      %7631 = vmatprep.mubr.f32.mxu0 %v6168
      %7632 = vmatmul.mubr.f32.gmra.mrb[0].mxu0 %v6167
      %v7633 = vpop.f32.mrb[0].mxu0
      %v7634 = vadd.f32 %v7329, %v7633
      %v7635 = vpop.f32.mrb[0].mxu0
      %7636 = vmatprep.mubr.f32.mxu0 %v6177
      %7637 = vmatmul.mubr.f32.gmra.mrb[0].mxu0 %v6176
      %v7638 = vpop.f32.mrb[0].mxu0
      %v7639 = vadd.f32 %v7334, %v7638
      %v7640 = vpop.f32.mrb[0].mxu0
      %7641 = vmatprep.mubr.f32.mxu0 %v6186
      %7642 = vmatmul.mubr.f32.gmra.mrb[0].mxu0 %v6185
      %v7643 = vpop.f32.mrb[0].mxu0
      %v7644 = vadd.f32 %v7339, %v7643
      %v7645 = vpop.f32.mrb[0].mxu0
      %7646 = vmatprep.mubr.f32.mxu0 %v6195
      %7647 = vmatmul.mubr.f32.gmra.mrb[0].mxu0 %v6194
      %v7648 = vpop.f32.mrb[0].mxu0
      %v7649 = vadd.f32 %v7344, %v7648
      %v7650 = vpop.f32.mrb[0].mxu0
      %7651 = vmatprep.mubr.f32.mxu0 %v6204
      %7652 = vmatmul.mubr.f32.gmra.mrb[0].mxu0 %v6203
      %v7653 = vpop.f32.mrb[0].mxu0
      %v7654 = vadd.f32 %v7349, %v7653
      %v7655 = vpop.f32.mrb[0].mxu0
      %7656 = vmatprep.mubr.f32.mxu0 %v6213
      %7657 = vmatmul.mubr.f32.gmra.mrb[0].mxu0 %v6212
      %v7658 = vpop.f32.mrb[0].mxu0
      %v7659 = vadd.f32 %v7354, %v7658
      %v7660 = vpop.f32.mrb[0].mxu0
      %7661 = vmatprep.mubr.f32.mxu0 %v6222
      %7662 = vmatmul.mubr.f32.gmra.mrb[0].mxu0 %v6221
      %v7663 = vpop.f32.mrb[0].mxu0
      %v7664 = vadd.f32 %v7359, %v7663
      %v7665 = vpop.f32.mrb[0].mxu0
      %7666 = vmatprep.mubr.f32.mxu0 %v6231
      %7667 = vmatmul.mubr.f32.gmra.mrb[0].mxu0 %v6230
      %v7668 = vpop.f32.mrb[0].mxu0
      %v7669 = vadd.f32 %v7364, %v7668
      %v7670 = vpop.f32.mrb[0].mxu0
      %7671 = vmatprep.mubr.f32.mxu0 %v6240
      %7672 = vmatmul.mubr.f32.gmra.mrb[0].mxu0 %v6239
      %v7673 = vpop.f32.mrb[0].mxu0
      %v7674 = vadd.f32 %v7369, %v7673
      %v7675 = vpop.f32.mrb[0].mxu0
      %7676 = vmatprep.mubr.f32.mxu0 %v6249
      %7677 = vmatmul.mubr.f32.gmra.mrb[0].mxu0 %v6248
      %v7678 = vpop.f32.mrb[0].mxu0
      %v7679 = vadd.f32 %v7374, %v7678
      %v7680 = vpop.f32.mrb[0].mxu0
      %7681 = vmatprep.mubr.f32.mxu0 %v6258
      %7682 = vmatmul.mubr.f32.gmra.mrb[0].mxu0 %v6257
      %v7683 = vpop.f32.mrb[0].mxu0
      %v7684 = vadd.f32 %v7379, %v7683
      %v7685 = vpop.f32.mrb[0].mxu0
      %7686 = vmatprep.mubr.f32.mxu0 %v6267
      %7687 = vmatmul.mubr.f32.gmra.mrb[0].mxu0 %v6266
      %v7688 = vpop.f32.mrb[0].mxu0
      %v7689 = vadd.f32 %v7384, %v7688
      %v7690 = vpop.f32.mrb[0].mxu0
      %7691 = vmatprep.mubr.f32.mxu0 %v6276
      %7692 = vmatmul.mubr.f32.gmra.mrb[0].mxu0 %v6275
      %v7693 = vpop.f32.mrb[0].mxu0
      %v7694 = vadd.f32 %v7389, %v7693
      %v7695 = vpop.f32.mrb[0].mxu0
      %7696 = vdwg.mxu0
      %7697 = vmatprep.subr.mxu0 0.0
      %7698 = vmatpush1.msra.mxu0 %v6406
      %7699 = vmatprep.subr.mxu0 0.0
      %7700 = vmatpush1.msra.mxu0 %v6407
      %7701 = vmatprep.subr.mxu0 0.0
      %7702 = vmatpush1.msra.mxu0 %v6408
      %7703 = vmatprep.subr.mxu0 0.0
      %7704 = vmatpush1.msra.mxu0 %v6409
      %7705 = vmatprep.subr.mxu0 0.0
      %7706 = vmatpush1.msra.mxu0 %v6410
      %7707 = vmatprep.subr.mxu0 0.0
      %7708 = vmatpush1.msra.mxu0 %v6411
      %7709 = vmatprep.subr.mxu0 0.0
      %7710 = vmatpush1.msra.mxu0 %v6412
      %7711 = vmatprep.subr.mxu0 0.0
      %7712 = vmatpush1.msra.mxu0 %v6413
      %7713 = vmatprep.subr.mxu0 0.0
      %7714 = vmatpush1.msra.mxu0 %v6414
      %7715 = vmatprep.subr.mxu0 0.0
      %7716 = vmatpush1.msra.mxu0 %v6415
      %7717 = vmatprep.subr.mxu0 0.0
      %7718 = vmatpush1.msra.mxu0 %v6416
      %7719 = vmatprep.subr.mxu0 0.0
      %7720 = vmatpush1.msra.mxu0 %v6417
      %7721 = vmatprep.subr.mxu0 0.0
      %7722 = vmatpush1.msra.mxu0 %v6418
      %7723 = vmatprep.subr.mxu0 0.0
      %7724 = vmatpush1.msra.mxu0 %v6419
      %7725 = vmatprep.subr.mxu0 0.0
      %7726 = vmatpush1.msra.mxu0 %v6420
      %7727 = vmatprep.subr.mxu0 0.0
      %7728 = vmatpush1.msra.mxu0 %v6421
      %7729 = vmatprep.subr.mxu0 0.0
      %7730 = vmatpush1.msra.mxu0 0.0
      %7731 = vmatprep.subr.mxu0 0.0
      %7732 = vmatpush1.msra.mxu0 0.0
      %7733 = vmatprep.subr.mxu0 0.0
      %7734 = vmatpush1.msra.mxu0 0.0
      %7735 = vmatprep.subr.mxu0 0.0
      %7736 = vmatpush1.msra.mxu0 0.0
      %7737 = vmatprep.subr.mxu0 0.0
      %7738 = vmatpush1.msra.mxu0 0.0
      %7739 = vmatprep.subr.mxu0 0.0
      %7740 = vmatpush1.msra.mxu0 0.0
      %7741 = vmatprep.subr.mxu0 0.0
      %7742 = vmatpush1.msra.mxu0 0.0
      %7743 = vmatprep.subr.mxu0 0.0
      %7744 = vmatpush1.msra.mxu0 0.0
      %7745 = vmatprep.subr.mxu0 0.0
      %7746 = vmatpush1.msra.mxu0 0.0
      %7747 = vmatprep.subr.mxu0 0.0
      %7748 = vmatpush1.msra.mxu0 0.0
      %7749 = vmatprep.subr.mxu0 0.0
      %7750 = vmatpush1.msra.mxu0 0.0
      %7751 = vmatprep.subr.mxu0 0.0
      %7752 = vmatpush1.msra.mxu0 0.0
      %7753 = vmatprep.subr.mxu0 0.0
      %7754 = vmatpush1.msra.mxu0 0.0
      %7755 = vmatprep.subr.mxu0 0.0
      %7756 = vmatpush1.msra.mxu0 0.0
      %7757 = vmatprep.subr.mxu0 0.0
      %7758 = vmatpush1.msra.mxu0 0.0
      %7759 = vmatprep.subr.mxu0 0.0
      %7760 = vmatpush1.msra.mxu0 0.0
      %7761 = vmatprep.mubr.f32.mxu0 0.0
      %7762 = vmatmul.mubr.f32.gmra.mrb[0].mxu0 %v5854
      %v7763 = vpop.f32.mrb[0].mxu0
      %v7764 = vadd.f32 %v7459, %v7763
      %v7765 = vpop.f32.mrb[0].mxu0
      %7766 = vmatprep.mubr.f32.mxu0 0.0
      %7767 = vmatmul.mubr.f32.gmra.mrb[0].mxu0 %v5863
      %v7768 = vpop.f32.mrb[0].mxu0
      %v7769 = vadd.f32 %v7464, %v7768
      %v7770 = vpop.f32.mrb[0].mxu0
      %7771 = vmatprep.mubr.f32.mxu0 0.0
      %7772 = vmatmul.mubr.f32.gmra.mrb[0].mxu0 %v5872
      %v7773 = vpop.f32.mrb[0].mxu0
      %v7774 = vadd.f32 %v7469, %v7773
      %v7775 = vpop.f32.mrb[0].mxu0
      %7776 = vmatprep.mubr.f32.mxu0 0.0
      %7777 = vmatmul.mubr.f32.gmra.mrb[0].mxu0 %v5881
      %v7778 = vpop.f32.mrb[0].mxu0
      %v7779 = vadd.f32 %v7474, %v7778
      %v7780 = vpop.f32.mrb[0].mxu0
      %7781 = vmatprep.mubr.f32.mxu0 0.0
      %7782 = vmatmul.mubr.f32.gmra.mrb[0].mxu0 %v5890
      %v7783 = vpop.f32.mrb[0].mxu0
      %v7784 = vadd.f32 %v7479, %v7783
      %v7785 = vpop.f32.mrb[0].mxu0
      %7786 = vmatprep.mubr.f32.mxu0 0.0
      %7787 = vmatmul.mubr.f32.gmra.mrb[0].mxu0 %v5899
      %v7788 = vpop.f32.mrb[0].mxu0
      %v7789 = vadd.f32 %v7484, %v7788
      %v7790 = vpop.f32.mrb[0].mxu0
      %7791 = vmatprep.mubr.f32.mxu0 0.0
      %7792 = vmatmul.mubr.f32.gmra.mrb[0].mxu0 %v5908
      %v7793 = vpop.f32.mrb[0].mxu0
      %v7794 = vadd.f32 %v7489, %v7793
      %v7795 = vpop.f32.mrb[0].mxu0
      %7796 = vmatprep.mubr.f32.mxu0 0.0
      %7797 = vmatmul.mubr.f32.gmra.mrb[0].mxu0 %v5917
      %v7798 = vpop.f32.mrb[0].mxu0
      %v7799 = vadd.f32 %v7494, %v7798
      %v7800 = vpop.f32.mrb[0].mxu0
      %7801 = vmatprep.mubr.f32.mxu0 0.0
      %7802 = vmatmul.mubr.f32.gmra.mrb[0].mxu0 %v5926
      %v7803 = vpop.f32.mrb[0].mxu0
      %v7804 = vadd.f32 %v7499, %v7803
      %v7805 = vpop.f32.mrb[0].mxu0
      %7806 = vmatprep.mubr.f32.mxu0 0.0
      %7807 = vmatmul.mubr.f32.gmra.mrb[0].mxu0 %v5935
      %v7808 = vpop.f32.mrb[0].mxu0
      %v7809 = vadd.f32 %v7504, %v7808
      %v7810 = vpop.f32.mrb[0].mxu0
      %7811 = vmatprep.mubr.f32.mxu0 0.0
      %7812 = vmatmul.mubr.f32.gmra.mrb[0].mxu0 %v5944
      %v7813 = vpop.f32.mrb[0].mxu0
      %v7814 = vadd.f32 %v7509, %v7813
      %v7815 = vpop.f32.mrb[0].mxu0
      %7816 = vmatprep.mubr.f32.mxu0 0.0
      %7817 = vmatmul.mubr.f32.gmra.mrb[0].mxu0 %v5953
      %v7818 = vpop.f32.mrb[0].mxu0
      %v7819 = vadd.f32 %v7514, %v7818
      %v7820 = vpop.f32.mrb[0].mxu0
      %7821 = vmatprep.mubr.f32.mxu0 0.0
      %7822 = vmatmul.mubr.f32.gmra.mrb[0].mxu0 %v5962
      %v7823 = vpop.f32.mrb[0].mxu0
      %v7824 = vadd.f32 %v7519, %v7823
      %v7825 = vpop.f32.mrb[0].mxu0
      %7826 = vmatprep.mubr.f32.mxu0 0.0
      %7827 = vmatmul.mubr.f32.gmra.mrb[0].mxu0 %v5971
      %v7828 = vpop.f32.mrb[0].mxu0
      %v7829 = vadd.f32 %v7524, %v7828
      %v7830 = vpop.f32.mrb[0].mxu0
      %7831 = vmatprep.mubr.f32.mxu0 0.0
      %7832 = vmatmul.mubr.f32.gmra.mrb[0].mxu0 %v5980
      %v7833 = vpop.f32.mrb[0].mxu0
      %v7834 = vadd.f32 %v7529, %v7833
      %v7835 = vpop.f32.mrb[0].mxu0
      %7836 = vmatprep.mubr.f32.mxu0 0.0
      %7837 = vmatmul.mubr.f32.gmra.mrb[0].mxu0 %v5989
      %v7838 = vpop.f32.mrb[0].mxu0
      %v7839 = vadd.f32 %v7534, %v7838
      %v7840 = vpop.f32.mrb[0].mxu0
      %7841 = vmatprep.mubr.f32.mxu0 0.0
      %7842 = vmatmul.mubr.f32.gmra.mrb[0].mxu0 %v5998
      %v7843 = vpop.f32.mrb[0].mxu0
      %v7844 = vadd.f32 %v7539, %v7843
      %v7845 = vpop.f32.mrb[0].mxu0
      %7846 = vmatprep.mubr.f32.mxu0 0.0
      %7847 = vmatmul.mubr.f32.gmra.mrb[0].mxu0 %v6007
      %v7848 = vpop.f32.mrb[0].mxu0
      %v7849 = vadd.f32 %v7544, %v7848
      %v7850 = vpop.f32.mrb[0].mxu0
      %7851 = vmatprep.mubr.f32.mxu0 0.0
      %7852 = vmatmul.mubr.f32.gmra.mrb[0].mxu0 %v6016
      %v7853 = vpop.f32.mrb[0].mxu0
      %v7854 = vadd.f32 %v7549, %v7853
      %v7855 = vpop.f32.mrb[0].mxu0
      %7856 = vmatprep.mubr.f32.mxu0 0.0
      %7857 = vmatmul.mubr.f32.gmra.mrb[0].mxu0 %v6025
      %v7858 = vpop.f32.mrb[0].mxu0
      %v7859 = vadd.f32 %v7554, %v7858
      %v7860 = vpop.f32.mrb[0].mxu0
      %7861 = vmatprep.mubr.f32.mxu0 0.0
      %7862 = vmatmul.mubr.f32.gmra.mrb[0].mxu0 %v6034
      %v7863 = vpop.f32.mrb[0].mxu0
      %v7864 = vadd.f32 %v7559, %v7863
      %v7865 = vpop.f32.mrb[0].mxu0
      %7866 = vmatprep.mubr.f32.mxu0 0.0
      %7867 = vmatmul.mubr.f32.gmra.mrb[0].mxu0 %v6043
      %v7868 = vpop.f32.mrb[0].mxu0
      %v7869 = vadd.f32 %v7564, %v7868
      %v7870 = vpop.f32.mrb[0].mxu0
      %7871 = vmatprep.mubr.f32.mxu0 0.0
      %7872 = vmatmul.mubr.f32.gmra.mrb[0].mxu0 %v6052
      %v7873 = vpop.f32.mrb[0].mxu0
      %v7874 = vadd.f32 %v7569, %v7873
      %v7875 = vpop.f32.mrb[0].mxu0
      %7876 = vmatprep.mubr.f32.mxu0 0.0
      %7877 = vmatmul.mubr.f32.gmra.mrb[0].mxu0 %v6061
      %v7878 = vpop.f32.mrb[0].mxu0
      %v7879 = vadd.f32 %v7574, %v7878
      %v7880 = vpop.f32.mrb[0].mxu0
      %7881 = vmatprep.mubr.f32.mxu0 0.0
      %7882 = vmatmul.mubr.f32.gmra.mrb[0].mxu0 %v6070
      %v7883 = vpop.f32.mrb[0].mxu0
      %v7884 = vadd.f32 %v7579, %v7883
      %v7885 = vpop.f32.mrb[0].mxu0
      %7886 = vmatprep.mubr.f32.mxu0 0.0
      %7887 = vmatmul.mubr.f32.gmra.mrb[0].mxu0 %v6079
      %v7888 = vpop.f32.mrb[0].mxu0
      %v7889 = vadd.f32 %v7584, %v7888
      %v7890 = vpop.f32.mrb[0].mxu0
      %7891 = vmatprep.mubr.f32.mxu0 0.0
      %7892 = vmatmul.mubr.f32.gmra.mrb[0].mxu0 %v6088
      %v7893 = vpop.f32.mrb[0].mxu0
      %v7894 = vadd.f32 %v7589, %v7893
      %v7895 = vpop.f32.mrb[0].mxu0
      %7896 = vmatprep.mubr.f32.mxu0 0.0
      %7897 = vmatmul.mubr.f32.gmra.mrb[0].mxu0 %v6097
      %v7898 = vpop.f32.mrb[0].mxu0
      %v7899 = vadd.f32 %v7594, %v7898
      %v7900 = vpop.f32.mrb[0].mxu0
      %7901 = vmatprep.mubr.f32.mxu0 0.0
      %7902 = vmatmul.mubr.f32.gmra.mrb[0].mxu0 %v6106
      %v7903 = vpop.f32.mrb[0].mxu0
      %v7904 = vadd.f32 %v7599, %v7903
      %v7905 = vpop.f32.mrb[0].mxu0
      %7906 = vmatprep.mubr.f32.mxu0 0.0
      %7907 = vmatmul.mubr.f32.gmra.mrb[0].mxu0 %v6115
      %v7908 = vpop.f32.mrb[0].mxu0
      %v7909 = vadd.f32 %v7604, %v7908
      %v7910 = vpop.f32.mrb[0].mxu0
      %7911 = vmatprep.mubr.f32.mxu0 0.0
      %7912 = vmatmul.mubr.f32.gmra.mrb[0].mxu0 %v6124
      %v7913 = vpop.f32.mrb[0].mxu0
      %v7914 = vadd.f32 %v7609, %v7913
      %v7915 = vpop.f32.mrb[0].mxu0
      %7916 = vmatprep.mubr.f32.mxu0 0.0
      %7917 = vmatmul.mubr.f32.gmra.mrb[0].mxu0 %v6133
      %v7918 = vpop.f32.mrb[0].mxu0
      %v7919 = vadd.f32 %v7614, %v7918
      %v7920 = vpop.f32.mrb[0].mxu0
      %7921 = vmatprep.mubr.f32.mxu0 0.0
      %7922 = vmatmul.mubr.f32.gmra.mrb[0].mxu0 %v6142
      %v7923 = vpop.f32.mrb[0].mxu0
      %v7924 = vadd.f32 %v7619, %v7923
      %v7925 = vpop.f32.mrb[0].mxu0
      %7926 = vmatprep.mubr.f32.mxu0 0.0
      %7927 = vmatmul.mubr.f32.gmra.mrb[0].mxu0 %v6151
      %v7928 = vpop.f32.mrb[0].mxu0
      %v7929 = vadd.f32 %v7624, %v7928
      %v7930 = vpop.f32.mrb[0].mxu0
      %7931 = vmatprep.mubr.f32.mxu0 0.0
      %7932 = vmatmul.mubr.f32.gmra.mrb[0].mxu0 %v6160
      %v7933 = vpop.f32.mrb[0].mxu0
      %v7934 = vadd.f32 %v7629, %v7933
      %v7935 = vpop.f32.mrb[0].mxu0
      %7936 = vmatprep.mubr.f32.mxu0 0.0
      %7937 = vmatmul.mubr.f32.gmra.mrb[0].mxu0 %v6169
      %v7938 = vpop.f32.mrb[0].mxu0
      %v7939 = vadd.f32 %v7634, %v7938
      %v7940 = vpop.f32.mrb[0].mxu0
      %7941 = vmatprep.mubr.f32.mxu0 0.0
      %7942 = vmatmul.mubr.f32.gmra.mrb[0].mxu0 %v6178
      %v7943 = vpop.f32.mrb[0].mxu0
      %v7944 = vadd.f32 %v7639, %v7943
      %v7945 = vpop.f32.mrb[0].mxu0
      %7946 = vmatprep.mubr.f32.mxu0 0.0
      %7947 = vmatmul.mubr.f32.gmra.mrb[0].mxu0 %v6187
      %v7948 = vpop.f32.mrb[0].mxu0
      %v7949 = vadd.f32 %v7644, %v7948
      %v7950 = vpop.f32.mrb[0].mxu0
      %7951 = vmatprep.mubr.f32.mxu0 0.0
      %7952 = vmatmul.mubr.f32.gmra.mrb[0].mxu0 %v6196
      %v7953 = vpop.f32.mrb[0].mxu0
      %v7954 = vadd.f32 %v7649, %v7953
      %v7955 = vpop.f32.mrb[0].mxu0
      %7956 = vmatprep.mubr.f32.mxu0 0.0
      %7957 = vmatmul.mubr.f32.gmra.mrb[0].mxu0 %v6205
      %v7958 = vpop.f32.mrb[0].mxu0
      %v7959 = vadd.f32 %v7654, %v7958
      %v7960 = vpop.f32.mrb[0].mxu0
      %7961 = vmatprep.mubr.f32.mxu0 0.0
      %7962 = vmatmul.mubr.f32.gmra.mrb[0].mxu0 %v6214
      %v7963 = vpop.f32.mrb[0].mxu0
      %v7964 = vadd.f32 %v7659, %v7963
      %v7965 = vpop.f32.mrb[0].mxu0
      %7966 = vmatprep.mubr.f32.mxu0 0.0
      %7967 = vmatmul.mubr.f32.gmra.mrb[0].mxu0 %v6223
      %v7968 = vpop.f32.mrb[0].mxu0
      %v7969 = vadd.f32 %v7664, %v7968
      %v7970 = vpop.f32.mrb[0].mxu0
      %7971 = vmatprep.mubr.f32.mxu0 0.0
      %7972 = vmatmul.mubr.f32.gmra.mrb[0].mxu0 %v6232
      %v7973 = vpop.f32.mrb[0].mxu0
      %v7974 = vadd.f32 %v7669, %v7973
      %v7975 = vpop.f32.mrb[0].mxu0
      %7976 = vmatprep.mubr.f32.mxu0 0.0
      %7977 = vmatmul.mubr.f32.gmra.mrb[0].mxu0 %v6241
      %v7978 = vpop.f32.mrb[0].mxu0
      %v7979 = vadd.f32 %v7674, %v7978
      %v7980 = vpop.f32.mrb[0].mxu0
      %7981 = vmatprep.mubr.f32.mxu0 0.0
      %7982 = vmatmul.mubr.f32.gmra.mrb[0].mxu0 %v6250
      %v7983 = vpop.f32.mrb[0].mxu0
      %v7984 = vadd.f32 %v7679, %v7983
      %v7985 = vpop.f32.mrb[0].mxu0
      %7986 = vmatprep.mubr.f32.mxu0 0.0
      %7987 = vmatmul.mubr.f32.gmra.mrb[0].mxu0 %v6259
      %v7988 = vpop.f32.mrb[0].mxu0
      %v7989 = vadd.f32 %v7684, %v7988
      %v7990 = vpop.f32.mrb[0].mxu0
      %7991 = vmatprep.mubr.f32.mxu0 0.0
      %7992 = vmatmul.mubr.f32.gmra.mrb[0].mxu0 %v6268
      %v7993 = vpop.f32.mrb[0].mxu0
      %v7994 = vadd.f32 %v7689, %v7993
      %v7995 = vpop.f32.mrb[0].mxu0
      %7996 = vmatprep.mubr.f32.mxu0 0.0
      %7997 = vmatmul.mubr.f32.gmra.mrb[0].mxu0 %v6277
      %v7998 = vpop.f32.mrb[0].mxu0
      %v7999 = vadd.f32 %v7694, %v7998
      %v8000 = vpop.f32.mrb[0].mxu0
      %8001 = vdwg.mxu0
      %v8002 = vadd.f32 %v7764, %v6422
      %v8003 = vadd.f32 %v7769, %v6423
      %v8004 = vadd.f32 %v7774, %v6424
      %v8005 = vadd.f32 %v7779, %v6425
      %v8006 = vadd.f32 %v7784, %v6426
      %v8007 = vadd.f32 %v7789, %v6427
      %v8008 = vadd.f32 %v7794, %v6428
      %v8009 = vadd.f32 %v7799, %v6429
      %v8010 = vadd.f32 %v7804, %v6430
      %v8011 = vadd.f32 %v7809, %v6431
      %v8012 = vadd.f32 %v7814, %v6432
      %v8013 = vadd.f32 %v7819, %v6433
      %v8014 = vadd.f32 %v7824, %v6434
      %v8015 = vadd.f32 %v7829, %v6435
      %v8016 = vadd.f32 %v7834, %v6436
      %v8017 = vadd.f32 %v7839, %v6437
      %v8018 = vadd.f32 %v7844, %v6438
      %v8019 = vadd.f32 %v7849, %v6439
      %v8020 = vadd.f32 %v7854, %v6440
      %v8021 = vadd.f32 %v7859, %v6441
      %v8022 = vadd.f32 %v7864, %v6442
      %v8023 = vadd.f32 %v7869, %v6443
      %v8024 = vadd.f32 %v7874, %v6444
      %v8025 = vadd.f32 %v7879, %v6445
      %v8026 = vadd.f32 %v7884, %v6446
      %v8027 = vadd.f32 %v7889, %v6447
      %v8028 = vadd.f32 %v7894, %v6448
      %v8029 = vadd.f32 %v7899, %v6449
      %v8030 = vadd.f32 %v7904, %v6450
      %v8031 = vadd.f32 %v7909, %v6451
      %v8032 = vadd.f32 %v7914, %v6452
      %v8033 = vadd.f32 %v7919, %v6453
      %v8034 = vadd.f32 %v7924, %v6454
      %v8035 = vadd.f32 %v7929, %v6455
      %v8036 = vadd.f32 %v7934, %v6456
      %v8037 = vadd.f32 %v7939, %v6457
      %v8038 = vadd.f32 %v7944, %v6458
      %v8039 = vadd.f32 %v7949, %v6459
      %v8040 = vadd.f32 %v7954, %v6460
      %v8041 = vadd.f32 %v7959, %v6461
      %v8042 = vadd.f32 %v7964, %v6462
      %v8043 = vadd.f32 %v7969, %v6463
      %v8044 = vadd.f32 %v7974, %v6464
      %v8045 = vadd.f32 %v7979, %v6465
      %v8046 = vadd.f32 %v7984, %v6466
      %v8047 = vadd.f32 %v7989, %v6467
      %v8048 = vadd.f32 %v7994, %v6468
      %v8049 = vadd.f32 %v7999, %v6469
      %v8050 = vmax.f32 %v8002, 0.0
      %v8051 = vmax.f32 %v8003, 0.0
      %v8052 = vmax.f32 %v8004, 0.0
      %v8053 = vmax.f32 %v8005, 0.0
      %v8054 = vmax.f32 %v8006, 0.0
      %v8055 = vmax.f32 %v8007, 0.0
      %v8056 = vmax.f32 %v8008, 0.0
      %v8057 = vmax.f32 %v8009, 0.0
      %v8058 = vmax.f32 %v8010, 0.0
      %v8059 = vmax.f32 %v8011, 0.0
      %v8060 = vmax.f32 %v8012, 0.0
      %v8061 = vmax.f32 %v8013, 0.0
      %v8062 = vmax.f32 %v8014, 0.0
      %v8063 = vmax.f32 %v8015, 0.0
      %v8064 = vmax.f32 %v8016, 0.0
      %v8065 = vmax.f32 %v8017, 0.0
      %v8066 = vmax.f32 %v8018, 0.0
      %v8067 = vmax.f32 %v8019, 0.0
      %v8068 = vmax.f32 %v8020, 0.0
      %v8069 = vmax.f32 %v8021, 0.0
      %v8070 = vmax.f32 %v8022, 0.0
      %v8071 = vmax.f32 %v8023, 0.0
      %v8072 = vmax.f32 %v8024, 0.0
      %v8073 = vmax.f32 %v8025, 0.0
      %v8074 = vmax.f32 %v8026, 0.0
      %v8075 = vmax.f32 %v8027, 0.0
      %v8076 = vmax.f32 %v8028, 0.0
      %v8077 = vmax.f32 %v8029, 0.0
      %v8078 = vmax.f32 %v8030, 0.0
      %v8079 = vmax.f32 %v8031, 0.0
      %v8080 = vmax.f32 %v8032, 0.0
      %v8081 = vmax.f32 %v8033, 0.0
      %v8082 = vmax.f32 %v8034, 0.0
      %v8083 = vmax.f32 %v8035, 0.0
      %v8084 = vmax.f32 %v8036, 0.0
      %v8085 = vmax.f32 %v8037, 0.0
      %v8086 = vmax.f32 %v8038, 0.0
      %v8087 = vmax.f32 %v8039, 0.0
      %v8088 = vmax.f32 %v8040, 0.0
      %v8089 = vmax.f32 %v8041, 0.0
      %v8090 = vmax.f32 %v8042, 0.0
      %v8091 = vmax.f32 %v8043, 0.0
      %v8092 = vmax.f32 %v8044, 0.0
      %v8093 = vmax.f32 %v8045, 0.0
      %v8094 = vmax.f32 %v8046, 0.0
      %v8095 = vmax.f32 %v8047, 0.0
      %v8096 = vmax.f32 %v8048, 0.0
      %v8097 = vmax.f32 %v8049, 0.0
      %8098 = vst [vmem:[%s224] sm:$0xff] %v8050
      %8099 = vst [vmem:[%s224 + $0x8] sm:$0xff] %v8051
      %8100 = vst [vmem:[%s224 + $0x10] sm:$0xff] %v8052
      %8101 = vst [vmem:[%s224 + $0x18] sm:$0xff] %v8053
      %8102 = vst [vmem:[%s224 + $0x20] sm:$0xff] %v8054
      %8103 = vst [vmem:[%s224 + $0x28] sm:$0xff] %v8055
      %8104 = vst [vmem:[%s224 + $0x30] sm:$0xff] %v8056
      %8105 = vst [vmem:[%s224 + $0x38] sm:$0xff] %v8057
      %8106 = vst [vmem:[%s224 + $0x40] sm:$0xff] %v8058
      %8107 = vst [vmem:[%s224 + $0x48] sm:$0xff] %v8059
      %8108 = vst [vmem:[%s224 + $0x50] sm:$0xff] %v8060
      %8109 = vst [vmem:[%s224 + $0x58] sm:$0xff] %v8061
      %8110 = vst [vmem:[%s224 + $0x60] sm:$0xff] %v8062
      %8111 = vst [vmem:[%s224 + $0x68] sm:$0xff] %v8063
      %8112 = vst [vmem:[%s224 + $0x70] sm:$0xff] %v8064
      %8113 = vst [vmem:[%s224 + $0x78] sm:$0xff] %v8065
      %8114 = vst [vmem:[%s224 + $0x80] sm:$0xff] %v8066
      %8115 = vst [vmem:[%s224 + $0x88] sm:$0xff] %v8067
      %8116 = vst [vmem:[%s224 + $0x90] sm:$0xff] %v8068
      %8117 = vst [vmem:[%s224 + $0x98] sm:$0xff] %v8069
      %8118 = vst [vmem:[%s224 + $0xa0] sm:$0xff] %v8070
      %8119 = vst [vmem:[%s224 + $0xa8] sm:$0xff] %v8071
      %8120 = vst [vmem:[%s224 + $0xb0] sm:$0xff] %v8072
      %8121 = vst [vmem:[%s224 + $0xb8] sm:$0xff] %v8073
      %8122 = vst [vmem:[%s224 + $0xc0] sm:$0xff] %v8074
      %8123 = vst [vmem:[%s224 + $0xc8] sm:$0xff] %v8075
      %8124 = vst [vmem:[%s224 + $0xd0] sm:$0xff] %v8076
      %8125 = vst [vmem:[%s224 + $0xd8] sm:$0xff] %v8077
      %8126 = vst [vmem:[%s224 + $0xe0] sm:$0xff] %v8078
      %8127 = vst [vmem:[%s224 + $0xe8] sm:$0xff] %v8079
      %8128 = vst [vmem:[%s224 + $0xf0] sm:$0xff] %v8080
      %8129 = vst [vmem:[%s224 + $0xf8] sm:$0xff] %v8081
      %8130 = vst [vmem:[%s224 + $0x100] sm:$0xff] %v8082
      %8131 = vst [vmem:[%s224 + $0x108] sm:$0xff] %v8083
      %8132 = vst [vmem:[%s224 + $0x110] sm:$0xff] %v8084
      %8133 = vst [vmem:[%s224 + $0x118] sm:$0xff] %v8085
      %8134 = vst [vmem:[%s224 + $0x120] sm:$0xff] %v8086
      %8135 = vst [vmem:[%s224 + $0x128] sm:$0xff] %v8087
      %8136 = vst [vmem:[%s224 + $0x130] sm:$0xff] %v8088
      %8137 = vst [vmem:[%s224 + $0x138] sm:$0xff] %v8089
      %8138 = vst [vmem:[%s224 + $0x140] sm:$0xff] %v8090
      %8139 = vst [vmem:[%s224 + $0x148] sm:$0xff] %v8091
      %8140 = vst [vmem:[%s224 + $0x150] sm:$0xff] %v8092
      %8141 = vst [vmem:[%s224 + $0x158] sm:$0xff] %v8093
      %8142 = vst [vmem:[%s224 + $0x160] sm:$0xff] %v8094
      %8143 = vst [vmem:[%s224 + $0x168] sm:$0xff] %v8095
      %8144 = vst [vmem:[%s224 + $0x170] sm:$0xff] %v8096
      %8145 = vst [vmem:[%s224 + $0x178] sm:$0xff] %v8097
      %p8146 = scmp.lt.s32.totalorder %s16, 1
      %s8147 = scalar_select %p8146, %s16, 1
      %s8148 = smul.addr %s8147, 48
      %s8149 = smul.addr %s8148, 8
      %s8150 = scalar_lea.vmem %s5, %s8149
      // Predicated region
      $region41: #{basic_block_forward.1} parent=39 // pred_check
        %p8151 = pneg %p144
      $region42: #{basic_block_forward.1} parent=39 // pred_check_branch
        %8153 = sbr.rel (%p8151) target = $region44
      $region43: #{basic_block_forward.1} parent=39 // pred_region
        _
      $region44: #{basic_block_forward.1} parent=39 // pred_fallthru
        _
    $region40: #{basic_block_forward.1} parent=5 // pred_fallthru
      _
    %p8154 = scmp.le.s32.totalorder 2, %s11
    // Predicated region
    $region45: #{basic_block_forward.1} parent=5 // pred_check
      %p8155 = pneg %p8154
    $region46: #{basic_block_forward.1} parent=5 // pred_check_branch
      %8157 = sbr.rel (%p8155) target = $region48
    $region47: #{basic_block_forward.1} parent=5 // pred_region
      %s8158 = ssub.s32 %s11, 2
      // Predicated region
      $region49: #{basic_block_forward.1} parent=47 // pred_check
        %p8159 = pneg %p150
      $region50: #{basic_block_forward.1} parent=47 // pred_check_branch
        %8161 = sbr.rel (%p8159) target = $region52
      $region51: #{basic_block_forward.1} parent=47 // pred_region
        %p8162 = scmp.lt.s32.totalorder %s17, 1
        %s8163 = scalar_select %p8162, %s17, 1
        %s8164 = smul.addr %s8163, 48
        %s8165 = smul.addr %s8164, 8
        %s8166 = scalar_lea.vmem %s5, %s8165
      $region52: #{basic_block_forward.1} parent=47 // pred_fallthru
        _
    $region48: #{basic_block_forward.1} parent=5 // pred_fallthru
      _
  $region6: #{basic_block_forward.1} parent=0 // loop_footer
    %s15 = sadd.s32 1, %s11
  $region7: #{basic_block_forward.1} parent=0 // loop_footer_branch
    %10 = sbr.rel target = $region3
  $region8: #{basic_block_forward.1} parent=0 // loop_exit
    _

</llo_original>
